<compile_context>
chip_gen: v6e
topology: v6e:2x2x1
jax: 0.10.0
libtpu: 0.0.40
codegen_flags: <defaults>
</compile_context>

<pallas_src>
import functools

import jax
import jax.numpy as jnp
from jax.experimental import pallas as pl
from jax.experimental.pallas import tpu as pltpu


def _round_up(x, m):
    return ((x + m - 1) // m) * m


def disease_classifier_kernel(
    B, F, E, C, ENC_pad,
    # inputs
    img_ref, seq_ref,                 # [B, C, H*W] f32 ; [B*F, L] f32
    w_enc_ref, b_enc_ref,             # [C, ENC_pad] f32 ; [1, ENC_pad] f32
    w_ih_ref, w_hh_ref, b_g_ref,      # [L, 4E] bf16 ; [E, 4E] bf16 ; [1, 4E] f32
    b_fc_ref, b_fin_ref,              # [1, D_pad] f32 ; [1, CLS_pad] f32
    w_fc_hbm, w_fin_hbm,              # HBM: [F*E, D_pad] bf16 ; [ENC_pad+D_pad, CLS_pad] bf16
    # output
    out_ref,                          # [B, CLS_pad] f32
    # scratch
    w_fc_buf, w_fin_buf, dma_sem, xproj_ref, hid_ref,
):
    f32, bf16 = jnp.float32, jnp.bfloat16

    # -- Kick off the two big, late-used weight copies so they overlap the LSTM / encoder work. --
    cp_fc = pltpu.make_async_copy(w_fc_hbm, w_fc_buf, dma_sem.at[0])
    cp_fin = pltpu.make_async_copy(w_fin_hbm, w_fin_buf, dma_sem.at[1])
    cp_fc.start()
    cp_fin.start()

    # -- LSTM input projection hoisted out of the recurrence; parked in VMEM scratch. --
    # nn.LSTM(max_len, E) fed a [B, F, L] tensor (batch_first=False): time axis = B,
    # batch inside the cell = F, input_size = L. Gates packed as (i, f, o, g) over 4E = 128 lanes.
    xproj_ref[...] = (
        jnp.dot(seq_ref[...].astype(bf16), w_ih_ref[...], preferred_element_type=f32)
        + b_g_ref[...])

    # -- Recurrence: only h/c stay live in vregs; w_hh re-read from VMEM each step. --
    h = jnp.zeros((F, E), f32)
    c = jnp.zeros((F, E), f32)
    for t in range(B):                                     # B small & static -> unrolled
        gates = xproj_ref[t * F:(t + 1) * F, :] + jnp.dot(
            h.astype(bf16), w_hh_ref[...], preferred_element_type=f32)   # [F, 4E] f32
        sig = jax.nn.sigmoid(gates[:, :3 * E])             # i, f, o in one EUP sweep
        i_g = sig[:, 0 * E:1 * E]
        f_g = sig[:, 1 * E:2 * E]
        o_g = sig[:, 2 * E:3 * E]
        g_g = jnp.tanh(gates[:, 3 * E:4 * E])
        c = f_g * c + i_g * g_g
        h = o_g * jnp.tanh(c)
        hid_ref[t * F:(t + 1) * F, :] = h                  # row block t of the stacked hidden states
    # TODO(synk): on v5e/v6e, pltpu.matmul_push_rhs/matmul_acc_lhs could keep w_hh resident in the
    # MXU across timesteps instead of re-staging its RHS every step.

    # -- rnn_fc: hidden.view(B, -1) @ W_fc as F accumulated dots; rows for feature f are gathered
    #    with a strided pl.ds read (no [B,F,E] -> [B,F*E] relayout on the critical tail). --
    cp_fc.wait()
    acc_fc = jnp.dot(hid_ref[pl.ds(0, B, stride=F), :].astype(bf16),
                     w_fc_buf[0:E, :], preferred_element_type=f32)
    for f in range(1, F):
        acc_fc = acc_fc + jnp.dot(hid_ref[pl.ds(f, B, stride=F), :].astype(bf16),
                                  w_fc_buf[f * E:(f + 1) * E, :],
                                  preferred_element_type=f32)
    fc = acc_fc + b_fc_ref[...]                            # [B, D_pad] f32

    # -- CNN encoder (proxy): global average pool + linear as C rank-1 VPU updates (K=4 is too
    #    small to be worth an MXU RHS push). --
    # TODO(synk): the pretrained EfficientNet-B5 backbone is not replicated here; a deterministic
    # pooled-linear stand-in produces the 1000-dim (padded to 1024) enc_out.
    pooled = jnp.mean(img_ref[...], axis=-1)               # [B, C] f32
    acc_e = pooled[:, 0:1] * w_enc_ref[0:1, :]
    for ch in range(1, C):
        acc_e = acc_e + pooled[:, ch:ch + 1] * w_enc_ref[ch:ch + 1, :]
    enc = acc_e + b_enc_ref[...]                           # [B, ENC_pad] f32

    # -- final_layer on concat([enc, fc], dim=1): single stacked weight (one overlapped DMA),
    #    accumulated as two dots. (On v7x a lane-concat [enc | fc] would let the MRB fuse them.) --
    cp_fin.wait()
    out = (jnp.dot(enc.astype(bf16), w_fin_buf[:ENC_pad, :], preferred_element_type=f32)
           + jnp.dot(fc.astype(bf16), w_fin_buf[ENC_pad:, :], preferred_element_type=f32)
           + b_fin_ref[...])                               # [B, CLS_pad] f32
    # nn.Dropout(rate) is the identity in eval mode.
    out_ref[...] = out.astype(out_ref.dtype)


def init_params(key, *, in_channels, max_len, embedding_dim, lstm_dim,
                num_features, num_classes):
    """Deterministic synthetic parameters matching the PyTorch module's shapes, pre-transposed and
    zero-padded to lane-dense layouts for the kernel (no per-gate padding)."""
    C, L, E, D, F = in_channels, max_len, embedding_dim, lstm_dim, num_features
    ENC = 1000
    ENC_pad = _round_up(ENC, 128)           # 1024
    D_pad = _round_up(D, 128)               # 128
    CLS_pad = _round_up(num_classes, 128)   # 128

    ks = jax.random.split(key, 10)
    s = 0.05
    f32 = jnp.float32
    bf16 = jnp.bfloat16

    # Raw parameters with the exact PyTorch shapes.
    w_enc = s * jax.random.normal(ks[0], (ENC, C), f32)       # encoder-proxy linear
    b_enc = s * jax.random.normal(ks[1], (ENC,), f32)
    w_ih = s * jax.random.normal(ks[2], (4 * E, L), f32)      # nn.LSTM(max_len, E)
    w_hh = s * jax.random.normal(ks[3], (4 * E, E), f32)
    b_ih = s * jax.random.normal(ks[4], (4 * E,), f32)
    b_hh = s * jax.random.normal(ks[5], (4 * E,), f32)
    w_fc = s * jax.random.normal(ks[6], (D, F * E), f32)      # nn.Linear(F*E, D)
    b_fc = s * jax.random.normal(ks[7], (D,), f32)
    w_fin = s * jax.random.normal(ks[8], (num_classes, ENC + D), f32)  # nn.Linear(1000+D, Cout)
    b_fin = s * jax.random.normal(ks[9], (num_classes,), f32)

    # Encoder-proxy linear (consumed by VPU rank-1 updates -> keep f32), padded 1000 -> 1024 lanes.
    w_enc_t = jnp.zeros((C, ENC_pad), f32).at[:, :ENC].set(w_enc.T)
    b_enc_p = jnp.zeros((1, ENC_pad), f32).at[:, :ENC].set(b_enc)

    # LSTM weights: gates reordered from PyTorch (i, f, g, o) to (i, f, o, g) so one sigmoid covers
    # the first 3E lanes; no per-gate lane padding (4E = 128 lanes exactly).
    order = (0, 1, 3, 2)   # destination slot -> PyTorch gate block
    b_sum = b_ih + b_hh
    w_ih_t = jnp.zeros((L, 4 * E), f32)
    w_hh_t = jnp.zeros((E, 4 * E), f32)
    b_g = jnp.zeros((1, 4 * E), f32)
    for dst, src in enumerate(order):
        w_ih_t = w_ih_t.at[:, dst * E:(dst + 1) * E].set(w_ih[src * E:(src + 1) * E, :].T)
        w_hh_t = w_hh_t.at[:, dst * E:(dst + 1) * E].set(w_hh[src * E:(src + 1) * E, :].T)
        b_g = b_g.at[:, dst * E:(dst + 1) * E].set(b_sum[src * E:(src + 1) * E])
    w_ih_t = w_ih_t.astype(bf16)
    w_hh_t = w_hh_t.astype(bf16)

    # rnn_fc: [F*E, D_pad]; padded output lanes are zero.
    w_fc_t = jnp.zeros((F * E, D_pad), f32).at[:, :D].set(w_fc.T).astype(bf16)
    b_fc_p = jnp.zeros((1, D_pad), f32).at[:, :D].set(b_fc)

    # final_layer stacked for the [enc | fc] split (rows 0:1024 -> enc, rows 1024:1152 -> fc);
    # classes padded to 128 lanes, padded rows are zero.
    w_fin_t = jnp.zeros((ENC_pad + D_pad, CLS_pad), f32)
    w_fin_t = w_fin_t.at[:ENC, :num_classes].set(w_fin[:, :ENC].T)
    w_fin_t = w_fin_t.at[ENC_pad:ENC_pad + D, :num_classes].set(w_fin[:, ENC:].T)
    w_fin_t = w_fin_t.astype(bf16)
    b_fin_p = jnp.zeros((1, CLS_pad), f32).at[:, :num_classes].set(b_fin)

    return dict(
        w_enc_t=w_enc_t, b_enc=b_enc_p,
        w_ih_t=w_ih_t, w_hh_t=w_hh_t, b_gates=b_g,
        w_fc_t=w_fc_t, b_fc=b_fc_p,
        w_fin_t=w_fin_t, b_fin=b_fin_p,
        num_classes=num_classes,
    )


def disease_classifier(img, seq, params):
    B, C, H, W = img.shape
    _, F, L = seq.shape
    E = params["w_hh_t"].shape[0]
    num_classes = params["num_classes"]
    enc_pad = params["b_enc"].shape[-1]
    d_pad = params["b_fc"].shape[-1]
    cls_pad = params["b_fin"].shape[-1]

    img_flat = img.reshape(B, C, H * W)   # lane-dense pooling axis (H*W = 256)
    seq_flat = seq.reshape(B * F, L)      # single fused x @ W_ih matmul

    vmem = pl.BlockSpec(memory_space=pltpu.MemorySpace.VMEM)
    hbm = pl.BlockSpec(memory_space=pl.ANY)    # manually DMA'd (overlapped) inside the kernel
    args = (
        img_flat, seq_flat,
        params["w_enc_t"], params["b_enc"],
        params["w_ih_t"], params["w_hh_t"], params["b_gates"],
        params["b_fc"], params["b_fin"],
        params["w_fc_t"], params["w_fin_t"],
    )
    out_padded = pl.pallas_call(
        functools.partial(disease_classifier_kernel, B, F, E, C, enc_pad),
        out_shape=jax.ShapeDtypeStruct((B, cls_pad), jnp.float32),
        in_specs=[vmem] * 9 + [hbm, hbm],
        out_specs=vmem,
        scratch_shapes=[
            pltpu.VMEM((F * E, d_pad), jnp.bfloat16),              # rnn_fc weight landing buffer
            pltpu.VMEM((enc_pad + d_pad, cls_pad), jnp.bfloat16),  # final_layer weight landing buffer
            pltpu.SemaphoreType.DMA((2,)),
            pltpu.VMEM((B * F, 4 * E), jnp.float32),               # hoisted x @ W_ih projection
            pltpu.VMEM((B * F, E), jnp.float32),                   # stacked LSTM hidden states
        ],
    )(*args)
    return out_padded[:, :num_classes]


if __name__ == "__main__":
    # Small shapes consistent with the module's forward:
    #   img: [B=2, C=4, H=16, W=16]  (NCHW)
    #   seq: [B=2, F=num_features=16, L=max_len=8]
    max_len, embedding_dim, lstm_dim = 8, 32, 64
    num_features, num_classes, rate = 16, 10, 0.3
    B, C, H, W = 2, 4, 16, 16

    key = jax.random.PRNGKey(0)
    k_img, k_seq, k_par = jax.random.split(key, 3)
    img = jax.random.normal(k_img, (B, C, H, W), jnp.float32)
    seq = jax.random.normal(k_seq, (B, num_features, max_len), jnp.float32)
    params = init_params(
        k_par, in_channels=C, max_len=max_len, embedding_dim=embedding_dim,
        lstm_dim=lstm_dim, num_features=num_features, num_classes=num_classes)

    out = disease_classifier(img, seq, params)
    out = jax.block_until_ready(out)
    assert out.shape == (B, num_classes), out.shape
    print("KERNEL_OK")
</pallas_src>

<mosaic_0001>
module attributes {stable_mosaic.version = 11 : i64} {
  func.func @disease_classifier_kernel(%arg0: memref<2x4x256xf32, #tpu.memory_space<vmem>>, %arg1: memref<32x8xf32, #tpu.memory_space<vmem>>, %arg2: memref<4x1024xf32, #tpu.memory_space<vmem>>, %arg3: memref<1x1024xf32, #tpu.memory_space<vmem>>, %arg4: memref<8x128xbf16, #tpu.memory_space<vmem>>, %arg5: memref<32x128xbf16, #tpu.memory_space<vmem>>, %arg6: memref<1x128xf32, #tpu.memory_space<vmem>>, %arg7: memref<1x128xf32, #tpu.memory_space<vmem>>, %arg8: memref<1x128xf32, #tpu.memory_space<vmem>>, %arg9: memref<512x128xbf16, #tpu.memory_space<any>>, %arg10: memref<1152x128xbf16, #tpu.memory_space<any>>, %arg11: memref<2x128xf32, #tpu.memory_space<vmem>>, %arg12: memref<512x128xbf16, #tpu.memory_space<vmem>>, %arg13: memref<1152x128xbf16, #tpu.memory_space<vmem>>, %arg14: memref<2x!tpu.dma_semaphore, #tpu.memory_space<semaphore_mem>>, %arg15: memref<32x128xf32, #tpu.memory_space<vmem>>, %arg16: memref<32x32xf32, #tpu.memory_space<vmem>>) attributes {dimension_semantics = [], scalar_prefetch = 0 : i64, scratch_operands = 5 : i64, tpu.core_type = #tpu.core_type<tc>} {
    %c0_i32 = arith.constant 0 : i32
    %0 = tpu.memref_slice %arg14[%c0_i32] : memref<2x!tpu.dma_semaphore, #tpu.memory_space<semaphore_mem>> -> memref<1x!tpu.dma_semaphore, #tpu.memory_space<semaphore_mem>>
    %1 = tpu.memref_squeeze %0 : memref<1x!tpu.dma_semaphore, #tpu.memory_space<semaphore_mem>> -> memref<!tpu.dma_semaphore, #tpu.memory_space<semaphore_mem>>
    tpu.enqueue_dma source(%arg9 : memref<512x128xbf16, #tpu.memory_space<any>>) target(%arg12 : memref<512x128xbf16, #tpu.memory_space<vmem>>) target_semaphore(%1 : memref<!tpu.dma_semaphore, #tpu.memory_space<semaphore_mem>>)
    %c1_i32 = arith.constant 1 : i32
    %2 = tpu.memref_slice %arg14[%c1_i32] : memref<2x!tpu.dma_semaphore, #tpu.memory_space<semaphore_mem>> -> memref<1x!tpu.dma_semaphore, #tpu.memory_space<semaphore_mem>>
    %3 = tpu.memref_squeeze %2 : memref<1x!tpu.dma_semaphore, #tpu.memory_space<semaphore_mem>> -> memref<!tpu.dma_semaphore, #tpu.memory_space<semaphore_mem>>
    tpu.enqueue_dma source(%arg10 : memref<1152x128xbf16, #tpu.memory_space<any>>) target(%arg13 : memref<1152x128xbf16, #tpu.memory_space<vmem>>) target_semaphore(%3 : memref<!tpu.dma_semaphore, #tpu.memory_space<semaphore_mem>>)
    %c0 = arith.constant 0 : index
    %c0_0 = arith.constant 0 : index
    %4 = vector.load %arg1[%c0, %c0_0] : memref<32x8xf32, #tpu.memory_space<vmem>>, vector<32x8xf32>
    %5 = arith.truncf %4 : vector<32x8xf32> to vector<32x8xbf16>
    %c0_1 = arith.constant 0 : index
    %c0_2 = arith.constant 0 : index
    %6 = vector.load %arg4[%c0_1, %c0_2] : memref<8x128xbf16, #tpu.memory_space<vmem>>, vector<8x128xbf16>
    %cst = arith.constant dense<0.000000e+00> : vector<32x128xf32>
    %7 = tpu.matmul %5, %6, %cst {dimension_numbers = #tpu.dot_dimension_numbers<[1], [0], [0], [1], [0, 0, 1, 1], [], []>} : vector<32x8xbf16>, vector<8x128xbf16>, vector<32x128xf32> -> vector<32x128xf32>
    %c0_3 = arith.constant 0 : index
    %c0_4 = arith.constant 0 : index
    %8 = vector.load %arg6[%c0_3, %c0_4] : memref<1x128xf32, #tpu.memory_space<vmem>>, vector<1x128xf32>
    %9 = vector.broadcast %8 : vector<1x128xf32> to vector<32x128xf32>
    %10 = arith.addf %7, %9 : vector<32x128xf32>
    %c0_5 = arith.constant 0 : index
    %c0_6 = arith.constant 0 : index
    %11 = vector.load %arg15[%c0_5, %c0_6] : memref<32x128xf32, #tpu.memory_space<vmem>>, vector<32x128xf32>
    tpu.vector_store %arg15[%c0_5, %c0_6], %10 {strides = array<i32>} : memref<32x128xf32, #tpu.memory_space<vmem>>, vector<32x128xf32>,
    %cst_7 = arith.constant 0.000000e+00 : f32
    %12 = vector.broadcast %cst_7 : f32 to vector<16x32xf32>
    %cst_8 = arith.constant 0.000000e+00 : f32
    %13 = vector.broadcast %cst_8 : f32 to vector<16x32xf32>
    %c0_9 = arith.constant 0 : index
    %c0_10 = arith.constant 0 : index
    %14 = vector.load %arg15[%c0_9, %c0_10] : memref<32x128xf32, #tpu.memory_space<vmem>>, vector<16x128xf32>
    %15 = arith.truncf %12 : vector<16x32xf32> to vector<16x32xbf16>
    %c0_11 = arith.constant 0 : index
    %c0_12 = arith.constant 0 : index
    %16 = vector.load %arg5[%c0_11, %c0_12] : memref<32x128xbf16, #tpu.memory_space<vmem>>, vector<32x128xbf16>
    %cst_13 = arith.constant dense<0.000000e+00> : vector<16x128xf32>
    %17 = tpu.matmul %15, %16, %cst_13 {dimension_numbers = #tpu.dot_dimension_numbers<[1], [0], [0], [1], [0, 0, 1, 1], [], []>} : vector<16x32xbf16>, vector<32x128xbf16>, vector<16x128xf32> -> vector<16x128xf32>
    %18 = arith.addf %14, %17 : vector<16x128xf32>
    %19 = vector.extract_strided_slice %18 {offsets = [0, 0], sizes = [16, 96], strides = [1, 1]} : vector<16x128xf32> to vector<16x96xf32>
    %20 = arith.negf %19 : vector<16x96xf32>
    %21 = math.exp %20 : vector<16x96xf32>
    %cst_14 = arith.constant 1.000000e+00 : f32
    %22 = vector.broadcast %cst_14 : f32 to vector<16x96xf32>
    %23 = arith.addf %22, %21 : vector<16x96xf32>
    %24 = arith.divf %22, %23 : vector<16x96xf32>
    %25 = vector.extract_strided_slice %24 {offsets = [0, 0], sizes = [16, 32], strides = [1, 1]} : vector<16x96xf32> to vector<16x32xf32>
    %26 = vector.extract_strided_slice %24 {offsets = [0, 32], sizes = [16, 32], strides = [1, 1]} : vector<16x96xf32> to vector<16x32xf32>
    %27 = vector.extract_strided_slice %24 {offsets = [0, 64], sizes = [16, 32], strides = [1, 1]} : vector<16x96xf32> to vector<16x32xf32>
    %28 = vector.extract_strided_slice %18 {offsets = [0, 96], sizes = [16, 32], strides = [1, 1]} : vector<16x128xf32> to vector<16x32xf32>
    %29 = math.tanh %28 : vector<16x32xf32>
    %30 = arith.mulf %26, %13 : vector<16x32xf32>
    %31 = arith.mulf %25, %29 : vector<16x32xf32>
    %32 = arith.addf %30, %31 : vector<16x32xf32>
    %33 = math.tanh %32 : vector<16x32xf32>
    %34 = arith.mulf %27, %33 : vector<16x32xf32>
    %c0_15 = arith.constant 0 : index
    %c0_16 = arith.constant 0 : index
    %35 = vector.load %arg16[%c0_15, %c0_16] : memref<32x32xf32, #tpu.memory_space<vmem>>, vector<16x32xf32>
    tpu.vector_store %arg16[%c0_15, %c0_16], %34 {strides = array<i32>} : memref<32x32xf32, #tpu.memory_space<vmem>>, vector<16x32xf32>,
    %c16 = arith.constant 16 : index
    %c0_17 = arith.constant 0 : index
    %36 = vector.load %arg15[%c16, %c0_17] : memref<32x128xf32, #tpu.memory_space<vmem>>, vector<16x128xf32>
    %37 = arith.truncf %34 : vector<16x32xf32> to vector<16x32xbf16>
    %c0_18 = arith.constant 0 : index
    %c0_19 = arith.constant 0 : index
    %38 = vector.load %arg5[%c0_18, %c0_19] : memref<32x128xbf16, #tpu.memory_space<vmem>>, vector<32x128xbf16>
    %cst_20 = arith.constant dense<0.000000e+00> : vector<16x128xf32>
    %39 = tpu.matmul %37, %38, %cst_20 {dimension_numbers = #tpu.dot_dimension_numbers<[1], [0], [0], [1], [0, 0, 1, 1], [], []>} : vector<16x32xbf16>, vector<32x128xbf16>, vector<16x128xf32> -> vector<16x128xf32>
    %40 = arith.addf %36, %39 : vector<16x128xf32>
    %41 = vector.extract_strided_slice %40 {offsets = [0, 0], sizes = [16, 96], strides = [1, 1]} : vector<16x128xf32> to vector<16x96xf32>
    %42 = arith.negf %41 : vector<16x96xf32>
    %43 = math.exp %42 : vector<16x96xf32>
    %cst_21 = arith.constant 1.000000e+00 : f32
    %44 = vector.broadcast %cst_21 : f32 to vector<16x96xf32>
    %45 = arith.addf %44, %43 : vector<16x96xf32>
    %46 = arith.divf %44, %45 : vector<16x96xf32>
    %47 = vector.extract_strided_slice %46 {offsets = [0, 0], sizes = [16, 32], strides = [1, 1]} : vector<16x96xf32> to vector<16x32xf32>
    %48 = vector.extract_strided_slice %46 {offsets = [0, 32], sizes = [16, 32], strides = [1, 1]} : vector<16x96xf32> to vector<16x32xf32>
    %49 = vector.extract_strided_slice %46 {offsets = [0, 64], sizes = [16, 32], strides = [1, 1]} : vector<16x96xf32> to vector<16x32xf32>
    %50 = vector.extract_strided_slice %40 {offsets = [0, 96], sizes = [16, 32], strides = [1, 1]} : vector<16x128xf32> to vector<16x32xf32>
    %51 = math.tanh %50 : vector<16x32xf32>
    %52 = arith.mulf %48, %32 : vector<16x32xf32>
    %53 = arith.mulf %47, %51 : vector<16x32xf32>
    %54 = arith.addf %52, %53 : vector<16x32xf32>
    %55 = math.tanh %54 : vector<16x32xf32>
    %56 = arith.mulf %49, %55 : vector<16x32xf32>
    %c16_22 = arith.constant 16 : index
    %c0_23 = arith.constant 0 : index
    %57 = vector.load %arg16[%c16_22, %c0_23] : memref<32x32xf32, #tpu.memory_space<vmem>>, vector<16x32xf32>
    tpu.vector_store %arg16[%c16_22, %c0_23], %56 {strides = array<i32>} : memref<32x32xf32, #tpu.memory_space<vmem>>, vector<16x32xf32>,
    %c0_i32_24 = arith.constant 0 : i32
    %58 = tpu.memref_slice %arg14[%c0_i32_24] : memref<2x!tpu.dma_semaphore, #tpu.memory_space<semaphore_mem>> -> memref<1x!tpu.dma_semaphore, #tpu.memory_space<semaphore_mem>>
    %59 = tpu.memref_squeeze %58 : memref<1x!tpu.dma_semaphore, #tpu.memory_space<semaphore_mem>> -> memref<!tpu.dma_semaphore, #tpu.memory_space<semaphore_mem>>
    tpu.wait_dma2 semaphore(%59 : memref<!tpu.dma_semaphore, #tpu.memory_space<semaphore_mem>>) src(%arg9 : memref<512x128xbf16, #tpu.memory_space<any>>) dst(%arg12 : memref<512x128xbf16, #tpu.memory_space<vmem>>)
    %c0_25 = arith.constant 0 : index
    %c0_26 = arith.constant 0 : index
    %60 = tpu.strided_load %arg16[%c0_25, %c0_26] {strides = array<i32: 16, 1>} : memref<32x32xf32, #tpu.memory_space<vmem>>, vector<2x32xf32>
    %61 = arith.truncf %60 : vector<2x32xf32> to vector<2x32xbf16>
    %c0_27 = arith.constant 0 : index
    %c0_28 = arith.constant 0 : index
    %62 = vector.load %arg12[%c0_27, %c0_28] : memref<512x128xbf16, #tpu.memory_space<vmem>>, vector<32x128xbf16>
    %cst_29 = arith.constant dense<0.000000e+00> : vector<2x128xf32>
    %63 = tpu.matmul %61, %62, %cst_29 {dimension_numbers = #tpu.dot_dimension_numbers<[1], [0], [0], [1], [0, 0, 1, 1], [], []>} : vector<2x32xbf16>, vector<32x128xbf16>, vector<2x128xf32> -> vector<2x128xf32>
    %c1 = arith.constant 1 : index
    %c0_30 = arith.constant 0 : index
    %64 = tpu.strided_load %arg16[%c1, %c0_30] {strides = array<i32: 16, 1>} : memref<32x32xf32, #tpu.memory_space<vmem>>, vector<2x32xf32>
    %65 = arith.truncf %64 : vector<2x32xf32> to vector<2x32xbf16>
    %c32 = arith.constant 32 : index
    %c0_31 = arith.constant 0 : index
    %66 = vector.load %arg12[%c32, %c0_31] : memref<512x128xbf16, #tpu.memory_space<vmem>>, vector<32x128xbf16>
    %cst_32 = arith.constant dense<0.000000e+00> : vector<2x128xf32>
    %67 = tpu.matmul %65, %66, %cst_32 {dimension_numbers = #tpu.dot_dimension_numbers<[1], [0], [0], [1], [0, 0, 1, 1], [], []>} : vector<2x32xbf16>, vector<32x128xbf16>, vector<2x128xf32> -> vector<2x128xf32>
    %68 = arith.addf %63, %67 : vector<2x128xf32>
    %c2 = arith.constant 2 : index
    %c0_33 = arith.constant 0 : index
    %69 = tpu.strided_load %arg16[%c2, %c0_33] {strides = array<i32: 16, 1>} : memref<32x32xf32, #tpu.memory_space<vmem>>, vector<2x32xf32>
    %70 = arith.truncf %69 : vector<2x32xf32> to vector<2x32xbf16>
    %c64 = arith.constant 64 : index
    %c0_34 = arith.constant 0 : index
    %71 = vector.load %arg12[%c64, %c0_34] : memref<512x128xbf16, #tpu.memory_space<vmem>>, vector<32x128xbf16>
    %cst_35 = arith.constant dense<0.000000e+00> : vector<2x128xf32>
    %72 = tpu.matmul %70, %71, %cst_35 {dimension_numbers = #tpu.dot_dimension_numbers<[1], [0], [0], [1], [0, 0, 1, 1], [], []>} : vector<2x32xbf16>, vector<32x128xbf16>, vector<2x128xf32> -> vector<2x128xf32>
    %73 = arith.addf %68, %72 : vector<2x128xf32>
    %c3 = arith.constant 3 : index
    %c0_36 = arith.constant 0 : index
    %74 = tpu.strided_load %arg16[%c3, %c0_36] {strides = array<i32: 16, 1>} : memref<32x32xf32, #tpu.memory_space<vmem>>, vector<2x32xf32>
    %75 = arith.truncf %74 : vector<2x32xf32> to vector<2x32xbf16>
    %c96 = arith.constant 96 : index
    %c0_37 = arith.constant 0 : index
    %76 = vector.load %arg12[%c96, %c0_37] : memref<512x128xbf16, #tpu.memory_space<vmem>>, vector<32x128xbf16>
    %cst_38 = arith.constant dense<0.000000e+00> : vector<2x128xf32>
    %77 = tpu.matmul %75, %76, %cst_38 {dimension_numbers = #tpu.dot_dimension_numbers<[1], [0], [0], [1], [0, 0, 1, 1], [], []>} : vector<2x32xbf16>, vector<32x128xbf16>, vector<2x128xf32> -> vector<2x128xf32>
    %78 = arith.addf %73, %77 : vector<2x128xf32>
    %c4 = arith.constant 4 : index
    %c0_39 = arith.constant 0 : index
    %79 = tpu.strided_load %arg16[%c4, %c0_39] {strides = array<i32: 16, 1>} : memref<32x32xf32, #tpu.memory_space<vmem>>, vector<2x32xf32>
    %80 = arith.truncf %79 : vector<2x32xf32> to vector<2x32xbf16>
    %c128 = arith.constant 128 : index
    %c0_40 = arith.constant 0 : index
    %81 = vector.load %arg12[%c128, %c0_40] : memref<512x128xbf16, #tpu.memory_space<vmem>>, vector<32x128xbf16>
    %cst_41 = arith.constant dense<0.000000e+00> : vector<2x128xf32>
    %82 = tpu.matmul %80, %81, %cst_41 {dimension_numbers = #tpu.dot_dimension_numbers<[1], [0], [0], [1], [0, 0, 1, 1], [], []>} : vector<2x32xbf16>, vector<32x128xbf16>, vector<2x128xf32> -> vector<2x128xf32>
    %83 = arith.addf %78, %82 : vector<2x128xf32>
    %c5 = arith.constant 5 : index
    %c0_42 = arith.constant 0 : index
    %84 = tpu.strided_load %arg16[%c5, %c0_42] {strides = array<i32: 16, 1>} : memref<32x32xf32, #tpu.memory_space<vmem>>, vector<2x32xf32>
    %85 = arith.truncf %84 : vector<2x32xf32> to vector<2x32xbf16>
    %c160 = arith.constant 160 : index
    %c0_43 = arith.constant 0 : index
    %86 = vector.load %arg12[%c160, %c0_43] : memref<512x128xbf16, #tpu.memory_space<vmem>>, vector<32x128xbf16>
    %cst_44 = arith.constant dense<0.000000e+00> : vector<2x128xf32>
    %87 = tpu.matmul %85, %86, %cst_44 {dimension_numbers = #tpu.dot_dimension_numbers<[1], [0], [0], [1], [0, 0, 1, 1], [], []>} : vector<2x32xbf16>, vector<32x128xbf16>, vector<2x128xf32> -> vector<2x128xf32>
    %88 = arith.addf %83, %87 : vector<2x128xf32>
    %c6 = arith.constant 6 : index
    %c0_45 = arith.constant 0 : index
    %89 = tpu.strided_load %arg16[%c6, %c0_45] {strides = array<i32: 16, 1>} : memref<32x32xf32, #tpu.memory_space<vmem>>, vector<2x32xf32>
    %90 = arith.truncf %89 : vector<2x32xf32> to vector<2x32xbf16>
    %c192 = arith.constant 192 : index
    %c0_46 = arith.constant 0 : index
    %91 = vector.load %arg12[%c192, %c0_46] : memref<512x128xbf16, #tpu.memory_space<vmem>>, vector<32x128xbf16>
    %cst_47 = arith.constant dense<0.000000e+00> : vector<2x128xf32>
    %92 = tpu.matmul %90, %91, %cst_47 {dimension_numbers = #tpu.dot_dimension_numbers<[1], [0], [0], [1], [0, 0, 1, 1], [], []>} : vector<2x32xbf16>, vector<32x128xbf16>, vector<2x128xf32> -> vector<2x128xf32>
    %93 = arith.addf %88, %92 : vector<2x128xf32>
    %c7 = arith.constant 7 : index
    %c0_48 = arith.constant 0 : index
    %94 = tpu.strided_load %arg16[%c7, %c0_48] {strides = array<i32: 16, 1>} : memref<32x32xf32, #tpu.memory_space<vmem>>, vector<2x32xf32>
    %95 = arith.truncf %94 : vector<2x32xf32> to vector<2x32xbf16>
    %c224 = arith.constant 224 : index
    %c0_49 = arith.constant 0 : index
    %96 = vector.load %arg12[%c224, %c0_49] : memref<512x128xbf16, #tpu.memory_space<vmem>>, vector<32x128xbf16>
    %cst_50 = arith.constant dense<0.000000e+00> : vector<2x128xf32>
    %97 = tpu.matmul %95, %96, %cst_50 {dimension_numbers = #tpu.dot_dimension_numbers<[1], [0], [0], [1], [0, 0, 1, 1], [], []>} : vector<2x32xbf16>, vector<32x128xbf16>, vector<2x128xf32> -> vector<2x128xf32>
    %98 = arith.addf %93, %97 : vector<2x128xf32>
    %c8 = arith.constant 8 : index
    %c0_51 = arith.constant 0 : index
    %99 = tpu.strided_load %arg16[%c8, %c0_51] {strides = array<i32: 16, 1>} : memref<32x32xf32, #tpu.memory_space<vmem>>, vector<2x32xf32>
    %100 = arith.truncf %99 : vector<2x32xf32> to vector<2x32xbf16>
    %c256 = arith.constant 256 : index
    %c0_52 = arith.constant 0 : index
    %101 = vector.load %arg12[%c256, %c0_52] : memref<512x128xbf16, #tpu.memory_space<vmem>>, vector<32x128xbf16>
    %cst_53 = arith.constant dense<0.000000e+00> : vector<2x128xf32>
    %102 = tpu.matmul %100, %101, %cst_53 {dimension_numbers = #tpu.dot_dimension_numbers<[1], [0], [0], [1], [0, 0, 1, 1], [], []>} : vector<2x32xbf16>, vector<32x128xbf16>, vector<2x128xf32> -> vector<2x128xf32>
    %103 = arith.addf %98, %102 : vector<2x128xf32>
    %c9 = arith.constant 9 : index
    %c0_54 = arith.constant 0 : index
    %104 = tpu.strided_load %arg16[%c9, %c0_54] {strides = array<i32: 16, 1>} : memref<32x32xf32, #tpu.memory_space<vmem>>, vector<2x32xf32>
    %105 = arith.truncf %104 : vector<2x32xf32> to vector<2x32xbf16>
    %c288 = arith.constant 288 : index
    %c0_55 = arith.constant 0 : index
    %106 = vector.load %arg12[%c288, %c0_55] : memref<512x128xbf16, #tpu.memory_space<vmem>>, vector<32x128xbf16>
    %cst_56 = arith.constant dense<0.000000e+00> : vector<2x128xf32>
    %107 = tpu.matmul %105, %106, %cst_56 {dimension_numbers = #tpu.dot_dimension_numbers<[1], [0], [0], [1], [0, 0, 1, 1], [], []>} : vector<2x32xbf16>, vector<32x128xbf16>, vector<2x128xf32> -> vector<2x128xf32>
    %108 = arith.addf %103, %107 : vector<2x128xf32>
    %c10 = arith.constant 10 : index
    %c0_57 = arith.constant 0 : index
    %109 = tpu.strided_load %arg16[%c10, %c0_57] {strides = array<i32: 16, 1>} : memref<32x32xf32, #tpu.memory_space<vmem>>, vector<2x32xf32>
    %110 = arith.truncf %109 : vector<2x32xf32> to vector<2x32xbf16>
    %c320 = arith.constant 320 : index
    %c0_58 = arith.constant 0 : index
    %111 = vector.load %arg12[%c320, %c0_58] : memref<512x128xbf16, #tpu.memory_space<vmem>>, vector<32x128xbf16>
    %cst_59 = arith.constant dense<0.000000e+00> : vector<2x128xf32>
    %112 = tpu.matmul %110, %111, %cst_59 {dimension_numbers = #tpu.dot_dimension_numbers<[1], [0], [0], [1], [0, 0, 1, 1], [], []>} : vector<2x32xbf16>, vector<32x128xbf16>, vector<2x128xf32> -> vector<2x128xf32>
    %113 = arith.addf %108, %112 : vector<2x128xf32>
    %c11 = arith.constant 11 : index
    %c0_60 = arith.constant 0 : index
    %114 = tpu.strided_load %arg16[%c11, %c0_60] {strides = array<i32: 16, 1>} : memref<32x32xf32, #tpu.memory_space<vmem>>, vector<2x32xf32>
    %115 = arith.truncf %114 : vector<2x32xf32> to vector<2x32xbf16>
    %c352 = arith.constant 352 : index
    %c0_61 = arith.constant 0 : index
    %116 = vector.load %arg12[%c352, %c0_61] : memref<512x128xbf16, #tpu.memory_space<vmem>>, vector<32x128xbf16>
    %cst_62 = arith.constant dense<0.000000e+00> : vector<2x128xf32>
    %117 = tpu.matmul %115, %116, %cst_62 {dimension_numbers = #tpu.dot_dimension_numbers<[1], [0], [0], [1], [0, 0, 1, 1], [], []>} : vector<2x32xbf16>, vector<32x128xbf16>, vector<2x128xf32> -> vector<2x128xf32>
    %118 = arith.addf %113, %117 : vector<2x128xf32>
    %c12 = arith.constant 12 : index
    %c0_63 = arith.constant 0 : index
    %119 = tpu.strided_load %arg16[%c12, %c0_63] {strides = array<i32: 16, 1>} : memref<32x32xf32, #tpu.memory_space<vmem>>, vector<2x32xf32>
    %120 = arith.truncf %119 : vector<2x32xf32> to vector<2x32xbf16>
    %c384 = arith.constant 384 : index
    %c0_64 = arith.constant 0 : index
    %121 = vector.load %arg12[%c384, %c0_64] : memref<512x128xbf16, #tpu.memory_space<vmem>>, vector<32x128xbf16>
    %cst_65 = arith.constant dense<0.000000e+00> : vector<2x128xf32>
    %122 = tpu.matmul %120, %121, %cst_65 {dimension_numbers = #tpu.dot_dimension_numbers<[1], [0], [0], [1], [0, 0, 1, 1], [], []>} : vector<2x32xbf16>, vector<32x128xbf16>, vector<2x128xf32> -> vector<2x128xf32>
    %123 = arith.addf %118, %122 : vector<2x128xf32>
    %c13 = arith.constant 13 : index
    %c0_66 = arith.constant 0 : index
    %124 = tpu.strided_load %arg16[%c13, %c0_66] {strides = array<i32: 16, 1>} : memref<32x32xf32, #tpu.memory_space<vmem>>, vector<2x32xf32>
    %125 = arith.truncf %124 : vector<2x32xf32> to vector<2x32xbf16>
    %c416 = arith.constant 416 : index
    %c0_67 = arith.constant 0 : index
    %126 = vector.load %arg12[%c416, %c0_67] : memref<512x128xbf16, #tpu.memory_space<vmem>>, vector<32x128xbf16>
    %cst_68 = arith.constant dense<0.000000e+00> : vector<2x128xf32>
    %127 = tpu.matmul %125, %126, %cst_68 {dimension_numbers = #tpu.dot_dimension_numbers<[1], [0], [0], [1], [0, 0, 1, 1], [], []>} : vector<2x32xbf16>, vector<32x128xbf16>, vector<2x128xf32> -> vector<2x128xf32>
    %128 = arith.addf %123, %127 : vector<2x128xf32>
    %c14 = arith.constant 14 : index
    %c0_69 = arith.constant 0 : index
    %129 = tpu.strided_load %arg16[%c14, %c0_69] {strides = array<i32: 16, 1>} : memref<32x32xf32, #tpu.memory_space<vmem>>, vector<2x32xf32>
    %130 = arith.truncf %129 : vector<2x32xf32> to vector<2x32xbf16>
    %c448 = arith.constant 448 : index
    %c0_70 = arith.constant 0 : index
    %131 = vector.load %arg12[%c448, %c0_70] : memref<512x128xbf16, #tpu.memory_space<vmem>>, vector<32x128xbf16>
    %cst_71 = arith.constant dense<0.000000e+00> : vector<2x128xf32>
    %132 = tpu.matmul %130, %131, %cst_71 {dimension_numbers = #tpu.dot_dimension_numbers<[1], [0], [0], [1], [0, 0, 1, 1], [], []>} : vector<2x32xbf16>, vector<32x128xbf16>, vector<2x128xf32> -> vector<2x128xf32>
    %133 = arith.addf %128, %132 : vector<2x128xf32>
    %c15 = arith.constant 15 : index
    %c0_72 = arith.constant 0 : index
    %134 = tpu.strided_load %arg16[%c15, %c0_72] {strides = array<i32: 16, 1>} : memref<32x32xf32, #tpu.memory_space<vmem>>, vector<2x32xf32>
    %135 = arith.truncf %134 : vector<2x32xf32> to vector<2x32xbf16>
    %c480 = arith.constant 480 : index
    %c0_73 = arith.constant 0 : index
    %136 = vector.load %arg12[%c480, %c0_73] : memref<512x128xbf16, #tpu.memory_space<vmem>>, vector<32x128xbf16>
    %cst_74 = arith.constant dense<0.000000e+00> : vector<2x128xf32>
    %137 = tpu.matmul %135, %136, %cst_74 {dimension_numbers = #tpu.dot_dimension_numbers<[1], [0], [0], [1], [0, 0, 1, 1], [], []>} : vector<2x32xbf16>, vector<32x128xbf16>, vector<2x128xf32> -> vector<2x128xf32>
    %138 = arith.addf %133, %137 : vector<2x128xf32>
    %c0_75 = arith.constant 0 : index
    %c0_76 = arith.constant 0 : index
    %139 = vector.load %arg7[%c0_75, %c0_76] : memref<1x128xf32, #tpu.memory_space<vmem>>, vector<1x128xf32>
    %140 = vector.broadcast %139 : vector<1x128xf32> to vector<2x128xf32>
    %141 = arith.addf %138, %140 : vector<2x128xf32>
    %c0_77 = arith.constant 0 : index
    %c0_78 = arith.constant 0 : index
    %c0_79 = arith.constant 0 : index
    %142 = vector.load %arg0[%c0_77, %c0_78, %c0_79] : memref<2x4x256xf32, #tpu.memory_space<vmem>>, vector<2x4x256xf32>
    %cst_80 = arith.constant dense<0.000000e+00> : vector<2x4xf32>
    %143 = vector.multi_reduction <add>, %142, %cst_80 [2] : vector<2x4x256xf32> to vector<2x4xf32>
    %cst_81 = arith.constant 2.560000e+02 : f32
    %144 = vector.broadcast %cst_81 : f32 to vector<2x4xf32>
    %145 = arith.divf %143, %144 : vector<2x4xf32>
    %146 = vector.extract_strided_slice %145 {offsets = [0, 0], sizes = [2, 1], strides = [1, 1]} : vector<2x4xf32> to vector<2x1xf32>
    %c0_82 = arith.constant 0 : index
    %c0_83 = arith.constant 0 : index
    %147 = vector.load %arg2[%c0_82, %c0_83] : memref<4x1024xf32, #tpu.memory_space<vmem>>, vector<1x1024xf32>
    %148 = vector.broadcast %146 : vector<2x1xf32> to vector<2x1024xf32>
    %149 = vector.broadcast %147 : vector<1x1024xf32> to vector<2x1024xf32>
    %150 = arith.mulf %148, %149 : vector<2x1024xf32>
    %151 = vector.extract_strided_slice %145 {offsets = [0, 1], sizes = [2, 1], strides = [1, 1]} : vector<2x4xf32> to vector<2x1xf32>
    %c1_84 = arith.constant 1 : index
    %c0_85 = arith.constant 0 : index
    %152 = vector.load %arg2[%c1_84, %c0_85] : memref<4x1024xf32, #tpu.memory_space<vmem>>, vector<1x1024xf32>
    %153 = vector.broadcast %151 : vector<2x1xf32> to vector<2x1024xf32>
    %154 = vector.broadcast %152 : vector<1x1024xf32> to vector<2x1024xf32>
    %155 = arith.mulf %153, %154 : vector<2x1024xf32>
    %156 = arith.addf %150, %155 : vector<2x1024xf32>
    %157 = vector.extract_strided_slice %145 {offsets = [0, 2], sizes = [2, 1], strides = [1, 1]} : vector<2x4xf32> to vector<2x1xf32>
    %c2_86 = arith.constant 2 : index
    %c0_87 = arith.constant 0 : index
    %158 = vector.load %arg2[%c2_86, %c0_87] : memref<4x1024xf32, #tpu.memory_space<vmem>>, vector<1x1024xf32>
    %159 = vector.broadcast %157 : vector<2x1xf32> to vector<2x1024xf32>
    %160 = vector.broadcast %158 : vector<1x1024xf32> to vector<2x1024xf32>
    %161 = arith.mulf %159, %160 : vector<2x1024xf32>
    %162 = arith.addf %156, %161 : vector<2x1024xf32>
    %163 = vector.extract_strided_slice %145 {offsets = [0, 3], sizes = [2, 1], strides = [1, 1]} : vector<2x4xf32> to vector<2x1xf32>
    %c3_88 = arith.constant 3 : index
    %c0_89 = arith.constant 0 : index
    %164 = vector.load %arg2[%c3_88, %c0_89] : memref<4x1024xf32, #tpu.memory_space<vmem>>, vector<1x1024xf32>
    %165 = vector.broadcast %163 : vector<2x1xf32> to vector<2x1024xf32>
    %166 = vector.broadcast %164 : vector<1x1024xf32> to vector<2x1024xf32>
    %167 = arith.mulf %165, %166 : vector<2x1024xf32>
    %168 = arith.addf %162, %167 : vector<2x1024xf32>
    %c0_90 = arith.constant 0 : index
    %c0_91 = arith.constant 0 : index
    %169 = vector.load %arg3[%c0_90, %c0_91] : memref<1x1024xf32, #tpu.memory_space<vmem>>, vector<1x1024xf32>
    %170 = vector.broadcast %169 : vector<1x1024xf32> to vector<2x1024xf32>
    %171 = arith.addf %168, %170 : vector<2x1024xf32>
    %c1_i32_92 = arith.constant 1 : i32
    %172 = tpu.memref_slice %arg14[%c1_i32_92] : memref<2x!tpu.dma_semaphore, #tpu.memory_space<semaphore_mem>> -> memref<1x!tpu.dma_semaphore, #tpu.memory_space<semaphore_mem>>
    %173 = tpu.memref_squeeze %172 : memref<1x!tpu.dma_semaphore, #tpu.memory_space<semaphore_mem>> -> memref<!tpu.dma_semaphore, #tpu.memory_space<semaphore_mem>>
    tpu.wait_dma2 semaphore(%173 : memref<!tpu.dma_semaphore, #tpu.memory_space<semaphore_mem>>) src(%arg10 : memref<1152x128xbf16, #tpu.memory_space<any>>) dst(%arg13 : memref<1152x128xbf16, #tpu.memory_space<vmem>>)
    %174 = arith.truncf %171 : vector<2x1024xf32> to vector<2x1024xbf16>
    %c0_93 = arith.constant 0 : index
    %c0_94 = arith.constant 0 : index
    %175 = vector.load %arg13[%c0_93, %c0_94] : memref<1152x128xbf16, #tpu.memory_space<vmem>>, vector<1024x128xbf16>
    %cst_95 = arith.constant dense<0.000000e+00> : vector<2x128xf32>
    %176 = tpu.matmul %174, %175, %cst_95 {dimension_numbers = #tpu.dot_dimension_numbers<[1], [0], [0], [1], [0, 0, 1, 1], [], []>} : vector<2x1024xbf16>, vector<1024x128xbf16>, vector<2x128xf32> -> vector<2x128xf32>
    %177 = arith.truncf %141 : vector<2x128xf32> to vector<2x128xbf16>
    %c1024 = arith.constant 1024 : index
    %c0_96 = arith.constant 0 : index
    %178 = vector.load %arg13[%c1024, %c0_96] : memref<1152x128xbf16, #tpu.memory_space<vmem>>, vector<128x128xbf16>
    %cst_97 = arith.constant dense<0.000000e+00> : vector<2x128xf32>
    %179 = tpu.matmul %177, %178, %cst_97 {dimension_numbers = #tpu.dot_dimension_numbers<[1], [0], [0], [1], [0, 0, 1, 1], [], []>} : vector<2x128xbf16>, vector<128x128xbf16>, vector<2x128xf32> -> vector<2x128xf32>
    %180 = arith.addf %176, %179 : vector<2x128xf32>
    %c0_98 = arith.constant 0 : index
    %c0_99 = arith.constant 0 : index
    %181 = vector.load %arg8[%c0_98, %c0_99] : memref<1x128xf32, #tpu.memory_space<vmem>>, vector<1x128xf32>
    %182 = vector.broadcast %181 : vector<1x128xf32> to vector<2x128xf32>
    %183 = arith.addf %180, %182 : vector<2x128xf32>
    %c0_100 = arith.constant 0 : index
    %c0_101 = arith.constant 0 : index
    %184 = vector.load %arg11[%c0_100, %c0_101] : memref<2x128xf32, #tpu.memory_space<vmem>>, vector<2x128xf32>
    tpu.vector_store %arg11[%c0_100, %c0_101], %183 {strides = array<i32>} : memref<2x128xf32, #tpu.memory_space<vmem>>, vector<2x128xf32>,
    return
  }
}

</mosaic_0001>

<llo_original>
// kernel: tpu_custom_call.1
$region0: #{tpu_custom_call.1}
  #allocation0 [shape = 'u32[]', space=smem, size = 0x4, offset = 0x4, fixed_abs, tag = 'smem constant byte address 0x4 - core index']
  #allocation1 [shape = 'u32[144,128]{1,0:T(1,128)}', space=vmem, size = 0x12000, scoped, tag = 'internal scratch']
  #allocation2 [shape = 'bf16[512,128]{1,0:T(8,128)(2,1)}', space=vmem, size = 0x20000, scoped, tag = 'scratch operand']
  #allocation3 [shape = 'bf16[1152,128]{1,0:T(8,128)(2,1)}', space=vmem, size = 0x48000, scoped, tag = 'scratch operand']
  #allocation4 [shape = 's32[2]{0}', space=sflag, size = 0x8, scoped, tag = 'scratch operand']
  #allocation5 [shape = 'f32[32,128]{1,0:T(8,128)}', space=vmem, size = 0x4000, scoped, tag = 'scratch operand']
  #allocation6 [shape = 'f32[32,32]{1,0:T(8,128)}', space=vmem, size = 0x4000, scoped, tag = 'scratch operand']
  #allocation14 [shape = 's32[]', space=sflag, size = 0x4, offset = 0, fixed_abs, tag = 'sflag constant byte address 0x0 - dummy sync flag']
  #allocation15 [shape = 's32[]', space=sflag, size = 0x4, offset = 0, fixed_abs, tag = 'sflag constant byte address 0x0 - dummy sync flag']
  #allocation16 [shape = 'u32[]', space=smem, size = 0x4, offset = 0x44, fixed_abs, tag = 'smem constant byte address 0x44 - assertion arg 0']
  #allocation17 [shape = 'u32[]', space=smem, size = 0x4, offset = 0x48, fixed_abs, tag = 'smem constant byte address 0x48 - assertion arg 1']
  #allocation18 [shape = 's32[]', space=sflag, size = 0x4, offset = 0, fixed_abs, tag = 'sflag constant byte address 0x0 - dummy sync flag']
  #allocation19 [shape = 's32[]', space=sflag, size = 0x4, offset = 0, fixed_abs, tag = 'sflag constant byte address 0x0 - dummy sync flag']
  %s0 = inlined_call_operand.hbm [shape: f32[2,4,256], index: 0, kind: input, shape index: {}]
  %s1 = inlined_call_operand.vmem [shape: f32[32,8], index: 1, kind: input, shape index: {}]
  %s2 = inlined_call_operand.vmem [shape: f32[4,1024], index: 2, kind: input, shape index: {}]
  %s3 = inlined_call_operand.hbm [shape: f32[1,1024], index: 3, kind: input, shape index: {}]
  %s4 = inlined_call_operand.hbm [shape: bf16[8,128], index: 4, kind: input, shape index: {}]
  %s5 = inlined_call_operand.vmem [shape: bf16[32,128], index: 5, kind: input, shape index: {}]
  %s6 = inlined_call_operand.vmem [shape: f32[1,128], index: 6, kind: input, shape index: {}]
  %s7 = inlined_call_operand.vmem [shape: f32[1,128], index: 7, kind: input, shape index: {}]
  %s8 = inlined_call_operand.vmem [shape: f32[1,128], index: 8, kind: input, shape index: {}]
  %s9 = inlined_call_operand.hbm [shape: bf16[512,128], index: 9, kind: input, shape index: {}]
  %s10 = inlined_call_operand.hbm [shape: bf16[1152,128], index: 10, kind: input, shape index: {}]
  %s11 = inlined_call_operand.hbm [shape: f32[2,128], index: 11, kind: output, shape index: {}]
  %s12 = sld [smem:[#allocation0]]
  $region66: #{tpu_custom_call.1} parent=0
    _
  %s14 = ssub.s32 1, %s12
  %s15 = scalar_select 0, %s14, %s12
  $region1: #{tpu_custom_call.1} parent=0
    #allocation7 [shape = 'u8[8192]{0}', space=vmem, size = 0x2000, scoped, tag = 'input window, operand 0, single buffered']
    #allocation8 [shape = 's32[1]{0}', space=sflag, size = 0x4, scoped, tag = 'scoped memory for tpu_custom_call.1']
    #allocation9 [shape = 's32[1]{0}', space=sflag, size = 0x4, scoped, tag = 'scoped memory for tpu_custom_call.1']
    #allocation10 [shape = 'u8[4096]{0}', space=vmem, size = 0x1000, scoped, tag = 'input window, operand 3, single buffered']
    #allocation11 [shape = 's32[1]{0}', space=sflag, size = 0x4, scoped, tag = 'scoped memory for tpu_custom_call.1']
    #allocation12 [shape = 'u8[2048]{0}', space=vmem, size = 0x800, scoped, tag = 'input window, operand 4, single buffered']
    #allocation13 [shape = 'u8[1024]{0}', space=vmem, size = 0x400, scoped, tag = 'output window, operand 0, single buffered']
    %16 = vsyncpa [#allocation8], 0
    %17 = vsyncpa [#allocation11], 0
    %18 = vsyncpa [#allocation9], 0
    // Predicated region
    $region2: #{tpu_custom_call.1} parent=1 // pred_check
      _
    $region3: #{tpu_custom_call.1} parent=1 // pred_check_branch
      %20 = sbr.rel (0) target = $region5
    $region4: #{tpu_custom_call.1} parent=1 // pred_region
      %s22 = ssub.s32 256, 256
      %23 = vsyncadd [#allocation8], %s22
      %s24 = sshll.u32 [#allocation7], 4
      %s25 = int_to_ptr.vmem [resolvable:$true] %s24
      %30 = dma.hbm_to_vmem [thread:$0]  %s0, 256, %s25, [#allocation8], 128, 128, 8
    $region5: #{tpu_custom_call.1} parent=1 // pred_fallthru
      _
    // Predicated region
    $region6: #{tpu_custom_call.1} parent=1 // pred_check
      _
    $region7: #{tpu_custom_call.1} parent=1 // pred_check_branch
      %32 = sbr.rel (0) target = $region9
    $region8: #{tpu_custom_call.1} parent=1 // pred_region
      _
    $region9: #{tpu_custom_call.1} parent=1 // pred_fallthru
      _
    // Predicated region
    $region10: #{tpu_custom_call.1} parent=1 // pred_check
      _
    $region11: #{tpu_custom_call.1} parent=1 // pred_check_branch
      %34 = sbr.rel (0) target = $region13
    $region12: #{tpu_custom_call.1} parent=1 // pred_region
      _
    $region13: #{tpu_custom_call.1} parent=1 // pred_fallthru
      _
    // Predicated region
    $region14: #{tpu_custom_call.1} parent=1 // pred_check
      _
    $region15: #{tpu_custom_call.1} parent=1 // pred_check_branch
      %36 = sbr.rel (0) target = $region17
    $region16: #{tpu_custom_call.1} parent=1 // pred_region
      %s38 = ssub.s32 128, 128
      %39 = vsyncadd [#allocation11], %s38
      %s41 = sshll.u32 [#allocation10], 4
      %s42 = int_to_ptr.vmem [resolvable:$true] %s41
      %44 = dma.hbm_to_vmem [thread:$0]  %s3, 128, %s42, [#allocation11]
    $region17: #{tpu_custom_call.1} parent=1 // pred_fallthru
      _
    // Predicated region
    $region18: #{tpu_custom_call.1} parent=1 // pred_check
      _
    $region19: #{tpu_custom_call.1} parent=1 // pred_check_branch
      %46 = sbr.rel (0) target = $region21
    $region20: #{tpu_custom_call.1} parent=1 // pred_region
      %s48 = ssub.s32 64, 64
      %49 = vsyncadd [#allocation11], %s48
      %s51 = sshll.u32 [#allocation12], 4
      %s52 = int_to_ptr.vmem [resolvable:$true] %s51
      %54 = dma.hbm_to_vmem [thread:$0]  %s4, 64, %s52, [#allocation11]
    $region21: #{tpu_custom_call.1} parent=1 // pred_fallthru
      _
    // Predicated region
    $region22: #{tpu_custom_call.1} parent=1 // pred_check
      _
    $region23: #{tpu_custom_call.1} parent=1 // pred_check_branch
      %56 = sbr.rel (0) target = $region25
    $region24: #{tpu_custom_call.1} parent=1 // pred_region
      _
    $region25: #{tpu_custom_call.1} parent=1 // pred_fallthru
      _
    // Predicated region
    $region26: #{tpu_custom_call.1} parent=1 // pred_check
      _
    $region27: #{tpu_custom_call.1} parent=1 // pred_check_branch
      %58 = sbr.rel (0) target = $region29
    $region28: #{tpu_custom_call.1} parent=1 // pred_region
      _
    $region29: #{tpu_custom_call.1} parent=1 // pred_fallthru
      _
    // Predicated region
    $region30: #{tpu_custom_call.1} parent=1 // pred_check
      _
    $region31: #{tpu_custom_call.1} parent=1 // pred_check_branch
      %60 = sbr.rel (0) target = $region33
    $region32: #{tpu_custom_call.1} parent=1 // pred_region
      _
    $region33: #{tpu_custom_call.1} parent=1 // pred_fallthru
      _
    // Predicated region
    $region34: #{tpu_custom_call.1} parent=1 // pred_check
      _
    $region35: #{tpu_custom_call.1} parent=1 // pred_check_branch
      %62 = sbr.rel (0) target = $region37
    $region36: #{tpu_custom_call.1} parent=1 // pred_region
      _
    $region37: #{tpu_custom_call.1} parent=1 // pred_fallthru
      _
    // Predicated region
    $region38: #{tpu_custom_call.1} parent=1 // pred_check
      _
    $region39: #{tpu_custom_call.1} parent=1 // pred_check_branch
      %64 = sbr.rel (0) target = $region41
    $region40: #{tpu_custom_call.1} parent=1 // pred_region
      %65 = dma.done [#allocation8], 256
    $region41: #{tpu_custom_call.1} parent=1 // pred_fallthru
      _
    // Predicated region
    $region42: #{tpu_custom_call.1} parent=1 // pred_check
      _
    $region43: #{tpu_custom_call.1} parent=1 // pred_check_branch
      %67 = sbr.rel (0) target = $region45
    $region44: #{tpu_custom_call.1} parent=1 // pred_region
      %68 = dma.done [#allocation11], 128
    $region45: #{tpu_custom_call.1} parent=1 // pred_fallthru
      _
    // Predicated region
    $region46: #{tpu_custom_call.1} parent=1 // pred_check
      _
    $region47: #{tpu_custom_call.1} parent=1 // pred_check_branch
      %70 = sbr.rel (0) target = $region49
    $region48: #{tpu_custom_call.1} parent=1 // pred_region
      %71 = dma.done [#allocation11], 64
    $region49: #{tpu_custom_call.1} parent=1 // pred_fallthru
      _
    // Predicated region
    $region50: #{tpu_custom_call.1} parent=1 // pred_check
      _
    $region51: #{tpu_custom_call.1} parent=1 // pred_check_branch
      %74 = sbr.rel target = $region53
    $region52: #{tpu_custom_call.1} parent=1 // pred_region
      %75 = sst [smem:[#allocation16]] [#allocation15]
      %76 = sst [smem:[#allocation17]] [#allocation14]
    $region53: #{tpu_custom_call.1} parent=1 // pred_fallthru
      _
    %78 = shalt.err (0)
    %s80 = sshll.u32 [#allocation2], 4
    %s81 = int_to_ptr.vmem [resolvable:$true] %s80
    %83 = dma.hbm_to_vmem [thread:$0]  %s9, 4096, %s81, [#allocation4]
    %s84 = scalar_lea.sflag [#allocation4], 1
    // Predicated region
    $region54: #{tpu_custom_call.1} parent=1 // pred_check
      _
    $region55: #{tpu_custom_call.1} parent=1 // pred_check_branch
      %86 = sbr.rel target = $region57
    $region56: #{tpu_custom_call.1} parent=1 // pred_region
      %87 = sst [smem:[#allocation16]] [#allocation19]
      %88 = sst [smem:[#allocation17]] [#allocation18]
    $region57: #{tpu_custom_call.1} parent=1 // pred_fallthru
      _
    %90 = shalt.err (0)
    %s92 = sshll.u32 [#allocation3], 4
    %s93 = int_to_ptr.vmem [resolvable:$true] %s92
    %95 = dma.hbm_to_vmem [thread:$0]  %s10, 9216, %s93, %s84
    %v96 = vld [vmem:[%s1] sm:$0xff]
    %v97 = vld [vmem:[%s1 + $0x8] sm:$0xff]
    %v98 = vld [vmem:[%s1 + $0x10] sm:$0xff]
    %v99 = vld [vmem:[%s1 + $0x18] sm:$0xff]
    %v100 = vpack.c.bf16 %v97, %v96
    %v101 = vpack.c.bf16 %v99, %v98
    %v102 = vld [vmem:[#allocation12] sm:$0xf]
    %v103 = vld [vmem:[%s6] sm:$0x1]
    %v105 = vlaneseq
    %v106 = vshrl.u32 %v105, 7
    %v107 = vsub.s32 0, %v106
    %v108 = vrot.slane %v103, %v107
    %vm110 = vcmask 64512
    %v112 = vsel %vm110, %v100, 0
    %v115 = vsel %vm110, %v101, 0
    %vm117 = vcmask 1043456
    %v119 = vsel %vm117, %v102, 0
    %121 = vmatprep.subr.bf16.mxu0 0
    %122 = vmatpush1.bf16.msra.mxu0 0
    %123 = vmatprep.subr.bf16.mxu0 0
    %124 = vmatpush1.bf16.msra.mxu0 0
    %125 = vmatprep.subr.bf16.mxu0 0
    %126 = vmatpush1.bf16.msra.mxu0 0
    %127 = vmatprep.subr.bf16.mxu0 0
    %128 = vmatpush1.bf16.msra.mxu0 0
    %129 = vmatprep.subr.bf16.mxu0 0
    %130 = vmatpush1.bf16.msra.mxu0 0
    %131 = vmatprep.subr.bf16.mxu0 0
    %132 = vmatpush1.bf16.msra.mxu0 0
    %133 = vmatprep.subr.bf16.mxu0 0
    %134 = vmatpush1.bf16.msra.mxu0 0
    %135 = vmatprep.subr.bf16.mxu0 0
    %136 = vmatpush1.bf16.msra.mxu0 %v119
    %137 = vmatprep.subr.bf16.mxu0 0
    %138 = vmatpush2.bf16.msra.mxu0 0
    %139 = vmatprep.subr.bf16.mxu0 0
    %140 = vmatpush2.bf16.msra.mxu0 0
    %141 = vmatprep.subr.bf16.mxu0 0
    %142 = vmatpush2.bf16.msra.mxu0 0
    %143 = vmatprep.subr.bf16.mxu0 0
    %144 = vmatpush2.bf16.msra.mxu0 0
    %145 = vmatprep.subr.bf16.mxu0 0
    %146 = vmatpush2.bf16.msra.mxu0 0
    %147 = vmatprep.subr.bf16.mxu0 0
    %148 = vmatpush2.bf16.msra.mxu0 0
    %149 = vmatprep.subr.bf16.mxu0 0
    %150 = vmatpush2.bf16.msra.mxu0 0
    %151 = vmatprep.subr.bf16.mxu0 0
    %152 = vmatpush2.bf16.msra.mxu0 0
    %153 = vmatprep.mubr.bf16.mxu0 0
    %154 = vmatmul.mubr.bf16.gmra.mxu0 %v112
    %v155 = vpop.f32.mrf.mxu0
    %v156 = vadd.f32 %v108, %v155
    %v157 = vpop.f32.mrf.mxu0
    %v158 = vpop.f32.mrf.mxu0
    %v159 = vadd.f32 %v108, %v158
    %v160 = vpop.f32.mrf.mxu0
    %161 = vmatprep.mubr.bf16.mxu0 0
    %162 = vmatmul.mubr.bf16.gmra.mxu0 %v115
    %v163 = vpop.f32.mrf.mxu0
    %v164 = vadd.f32 %v108, %v163
    %v165 = vpop.f32.mrf.mxu0
    %v166 = vpop.f32.mrf.mxu0
    %v167 = vadd.f32 %v108, %v166
    %v168 = vpop.f32.mrf.mxu0
    %169 = vdwg.mxu0
    %170 = vst [vmem:[#allocation5] sm:$0xff] %v156
    %171 = vst [vmem:[#allocation5 + $0x8] sm:$0xff] %v159
    %172 = vst [vmem:[#allocation5 + $0x10] sm:$0xff] %v164
    %173 = vst [vmem:[#allocation5 + $0x18] sm:$0xff] %v167
    %v174 = vld [vmem:[#allocation5] sm:$0xff]
    %v175 = vld [vmem:[#allocation5 + $0x8] sm:$0xff]
    %v176 = vld [vmem:[%s5] sm:$0xf]
    %v177 = vld [vmem:[%s5 + $0x4] sm:$0xf]
    %v178 = vld [vmem:[%s5 + $0x8] sm:$0xf]
    %v179 = vld [vmem:[%s5 + $0xc] sm:$0xf]
    %v184 = vunpack.c.l.b16 %v176
    %v185 = vunpack.c.l.b16 %v177
    %v186 = vunpack.c.l.b16 %v178
    %v187 = vunpack.c.l.b16 %v179
    %v188 = vpack.c.b16 %v185, %v184
    %v189 = vpack.c.b16 %v187, %v186
    %vm192 = vcmask 261120
    %v194 = vsel %vm192, 0, 0
    %196 = vmatprep.subr.bf16.mxu0 0
    %197 = vmatpush1.bf16.msra.mxu0 0
    %198 = vmatprep.subr.bf16.mxu0 0
    %199 = vmatpush1.bf16.msra.mxu0 0
    %200 = vmatprep.subr.bf16.mxu0 0
    %201 = vmatpush1.bf16.msra.mxu0 0
    %202 = vmatprep.subr.bf16.mxu0 0
    %203 = vmatpush1.bf16.msra.mxu0 0
    %204 = vmatprep.subr.bf16.mxu0 0
    %205 = vmatpush1.bf16.msra.mxu0 0
    %206 = vmatprep.subr.bf16.mxu0 0
    %207 = vmatpush1.bf16.msra.mxu0 0
    %208 = vmatprep.subr.bf16.mxu0 0
    %209 = vmatpush1.bf16.msra.mxu0 %v189
    %210 = vmatprep.subr.bf16.mxu0 0
    %211 = vmatpush1.bf16.msra.mxu0 %v188
    %212 = vmatprep.subr.bf16.mxu0 0
    %213 = vmatpush2.bf16.msra.mxu0 0
    %214 = vmatprep.subr.bf16.mxu0 0
    %215 = vmatpush2.bf16.msra.mxu0 0
    %216 = vmatprep.subr.bf16.mxu0 0
    %217 = vmatpush2.bf16.msra.mxu0 0
    %218 = vmatprep.subr.bf16.mxu0 0
    %219 = vmatpush2.bf16.msra.mxu0 0
    %220 = vmatprep.subr.bf16.mxu0 0
    %221 = vmatpush2.bf16.msra.mxu0 0
    %222 = vmatprep.subr.bf16.mxu0 0
    %223 = vmatpush2.bf16.msra.mxu0 0
    %224 = vmatprep.subr.bf16.mxu0 0
    %225 = vmatpush2.bf16.msra.mxu0 0
    %226 = vmatprep.subr.bf16.mxu0 0
    %227 = vmatpush2.bf16.msra.mxu0 0
    %228 = vmatprep.mubr.bf16.mxu0 0
    %229 = vmatmul.mubr.bf16.gmra.mxu0 %v194
    %v230 = vpop.f32.mrf.mxu0
    %v231 = vadd.f32 0.0, %v230
    %v232 = vpop.f32.mrf.mxu0
    %v233 = vpop.f32.mrf.mxu0
    %v234 = vadd.f32 0.0, %v233
    %v235 = vpop.f32.mrf.mxu0
    %236 = vdwg.mxu0
    %v237 = vadd.f32 %v174, %v231
    %v238 = vadd.f32 %v175, %v234
    %v239 = vxor.u32 %v237, 2147483648
    %v240 = vxor.u32 %v238, 2147483648
    %v241 = vmul.f32 %v239, 1.442695
    %v242 = vpow.pop %v241
    %v243 = vmul.f32 %v240, 1.442695
    %v244 = vpow.pop %v243
    %v245 = vadd.f32 %v242, 1.0
    %v246 = vadd.f32 %v244, 1.0
    %v247 = vrcp.pop %v245
    %v248 = vmul.f32 1.0, %v247
    %v249 = vrcp.pop %v246
    %v250 = vmul.f32 1.0, %v249
    %v251 = vtanh.pop %v237
    %v252 = vtanh.pop %v238
    %v253 = vmul.f32 %v248, 0.0
    %v254 = vmul.f32 %v250, 0.0
    %257 = vrot.lane.b32.xlu0 %v251, 32
    %v258 = vpop.permute.xlu0 %257
    %259 = vrot.lane.b32.xlu0 %v252, 32
    %v260 = vpop.permute.xlu0 %259
    %v263 = vmul.f32 %v248, %v258
    %v264 = vmul.f32 %v250, %v260
    %267 = vrot.lane.b32.xlu0 %v263, 32
    %v268 = vpop.permute.xlu0 %267
    %269 = vrot.lane.b32.xlu0 %v264, 32
    %v270 = vpop.permute.xlu0 %269
    %v273 = vadd.f32 %v253, %v268
    %v274 = vadd.f32 %v254, %v270
    %v275 = vtanh.pop %v273
    %v276 = vtanh.pop %v274
    %279 = vrot.lane.b32.xlu0 %v275, 32
    %v280 = vpop.permute.xlu0 %279
    %281 = vrot.lane.b32.xlu0 %v276, 32
    %v282 = vpop.permute.xlu0 %281
    %v285 = vmul.f32 %v248, %v280
    %v286 = vmul.f32 %v250, %v282
    %289 = vrot.lane.b32.xlu0 %v285, 64
    %v290 = vpop.permute.xlu0 %289
    %291 = vrot.lane.b32.xlu0 %v286, 64
    %v292 = vpop.permute.xlu0 %291
    %295 = vst.msk [vmem:[#allocation6] sm:$0xff] %vm192, %v290
    %296 = vst.msk [vmem:[#allocation6 + $0x8] sm:$0xff] %vm192, %v292
    %v297 = vld [vmem:[#allocation5 + $0x10] sm:$0xff]
    %v298 = vld [vmem:[#allocation5 + $0x18] sm:$0xff]
    %v299 = vpack.c.bf16 %v286, %v285
    %v300 = vld [vmem:[%s5] sm:$0xf]
    %v301 = vld [vmem:[%s5 + $0x4] sm:$0xf]
    %v302 = vld [vmem:[%s5 + $0x8] sm:$0xf]
    %v303 = vld [vmem:[%s5 + $0xc] sm:$0xf]
    %305 = vrot.lane.b32.xlu0 %v299, 64
    %v306 = vpop.permute.xlu0 %305
    %v311 = vunpack.c.l.b16 %v300
    %v312 = vunpack.c.l.b16 %v301
    %v313 = vunpack.c.l.b16 %v302
    %v314 = vunpack.c.l.b16 %v303
    %v315 = vpack.c.b16 %v312, %v311
    %v316 = vpack.c.b16 %v314, %v313
    %v320 = vsel %vm192, %v306, 0
    %322 = vmatprep.subr.bf16.mxu0 0
    %323 = vmatpush1.bf16.msra.mxu0 0
    %324 = vmatprep.subr.bf16.mxu0 0
    %325 = vmatpush1.bf16.msra.mxu0 0
    %326 = vmatprep.subr.bf16.mxu0 0
    %327 = vmatpush1.bf16.msra.mxu0 0
    %328 = vmatprep.subr.bf16.mxu0 0
    %329 = vmatpush1.bf16.msra.mxu0 0
    %330 = vmatprep.subr.bf16.mxu0 0
    %331 = vmatpush1.bf16.msra.mxu0 0
    %332 = vmatprep.subr.bf16.mxu0 0
    %333 = vmatpush1.bf16.msra.mxu0 0
    %334 = vmatprep.subr.bf16.mxu0 0
    %335 = vmatpush1.bf16.msra.mxu0 %v316
    %336 = vmatprep.subr.bf16.mxu0 0
    %337 = vmatpush1.bf16.msra.mxu0 %v315
    %338 = vmatprep.subr.bf16.mxu0 0
    %339 = vmatpush2.bf16.msra.mxu0 0
    %340 = vmatprep.subr.bf16.mxu0 0
    %341 = vmatpush2.bf16.msra.mxu0 0
    %342 = vmatprep.subr.bf16.mxu0 0
    %343 = vmatpush2.bf16.msra.mxu0 0
    %344 = vmatprep.subr.bf16.mxu0 0
    %345 = vmatpush2.bf16.msra.mxu0 0
    %346 = vmatprep.subr.bf16.mxu0 0
    %347 = vmatpush2.bf16.msra.mxu0 0
    %348 = vmatprep.subr.bf16.mxu0 0
    %349 = vmatpush2.bf16.msra.mxu0 0
    %350 = vmatprep.subr.bf16.mxu0 0
    %351 = vmatpush2.bf16.msra.mxu0 0
    %352 = vmatprep.subr.bf16.mxu0 0
    %353 = vmatpush2.bf16.msra.mxu0 0
    %354 = vmatprep.mubr.bf16.mxu0 0
    %355 = vmatmul.mubr.bf16.gmra.mxu0 %v320
    %v356 = vpop.f32.mrf.mxu0
    %v357 = vadd.f32 0.0, %v356
    %v358 = vpop.f32.mrf.mxu0
    %v359 = vpop.f32.mrf.mxu0
    %v360 = vadd.f32 0.0, %v359
    %v361 = vpop.f32.mrf.mxu0
    %362 = vdwg.mxu0
    %v363 = vadd.f32 %v297, %v357
    %v364 = vadd.f32 %v298, %v360
    %v365 = vxor.u32 %v363, 2147483648
    %v366 = vxor.u32 %v364, 2147483648
    %v367 = vmul.f32 %v365, 1.442695
    %v368 = vpow.pop %v367
    %v369 = vmul.f32 %v366, 1.442695
    %v370 = vpow.pop %v369
    %v371 = vadd.f32 %v368, 1.0
    %v372 = vadd.f32 %v370, 1.0
    %v373 = vrcp.pop %v371
    %v374 = vmul.f32 1.0, %v373
    %v375 = vrcp.pop %v372
    %v376 = vmul.f32 1.0, %v375
    %v377 = vtanh.pop %v363
    %v378 = vtanh.pop %v364
    %v379 = vmul.f32 %v374, %v273
    %v380 = vmul.f32 %v376, %v274
    %383 = vrot.lane.b32.xlu0 %v377, 32
    %v384 = vpop.permute.xlu0 %383
    %385 = vrot.lane.b32.xlu0 %v378, 32
    %v386 = vpop.permute.xlu0 %385
    %v389 = vmul.f32 %v374, %v384
    %v390 = vmul.f32 %v376, %v386
    %393 = vrot.lane.b32.xlu0 %v389, 32
    %v394 = vpop.permute.xlu0 %393
    %395 = vrot.lane.b32.xlu0 %v390, 32
    %v396 = vpop.permute.xlu0 %395
    %v399 = vadd.f32 %v379, %v394
    %v400 = vadd.f32 %v380, %v396
    %v401 = vtanh.pop %v399
    %v402 = vtanh.pop %v400
    %405 = vrot.lane.b32.xlu0 %v401, 32
    %v406 = vpop.permute.xlu0 %405
    %407 = vrot.lane.b32.xlu0 %v402, 32
    %v408 = vpop.permute.xlu0 %407
    %v411 = vmul.f32 %v374, %v406
    %v412 = vmul.f32 %v376, %v408
    %415 = vrot.lane.b32.xlu0 %v411, 64
    %v416 = vpop.permute.xlu0 %415
    %417 = vrot.lane.b32.xlu0 %v412, 64
    %v418 = vpop.permute.xlu0 %417
    %421 = vst.msk [vmem:[#allocation6 + $0x10] sm:$0xff] %vm192, %v416
    %422 = vst.msk [vmem:[#allocation6 + $0x18] sm:$0xff] %vm192, %v418
    %s423 = smul.u32 4, 64
    %s424 = smul.u32 %s423, 1
    %s425 = sshll.u32 %s424, 4
    %426 = dma.done [#allocation4], %s425
    %v427 = vld [vmem:[#allocation6] ss:$16 sm:$0x3]
    %v428 = vpack.c.bf16 %v427, %v427
    %v429 = vld [vmem:[#allocation2] sm:$0xf]
    %v430 = vld [vmem:[#allocation2 + $0x4] sm:$0xf]
    %v431 = vld [vmem:[#allocation2 + $0x8] sm:$0xf]
    %v432 = vld [vmem:[#allocation2 + $0xc] sm:$0xf]
    %s433 = scalar_lea.vmem [#allocation6], 1
    %v434 = vld [vmem:[%s433] ss:$16 sm:$0x3]
    %v435 = vpack.c.bf16 %v434, %v434
    %v436 = vld [vmem:[#allocation2 + $0x10] sm:$0xf]
    %v437 = vld [vmem:[#allocation2 + $0x14] sm:$0xf]
    %v438 = vld [vmem:[#allocation2 + $0x18] sm:$0xf]
    %v439 = vld [vmem:[#allocation2 + $0x1c] sm:$0xf]
    %v444 = vunpack.c.l.b16 %v436
    %v445 = vunpack.c.l.b16 %v437
    %v446 = vunpack.c.l.b16 %v438
    %v447 = vunpack.c.l.b16 %v439
    %v448 = vpack.c.b16 %v445, %v444
    %v449 = vpack.c.b16 %v447, %v446
    %v453 = vsel %vm192, %v435, 0
    %455 = vmatprep.subr.bf16.mxu0 0
    %456 = vmatpush1.bf16.msra.mxu0 0
    %457 = vmatprep.subr.bf16.mxu0 0
    %458 = vmatpush1.bf16.msra.mxu0 0
    %459 = vmatprep.subr.bf16.mxu0 0
    %460 = vmatpush1.bf16.msra.mxu0 0
    %461 = vmatprep.subr.bf16.mxu0 0
    %462 = vmatpush1.bf16.msra.mxu0 0
    %463 = vmatprep.subr.bf16.mxu0 0
    %464 = vmatpush1.bf16.msra.mxu0 0
    %465 = vmatprep.subr.bf16.mxu0 0
    %466 = vmatpush1.bf16.msra.mxu0 0
    %467 = vmatprep.subr.bf16.mxu0 0
    %468 = vmatpush1.bf16.msra.mxu0 %v449
    %469 = vmatprep.subr.bf16.mxu0 0
    %470 = vmatpush1.bf16.msra.mxu0 %v448
    %471 = vmatprep.subr.bf16.mxu0 0
    %472 = vmatpush2.bf16.msra.mxu0 0
    %473 = vmatprep.subr.bf16.mxu0 0
    %474 = vmatpush2.bf16.msra.mxu0 0
    %475 = vmatprep.subr.bf16.mxu0 0
    %476 = vmatpush2.bf16.msra.mxu0 0
    %477 = vmatprep.subr.bf16.mxu0 0
    %478 = vmatpush2.bf16.msra.mxu0 0
    %479 = vmatprep.subr.bf16.mxu0 0
    %480 = vmatpush2.bf16.msra.mxu0 0
    %481 = vmatprep.subr.bf16.mxu0 0
    %482 = vmatpush2.bf16.msra.mxu0 0
    %483 = vmatprep.subr.bf16.mxu0 0
    %484 = vmatpush2.bf16.msra.mxu0 0
    %485 = vmatprep.subr.bf16.mxu0 0
    %486 = vmatpush2.bf16.msra.mxu0 0
    %487 = vmatprep.mubr.bf16.mxu0 0
    %488 = vmatmul.mubr.bf16.gmra.mxu0 %v453
    %v489 = vpop.f32.mrf.mxu0
    %v490 = vadd.f32 0.0, %v489
    %v491 = vpop.f32.mrf.mxu0
    %v492 = vpop.f32.mrf.mxu0
    %v493 = vpop.f32.mrf.mxu0
    %494 = vdwg.mxu0
    %v499 = vunpack.c.l.b16 %v429
    %v500 = vunpack.c.l.b16 %v430
    %v501 = vunpack.c.l.b16 %v431
    %v502 = vunpack.c.l.b16 %v432
    %v503 = vpack.c.b16 %v500, %v499
    %v504 = vpack.c.b16 %v502, %v501
    %v508 = vsel %vm192, %v428, 0
    %510 = vmatprep.subr.bf16.mxu0 0
    %511 = vmatpush1.bf16.msra.mxu0 0
    %512 = vmatprep.subr.bf16.mxu0 0
    %513 = vmatpush1.bf16.msra.mxu0 0
    %514 = vmatprep.subr.bf16.mxu0 0
    %515 = vmatpush1.bf16.msra.mxu0 0
    %516 = vmatprep.subr.bf16.mxu0 0
    %517 = vmatpush1.bf16.msra.mxu0 0
    %518 = vmatprep.subr.bf16.mxu0 0
    %519 = vmatpush1.bf16.msra.mxu0 0
    %520 = vmatprep.subr.bf16.mxu0 0
    %521 = vmatpush1.bf16.msra.mxu0 0
    %522 = vmatprep.subr.bf16.mxu0 0
    %523 = vmatpush1.bf16.msra.mxu0 %v504
    %524 = vmatprep.subr.bf16.mxu0 0
    %525 = vmatpush1.bf16.msra.mxu0 %v503
    %526 = vmatprep.subr.bf16.mxu0 0
    %527 = vmatpush2.bf16.msra.mxu0 0
    %528 = vmatprep.subr.bf16.mxu0 0
    %529 = vmatpush2.bf16.msra.mxu0 0
    %530 = vmatprep.subr.bf16.mxu0 0
    %531 = vmatpush2.bf16.msra.mxu0 0
    %532 = vmatprep.subr.bf16.mxu0 0
    %533 = vmatpush2.bf16.msra.mxu0 0
    %534 = vmatprep.subr.bf16.mxu0 0
    %535 = vmatpush2.bf16.msra.mxu0 0
    %536 = vmatprep.subr.bf16.mxu0 0
    %537 = vmatpush2.bf16.msra.mxu0 0
    %538 = vmatprep.subr.bf16.mxu0 0
    %539 = vmatpush2.bf16.msra.mxu0 0
    %540 = vmatprep.subr.bf16.mxu0 0
    %541 = vmatpush2.bf16.msra.mxu0 0
    %542 = vmatprep.mubr.bf16.mxu0 0
    %543 = vmatmul.mubr.bf16.gmra.mxu0 %v508
    %v544 = vpop.f32.mrf.mxu0
    %v545 = vadd.f32 %v490, %v544
    %v546 = vpop.f32.mrf.mxu0
    %v547 = vpop.f32.mrf.mxu0
    %v548 = vpop.f32.mrf.mxu0
    %549 = vdwg.mxu0
    %s550 = scalar_lea.vmem [#allocation6], 2
    %v551 = vld [vmem:[%s550] ss:$16 sm:$0x3]
    %v552 = vpack.c.bf16 %v551, %v551
    %v553 = vld [vmem:[#allocation2 + $0x20] sm:$0xf]
    %v554 = vld [vmem:[#allocation2 + $0x24] sm:$0xf]
    %v555 = vld [vmem:[#allocation2 + $0x28] sm:$0xf]
    %v556 = vld [vmem:[#allocation2 + $0x2c] sm:$0xf]
    %v561 = vunpack.c.l.b16 %v553
    %v562 = vunpack.c.l.b16 %v554
    %v563 = vunpack.c.l.b16 %v555
    %v564 = vunpack.c.l.b16 %v556
    %v565 = vpack.c.b16 %v562, %v561
    %v566 = vpack.c.b16 %v564, %v563
    %v570 = vsel %vm192, %v552, 0
    %572 = vmatprep.subr.bf16.mxu0 0
    %573 = vmatpush1.bf16.msra.mxu0 0
    %574 = vmatprep.subr.bf16.mxu0 0
    %575 = vmatpush1.bf16.msra.mxu0 0
    %576 = vmatprep.subr.bf16.mxu0 0
    %577 = vmatpush1.bf16.msra.mxu0 0
    %578 = vmatprep.subr.bf16.mxu0 0
    %579 = vmatpush1.bf16.msra.mxu0 0
    %580 = vmatprep.subr.bf16.mxu0 0
    %581 = vmatpush1.bf16.msra.mxu0 0
    %582 = vmatprep.subr.bf16.mxu0 0
    %583 = vmatpush1.bf16.msra.mxu0 0
    %584 = vmatprep.subr.bf16.mxu0 0
    %585 = vmatpush1.bf16.msra.mxu0 %v566
    %586 = vmatprep.subr.bf16.mxu0 0
    %587 = vmatpush1.bf16.msra.mxu0 %v565
    %588 = vmatprep.subr.bf16.mxu0 0
    %589 = vmatpush2.bf16.msra.mxu0 0
    %590 = vmatprep.subr.bf16.mxu0 0
    %591 = vmatpush2.bf16.msra.mxu0 0
    %592 = vmatprep.subr.bf16.mxu0 0
    %593 = vmatpush2.bf16.msra.mxu0 0
    %594 = vmatprep.subr.bf16.mxu0 0
    %595 = vmatpush2.bf16.msra.mxu0 0
    %596 = vmatprep.subr.bf16.mxu0 0
    %597 = vmatpush2.bf16.msra.mxu0 0
    %598 = vmatprep.subr.bf16.mxu0 0
    %599 = vmatpush2.bf16.msra.mxu0 0
    %600 = vmatprep.subr.bf16.mxu0 0
    %601 = vmatpush2.bf16.msra.mxu0 0
    %602 = vmatprep.subr.bf16.mxu0 0
    %603 = vmatpush2.bf16.msra.mxu0 0
    %604 = vmatprep.mubr.bf16.mxu0 0
    %605 = vmatmul.mubr.bf16.gmra.mxu0 %v570
    %v606 = vpop.f32.mrf.mxu0
    %v607 = vadd.f32 0.0, %v606
    %v608 = vpop.f32.mrf.mxu0
    %v609 = vpop.f32.mrf.mxu0
    %v610 = vpop.f32.mrf.mxu0
    %611 = vdwg.mxu0
    %v612 = vadd.f32 %v545, %v607
    %s613 = scalar_lea.vmem [#allocation6], 3
    %v614 = vld [vmem:[%s613] ss:$16 sm:$0x3]
    %v615 = vpack.c.bf16 %v614, %v614
    %v616 = vld [vmem:[#allocation2 + $0x30] sm:$0xf]
    %v617 = vld [vmem:[#allocation2 + $0x34] sm:$0xf]
    %v618 = vld [vmem:[#allocation2 + $0x38] sm:$0xf]
    %v619 = vld [vmem:[#allocation2 + $0x3c] sm:$0xf]
    %v624 = vunpack.c.l.b16 %v616
    %v625 = vunpack.c.l.b16 %v617
    %v626 = vunpack.c.l.b16 %v618
    %v627 = vunpack.c.l.b16 %v619
    %v628 = vpack.c.b16 %v625, %v624
    %v629 = vpack.c.b16 %v627, %v626
    %v633 = vsel %vm192, %v615, 0
    %635 = vmatprep.subr.bf16.mxu0 0
    %636 = vmatpush1.bf16.msra.mxu0 0
    %637 = vmatprep.subr.bf16.mxu0 0
    %638 = vmatpush1.bf16.msra.mxu0 0
    %639 = vmatprep.subr.bf16.mxu0 0
    %640 = vmatpush1.bf16.msra.mxu0 0
    %641 = vmatprep.subr.bf16.mxu0 0
    %642 = vmatpush1.bf16.msra.mxu0 0
    %643 = vmatprep.subr.bf16.mxu0 0
    %644 = vmatpush1.bf16.msra.mxu0 0
    %645 = vmatprep.subr.bf16.mxu0 0
    %646 = vmatpush1.bf16.msra.mxu0 0
    %647 = vmatprep.subr.bf16.mxu0 0
    %648 = vmatpush1.bf16.msra.mxu0 %v629
    %649 = vmatprep.subr.bf16.mxu0 0
    %650 = vmatpush1.bf16.msra.mxu0 %v628
    %651 = vmatprep.subr.bf16.mxu0 0
    %652 = vmatpush2.bf16.msra.mxu0 0
    %653 = vmatprep.subr.bf16.mxu0 0
    %654 = vmatpush2.bf16.msra.mxu0 0
    %655 = vmatprep.subr.bf16.mxu0 0
    %656 = vmatpush2.bf16.msra.mxu0 0
    %657 = vmatprep.subr.bf16.mxu0 0
    %658 = vmatpush2.bf16.msra.mxu0 0
    %659 = vmatprep.subr.bf16.mxu0 0
    %660 = vmatpush2.bf16.msra.mxu0 0
    %661 = vmatprep.subr.bf16.mxu0 0
    %662 = vmatpush2.bf16.msra.mxu0 0
    %663 = vmatprep.subr.bf16.mxu0 0
    %664 = vmatpush2.bf16.msra.mxu0 0
    %665 = vmatprep.subr.bf16.mxu0 0
    %666 = vmatpush2.bf16.msra.mxu0 0
    %667 = vmatprep.mubr.bf16.mxu0 0
    %668 = vmatmul.mubr.bf16.gmra.mxu0 %v633
    %v669 = vpop.f32.mrf.mxu0
    %v670 = vadd.f32 0.0, %v669
    %v671 = vpop.f32.mrf.mxu0
    %v672 = vpop.f32.mrf.mxu0
    %v673 = vpop.f32.mrf.mxu0
    %674 = vdwg.mxu0
    %v675 = vadd.f32 %v612, %v670
    %s676 = scalar_lea.vmem [#allocation6], 4
    %v677 = vld [vmem:[%s676] ss:$16 sm:$0x3]
    %v678 = vpack.c.bf16 %v677, %v677
    %v679 = vld [vmem:[#allocation2 + $0x40] sm:$0xf]
    %v680 = vld [vmem:[#allocation2 + $0x44] sm:$0xf]
    %v681 = vld [vmem:[#allocation2 + $0x48] sm:$0xf]
    %v682 = vld [vmem:[#allocation2 + $0x4c] sm:$0xf]
    %v687 = vunpack.c.l.b16 %v679
    %v688 = vunpack.c.l.b16 %v680
    %v689 = vunpack.c.l.b16 %v681
    %v690 = vunpack.c.l.b16 %v682
    %v691 = vpack.c.b16 %v688, %v687
    %v692 = vpack.c.b16 %v690, %v689
    %v696 = vsel %vm192, %v678, 0
    %698 = vmatprep.subr.bf16.mxu0 0
    %699 = vmatpush1.bf16.msra.mxu0 0
    %700 = vmatprep.subr.bf16.mxu0 0
    %701 = vmatpush1.bf16.msra.mxu0 0
    %702 = vmatprep.subr.bf16.mxu0 0
    %703 = vmatpush1.bf16.msra.mxu0 0
    %704 = vmatprep.subr.bf16.mxu0 0
    %705 = vmatpush1.bf16.msra.mxu0 0
    %706 = vmatprep.subr.bf16.mxu0 0
    %707 = vmatpush1.bf16.msra.mxu0 0
    %708 = vmatprep.subr.bf16.mxu0 0
    %709 = vmatpush1.bf16.msra.mxu0 0
    %710 = vmatprep.subr.bf16.mxu0 0
    %711 = vmatpush1.bf16.msra.mxu0 %v692
    %712 = vmatprep.subr.bf16.mxu0 0
    %713 = vmatpush1.bf16.msra.mxu0 %v691
    %714 = vmatprep.subr.bf16.mxu0 0
    %715 = vmatpush2.bf16.msra.mxu0 0
    %716 = vmatprep.subr.bf16.mxu0 0
    %717 = vmatpush2.bf16.msra.mxu0 0
    %718 = vmatprep.subr.bf16.mxu0 0
    %719 = vmatpush2.bf16.msra.mxu0 0
    %720 = vmatprep.subr.bf16.mxu0 0
    %721 = vmatpush2.bf16.msra.mxu0 0
    %722 = vmatprep.subr.bf16.mxu0 0
    %723 = vmatpush2.bf16.msra.mxu0 0
    %724 = vmatprep.subr.bf16.mxu0 0
    %725 = vmatpush2.bf16.msra.mxu0 0
    %726 = vmatprep.subr.bf16.mxu0 0
    %727 = vmatpush2.bf16.msra.mxu0 0
    %728 = vmatprep.subr.bf16.mxu0 0
    %729 = vmatpush2.bf16.msra.mxu0 0
    %730 = vmatprep.mubr.bf16.mxu0 0
    %731 = vmatmul.mubr.bf16.gmra.mxu0 %v696
    %v732 = vpop.f32.mrf.mxu0
    %v733 = vadd.f32 0.0, %v732
    %v734 = vpop.f32.mrf.mxu0
    %v735 = vpop.f32.mrf.mxu0
    %v736 = vpop.f32.mrf.mxu0
    %737 = vdwg.mxu0
    %v738 = vadd.f32 %v675, %v733
    %s739 = scalar_lea.vmem [#allocation6], 5
    %v740 = vld [vmem:[%s739] ss:$16 sm:$0x3]
    %v741 = vpack.c.bf16 %v740, %v740
    %v742 = vld [vmem:[#allocation2 + $0x50] sm:$0xf]
    %v743 = vld [vmem:[#allocation2 + $0x54] sm:$0xf]
    %v744 = vld [vmem:[#allocation2 + $0x58] sm:$0xf]
    %v745 = vld [vmem:[#allocation2 + $0x5c] sm:$0xf]
    %v750 = vunpack.c.l.b16 %v742
    %v751 = vunpack.c.l.b16 %v743
    %v752 = vunpack.c.l.b16 %v744
    %v753 = vunpack.c.l.b16 %v745
    %v754 = vpack.c.b16 %v751, %v750
    %v755 = vpack.c.b16 %v753, %v752
    %v759 = vsel %vm192, %v741, 0
    %761 = vmatprep.subr.bf16.mxu0 0
    %762 = vmatpush1.bf16.msra.mxu0 0
    %763 = vmatprep.subr.bf16.mxu0 0
    %764 = vmatpush1.bf16.msra.mxu0 0
    %765 = vmatprep.subr.bf16.mxu0 0
    %766 = vmatpush1.bf16.msra.mxu0 0
    %767 = vmatprep.subr.bf16.mxu0 0
    %768 = vmatpush1.bf16.msra.mxu0 0
    %769 = vmatprep.subr.bf16.mxu0 0
    %770 = vmatpush1.bf16.msra.mxu0 0
    %771 = vmatprep.subr.bf16.mxu0 0
    %772 = vmatpush1.bf16.msra.mxu0 0
    %773 = vmatprep.subr.bf16.mxu0 0
    %774 = vmatpush1.bf16.msra.mxu0 %v755
    %775 = vmatprep.subr.bf16.mxu0 0
    %776 = vmatpush1.bf16.msra.mxu0 %v754
    %777 = vmatprep.subr.bf16.mxu0 0
    %778 = vmatpush2.bf16.msra.mxu0 0
    %779 = vmatprep.subr.bf16.mxu0 0
    %780 = vmatpush2.bf16.msra.mxu0 0
    %781 = vmatprep.subr.bf16.mxu0 0
    %782 = vmatpush2.bf16.msra.mxu0 0
    %783 = vmatprep.subr.bf16.mxu0 0
    %784 = vmatpush2.bf16.msra.mxu0 0
    %785 = vmatprep.subr.bf16.mxu0 0
    %786 = vmatpush2.bf16.msra.mxu0 0
    %787 = vmatprep.subr.bf16.mxu0 0
    %788 = vmatpush2.bf16.msra.mxu0 0
    %789 = vmatprep.subr.bf16.mxu0 0
    %790 = vmatpush2.bf16.msra.mxu0 0
    %791 = vmatprep.subr.bf16.mxu0 0
    %792 = vmatpush2.bf16.msra.mxu0 0
    %793 = vmatprep.mubr.bf16.mxu0 0
    %794 = vmatmul.mubr.bf16.gmra.mxu0 %v759
    %v795 = vpop.f32.mrf.mxu0
    %v796 = vadd.f32 0.0, %v795
    %v797 = vpop.f32.mrf.mxu0
    %v798 = vpop.f32.mrf.mxu0
    %v799 = vpop.f32.mrf.mxu0
    %800 = vdwg.mxu0
    %v801 = vadd.f32 %v738, %v796
    %s802 = scalar_lea.vmem [#allocation6], 6
    %v803 = vld [vmem:[%s802] ss:$16 sm:$0x3]
    %v804 = vpack.c.bf16 %v803, %v803
    %v805 = vld [vmem:[#allocation2 + $0x60] sm:$0xf]
    %v806 = vld [vmem:[#allocation2 + $0x64] sm:$0xf]
    %v807 = vld [vmem:[#allocation2 + $0x68] sm:$0xf]
    %v808 = vld [vmem:[#allocation2 + $0x6c] sm:$0xf]
    %v813 = vunpack.c.l.b16 %v805
    %v814 = vunpack.c.l.b16 %v806
    %v815 = vunpack.c.l.b16 %v807
    %v816 = vunpack.c.l.b16 %v808
    %v817 = vpack.c.b16 %v814, %v813
    %v818 = vpack.c.b16 %v816, %v815
    %v822 = vsel %vm192, %v804, 0
    %824 = vmatprep.subr.bf16.mxu0 0
    %825 = vmatpush1.bf16.msra.mxu0 0
    %826 = vmatprep.subr.bf16.mxu0 0
    %827 = vmatpush1.bf16.msra.mxu0 0
    %828 = vmatprep.subr.bf16.mxu0 0
    %829 = vmatpush1.bf16.msra.mxu0 0
    %830 = vmatprep.subr.bf16.mxu0 0
    %831 = vmatpush1.bf16.msra.mxu0 0
    %832 = vmatprep.subr.bf16.mxu0 0
    %833 = vmatpush1.bf16.msra.mxu0 0
    %834 = vmatprep.subr.bf16.mxu0 0
    %835 = vmatpush1.bf16.msra.mxu0 0
    %836 = vmatprep.subr.bf16.mxu0 0
    %837 = vmatpush1.bf16.msra.mxu0 %v818
    %838 = vmatprep.subr.bf16.mxu0 0
    %839 = vmatpush1.bf16.msra.mxu0 %v817
    %840 = vmatprep.subr.bf16.mxu0 0
    %841 = vmatpush2.bf16.msra.mxu0 0
    %842 = vmatprep.subr.bf16.mxu0 0
    %843 = vmatpush2.bf16.msra.mxu0 0
    %844 = vmatprep.subr.bf16.mxu0 0
    %845 = vmatpush2.bf16.msra.mxu0 0
    %846 = vmatprep.subr.bf16.mxu0 0
    %847 = vmatpush2.bf16.msra.mxu0 0
    %848 = vmatprep.subr.bf16.mxu0 0
    %849 = vmatpush2.bf16.msra.mxu0 0
    %850 = vmatprep.subr.bf16.mxu0 0
    %851 = vmatpush2.bf16.msra.mxu0 0
    %852 = vmatprep.subr.bf16.mxu0 0
    %853 = vmatpush2.bf16.msra.mxu0 0
    %854 = vmatprep.subr.bf16.mxu0 0
    %855 = vmatpush2.bf16.msra.mxu0 0
    %856 = vmatprep.mubr.bf16.mxu0 0
    %857 = vmatmul.mubr.bf16.gmra.mxu0 %v822
    %v858 = vpop.f32.mrf.mxu0
    %v859 = vadd.f32 0.0, %v858
    %v860 = vpop.f32.mrf.mxu0
    %v861 = vpop.f32.mrf.mxu0
    %v862 = vpop.f32.mrf.mxu0
    %863 = vdwg.mxu0
    %v864 = vadd.f32 %v801, %v859
    %s865 = scalar_lea.vmem [#allocation6], 7
    %v866 = vld [vmem:[%s865] ss:$16 sm:$0x3]
    %v867 = vpack.c.bf16 %v866, %v866
    %v868 = vld [vmem:[#allocation2 + $0x70] sm:$0xf]
    %v869 = vld [vmem:[#allocation2 + $0x74] sm:$0xf]
    %v870 = vld [vmem:[#allocation2 + $0x78] sm:$0xf]
    %v871 = vld [vmem:[#allocation2 + $0x7c] sm:$0xf]
    %v876 = vunpack.c.l.b16 %v868
    %v877 = vunpack.c.l.b16 %v869
    %v878 = vunpack.c.l.b16 %v870
    %v879 = vunpack.c.l.b16 %v871
    %v880 = vpack.c.b16 %v877, %v876
    %v881 = vpack.c.b16 %v879, %v878
    %v885 = vsel %vm192, %v867, 0
    %887 = vmatprep.subr.bf16.mxu0 0
    %888 = vmatpush1.bf16.msra.mxu0 0
    %889 = vmatprep.subr.bf16.mxu0 0
    %890 = vmatpush1.bf16.msra.mxu0 0
    %891 = vmatprep.subr.bf16.mxu0 0
    %892 = vmatpush1.bf16.msra.mxu0 0
    %893 = vmatprep.subr.bf16.mxu0 0
    %894 = vmatpush1.bf16.msra.mxu0 0
    %895 = vmatprep.subr.bf16.mxu0 0
    %896 = vmatpush1.bf16.msra.mxu0 0
    %897 = vmatprep.subr.bf16.mxu0 0
    %898 = vmatpush1.bf16.msra.mxu0 0
    %899 = vmatprep.subr.bf16.mxu0 0
    %900 = vmatpush1.bf16.msra.mxu0 %v881
    %901 = vmatprep.subr.bf16.mxu0 0
    %902 = vmatpush1.bf16.msra.mxu0 %v880
    %903 = vmatprep.subr.bf16.mxu0 0
    %904 = vmatpush2.bf16.msra.mxu0 0
    %905 = vmatprep.subr.bf16.mxu0 0
    %906 = vmatpush2.bf16.msra.mxu0 0
    %907 = vmatprep.subr.bf16.mxu0 0
    %908 = vmatpush2.bf16.msra.mxu0 0
    %909 = vmatprep.subr.bf16.mxu0 0
    %910 = vmatpush2.bf16.msra.mxu0 0
    %911 = vmatprep.subr.bf16.mxu0 0
    %912 = vmatpush2.bf16.msra.mxu0 0
    %913 = vmatprep.subr.bf16.mxu0 0
    %914 = vmatpush2.bf16.msra.mxu0 0
    %915 = vmatprep.subr.bf16.mxu0 0
    %916 = vmatpush2.bf16.msra.mxu0 0
    %917 = vmatprep.subr.bf16.mxu0 0
    %918 = vmatpush2.bf16.msra.mxu0 0
    %919 = vmatprep.mubr.bf16.mxu0 0
    %920 = vmatmul.mubr.bf16.gmra.mxu0 %v885
    %v921 = vpop.f32.mrf.mxu0
    %v922 = vadd.f32 0.0, %v921
    %v923 = vpop.f32.mrf.mxu0
    %v924 = vpop.f32.mrf.mxu0
    %v925 = vpop.f32.mrf.mxu0
    %926 = vdwg.mxu0
    %v927 = vadd.f32 %v864, %v922
    %s928 = scalar_lea.vmem [#allocation6], 8
    %v929 = vld [vmem:[%s928] ss:$16 sm:$0x3]
    %v930 = vpack.c.bf16 %v929, %v929
    %v931 = vld [vmem:[#allocation2 + $0x80] sm:$0xf]
    %v932 = vld [vmem:[#allocation2 + $0x84] sm:$0xf]
    %v933 = vld [vmem:[#allocation2 + $0x88] sm:$0xf]
    %v934 = vld [vmem:[#allocation2 + $0x8c] sm:$0xf]
    %v939 = vunpack.c.l.b16 %v931
    %v940 = vunpack.c.l.b16 %v932
    %v941 = vunpack.c.l.b16 %v933
    %v942 = vunpack.c.l.b16 %v934
    %v943 = vpack.c.b16 %v940, %v939
    %v944 = vpack.c.b16 %v942, %v941
    %v948 = vsel %vm192, %v930, 0
    %950 = vmatprep.subr.bf16.mxu0 0
    %951 = vmatpush1.bf16.msra.mxu0 0
    %952 = vmatprep.subr.bf16.mxu0 0
    %953 = vmatpush1.bf16.msra.mxu0 0
    %954 = vmatprep.subr.bf16.mxu0 0
    %955 = vmatpush1.bf16.msra.mxu0 0
    %956 = vmatprep.subr.bf16.mxu0 0
    %957 = vmatpush1.bf16.msra.mxu0 0
    %958 = vmatprep.subr.bf16.mxu0 0
    %959 = vmatpush1.bf16.msra.mxu0 0
    %960 = vmatprep.subr.bf16.mxu0 0
    %961 = vmatpush1.bf16.msra.mxu0 0
    %962 = vmatprep.subr.bf16.mxu0 0
    %963 = vmatpush1.bf16.msra.mxu0 %v944
    %964 = vmatprep.subr.bf16.mxu0 0
    %965 = vmatpush1.bf16.msra.mxu0 %v943
    %966 = vmatprep.subr.bf16.mxu0 0
    %967 = vmatpush2.bf16.msra.mxu0 0
    %968 = vmatprep.subr.bf16.mxu0 0
    %969 = vmatpush2.bf16.msra.mxu0 0
    %970 = vmatprep.subr.bf16.mxu0 0
    %971 = vmatpush2.bf16.msra.mxu0 0
    %972 = vmatprep.subr.bf16.mxu0 0
    %973 = vmatpush2.bf16.msra.mxu0 0
    %974 = vmatprep.subr.bf16.mxu0 0
    %975 = vmatpush2.bf16.msra.mxu0 0
    %976 = vmatprep.subr.bf16.mxu0 0
    %977 = vmatpush2.bf16.msra.mxu0 0
    %978 = vmatprep.subr.bf16.mxu0 0
    %979 = vmatpush2.bf16.msra.mxu0 0
    %980 = vmatprep.subr.bf16.mxu0 0
    %981 = vmatpush2.bf16.msra.mxu0 0
    %982 = vmatprep.mubr.bf16.mxu0 0
    %983 = vmatmul.mubr.bf16.gmra.mxu0 %v948
    %v984 = vpop.f32.mrf.mxu0
    %v985 = vadd.f32 0.0, %v984
    %v986 = vpop.f32.mrf.mxu0
    %v987 = vpop.f32.mrf.mxu0
    %v988 = vpop.f32.mrf.mxu0
    %989 = vdwg.mxu0
    %v990 = vadd.f32 %v927, %v985
    %s991 = scalar_lea.vmem [#allocation6], 9
    %v992 = vld [vmem:[%s991] ss:$16 sm:$0x3]
    %v993 = vpack.c.bf16 %v992, %v992
    %v994 = vld [vmem:[#allocation2 + $0x90] sm:$0xf]
    %v995 = vld [vmem:[#allocation2 + $0x94] sm:$0xf]
    %v996 = vld [vmem:[#allocation2 + $0x98] sm:$0xf]
    %v997 = vld [vmem:[#allocation2 + $0x9c] sm:$0xf]
    %v1002 = vunpack.c.l.b16 %v994
    %v1003 = vunpack.c.l.b16 %v995
    %v1004 = vunpack.c.l.b16 %v996
    %v1005 = vunpack.c.l.b16 %v997
    %v1006 = vpack.c.b16 %v1003, %v1002
    %v1007 = vpack.c.b16 %v1005, %v1004
    %v1011 = vsel %vm192, %v993, 0
    %1013 = vmatprep.subr.bf16.mxu0 0
    %1014 = vmatpush1.bf16.msra.mxu0 0
    %1015 = vmatprep.subr.bf16.mxu0 0
    %1016 = vmatpush1.bf16.msra.mxu0 0
    %1017 = vmatprep.subr.bf16.mxu0 0
    %1018 = vmatpush1.bf16.msra.mxu0 0
    %1019 = vmatprep.subr.bf16.mxu0 0
    %1020 = vmatpush1.bf16.msra.mxu0 0
    %1021 = vmatprep.subr.bf16.mxu0 0
    %1022 = vmatpush1.bf16.msra.mxu0 0
    %1023 = vmatprep.subr.bf16.mxu0 0
    %1024 = vmatpush1.bf16.msra.mxu0 0
    %1025 = vmatprep.subr.bf16.mxu0 0
    %1026 = vmatpush1.bf16.msra.mxu0 %v1007
    %1027 = vmatprep.subr.bf16.mxu0 0
    %1028 = vmatpush1.bf16.msra.mxu0 %v1006
    %1029 = vmatprep.subr.bf16.mxu0 0
    %1030 = vmatpush2.bf16.msra.mxu0 0
    %1031 = vmatprep.subr.bf16.mxu0 0
    %1032 = vmatpush2.bf16.msra.mxu0 0
    %1033 = vmatprep.subr.bf16.mxu0 0
    %1034 = vmatpush2.bf16.msra.mxu0 0
    %1035 = vmatprep.subr.bf16.mxu0 0
    %1036 = vmatpush2.bf16.msra.mxu0 0
    %1037 = vmatprep.subr.bf16.mxu0 0
    %1038 = vmatpush2.bf16.msra.mxu0 0
    %1039 = vmatprep.subr.bf16.mxu0 0
    %1040 = vmatpush2.bf16.msra.mxu0 0
    %1041 = vmatprep.subr.bf16.mxu0 0
    %1042 = vmatpush2.bf16.msra.mxu0 0
    %1043 = vmatprep.subr.bf16.mxu0 0
    %1044 = vmatpush2.bf16.msra.mxu0 0
    %1045 = vmatprep.mubr.bf16.mxu0 0
    %1046 = vmatmul.mubr.bf16.gmra.mxu0 %v1011
    %v1047 = vpop.f32.mrf.mxu0
    %v1048 = vadd.f32 0.0, %v1047
    %v1049 = vpop.f32.mrf.mxu0
    %v1050 = vpop.f32.mrf.mxu0
    %v1051 = vpop.f32.mrf.mxu0
    %1052 = vdwg.mxu0
    %v1053 = vadd.f32 %v990, %v1048
    %s1054 = scalar_lea.vmem [#allocation6], 10
    %v1055 = vld [vmem:[%s1054] ss:$16 sm:$0x3]
    %v1056 = vpack.c.bf16 %v1055, %v1055
    %v1057 = vld [vmem:[#allocation2 + $0xa0] sm:$0xf]
    %v1058 = vld [vmem:[#allocation2 + $0xa4] sm:$0xf]
    %v1059 = vld [vmem:[#allocation2 + $0xa8] sm:$0xf]
    %v1060 = vld [vmem:[#allocation2 + $0xac] sm:$0xf]
    %v1065 = vunpack.c.l.b16 %v1057
    %v1066 = vunpack.c.l.b16 %v1058
    %v1067 = vunpack.c.l.b16 %v1059
    %v1068 = vunpack.c.l.b16 %v1060
    %v1069 = vpack.c.b16 %v1066, %v1065
    %v1070 = vpack.c.b16 %v1068, %v1067
    %v1074 = vsel %vm192, %v1056, 0
    %1076 = vmatprep.subr.bf16.mxu0 0
    %1077 = vmatpush1.bf16.msra.mxu0 0
    %1078 = vmatprep.subr.bf16.mxu0 0
    %1079 = vmatpush1.bf16.msra.mxu0 0
    %1080 = vmatprep.subr.bf16.mxu0 0
    %1081 = vmatpush1.bf16.msra.mxu0 0
    %1082 = vmatprep.subr.bf16.mxu0 0
    %1083 = vmatpush1.bf16.msra.mxu0 0
    %1084 = vmatprep.subr.bf16.mxu0 0
    %1085 = vmatpush1.bf16.msra.mxu0 0
    %1086 = vmatprep.subr.bf16.mxu0 0
    %1087 = vmatpush1.bf16.msra.mxu0 0
    %1088 = vmatprep.subr.bf16.mxu0 0
    %1089 = vmatpush1.bf16.msra.mxu0 %v1070
    %1090 = vmatprep.subr.bf16.mxu0 0
    %1091 = vmatpush1.bf16.msra.mxu0 %v1069
    %1092 = vmatprep.subr.bf16.mxu0 0
    %1093 = vmatpush2.bf16.msra.mxu0 0
    %1094 = vmatprep.subr.bf16.mxu0 0
    %1095 = vmatpush2.bf16.msra.mxu0 0
    %1096 = vmatprep.subr.bf16.mxu0 0
    %1097 = vmatpush2.bf16.msra.mxu0 0
    %1098 = vmatprep.subr.bf16.mxu0 0
    %1099 = vmatpush2.bf16.msra.mxu0 0
    %1100 = vmatprep.subr.bf16.mxu0 0
    %1101 = vmatpush2.bf16.msra.mxu0 0
    %1102 = vmatprep.subr.bf16.mxu0 0
    %1103 = vmatpush2.bf16.msra.mxu0 0
    %1104 = vmatprep.subr.bf16.mxu0 0
    %1105 = vmatpush2.bf16.msra.mxu0 0
    %1106 = vmatprep.subr.bf16.mxu0 0
    %1107 = vmatpush2.bf16.msra.mxu0 0
    %1108 = vmatprep.mubr.bf16.mxu0 0
    %1109 = vmatmul.mubr.bf16.gmra.mxu0 %v1074
    %v1110 = vpop.f32.mrf.mxu0
    %v1111 = vadd.f32 0.0, %v1110
    %v1112 = vpop.f32.mrf.mxu0
    %v1113 = vpop.f32.mrf.mxu0
    %v1114 = vpop.f32.mrf.mxu0
    %1115 = vdwg.mxu0
    %v1116 = vadd.f32 %v1053, %v1111
    %s1117 = scalar_lea.vmem [#allocation6], 11
    %v1118 = vld [vmem:[%s1117] ss:$16 sm:$0x3]
    %v1119 = vpack.c.bf16 %v1118, %v1118
    %v1120 = vld [vmem:[#allocation2 + $0xb0] sm:$0xf]
    %v1121 = vld [vmem:[#allocation2 + $0xb4] sm:$0xf]
    %v1122 = vld [vmem:[#allocation2 + $0xb8] sm:$0xf]
    %v1123 = vld [vmem:[#allocation2 + $0xbc] sm:$0xf]
    %v1128 = vunpack.c.l.b16 %v1120
    %v1129 = vunpack.c.l.b16 %v1121
    %v1130 = vunpack.c.l.b16 %v1122
    %v1131 = vunpack.c.l.b16 %v1123
    %v1132 = vpack.c.b16 %v1129, %v1128
    %v1133 = vpack.c.b16 %v1131, %v1130
    %v1137 = vsel %vm192, %v1119, 0
    %1139 = vmatprep.subr.bf16.mxu0 0
    %1140 = vmatpush1.bf16.msra.mxu0 0
    %1141 = vmatprep.subr.bf16.mxu0 0
    %1142 = vmatpush1.bf16.msra.mxu0 0
    %1143 = vmatprep.subr.bf16.mxu0 0
    %1144 = vmatpush1.bf16.msra.mxu0 0
    %1145 = vmatprep.subr.bf16.mxu0 0
    %1146 = vmatpush1.bf16.msra.mxu0 0
    %1147 = vmatprep.subr.bf16.mxu0 0
    %1148 = vmatpush1.bf16.msra.mxu0 0
    %1149 = vmatprep.subr.bf16.mxu0 0
    %1150 = vmatpush1.bf16.msra.mxu0 0
    %1151 = vmatprep.subr.bf16.mxu0 0
    %1152 = vmatpush1.bf16.msra.mxu0 %v1133
    %1153 = vmatprep.subr.bf16.mxu0 0
    %1154 = vmatpush1.bf16.msra.mxu0 %v1132
    %1155 = vmatprep.subr.bf16.mxu0 0
    %1156 = vmatpush2.bf16.msra.mxu0 0
    %1157 = vmatprep.subr.bf16.mxu0 0
    %1158 = vmatpush2.bf16.msra.mxu0 0
    %1159 = vmatprep.subr.bf16.mxu0 0
    %1160 = vmatpush2.bf16.msra.mxu0 0
    %1161 = vmatprep.subr.bf16.mxu0 0
    %1162 = vmatpush2.bf16.msra.mxu0 0
    %1163 = vmatprep.subr.bf16.mxu0 0
    %1164 = vmatpush2.bf16.msra.mxu0 0
    %1165 = vmatprep.subr.bf16.mxu0 0
    %1166 = vmatpush2.bf16.msra.mxu0 0
    %1167 = vmatprep.subr.bf16.mxu0 0
    %1168 = vmatpush2.bf16.msra.mxu0 0
    %1169 = vmatprep.subr.bf16.mxu0 0
    %1170 = vmatpush2.bf16.msra.mxu0 0
    %1171 = vmatprep.mubr.bf16.mxu0 0
    %1172 = vmatmul.mubr.bf16.gmra.mxu0 %v1137
    %v1173 = vpop.f32.mrf.mxu0
    %v1174 = vadd.f32 0.0, %v1173
    %v1175 = vpop.f32.mrf.mxu0
    %v1176 = vpop.f32.mrf.mxu0
    %v1177 = vpop.f32.mrf.mxu0
    %1178 = vdwg.mxu0
    %v1179 = vadd.f32 %v1116, %v1174
    %s1180 = scalar_lea.vmem [#allocation6], 12
    %v1181 = vld [vmem:[%s1180] ss:$16 sm:$0x3]
    %v1182 = vpack.c.bf16 %v1181, %v1181
    %v1183 = vld [vmem:[#allocation2 + $0xc0] sm:$0xf]
    %v1184 = vld [vmem:[#allocation2 + $0xc4] sm:$0xf]
    %v1185 = vld [vmem:[#allocation2 + $0xc8] sm:$0xf]
    %v1186 = vld [vmem:[#allocation2 + $0xcc] sm:$0xf]
    %v1191 = vunpack.c.l.b16 %v1183
    %v1192 = vunpack.c.l.b16 %v1184
    %v1193 = vunpack.c.l.b16 %v1185
    %v1194 = vunpack.c.l.b16 %v1186
    %v1195 = vpack.c.b16 %v1192, %v1191
    %v1196 = vpack.c.b16 %v1194, %v1193
    %v1200 = vsel %vm192, %v1182, 0
    %1202 = vmatprep.subr.bf16.mxu0 0
    %1203 = vmatpush1.bf16.msra.mxu0 0
    %1204 = vmatprep.subr.bf16.mxu0 0
    %1205 = vmatpush1.bf16.msra.mxu0 0
    %1206 = vmatprep.subr.bf16.mxu0 0
    %1207 = vmatpush1.bf16.msra.mxu0 0
    %1208 = vmatprep.subr.bf16.mxu0 0
    %1209 = vmatpush1.bf16.msra.mxu0 0
    %1210 = vmatprep.subr.bf16.mxu0 0
    %1211 = vmatpush1.bf16.msra.mxu0 0
    %1212 = vmatprep.subr.bf16.mxu0 0
    %1213 = vmatpush1.bf16.msra.mxu0 0
    %1214 = vmatprep.subr.bf16.mxu0 0
    %1215 = vmatpush1.bf16.msra.mxu0 %v1196
    %1216 = vmatprep.subr.bf16.mxu0 0
    %1217 = vmatpush1.bf16.msra.mxu0 %v1195
    %1218 = vmatprep.subr.bf16.mxu0 0
    %1219 = vmatpush2.bf16.msra.mxu0 0
    %1220 = vmatprep.subr.bf16.mxu0 0
    %1221 = vmatpush2.bf16.msra.mxu0 0
    %1222 = vmatprep.subr.bf16.mxu0 0
    %1223 = vmatpush2.bf16.msra.mxu0 0
    %1224 = vmatprep.subr.bf16.mxu0 0
    %1225 = vmatpush2.bf16.msra.mxu0 0
    %1226 = vmatprep.subr.bf16.mxu0 0
    %1227 = vmatpush2.bf16.msra.mxu0 0
    %1228 = vmatprep.subr.bf16.mxu0 0
    %1229 = vmatpush2.bf16.msra.mxu0 0
    %1230 = vmatprep.subr.bf16.mxu0 0
    %1231 = vmatpush2.bf16.msra.mxu0 0
    %1232 = vmatprep.subr.bf16.mxu0 0
    %1233 = vmatpush2.bf16.msra.mxu0 0
    %1234 = vmatprep.mubr.bf16.mxu0 0
    %1235 = vmatmul.mubr.bf16.gmra.mxu0 %v1200
    %v1236 = vpop.f32.mrf.mxu0
    %v1237 = vadd.f32 0.0, %v1236
    %v1238 = vpop.f32.mrf.mxu0
    %v1239 = vpop.f32.mrf.mxu0
    %v1240 = vpop.f32.mrf.mxu0
    %1241 = vdwg.mxu0
    %v1242 = vadd.f32 %v1179, %v1237
    %s1243 = scalar_lea.vmem [#allocation6], 13
    %v1244 = vld [vmem:[%s1243] ss:$16 sm:$0x3]
    %v1245 = vpack.c.bf16 %v1244, %v1244
    %v1246 = vld [vmem:[#allocation2 + $0xd0] sm:$0xf]
    %v1247 = vld [vmem:[#allocation2 + $0xd4] sm:$0xf]
    %v1248 = vld [vmem:[#allocation2 + $0xd8] sm:$0xf]
    %v1249 = vld [vmem:[#allocation2 + $0xdc] sm:$0xf]
    %v1254 = vunpack.c.l.b16 %v1246
    %v1255 = vunpack.c.l.b16 %v1247
    %v1256 = vunpack.c.l.b16 %v1248
    %v1257 = vunpack.c.l.b16 %v1249
    %v1258 = vpack.c.b16 %v1255, %v1254
    %v1259 = vpack.c.b16 %v1257, %v1256
    %v1263 = vsel %vm192, %v1245, 0
    %1265 = vmatprep.subr.bf16.mxu0 0
    %1266 = vmatpush1.bf16.msra.mxu0 0
    %1267 = vmatprep.subr.bf16.mxu0 0
    %1268 = vmatpush1.bf16.msra.mxu0 0
    %1269 = vmatprep.subr.bf16.mxu0 0
    %1270 = vmatpush1.bf16.msra.mxu0 0
    %1271 = vmatprep.subr.bf16.mxu0 0
    %1272 = vmatpush1.bf16.msra.mxu0 0
    %1273 = vmatprep.subr.bf16.mxu0 0
    %1274 = vmatpush1.bf16.msra.mxu0 0
    %1275 = vmatprep.subr.bf16.mxu0 0
    %1276 = vmatpush1.bf16.msra.mxu0 0
    %1277 = vmatprep.subr.bf16.mxu0 0
    %1278 = vmatpush1.bf16.msra.mxu0 %v1259
    %1279 = vmatprep.subr.bf16.mxu0 0
    %1280 = vmatpush1.bf16.msra.mxu0 %v1258
    %1281 = vmatprep.subr.bf16.mxu0 0
    %1282 = vmatpush2.bf16.msra.mxu0 0
    %1283 = vmatprep.subr.bf16.mxu0 0
    %1284 = vmatpush2.bf16.msra.mxu0 0
    %1285 = vmatprep.subr.bf16.mxu0 0
    %1286 = vmatpush2.bf16.msra.mxu0 0
    %1287 = vmatprep.subr.bf16.mxu0 0
    %1288 = vmatpush2.bf16.msra.mxu0 0
    %1289 = vmatprep.subr.bf16.mxu0 0
    %1290 = vmatpush2.bf16.msra.mxu0 0
    %1291 = vmatprep.subr.bf16.mxu0 0
    %1292 = vmatpush2.bf16.msra.mxu0 0
    %1293 = vmatprep.subr.bf16.mxu0 0
    %1294 = vmatpush2.bf16.msra.mxu0 0
    %1295 = vmatprep.subr.bf16.mxu0 0
    %1296 = vmatpush2.bf16.msra.mxu0 0
    %1297 = vmatprep.mubr.bf16.mxu0 0
    %1298 = vmatmul.mubr.bf16.gmra.mxu0 %v1263
    %v1299 = vpop.f32.mrf.mxu0
    %v1300 = vadd.f32 0.0, %v1299
    %v1301 = vpop.f32.mrf.mxu0
    %v1302 = vpop.f32.mrf.mxu0
    %v1303 = vpop.f32.mrf.mxu0
    %1304 = vdwg.mxu0
    %v1305 = vadd.f32 %v1242, %v1300
    %s1306 = scalar_lea.vmem [#allocation6], 14
    %v1307 = vld [vmem:[%s1306] ss:$16 sm:$0x3]
    %v1308 = vpack.c.bf16 %v1307, %v1307
    %v1309 = vld [vmem:[#allocation2 + $0xe0] sm:$0xf]
    %v1310 = vld [vmem:[#allocation2 + $0xe4] sm:$0xf]
    %v1311 = vld [vmem:[#allocation2 + $0xe8] sm:$0xf]
    %v1312 = vld [vmem:[#allocation2 + $0xec] sm:$0xf]
    %v1317 = vunpack.c.l.b16 %v1309
    %v1318 = vunpack.c.l.b16 %v1310
    %v1319 = vunpack.c.l.b16 %v1311
    %v1320 = vunpack.c.l.b16 %v1312
    %v1321 = vpack.c.b16 %v1318, %v1317
    %v1322 = vpack.c.b16 %v1320, %v1319
    %v1326 = vsel %vm192, %v1308, 0
    %1328 = vmatprep.subr.bf16.mxu0 0
    %1329 = vmatpush1.bf16.msra.mxu0 0
    %1330 = vmatprep.subr.bf16.mxu0 0
    %1331 = vmatpush1.bf16.msra.mxu0 0
    %1332 = vmatprep.subr.bf16.mxu0 0
    %1333 = vmatpush1.bf16.msra.mxu0 0
    %1334 = vmatprep.subr.bf16.mxu0 0
    %1335 = vmatpush1.bf16.msra.mxu0 0
    %1336 = vmatprep.subr.bf16.mxu0 0
    %1337 = vmatpush1.bf16.msra.mxu0 0
    %1338 = vmatprep.subr.bf16.mxu0 0
    %1339 = vmatpush1.bf16.msra.mxu0 0
    %1340 = vmatprep.subr.bf16.mxu0 0
    %1341 = vmatpush1.bf16.msra.mxu0 %v1322
    %1342 = vmatprep.subr.bf16.mxu0 0
    %1343 = vmatpush1.bf16.msra.mxu0 %v1321
    %1344 = vmatprep.subr.bf16.mxu0 0
    %1345 = vmatpush2.bf16.msra.mxu0 0
    %1346 = vmatprep.subr.bf16.mxu0 0
    %1347 = vmatpush2.bf16.msra.mxu0 0
    %1348 = vmatprep.subr.bf16.mxu0 0
    %1349 = vmatpush2.bf16.msra.mxu0 0
    %1350 = vmatprep.subr.bf16.mxu0 0
    %1351 = vmatpush2.bf16.msra.mxu0 0
    %1352 = vmatprep.subr.bf16.mxu0 0
    %1353 = vmatpush2.bf16.msra.mxu0 0
    %1354 = vmatprep.subr.bf16.mxu0 0
    %1355 = vmatpush2.bf16.msra.mxu0 0
    %1356 = vmatprep.subr.bf16.mxu0 0
    %1357 = vmatpush2.bf16.msra.mxu0 0
    %1358 = vmatprep.subr.bf16.mxu0 0
    %1359 = vmatpush2.bf16.msra.mxu0 0
    %1360 = vmatprep.mubr.bf16.mxu0 0
    %1361 = vmatmul.mubr.bf16.gmra.mxu0 %v1326
    %v1362 = vpop.f32.mrf.mxu0
    %v1363 = vadd.f32 0.0, %v1362
    %v1364 = vpop.f32.mrf.mxu0
    %v1365 = vpop.f32.mrf.mxu0
    %v1366 = vpop.f32.mrf.mxu0
    %1367 = vdwg.mxu0
    %v1368 = vadd.f32 %v1305, %v1363
    %s1369 = scalar_lea.vmem [#allocation6], 15
    %v1370 = vld [vmem:[%s1369] ss:$16 sm:$0x3]
    %v1371 = vpack.c.bf16 %v1370, %v1370
    %v1372 = vld [vmem:[#allocation2 + $0xf0] sm:$0xf]
    %v1373 = vld [vmem:[#allocation2 + $0xf4] sm:$0xf]
    %v1374 = vld [vmem:[#allocation2 + $0xf8] sm:$0xf]
    %v1375 = vld [vmem:[#allocation2 + $0xfc] sm:$0xf]
    %v1380 = vunpack.c.l.b16 %v1372
    %v1381 = vunpack.c.l.b16 %v1373
    %v1382 = vunpack.c.l.b16 %v1374
    %v1383 = vunpack.c.l.b16 %v1375
    %v1384 = vpack.c.b16 %v1381, %v1380
    %v1385 = vpack.c.b16 %v1383, %v1382
    %v1389 = vsel %vm192, %v1371, 0
    %1391 = vmatprep.subr.bf16.mxu0 0
    %1392 = vmatpush1.bf16.msra.mxu0 0
    %1393 = vmatprep.subr.bf16.mxu0 0
    %1394 = vmatpush1.bf16.msra.mxu0 0
    %1395 = vmatprep.subr.bf16.mxu0 0
    %1396 = vmatpush1.bf16.msra.mxu0 0
    %1397 = vmatprep.subr.bf16.mxu0 0
    %1398 = vmatpush1.bf16.msra.mxu0 0
    %1399 = vmatprep.subr.bf16.mxu0 0
    %1400 = vmatpush1.bf16.msra.mxu0 0
    %1401 = vmatprep.subr.bf16.mxu0 0
    %1402 = vmatpush1.bf16.msra.mxu0 0
    %1403 = vmatprep.subr.bf16.mxu0 0
    %1404 = vmatpush1.bf16.msra.mxu0 %v1385
    %1405 = vmatprep.subr.bf16.mxu0 0
    %1406 = vmatpush1.bf16.msra.mxu0 %v1384
    %1407 = vmatprep.subr.bf16.mxu0 0
    %1408 = vmatpush2.bf16.msra.mxu0 0
    %1409 = vmatprep.subr.bf16.mxu0 0
    %1410 = vmatpush2.bf16.msra.mxu0 0
    %1411 = vmatprep.subr.bf16.mxu0 0
    %1412 = vmatpush2.bf16.msra.mxu0 0
    %1413 = vmatprep.subr.bf16.mxu0 0
    %1414 = vmatpush2.bf16.msra.mxu0 0
    %1415 = vmatprep.subr.bf16.mxu0 0
    %1416 = vmatpush2.bf16.msra.mxu0 0
    %1417 = vmatprep.subr.bf16.mxu0 0
    %1418 = vmatpush2.bf16.msra.mxu0 0
    %1419 = vmatprep.subr.bf16.mxu0 0
    %1420 = vmatpush2.bf16.msra.mxu0 0
    %1421 = vmatprep.subr.bf16.mxu0 0
    %1422 = vmatpush2.bf16.msra.mxu0 0
    %1423 = vmatprep.mubr.bf16.mxu0 0
    %1424 = vmatmul.mubr.bf16.gmra.mxu0 %v1389
    %v1425 = vpop.f32.mrf.mxu0
    %v1426 = vadd.f32 0.0, %v1425
    %v1427 = vpop.f32.mrf.mxu0
    %v1428 = vpop.f32.mrf.mxu0
    %v1429 = vpop.f32.mrf.mxu0
    %1430 = vdwg.mxu0
    %v1431 = vadd.f32 %v1368, %v1426
    %v1432 = vld [vmem:[%s7] sm:$0x1]
    %v1434 = vlaneseq
    %v1435 = vshrl.u32 %v1434, 7
    %v1436 = vsub.s32 0, %v1435
    %v1437 = vrot.slane %v1432, %v1436
    %v1439 = vadd.f32 %v1431, %v1437
    %v1440 = vld [vmem:[#allocation7] sm:$0xff]
    %v1441 = vld [vmem:[#allocation7 + $0x8] sm:$0xff]
    %v1444 = vcombine.high %v1440, %v1440
    %v1445 = vcombine.high %v1441, %v1441
    %v1448 = vsel %vm117, %v1440, 0.0
    %v1449 = vsel %vm117, %v1444, 0.0
    %v1450 = vadd.f32 %v1448, %v1449
    %1451 = vadd.xlane.f32.xlu0 %v1450
    %v1452 = vpop.xlane.xlu0 %1451
    %v1453 = vsel %vm117, %v1441, 0.0
    %v1454 = vsel %vm117, %v1445, 0.0
    %v1455 = vadd.f32 %v1453, %v1454
    %1456 = vadd.xlane.f32.xlu0 %v1455
    %v1457 = vpop.xlane.xlu0 %1456
    %v1458 = vrcp.pop 256.0
    %v1459 = vmul.f32 %v1452, %v1458
    %v1460 = vmul.f32 %v1457, %v1458
    %v1461 = vld [vmem:[%s2] ss:$4 sm:$0xff]
    %v1462 = vlaneseq
    %v1463 = vshrl.u32 %v1462, 7
    %v1464 = vsub.s32 0, %v1463
    %v1465 = vrot.slane %v1459, %v1464
    %v1466 = vlaneseq
    %v1467 = vshrl.u32 %v1466, 7
    %v1468 = vsub.s32 0, %v1467
    %v1469 = vrot.slane %v1460, %v1468
    %v1471 = vlaneseq
    %v1472 = vshrl.u32 %v1471, 7
    %v1473 = vsub.s32 0, %v1472
    %v1474 = vrot.slane %v1461, %v1473
    %v1475 = vlaneseq
    %v1476 = vshrl.u32 %v1475, 7
    %v1477 = vsub.s32 1, %v1476
    %v1478 = vrot.slane %v1461, %v1477
    %v1479 = vlaneseq
    %v1480 = vshrl.u32 %v1479, 7
    %v1481 = vsub.s32 2, %v1480
    %v1482 = vrot.slane %v1461, %v1481
    %v1483 = vlaneseq
    %v1484 = vshrl.u32 %v1483, 7
    %v1485 = vsub.s32 3, %v1484
    %v1486 = vrot.slane %v1461, %v1485
    %v1487 = vlaneseq
    %v1488 = vshrl.u32 %v1487, 7
    %v1489 = vsub.s32 4, %v1488
    %v1490 = vrot.slane %v1461, %v1489
    %v1491 = vlaneseq
    %v1492 = vshrl.u32 %v1491, 7
    %v1493 = vsub.s32 5, %v1492
    %v1494 = vrot.slane %v1461, %v1493
    %v1495 = vlaneseq
    %v1496 = vshrl.u32 %v1495, 7
    %v1497 = vsub.s32 6, %v1496
    %v1498 = vrot.slane %v1461, %v1497
    %v1499 = vlaneseq
    %v1500 = vshrl.u32 %v1499, 7
    %v1501 = vsub.s32 7, %v1500
    %v1502 = vrot.slane %v1461, %v1501
    %1504 = vbcast.lane.b32.xlu0 %v1474, 256
    %v1505 = vpop.permute.xlu0 %1504
    %s1507 = sor.u32 256, 8
    %1508 = vbcast.lane.b32.xlu0 %v1474, %s1507
    %v1509 = vpop.permute.xlu0 %1508
    %s1511 = sor.u32 256, 16
    %1512 = vbcast.lane.b32.xlu0 %v1474, %s1511
    %v1513 = vpop.permute.xlu0 %1512
    %s1515 = sor.u32 256, 24
    %1516 = vbcast.lane.b32.xlu0 %v1474, %s1515
    %v1517 = vpop.permute.xlu0 %1516
    %s1519 = sor.u32 256, 32
    %1520 = vbcast.lane.b32.xlu0 %v1474, %s1519
    %v1521 = vpop.permute.xlu0 %1520
    %s1523 = sor.u32 256, 40
    %1524 = vbcast.lane.b32.xlu0 %v1474, %s1523
    %v1525 = vpop.permute.xlu0 %1524
    %s1527 = sor.u32 256, 48
    %1528 = vbcast.lane.b32.xlu0 %v1474, %s1527
    %v1529 = vpop.permute.xlu0 %1528
    %s1531 = sor.u32 256, 56
    %1532 = vbcast.lane.b32.xlu0 %v1474, %s1531
    %v1533 = vpop.permute.xlu0 %1532
    %s1535 = sor.u32 256, 64
    %1536 = vbcast.lane.b32.xlu0 %v1474, %s1535
    %v1537 = vpop.permute.xlu0 %1536
    %s1539 = sor.u32 256, 72
    %1540 = vbcast.lane.b32.xlu0 %v1474, %s1539
    %v1541 = vpop.permute.xlu0 %1540
    %s1543 = sor.u32 256, 80
    %1544 = vbcast.lane.b32.xlu0 %v1474, %s1543
    %v1545 = vpop.permute.xlu0 %1544
    %s1547 = sor.u32 256, 88
    %1548 = vbcast.lane.b32.xlu0 %v1474, %s1547
    %v1549 = vpop.permute.xlu0 %1548
    %s1551 = sor.u32 256, 96
    %1552 = vbcast.lane.b32.xlu0 %v1474, %s1551
    %v1553 = vpop.permute.xlu0 %1552
    %s1555 = sor.u32 256, 104
    %1556 = vbcast.lane.b32.xlu0 %v1474, %s1555
    %v1557 = vpop.permute.xlu0 %1556
    %s1559 = sor.u32 256, 112
    %1560 = vbcast.lane.b32.xlu0 %v1474, %s1559
    %v1561 = vpop.permute.xlu0 %1560
    %s1563 = sor.u32 256, 120
    %1564 = vbcast.lane.b32.xlu0 %v1474, %s1563
    %v1565 = vpop.permute.xlu0 %1564
    %1567 = vbcast.lane.b32.xlu0 %v1478, 256
    %v1568 = vpop.permute.xlu0 %1567
    %s1570 = sor.u32 256, 8
    %1571 = vbcast.lane.b32.xlu0 %v1478, %s1570
    %v1572 = vpop.permute.xlu0 %1571
    %s1574 = sor.u32 256, 16
    %1575 = vbcast.lane.b32.xlu0 %v1478, %s1574
    %v1576 = vpop.permute.xlu0 %1575
    %s1578 = sor.u32 256, 24
    %1579 = vbcast.lane.b32.xlu0 %v1478, %s1578
    %v1580 = vpop.permute.xlu0 %1579
    %s1582 = sor.u32 256, 32
    %1583 = vbcast.lane.b32.xlu0 %v1478, %s1582
    %v1584 = vpop.permute.xlu0 %1583
    %s1586 = sor.u32 256, 40
    %1587 = vbcast.lane.b32.xlu0 %v1478, %s1586
    %v1588 = vpop.permute.xlu0 %1587
    %s1590 = sor.u32 256, 48
    %1591 = vbcast.lane.b32.xlu0 %v1478, %s1590
    %v1592 = vpop.permute.xlu0 %1591
    %s1594 = sor.u32 256, 56
    %1595 = vbcast.lane.b32.xlu0 %v1478, %s1594
    %v1596 = vpop.permute.xlu0 %1595
    %s1598 = sor.u32 256, 64
    %1599 = vbcast.lane.b32.xlu0 %v1478, %s1598
    %v1600 = vpop.permute.xlu0 %1599
    %s1602 = sor.u32 256, 72
    %1603 = vbcast.lane.b32.xlu0 %v1478, %s1602
    %v1604 = vpop.permute.xlu0 %1603
    %s1606 = sor.u32 256, 80
    %1607 = vbcast.lane.b32.xlu0 %v1478, %s1606
    %v1608 = vpop.permute.xlu0 %1607
    %s1610 = sor.u32 256, 88
    %1611 = vbcast.lane.b32.xlu0 %v1478, %s1610
    %v1612 = vpop.permute.xlu0 %1611
    %s1614 = sor.u32 256, 96
    %1615 = vbcast.lane.b32.xlu0 %v1478, %s1614
    %v1616 = vpop.permute.xlu0 %1615
    %s1618 = sor.u32 256, 104
    %1619 = vbcast.lane.b32.xlu0 %v1478, %s1618
    %v1620 = vpop.permute.xlu0 %1619
    %s1622 = sor.u32 256, 112
    %1623 = vbcast.lane.b32.xlu0 %v1478, %s1622
    %v1624 = vpop.permute.xlu0 %1623
    %s1626 = sor.u32 256, 120
    %1627 = vbcast.lane.b32.xlu0 %v1478, %s1626
    %v1628 = vpop.permute.xlu0 %1627
    %1630 = vbcast.lane.b32.xlu0 %v1482, 256
    %v1631 = vpop.permute.xlu0 %1630
    %s1633 = sor.u32 256, 8
    %1634 = vbcast.lane.b32.xlu0 %v1482, %s1633
    %v1635 = vpop.permute.xlu0 %1634
    %s1637 = sor.u32 256, 16
    %1638 = vbcast.lane.b32.xlu0 %v1482, %s1637
    %v1639 = vpop.permute.xlu0 %1638
    %s1641 = sor.u32 256, 24
    %1642 = vbcast.lane.b32.xlu0 %v1482, %s1641
    %v1643 = vpop.permute.xlu0 %1642
    %s1645 = sor.u32 256, 32
    %1646 = vbcast.lane.b32.xlu0 %v1482, %s1645
    %v1647 = vpop.permute.xlu0 %1646
    %s1649 = sor.u32 256, 40
    %1650 = vbcast.lane.b32.xlu0 %v1482, %s1649
    %v1651 = vpop.permute.xlu0 %1650
    %s1653 = sor.u32 256, 48
    %1654 = vbcast.lane.b32.xlu0 %v1482, %s1653
    %v1655 = vpop.permute.xlu0 %1654
    %s1657 = sor.u32 256, 56
    %1658 = vbcast.lane.b32.xlu0 %v1482, %s1657
    %v1659 = vpop.permute.xlu0 %1658
    %s1661 = sor.u32 256, 64
    %1662 = vbcast.lane.b32.xlu0 %v1482, %s1661
    %v1663 = vpop.permute.xlu0 %1662
    %s1665 = sor.u32 256, 72
    %1666 = vbcast.lane.b32.xlu0 %v1482, %s1665
    %v1667 = vpop.permute.xlu0 %1666
    %s1669 = sor.u32 256, 80
    %1670 = vbcast.lane.b32.xlu0 %v1482, %s1669
    %v1671 = vpop.permute.xlu0 %1670
    %s1673 = sor.u32 256, 88
    %1674 = vbcast.lane.b32.xlu0 %v1482, %s1673
    %v1675 = vpop.permute.xlu0 %1674
    %s1677 = sor.u32 256, 96
    %1678 = vbcast.lane.b32.xlu0 %v1482, %s1677
    %v1679 = vpop.permute.xlu0 %1678
    %s1681 = sor.u32 256, 104
    %1682 = vbcast.lane.b32.xlu0 %v1482, %s1681
    %v1683 = vpop.permute.xlu0 %1682
    %s1685 = sor.u32 256, 112
    %1686 = vbcast.lane.b32.xlu0 %v1482, %s1685
    %v1687 = vpop.permute.xlu0 %1686
    %s1689 = sor.u32 256, 120
    %1690 = vbcast.lane.b32.xlu0 %v1482, %s1689
    %v1691 = vpop.permute.xlu0 %1690
    %1693 = vbcast.lane.b32.xlu0 %v1486, 256
    %v1694 = vpop.permute.xlu0 %1693
    %s1696 = sor.u32 256, 8
    %1697 = vbcast.lane.b32.xlu0 %v1486, %s1696
    %v1698 = vpop.permute.xlu0 %1697
    %s1700 = sor.u32 256, 16
    %1701 = vbcast.lane.b32.xlu0 %v1486, %s1700
    %v1702 = vpop.permute.xlu0 %1701
    %s1704 = sor.u32 256, 24
    %1705 = vbcast.lane.b32.xlu0 %v1486, %s1704
    %v1706 = vpop.permute.xlu0 %1705
    %s1708 = sor.u32 256, 32
    %1709 = vbcast.lane.b32.xlu0 %v1486, %s1708
    %v1710 = vpop.permute.xlu0 %1709
    %s1712 = sor.u32 256, 40
    %1713 = vbcast.lane.b32.xlu0 %v1486, %s1712
    %v1714 = vpop.permute.xlu0 %1713
    %s1716 = sor.u32 256, 48
    %1717 = vbcast.lane.b32.xlu0 %v1486, %s1716
    %v1718 = vpop.permute.xlu0 %1717
    %s1720 = sor.u32 256, 56
    %1721 = vbcast.lane.b32.xlu0 %v1486, %s1720
    %v1722 = vpop.permute.xlu0 %1721
    %s1724 = sor.u32 256, 64
    %1725 = vbcast.lane.b32.xlu0 %v1486, %s1724
    %v1726 = vpop.permute.xlu0 %1725
    %s1728 = sor.u32 256, 72
    %1729 = vbcast.lane.b32.xlu0 %v1486, %s1728
    %v1730 = vpop.permute.xlu0 %1729
    %s1732 = sor.u32 256, 80
    %1733 = vbcast.lane.b32.xlu0 %v1486, %s1732
    %v1734 = vpop.permute.xlu0 %1733
    %s1736 = sor.u32 256, 88
    %1737 = vbcast.lane.b32.xlu0 %v1486, %s1736
    %v1738 = vpop.permute.xlu0 %1737
    %s1740 = sor.u32 256, 96
    %1741 = vbcast.lane.b32.xlu0 %v1486, %s1740
    %v1742 = vpop.permute.xlu0 %1741
    %s1744 = sor.u32 256, 104
    %1745 = vbcast.lane.b32.xlu0 %v1486, %s1744
    %v1746 = vpop.permute.xlu0 %1745
    %s1748 = sor.u32 256, 112
    %1749 = vbcast.lane.b32.xlu0 %v1486, %s1748
    %v1750 = vpop.permute.xlu0 %1749
    %s1752 = sor.u32 256, 120
    %1753 = vbcast.lane.b32.xlu0 %v1486, %s1752
    %v1754 = vpop.permute.xlu0 %1753
    %1756 = vbcast.lane.b32.xlu0 %v1490, 256
    %v1757 = vpop.permute.xlu0 %1756
    %s1759 = sor.u32 256, 8
    %1760 = vbcast.lane.b32.xlu0 %v1490, %s1759
    %v1761 = vpop.permute.xlu0 %1760
    %s1763 = sor.u32 256, 16
    %1764 = vbcast.lane.b32.xlu0 %v1490, %s1763
    %v1765 = vpop.permute.xlu0 %1764
    %s1767 = sor.u32 256, 24
    %1768 = vbcast.lane.b32.xlu0 %v1490, %s1767
    %v1769 = vpop.permute.xlu0 %1768
    %s1771 = sor.u32 256, 32
    %1772 = vbcast.lane.b32.xlu0 %v1490, %s1771
    %v1773 = vpop.permute.xlu0 %1772
    %s1775 = sor.u32 256, 40
    %1776 = vbcast.lane.b32.xlu0 %v1490, %s1775
    %v1777 = vpop.permute.xlu0 %1776
    %s1779 = sor.u32 256, 48
    %1780 = vbcast.lane.b32.xlu0 %v1490, %s1779
    %v1781 = vpop.permute.xlu0 %1780
    %s1783 = sor.u32 256, 56
    %1784 = vbcast.lane.b32.xlu0 %v1490, %s1783
    %v1785 = vpop.permute.xlu0 %1784
    %s1787 = sor.u32 256, 64
    %1788 = vbcast.lane.b32.xlu0 %v1490, %s1787
    %v1789 = vpop.permute.xlu0 %1788
    %s1791 = sor.u32 256, 72
    %1792 = vbcast.lane.b32.xlu0 %v1490, %s1791
    %v1793 = vpop.permute.xlu0 %1792
    %s1795 = sor.u32 256, 80
    %1796 = vbcast.lane.b32.xlu0 %v1490, %s1795
    %v1797 = vpop.permute.xlu0 %1796
    %s1799 = sor.u32 256, 88
    %1800 = vbcast.lane.b32.xlu0 %v1490, %s1799
    %v1801 = vpop.permute.xlu0 %1800
    %s1803 = sor.u32 256, 96
    %1804 = vbcast.lane.b32.xlu0 %v1490, %s1803
    %v1805 = vpop.permute.xlu0 %1804
    %s1807 = sor.u32 256, 104
    %1808 = vbcast.lane.b32.xlu0 %v1490, %s1807
    %v1809 = vpop.permute.xlu0 %1808
    %s1811 = sor.u32 256, 112
    %1812 = vbcast.lane.b32.xlu0 %v1490, %s1811
    %v1813 = vpop.permute.xlu0 %1812
    %s1815 = sor.u32 256, 120
    %1816 = vbcast.lane.b32.xlu0 %v1490, %s1815
    %v1817 = vpop.permute.xlu0 %1816
    %1819 = vbcast.lane.b32.xlu0 %v1494, 256
    %v1820 = vpop.permute.xlu0 %1819
    %s1822 = sor.u32 256, 8
    %1823 = vbcast.lane.b32.xlu0 %v1494, %s1822
    %v1824 = vpop.permute.xlu0 %1823
    %s1826 = sor.u32 256, 16
    %1827 = vbcast.lane.b32.xlu0 %v1494, %s1826
    %v1828 = vpop.permute.xlu0 %1827
    %s1830 = sor.u32 256, 24
    %1831 = vbcast.lane.b32.xlu0 %v1494, %s1830
    %v1832 = vpop.permute.xlu0 %1831
    %s1834 = sor.u32 256, 32
    %1835 = vbcast.lane.b32.xlu0 %v1494, %s1834
    %v1836 = vpop.permute.xlu0 %1835
    %s1838 = sor.u32 256, 40
    %1839 = vbcast.lane.b32.xlu0 %v1494, %s1838
    %v1840 = vpop.permute.xlu0 %1839
    %s1842 = sor.u32 256, 48
    %1843 = vbcast.lane.b32.xlu0 %v1494, %s1842
    %v1844 = vpop.permute.xlu0 %1843
    %s1846 = sor.u32 256, 56
    %1847 = vbcast.lane.b32.xlu0 %v1494, %s1846
    %v1848 = vpop.permute.xlu0 %1847
    %s1850 = sor.u32 256, 64
    %1851 = vbcast.lane.b32.xlu0 %v1494, %s1850
    %v1852 = vpop.permute.xlu0 %1851
    %s1854 = sor.u32 256, 72
    %1855 = vbcast.lane.b32.xlu0 %v1494, %s1854
    %v1856 = vpop.permute.xlu0 %1855
    %s1858 = sor.u32 256, 80
    %1859 = vbcast.lane.b32.xlu0 %v1494, %s1858
    %v1860 = vpop.permute.xlu0 %1859
    %s1862 = sor.u32 256, 88
    %1863 = vbcast.lane.b32.xlu0 %v1494, %s1862
    %v1864 = vpop.permute.xlu0 %1863
    %s1866 = sor.u32 256, 96
    %1867 = vbcast.lane.b32.xlu0 %v1494, %s1866
    %v1868 = vpop.permute.xlu0 %1867
    %s1870 = sor.u32 256, 104
    %1871 = vbcast.lane.b32.xlu0 %v1494, %s1870
    %v1872 = vpop.permute.xlu0 %1871
    %s1874 = sor.u32 256, 112
    %1875 = vbcast.lane.b32.xlu0 %v1494, %s1874
    %v1876 = vpop.permute.xlu0 %1875
    %s1878 = sor.u32 256, 120
    %1879 = vbcast.lane.b32.xlu0 %v1494, %s1878
    %v1880 = vpop.permute.xlu0 %1879
    %1882 = vbcast.lane.b32.xlu0 %v1498, 256
    %v1883 = vpop.permute.xlu0 %1882
    %s1885 = sor.u32 256, 8
    %1886 = vbcast.lane.b32.xlu0 %v1498, %s1885
    %v1887 = vpop.permute.xlu0 %1886
    %s1889 = sor.u32 256, 16
    %1890 = vbcast.lane.b32.xlu0 %v1498, %s1889
    %v1891 = vpop.permute.xlu0 %1890
    %s1893 = sor.u32 256, 24
    %1894 = vbcast.lane.b32.xlu0 %v1498, %s1893
    %v1895 = vpop.permute.xlu0 %1894
    %s1897 = sor.u32 256, 32
    %1898 = vbcast.lane.b32.xlu0 %v1498, %s1897
    %v1899 = vpop.permute.xlu0 %1898
    %s1901 = sor.u32 256, 40
    %1902 = vbcast.lane.b32.xlu0 %v1498, %s1901
    %v1903 = vpop.permute.xlu0 %1902
    %s1905 = sor.u32 256, 48
    %1906 = vbcast.lane.b32.xlu0 %v1498, %s1905
    %v1907 = vpop.permute.xlu0 %1906
    %s1909 = sor.u32 256, 56
    %1910 = vbcast.lane.b32.xlu0 %v1498, %s1909
    %v1911 = vpop.permute.xlu0 %1910
    %s1913 = sor.u32 256, 64
    %1914 = vbcast.lane.b32.xlu0 %v1498, %s1913
    %v1915 = vpop.permute.xlu0 %1914
    %s1917 = sor.u32 256, 72
    %1918 = vbcast.lane.b32.xlu0 %v1498, %s1917
    %v1919 = vpop.permute.xlu0 %1918
    %s1921 = sor.u32 256, 80
    %1922 = vbcast.lane.b32.xlu0 %v1498, %s1921
    %v1923 = vpop.permute.xlu0 %1922
    %s1925 = sor.u32 256, 88
    %1926 = vbcast.lane.b32.xlu0 %v1498, %s1925
    %v1927 = vpop.permute.xlu0 %1926
    %s1929 = sor.u32 256, 96
    %1930 = vbcast.lane.b32.xlu0 %v1498, %s1929
    %v1931 = vpop.permute.xlu0 %1930
    %s1933 = sor.u32 256, 104
    %1934 = vbcast.lane.b32.xlu0 %v1498, %s1933
    %v1935 = vpop.permute.xlu0 %1934
    %s1937 = sor.u32 256, 112
    %1938 = vbcast.lane.b32.xlu0 %v1498, %s1937
    %v1939 = vpop.permute.xlu0 %1938
    %s1941 = sor.u32 256, 120
    %1942 = vbcast.lane.b32.xlu0 %v1498, %s1941
    %v1943 = vpop.permute.xlu0 %1942
    %1945 = vbcast.lane.b32.xlu0 %v1502, 256
    %v1946 = vpop.permute.xlu0 %1945
    %s1948 = sor.u32 256, 8
    %1949 = vbcast.lane.b32.xlu0 %v1502, %s1948
    %v1950 = vpop.permute.xlu0 %1949
    %s1952 = sor.u32 256, 16
    %1953 = vbcast.lane.b32.xlu0 %v1502, %s1952
    %v1954 = vpop.permute.xlu0 %1953
    %s1956 = sor.u32 256, 24
    %1957 = vbcast.lane.b32.xlu0 %v1502, %s1956
    %v1958 = vpop.permute.xlu0 %1957
    %s1960 = sor.u32 256, 32
    %1961 = vbcast.lane.b32.xlu0 %v1502, %s1960
    %v1962 = vpop.permute.xlu0 %1961
    %s1964 = sor.u32 256, 40
    %1965 = vbcast.lane.b32.xlu0 %v1502, %s1964
    %v1966 = vpop.permute.xlu0 %1965
    %s1968 = sor.u32 256, 48
    %1969 = vbcast.lane.b32.xlu0 %v1502, %s1968
    %v1970 = vpop.permute.xlu0 %1969
    %s1972 = sor.u32 256, 56
    %1973 = vbcast.lane.b32.xlu0 %v1502, %s1972
    %v1974 = vpop.permute.xlu0 %1973
    %s1976 = sor.u32 256, 64
    %1977 = vbcast.lane.b32.xlu0 %v1502, %s1976
    %v1978 = vpop.permute.xlu0 %1977
    %s1980 = sor.u32 256, 72
    %1981 = vbcast.lane.b32.xlu0 %v1502, %s1980
    %v1982 = vpop.permute.xlu0 %1981
    %s1984 = sor.u32 256, 80
    %1985 = vbcast.lane.b32.xlu0 %v1502, %s1984
    %v1986 = vpop.permute.xlu0 %1985
    %s1988 = sor.u32 256, 88
    %1989 = vbcast.lane.b32.xlu0 %v1502, %s1988
    %v1990 = vpop.permute.xlu0 %1989
    %s1992 = sor.u32 256, 96
    %1993 = vbcast.lane.b32.xlu0 %v1502, %s1992
    %v1994 = vpop.permute.xlu0 %1993
    %s1996 = sor.u32 256, 104
    %1997 = vbcast.lane.b32.xlu0 %v1502, %s1996
    %v1998 = vpop.permute.xlu0 %1997
    %s2000 = sor.u32 256, 112
    %2001 = vbcast.lane.b32.xlu0 %v1502, %s2000
    %v2002 = vpop.permute.xlu0 %2001
    %s2004 = sor.u32 256, 120
    %2005 = vbcast.lane.b32.xlu0 %v1502, %s2004
    %v2006 = vpop.permute.xlu0 %2005
    %v2135 = vmul.f32 %v1465, %v1505
    %v2136 = vmul.f32 %v1465, %v1509
    %v2137 = vmul.f32 %v1465, %v1513
    %v2138 = vmul.f32 %v1465, %v1517
    %v2139 = vmul.f32 %v1465, %v1521
    %v2140 = vmul.f32 %v1465, %v1525
    %v2141 = vmul.f32 %v1465, %v1529
    %v2142 = vmul.f32 %v1465, %v1533
    %v2143 = vmul.f32 %v1465, %v1537
    %v2144 = vmul.f32 %v1465, %v1541
    %v2145 = vmul.f32 %v1465, %v1545
    %v2146 = vmul.f32 %v1465, %v1549
    %v2147 = vmul.f32 %v1465, %v1553
    %v2148 = vmul.f32 %v1465, %v1557
    %v2149 = vmul.f32 %v1465, %v1561
    %v2150 = vmul.f32 %v1465, %v1565
    %v2151 = vmul.f32 %v1465, %v1568
    %v2152 = vmul.f32 %v1465, %v1572
    %v2153 = vmul.f32 %v1465, %v1576
    %v2154 = vmul.f32 %v1465, %v1580
    %v2155 = vmul.f32 %v1465, %v1584
    %v2156 = vmul.f32 %v1465, %v1588
    %v2157 = vmul.f32 %v1465, %v1592
    %v2158 = vmul.f32 %v1465, %v1596
    %v2159 = vmul.f32 %v1465, %v1600
    %v2160 = vmul.f32 %v1465, %v1604
    %v2161 = vmul.f32 %v1465, %v1608
    %v2162 = vmul.f32 %v1465, %v1612
    %v2163 = vmul.f32 %v1465, %v1616
    %v2164 = vmul.f32 %v1465, %v1620
    %v2165 = vmul.f32 %v1465, %v1624
    %v2166 = vmul.f32 %v1465, %v1628
    %v2167 = vmul.f32 %v1465, %v1631
    %v2168 = vmul.f32 %v1465, %v1635
    %v2169 = vmul.f32 %v1465, %v1639
    %v2170 = vmul.f32 %v1465, %v1643
    %v2171 = vmul.f32 %v1465, %v1647
    %v2172 = vmul.f32 %v1465, %v1651
    %v2173 = vmul.f32 %v1465, %v1655
    %v2174 = vmul.f32 %v1465, %v1659
    %v2175 = vmul.f32 %v1465, %v1663
    %v2176 = vmul.f32 %v1465, %v1667
    %v2177 = vmul.f32 %v1465, %v1671
    %v2178 = vmul.f32 %v1465, %v1675
    %v2179 = vmul.f32 %v1465, %v1679
    %v2180 = vmul.f32 %v1465, %v1683
    %v2181 = vmul.f32 %v1465, %v1687
    %v2182 = vmul.f32 %v1465, %v1691
    %v2183 = vmul.f32 %v1465, %v1694
    %v2184 = vmul.f32 %v1465, %v1698
    %v2185 = vmul.f32 %v1465, %v1702
    %v2186 = vmul.f32 %v1465, %v1706
    %v2187 = vmul.f32 %v1465, %v1710
    %v2188 = vmul.f32 %v1465, %v1714
    %v2189 = vmul.f32 %v1465, %v1718
    %v2190 = vmul.f32 %v1465, %v1722
    %v2191 = vmul.f32 %v1465, %v1726
    %v2192 = vmul.f32 %v1465, %v1730
    %v2193 = vmul.f32 %v1465, %v1734
    %v2194 = vmul.f32 %v1465, %v1738
    %v2195 = vmul.f32 %v1465, %v1742
    %v2196 = vmul.f32 %v1465, %v1746
    %v2197 = vmul.f32 %v1465, %v1750
    %v2198 = vmul.f32 %v1465, %v1754
    %v2199 = vmul.f32 %v1465, %v1757
    %v2200 = vmul.f32 %v1465, %v1761
    %v2201 = vmul.f32 %v1465, %v1765
    %v2202 = vmul.f32 %v1465, %v1769
    %v2203 = vmul.f32 %v1465, %v1773
    %v2204 = vmul.f32 %v1465, %v1777
    %v2205 = vmul.f32 %v1465, %v1781
    %v2206 = vmul.f32 %v1465, %v1785
    %v2207 = vmul.f32 %v1465, %v1789
    %v2208 = vmul.f32 %v1465, %v1793
    %v2209 = vmul.f32 %v1465, %v1797
    %v2210 = vmul.f32 %v1465, %v1801
    %v2211 = vmul.f32 %v1465, %v1805
    %v2212 = vmul.f32 %v1465, %v1809
    %v2213 = vmul.f32 %v1465, %v1813
    %v2214 = vmul.f32 %v1465, %v1817
    %v2215 = vmul.f32 %v1465, %v1820
    %v2216 = vmul.f32 %v1465, %v1824
    %v2217 = vmul.f32 %v1465, %v1828
    %v2218 = vmul.f32 %v1465, %v1832
    %v2219 = vmul.f32 %v1465, %v1836
    %v2220 = vmul.f32 %v1465, %v1840
    %v2221 = vmul.f32 %v1465, %v1844
    %v2222 = vmul.f32 %v1465, %v1848
    %v2223 = vmul.f32 %v1465, %v1852
    %v2224 = vmul.f32 %v1465, %v1856
    %v2225 = vmul.f32 %v1465, %v1860
    %v2226 = vmul.f32 %v1465, %v1864
    %v2227 = vmul.f32 %v1465, %v1868
    %v2228 = vmul.f32 %v1465, %v1872
    %v2229 = vmul.f32 %v1465, %v1876
    %v2230 = vmul.f32 %v1465, %v1880
    %v2231 = vmul.f32 %v1465, %v1883
    %v2232 = vmul.f32 %v1465, %v1887
    %v2233 = vmul.f32 %v1465, %v1891
    %v2234 = vmul.f32 %v1465, %v1895
    %v2235 = vmul.f32 %v1465, %v1899
    %v2236 = vmul.f32 %v1465, %v1903
    %v2237 = vmul.f32 %v1465, %v1907
    %v2238 = vmul.f32 %v1465, %v1911
    %v2239 = vmul.f32 %v1465, %v1915
    %v2240 = vmul.f32 %v1465, %v1919
    %v2241 = vmul.f32 %v1465, %v1923
    %v2242 = vmul.f32 %v1465, %v1927
    %v2243 = vmul.f32 %v1465, %v1931
    %v2244 = vmul.f32 %v1465, %v1935
    %v2245 = vmul.f32 %v1465, %v1939
    %v2246 = vmul.f32 %v1465, %v1943
    %v2247 = vmul.f32 %v1465, %v1946
    %v2248 = vmul.f32 %v1465, %v1950
    %v2249 = vmul.f32 %v1465, %v1954
    %v2250 = vmul.f32 %v1465, %v1958
    %v2251 = vmul.f32 %v1465, %v1962
    %v2252 = vmul.f32 %v1465, %v1966
    %v2253 = vmul.f32 %v1465, %v1970
    %v2254 = vmul.f32 %v1465, %v1974
    %v2255 = vmul.f32 %v1465, %v1978
    %v2256 = vmul.f32 %v1465, %v1982
    %v2257 = vmul.f32 %v1465, %v1986
    %v2258 = vmul.f32 %v1465, %v1990
    %v2259 = vmul.f32 %v1465, %v1994
    %v2260 = vmul.f32 %v1465, %v1998
    %v2261 = vmul.f32 %v1465, %v2002
    %v2262 = vmul.f32 %v1465, %v2006
    %v2263 = vmul.f32 %v1469, %v1505
    %v2264 = vmul.f32 %v1469, %v1509
    %v2265 = vmul.f32 %v1469, %v1513
    %v2266 = vmul.f32 %v1469, %v1517
    %v2267 = vmul.f32 %v1469, %v1521
    %v2268 = vmul.f32 %v1469, %v1525
    %v2269 = vmul.f32 %v1469, %v1529
    %v2270 = vmul.f32 %v1469, %v1533
    %v2271 = vmul.f32 %v1469, %v1537
    %v2272 = vmul.f32 %v1469, %v1541
    %v2273 = vmul.f32 %v1469, %v1545
    %v2274 = vmul.f32 %v1469, %v1549
    %v2275 = vmul.f32 %v1469, %v1553
    %v2276 = vmul.f32 %v1469, %v1557
    %v2277 = vmul.f32 %v1469, %v1561
    %v2278 = vmul.f32 %v1469, %v1565
    %v2279 = vmul.f32 %v1469, %v1568
    %v2280 = vmul.f32 %v1469, %v1572
    %v2281 = vmul.f32 %v1469, %v1576
    %v2282 = vmul.f32 %v1469, %v1580
    %v2283 = vmul.f32 %v1469, %v1584
    %v2284 = vmul.f32 %v1469, %v1588
    %v2285 = vmul.f32 %v1469, %v1592
    %v2286 = vmul.f32 %v1469, %v1596
    %v2287 = vmul.f32 %v1469, %v1600
    %v2288 = vmul.f32 %v1469, %v1604
    %v2289 = vmul.f32 %v1469, %v1608
    %v2290 = vmul.f32 %v1469, %v1612
    %v2291 = vmul.f32 %v1469, %v1616
    %v2292 = vmul.f32 %v1469, %v1620
    %v2293 = vmul.f32 %v1469, %v1624
    %v2294 = vmul.f32 %v1469, %v1628
    %v2295 = vmul.f32 %v1469, %v1631
    %v2296 = vmul.f32 %v1469, %v1635
    %v2297 = vmul.f32 %v1469, %v1639
    %v2298 = vmul.f32 %v1469, %v1643
    %v2299 = vmul.f32 %v1469, %v1647
    %v2300 = vmul.f32 %v1469, %v1651
    %v2301 = vmul.f32 %v1469, %v1655
    %v2302 = vmul.f32 %v1469, %v1659
    %v2303 = vmul.f32 %v1469, %v1663
    %v2304 = vmul.f32 %v1469, %v1667
    %v2305 = vmul.f32 %v1469, %v1671
    %v2306 = vmul.f32 %v1469, %v1675
    %v2307 = vmul.f32 %v1469, %v1679
    %v2308 = vmul.f32 %v1469, %v1683
    %v2309 = vmul.f32 %v1469, %v1687
    %v2310 = vmul.f32 %v1469, %v1691
    %v2311 = vmul.f32 %v1469, %v1694
    %v2312 = vmul.f32 %v1469, %v1698
    %v2313 = vmul.f32 %v1469, %v1702
    %v2314 = vmul.f32 %v1469, %v1706
    %v2315 = vmul.f32 %v1469, %v1710
    %v2316 = vmul.f32 %v1469, %v1714
    %v2317 = vmul.f32 %v1469, %v1718
    %v2318 = vmul.f32 %v1469, %v1722
    %v2319 = vmul.f32 %v1469, %v1726
    %v2320 = vmul.f32 %v1469, %v1730
    %v2321 = vmul.f32 %v1469, %v1734
    %v2322 = vmul.f32 %v1469, %v1738
    %v2323 = vmul.f32 %v1469, %v1742
    %v2324 = vmul.f32 %v1469, %v1746
    %v2325 = vmul.f32 %v1469, %v1750
    %v2326 = vmul.f32 %v1469, %v1754
    %v2327 = vmul.f32 %v1469, %v1757
    %v2328 = vmul.f32 %v1469, %v1761
    %v2329 = vmul.f32 %v1469, %v1765
    %v2330 = vmul.f32 %v1469, %v1769
    %v2331 = vmul.f32 %v1469, %v1773
    %v2332 = vmul.f32 %v1469, %v1777
    %v2333 = vmul.f32 %v1469, %v1781
    %v2334 = vmul.f32 %v1469, %v1785
    %v2335 = vmul.f32 %v1469, %v1789
    %v2336 = vmul.f32 %v1469, %v1793
    %v2337 = vmul.f32 %v1469, %v1797
    %v2338 = vmul.f32 %v1469, %v1801
    %v2339 = vmul.f32 %v1469, %v1805
    %v2340 = vmul.f32 %v1469, %v1809
    %v2341 = vmul.f32 %v1469, %v1813
    %v2342 = vmul.f32 %v1469, %v1817
    %v2343 = vmul.f32 %v1469, %v1820
    %v2344 = vmul.f32 %v1469, %v1824
    %v2345 = vmul.f32 %v1469, %v1828
    %v2346 = vmul.f32 %v1469, %v1832
    %v2347 = vmul.f32 %v1469, %v1836
    %v2348 = vmul.f32 %v1469, %v1840
    %v2349 = vmul.f32 %v1469, %v1844
    %v2350 = vmul.f32 %v1469, %v1848
    %v2351 = vmul.f32 %v1469, %v1852
    %v2352 = vmul.f32 %v1469, %v1856
    %v2353 = vmul.f32 %v1469, %v1860
    %v2354 = vmul.f32 %v1469, %v1864
    %v2355 = vmul.f32 %v1469, %v1868
    %v2356 = vmul.f32 %v1469, %v1872
    %v2357 = vmul.f32 %v1469, %v1876
    %v2358 = vmul.f32 %v1469, %v1880
    %v2359 = vmul.f32 %v1469, %v1883
    %v2360 = vmul.f32 %v1469, %v1887
    %v2361 = vmul.f32 %v1469, %v1891
    %v2362 = vmul.f32 %v1469, %v1895
    %v2363 = vmul.f32 %v1469, %v1899
    %v2364 = vmul.f32 %v1469, %v1903
    %v2365 = vmul.f32 %v1469, %v1907
    %v2366 = vmul.f32 %v1469, %v1911
    %v2367 = vmul.f32 %v1469, %v1915
    %v2368 = vmul.f32 %v1469, %v1919
    %v2369 = vmul.f32 %v1469, %v1923
    %v2370 = vmul.f32 %v1469, %v1927
    %v2371 = vmul.f32 %v1469, %v1931
    %v2372 = vmul.f32 %v1469, %v1935
    %v2373 = vmul.f32 %v1469, %v1939
    %v2374 = vmul.f32 %v1469, %v1943
    %v2375 = vmul.f32 %v1469, %v1946
    %v2376 = vmul.f32 %v1469, %v1950
    %v2377 = vmul.f32 %v1469, %v1954
    %v2378 = vmul.f32 %v1469, %v1958
    %v2379 = vmul.f32 %v1469, %v1962
    %v2380 = vmul.f32 %v1469, %v1966
    %v2381 = vmul.f32 %v1469, %v1970
    %v2382 = vmul.f32 %v1469, %v1974
    %v2383 = vmul.f32 %v1469, %v1978
    %v2384 = vmul.f32 %v1469, %v1982
    %v2385 = vmul.f32 %v1469, %v1986
    %v2386 = vmul.f32 %v1469, %v1990
    %v2387 = vmul.f32 %v1469, %v1994
    %v2388 = vmul.f32 %v1469, %v1998
    %v2389 = vmul.f32 %v1469, %v2002
    %v2390 = vmul.f32 %v1469, %v2006
    %s2391 = scalar_lea.vmem %s2, 1
    %v2392 = vld [vmem:[%s2391] ss:$4 sm:$0xff]
    %v2393 = vlaneseq
    %v2394 = vshrl.u32 %v2393, 7
    %v2395 = vsub.s32 1, %v2394
    %v2396 = vrot.slane %v1459, %v2395
    %v2397 = vlaneseq
    %v2398 = vshrl.u32 %v2397, 7
    %v2399 = vsub.s32 1, %v2398
    %v2400 = vrot.slane %v1460, %v2399
    %v2402 = vlaneseq
    %v2403 = vshrl.u32 %v2402, 7
    %v2404 = vsub.s32 0, %v2403
    %v2405 = vrot.slane %v2392, %v2404
    %v2406 = vlaneseq
    %v2407 = vshrl.u32 %v2406, 7
    %v2408 = vsub.s32 1, %v2407
    %v2409 = vrot.slane %v2392, %v2408
    %v2410 = vlaneseq
    %v2411 = vshrl.u32 %v2410, 7
    %v2412 = vsub.s32 2, %v2411
    %v2413 = vrot.slane %v2392, %v2412
    %v2414 = vlaneseq
    %v2415 = vshrl.u32 %v2414, 7
    %v2416 = vsub.s32 3, %v2415
    %v2417 = vrot.slane %v2392, %v2416
    %v2418 = vlaneseq
    %v2419 = vshrl.u32 %v2418, 7
    %v2420 = vsub.s32 4, %v2419
    %v2421 = vrot.slane %v2392, %v2420
    %v2422 = vlaneseq
    %v2423 = vshrl.u32 %v2422, 7
    %v2424 = vsub.s32 5, %v2423
    %v2425 = vrot.slane %v2392, %v2424
    %v2426 = vlaneseq
    %v2427 = vshrl.u32 %v2426, 7
    %v2428 = vsub.s32 6, %v2427
    %v2429 = vrot.slane %v2392, %v2428
    %v2430 = vlaneseq
    %v2431 = vshrl.u32 %v2430, 7
    %v2432 = vsub.s32 7, %v2431
    %v2433 = vrot.slane %v2392, %v2432
    %2435 = vbcast.lane.b32.xlu0 %v2405, 256
    %v2436 = vpop.permute.xlu0 %2435
    %s2438 = sor.u32 256, 8
    %2439 = vbcast.lane.b32.xlu0 %v2405, %s2438
    %v2440 = vpop.permute.xlu0 %2439
    %s2442 = sor.u32 256, 16
    %2443 = vbcast.lane.b32.xlu0 %v2405, %s2442
    %v2444 = vpop.permute.xlu0 %2443
    %s2446 = sor.u32 256, 24
    %2447 = vbcast.lane.b32.xlu0 %v2405, %s2446
    %v2448 = vpop.permute.xlu0 %2447
    %s2450 = sor.u32 256, 32
    %2451 = vbcast.lane.b32.xlu0 %v2405, %s2450
    %v2452 = vpop.permute.xlu0 %2451
    %s2454 = sor.u32 256, 40
    %2455 = vbcast.lane.b32.xlu0 %v2405, %s2454
    %v2456 = vpop.permute.xlu0 %2455
    %s2458 = sor.u32 256, 48
    %2459 = vbcast.lane.b32.xlu0 %v2405, %s2458
    %v2460 = vpop.permute.xlu0 %2459
    %s2462 = sor.u32 256, 56
    %2463 = vbcast.lane.b32.xlu0 %v2405, %s2462
    %v2464 = vpop.permute.xlu0 %2463
    %s2466 = sor.u32 256, 64
    %2467 = vbcast.lane.b32.xlu0 %v2405, %s2466
    %v2468 = vpop.permute.xlu0 %2467
    %s2470 = sor.u32 256, 72
    %2471 = vbcast.lane.b32.xlu0 %v2405, %s2470
    %v2472 = vpop.permute.xlu0 %2471
    %s2474 = sor.u32 256, 80
    %2475 = vbcast.lane.b32.xlu0 %v2405, %s2474
    %v2476 = vpop.permute.xlu0 %2475
    %s2478 = sor.u32 256, 88
    %2479 = vbcast.lane.b32.xlu0 %v2405, %s2478
    %v2480 = vpop.permute.xlu0 %2479
    %s2482 = sor.u32 256, 96
    %2483 = vbcast.lane.b32.xlu0 %v2405, %s2482
    %v2484 = vpop.permute.xlu0 %2483
    %s2486 = sor.u32 256, 104
    %2487 = vbcast.lane.b32.xlu0 %v2405, %s2486
    %v2488 = vpop.permute.xlu0 %2487
    %s2490 = sor.u32 256, 112
    %2491 = vbcast.lane.b32.xlu0 %v2405, %s2490
    %v2492 = vpop.permute.xlu0 %2491
    %s2494 = sor.u32 256, 120
    %2495 = vbcast.lane.b32.xlu0 %v2405, %s2494
    %v2496 = vpop.permute.xlu0 %2495
    %2498 = vbcast.lane.b32.xlu0 %v2409, 256
    %v2499 = vpop.permute.xlu0 %2498
    %s2501 = sor.u32 256, 8
    %2502 = vbcast.lane.b32.xlu0 %v2409, %s2501
    %v2503 = vpop.permute.xlu0 %2502
    %s2505 = sor.u32 256, 16
    %2506 = vbcast.lane.b32.xlu0 %v2409, %s2505
    %v2507 = vpop.permute.xlu0 %2506
    %s2509 = sor.u32 256, 24
    %2510 = vbcast.lane.b32.xlu0 %v2409, %s2509
    %v2511 = vpop.permute.xlu0 %2510
    %s2513 = sor.u32 256, 32
    %2514 = vbcast.lane.b32.xlu0 %v2409, %s2513
    %v2515 = vpop.permute.xlu0 %2514
    %s2517 = sor.u32 256, 40
    %2518 = vbcast.lane.b32.xlu0 %v2409, %s2517
    %v2519 = vpop.permute.xlu0 %2518
    %s2521 = sor.u32 256, 48
    %2522 = vbcast.lane.b32.xlu0 %v2409, %s2521
    %v2523 = vpop.permute.xlu0 %2522
    %s2525 = sor.u32 256, 56
    %2526 = vbcast.lane.b32.xlu0 %v2409, %s2525
    %v2527 = vpop.permute.xlu0 %2526
    %s2529 = sor.u32 256, 64
    %2530 = vbcast.lane.b32.xlu0 %v2409, %s2529
    %v2531 = vpop.permute.xlu0 %2530
    %s2533 = sor.u32 256, 72
    %2534 = vbcast.lane.b32.xlu0 %v2409, %s2533
    %v2535 = vpop.permute.xlu0 %2534
    %s2537 = sor.u32 256, 80
    %2538 = vbcast.lane.b32.xlu0 %v2409, %s2537
    %v2539 = vpop.permute.xlu0 %2538
    %s2541 = sor.u32 256, 88
    %2542 = vbcast.lane.b32.xlu0 %v2409, %s2541
    %v2543 = vpop.permute.xlu0 %2542
    %s2545 = sor.u32 256, 96
    %2546 = vbcast.lane.b32.xlu0 %v2409, %s2545
    %v2547 = vpop.permute.xlu0 %2546
    %s2549 = sor.u32 256, 104
    %2550 = vbcast.lane.b32.xlu0 %v2409, %s2549
    %v2551 = vpop.permute.xlu0 %2550
    %s2553 = sor.u32 256, 112
    %2554 = vbcast.lane.b32.xlu0 %v2409, %s2553
    %v2555 = vpop.permute.xlu0 %2554
    %s2557 = sor.u32 256, 120
    %2558 = vbcast.lane.b32.xlu0 %v2409, %s2557
    %v2559 = vpop.permute.xlu0 %2558
    %2561 = vbcast.lane.b32.xlu0 %v2413, 256
    %v2562 = vpop.permute.xlu0 %2561
    %s2564 = sor.u32 256, 8
    %2565 = vbcast.lane.b32.xlu0 %v2413, %s2564
    %v2566 = vpop.permute.xlu0 %2565
    %s2568 = sor.u32 256, 16
    %2569 = vbcast.lane.b32.xlu0 %v2413, %s2568
    %v2570 = vpop.permute.xlu0 %2569
    %s2572 = sor.u32 256, 24
    %2573 = vbcast.lane.b32.xlu0 %v2413, %s2572
    %v2574 = vpop.permute.xlu0 %2573
    %s2576 = sor.u32 256, 32
    %2577 = vbcast.lane.b32.xlu0 %v2413, %s2576
    %v2578 = vpop.permute.xlu0 %2577
    %s2580 = sor.u32 256, 40
    %2581 = vbcast.lane.b32.xlu0 %v2413, %s2580
    %v2582 = vpop.permute.xlu0 %2581
    %s2584 = sor.u32 256, 48
    %2585 = vbcast.lane.b32.xlu0 %v2413, %s2584
    %v2586 = vpop.permute.xlu0 %2585
    %s2588 = sor.u32 256, 56
    %2589 = vbcast.lane.b32.xlu0 %v2413, %s2588
    %v2590 = vpop.permute.xlu0 %2589
    %s2592 = sor.u32 256, 64
    %2593 = vbcast.lane.b32.xlu0 %v2413, %s2592
    %v2594 = vpop.permute.xlu0 %2593
    %s2596 = sor.u32 256, 72
    %2597 = vbcast.lane.b32.xlu0 %v2413, %s2596
    %v2598 = vpop.permute.xlu0 %2597
    %s2600 = sor.u32 256, 80
    %2601 = vbcast.lane.b32.xlu0 %v2413, %s2600
    %v2602 = vpop.permute.xlu0 %2601
    %s2604 = sor.u32 256, 88
    %2605 = vbcast.lane.b32.xlu0 %v2413, %s2604
    %v2606 = vpop.permute.xlu0 %2605
    %s2608 = sor.u32 256, 96
    %2609 = vbcast.lane.b32.xlu0 %v2413, %s2608
    %v2610 = vpop.permute.xlu0 %2609
    %s2612 = sor.u32 256, 104
    %2613 = vbcast.lane.b32.xlu0 %v2413, %s2612
    %v2614 = vpop.permute.xlu0 %2613
    %s2616 = sor.u32 256, 112
    %2617 = vbcast.lane.b32.xlu0 %v2413, %s2616
    %v2618 = vpop.permute.xlu0 %2617
    %s2620 = sor.u32 256, 120
    %2621 = vbcast.lane.b32.xlu0 %v2413, %s2620
    %v2622 = vpop.permute.xlu0 %2621
    %2624 = vbcast.lane.b32.xlu0 %v2417, 256
    %v2625 = vpop.permute.xlu0 %2624
    %s2627 = sor.u32 256, 8
    %2628 = vbcast.lane.b32.xlu0 %v2417, %s2627
    %v2629 = vpop.permute.xlu0 %2628
    %s2631 = sor.u32 256, 16
    %2632 = vbcast.lane.b32.xlu0 %v2417, %s2631
    %v2633 = vpop.permute.xlu0 %2632
    %s2635 = sor.u32 256, 24
    %2636 = vbcast.lane.b32.xlu0 %v2417, %s2635
    %v2637 = vpop.permute.xlu0 %2636
    %s2639 = sor.u32 256, 32
    %2640 = vbcast.lane.b32.xlu0 %v2417, %s2639
    %v2641 = vpop.permute.xlu0 %2640
    %s2643 = sor.u32 256, 40
    %2644 = vbcast.lane.b32.xlu0 %v2417, %s2643
    %v2645 = vpop.permute.xlu0 %2644
    %s2647 = sor.u32 256, 48
    %2648 = vbcast.lane.b32.xlu0 %v2417, %s2647
    %v2649 = vpop.permute.xlu0 %2648
    %s2651 = sor.u32 256, 56
    %2652 = vbcast.lane.b32.xlu0 %v2417, %s2651
    %v2653 = vpop.permute.xlu0 %2652
    %s2655 = sor.u32 256, 64
    %2656 = vbcast.lane.b32.xlu0 %v2417, %s2655
    %v2657 = vpop.permute.xlu0 %2656
    %s2659 = sor.u32 256, 72
    %2660 = vbcast.lane.b32.xlu0 %v2417, %s2659
    %v2661 = vpop.permute.xlu0 %2660
    %s2663 = sor.u32 256, 80
    %2664 = vbcast.lane.b32.xlu0 %v2417, %s2663
    %v2665 = vpop.permute.xlu0 %2664
    %s2667 = sor.u32 256, 88
    %2668 = vbcast.lane.b32.xlu0 %v2417, %s2667
    %v2669 = vpop.permute.xlu0 %2668
    %s2671 = sor.u32 256, 96
    %2672 = vbcast.lane.b32.xlu0 %v2417, %s2671
    %v2673 = vpop.permute.xlu0 %2672
    %s2675 = sor.u32 256, 104
    %2676 = vbcast.lane.b32.xlu0 %v2417, %s2675
    %v2677 = vpop.permute.xlu0 %2676
    %s2679 = sor.u32 256, 112
    %2680 = vbcast.lane.b32.xlu0 %v2417, %s2679
    %v2681 = vpop.permute.xlu0 %2680
    %s2683 = sor.u32 256, 120
    %2684 = vbcast.lane.b32.xlu0 %v2417, %s2683
    %v2685 = vpop.permute.xlu0 %2684
    %2687 = vbcast.lane.b32.xlu0 %v2421, 256
    %v2688 = vpop.permute.xlu0 %2687
    %s2690 = sor.u32 256, 8
    %2691 = vbcast.lane.b32.xlu0 %v2421, %s2690
    %v2692 = vpop.permute.xlu0 %2691
    %s2694 = sor.u32 256, 16
    %2695 = vbcast.lane.b32.xlu0 %v2421, %s2694
    %v2696 = vpop.permute.xlu0 %2695
    %s2698 = sor.u32 256, 24
    %2699 = vbcast.lane.b32.xlu0 %v2421, %s2698
    %v2700 = vpop.permute.xlu0 %2699
    %s2702 = sor.u32 256, 32
    %2703 = vbcast.lane.b32.xlu0 %v2421, %s2702
    %v2704 = vpop.permute.xlu0 %2703
    %s2706 = sor.u32 256, 40
    %2707 = vbcast.lane.b32.xlu0 %v2421, %s2706
    %v2708 = vpop.permute.xlu0 %2707
    %s2710 = sor.u32 256, 48
    %2711 = vbcast.lane.b32.xlu0 %v2421, %s2710
    %v2712 = vpop.permute.xlu0 %2711
    %s2714 = sor.u32 256, 56
    %2715 = vbcast.lane.b32.xlu0 %v2421, %s2714
    %v2716 = vpop.permute.xlu0 %2715
    %s2718 = sor.u32 256, 64
    %2719 = vbcast.lane.b32.xlu0 %v2421, %s2718
    %v2720 = vpop.permute.xlu0 %2719
    %s2722 = sor.u32 256, 72
    %2723 = vbcast.lane.b32.xlu0 %v2421, %s2722
    %v2724 = vpop.permute.xlu0 %2723
    %s2726 = sor.u32 256, 80
    %2727 = vbcast.lane.b32.xlu0 %v2421, %s2726
    %v2728 = vpop.permute.xlu0 %2727
    %s2730 = sor.u32 256, 88
    %2731 = vbcast.lane.b32.xlu0 %v2421, %s2730
    %v2732 = vpop.permute.xlu0 %2731
    %s2734 = sor.u32 256, 96
    %2735 = vbcast.lane.b32.xlu0 %v2421, %s2734
    %v2736 = vpop.permute.xlu0 %2735
    %s2738 = sor.u32 256, 104
    %2739 = vbcast.lane.b32.xlu0 %v2421, %s2738
    %v2740 = vpop.permute.xlu0 %2739
    %s2742 = sor.u32 256, 112
    %2743 = vbcast.lane.b32.xlu0 %v2421, %s2742
    %v2744 = vpop.permute.xlu0 %2743
    %s2746 = sor.u32 256, 120
    %2747 = vbcast.lane.b32.xlu0 %v2421, %s2746
    %v2748 = vpop.permute.xlu0 %2747
    %2750 = vbcast.lane.b32.xlu0 %v2425, 256
    %v2751 = vpop.permute.xlu0 %2750
    %s2753 = sor.u32 256, 8
    %2754 = vbcast.lane.b32.xlu0 %v2425, %s2753
    %v2755 = vpop.permute.xlu0 %2754
    %s2757 = sor.u32 256, 16
    %2758 = vbcast.lane.b32.xlu0 %v2425, %s2757
    %v2759 = vpop.permute.xlu0 %2758
    %s2761 = sor.u32 256, 24
    %2762 = vbcast.lane.b32.xlu0 %v2425, %s2761
    %v2763 = vpop.permute.xlu0 %2762
    %s2765 = sor.u32 256, 32
    %2766 = vbcast.lane.b32.xlu0 %v2425, %s2765
    %v2767 = vpop.permute.xlu0 %2766
    %s2769 = sor.u32 256, 40
    %2770 = vbcast.lane.b32.xlu0 %v2425, %s2769
    %v2771 = vpop.permute.xlu0 %2770
    %s2773 = sor.u32 256, 48
    %2774 = vbcast.lane.b32.xlu0 %v2425, %s2773
    %v2775 = vpop.permute.xlu0 %2774
    %s2777 = sor.u32 256, 56
    %2778 = vbcast.lane.b32.xlu0 %v2425, %s2777
    %v2779 = vpop.permute.xlu0 %2778
    %s2781 = sor.u32 256, 64
    %2782 = vbcast.lane.b32.xlu0 %v2425, %s2781
    %v2783 = vpop.permute.xlu0 %2782
    %s2785 = sor.u32 256, 72
    %2786 = vbcast.lane.b32.xlu0 %v2425, %s2785
    %v2787 = vpop.permute.xlu0 %2786
    %s2789 = sor.u32 256, 80
    %2790 = vbcast.lane.b32.xlu0 %v2425, %s2789
    %v2791 = vpop.permute.xlu0 %2790
    %s2793 = sor.u32 256, 88
    %2794 = vbcast.lane.b32.xlu0 %v2425, %s2793
    %v2795 = vpop.permute.xlu0 %2794
    %s2797 = sor.u32 256, 96
    %2798 = vbcast.lane.b32.xlu0 %v2425, %s2797
    %v2799 = vpop.permute.xlu0 %2798
    %s2801 = sor.u32 256, 104
    %2802 = vbcast.lane.b32.xlu0 %v2425, %s2801
    %v2803 = vpop.permute.xlu0 %2802
    %s2805 = sor.u32 256, 112
    %2806 = vbcast.lane.b32.xlu0 %v2425, %s2805
    %v2807 = vpop.permute.xlu0 %2806
    %s2809 = sor.u32 256, 120
    %2810 = vbcast.lane.b32.xlu0 %v2425, %s2809
    %v2811 = vpop.permute.xlu0 %2810
    %2813 = vbcast.lane.b32.xlu0 %v2429, 256
    %v2814 = vpop.permute.xlu0 %2813
    %s2816 = sor.u32 256, 8
    %2817 = vbcast.lane.b32.xlu0 %v2429, %s2816
    %v2818 = vpop.permute.xlu0 %2817
    %s2820 = sor.u32 256, 16
    %2821 = vbcast.lane.b32.xlu0 %v2429, %s2820
    %v2822 = vpop.permute.xlu0 %2821
    %s2824 = sor.u32 256, 24
    %2825 = vbcast.lane.b32.xlu0 %v2429, %s2824
    %v2826 = vpop.permute.xlu0 %2825
    %s2828 = sor.u32 256, 32
    %2829 = vbcast.lane.b32.xlu0 %v2429, %s2828
    %v2830 = vpop.permute.xlu0 %2829
    %s2832 = sor.u32 256, 40
    %2833 = vbcast.lane.b32.xlu0 %v2429, %s2832
    %v2834 = vpop.permute.xlu0 %2833
    %s2836 = sor.u32 256, 48
    %2837 = vbcast.lane.b32.xlu0 %v2429, %s2836
    %v2838 = vpop.permute.xlu0 %2837
    %s2840 = sor.u32 256, 56
    %2841 = vbcast.lane.b32.xlu0 %v2429, %s2840
    %v2842 = vpop.permute.xlu0 %2841
    %s2844 = sor.u32 256, 64
    %2845 = vbcast.lane.b32.xlu0 %v2429, %s2844
    %v2846 = vpop.permute.xlu0 %2845
    %s2848 = sor.u32 256, 72
    %2849 = vbcast.lane.b32.xlu0 %v2429, %s2848
    %v2850 = vpop.permute.xlu0 %2849
    %s2852 = sor.u32 256, 80
    %2853 = vbcast.lane.b32.xlu0 %v2429, %s2852
    %v2854 = vpop.permute.xlu0 %2853
    %s2856 = sor.u32 256, 88
    %2857 = vbcast.lane.b32.xlu0 %v2429, %s2856
    %v2858 = vpop.permute.xlu0 %2857
    %s2860 = sor.u32 256, 96
    %2861 = vbcast.lane.b32.xlu0 %v2429, %s2860
    %v2862 = vpop.permute.xlu0 %2861
    %s2864 = sor.u32 256, 104
    %2865 = vbcast.lane.b32.xlu0 %v2429, %s2864
    %v2866 = vpop.permute.xlu0 %2865
    %s2868 = sor.u32 256, 112
    %2869 = vbcast.lane.b32.xlu0 %v2429, %s2868
    %v2870 = vpop.permute.xlu0 %2869
    %s2872 = sor.u32 256, 120
    %2873 = vbcast.lane.b32.xlu0 %v2429, %s2872
    %v2874 = vpop.permute.xlu0 %2873
    %2876 = vbcast.lane.b32.xlu0 %v2433, 256
    %v2877 = vpop.permute.xlu0 %2876
    %s2879 = sor.u32 256, 8
    %2880 = vbcast.lane.b32.xlu0 %v2433, %s2879
    %v2881 = vpop.permute.xlu0 %2880
    %s2883 = sor.u32 256, 16
    %2884 = vbcast.lane.b32.xlu0 %v2433, %s2883
    %v2885 = vpop.permute.xlu0 %2884
    %s2887 = sor.u32 256, 24
    %2888 = vbcast.lane.b32.xlu0 %v2433, %s2887
    %v2889 = vpop.permute.xlu0 %2888
    %s2891 = sor.u32 256, 32
    %2892 = vbcast.lane.b32.xlu0 %v2433, %s2891
    %v2893 = vpop.permute.xlu0 %2892
    %s2895 = sor.u32 256, 40
    %2896 = vbcast.lane.b32.xlu0 %v2433, %s2895
    %v2897 = vpop.permute.xlu0 %2896
    %s2899 = sor.u32 256, 48
    %2900 = vbcast.lane.b32.xlu0 %v2433, %s2899
    %v2901 = vpop.permute.xlu0 %2900
    %s2903 = sor.u32 256, 56
    %2904 = vbcast.lane.b32.xlu0 %v2433, %s2903
    %v2905 = vpop.permute.xlu0 %2904
    %s2907 = sor.u32 256, 64
    %2908 = vbcast.lane.b32.xlu0 %v2433, %s2907
    %v2909 = vpop.permute.xlu0 %2908
    %s2911 = sor.u32 256, 72
    %2912 = vbcast.lane.b32.xlu0 %v2433, %s2911
    %v2913 = vpop.permute.xlu0 %2912
    %s2915 = sor.u32 256, 80
    %2916 = vbcast.lane.b32.xlu0 %v2433, %s2915
    %v2917 = vpop.permute.xlu0 %2916
    %s2919 = sor.u32 256, 88
    %2920 = vbcast.lane.b32.xlu0 %v2433, %s2919
    %v2921 = vpop.permute.xlu0 %2920
    %s2923 = sor.u32 256, 96
    %2924 = vbcast.lane.b32.xlu0 %v2433, %s2923
    %v2925 = vpop.permute.xlu0 %2924
    %s2927 = sor.u32 256, 104
    %2928 = vbcast.lane.b32.xlu0 %v2433, %s2927
    %v2929 = vpop.permute.xlu0 %2928
    %s2931 = sor.u32 256, 112
    %2932 = vbcast.lane.b32.xlu0 %v2433, %s2931
    %v2933 = vpop.permute.xlu0 %2932
    %s2935 = sor.u32 256, 120
    %2936 = vbcast.lane.b32.xlu0 %v2433, %s2935
    %v2937 = vpop.permute.xlu0 %2936
    %v3066 = vmul.f32 %v2396, %v2436
    %v3067 = vmul.f32 %v2396, %v2440
    %v3068 = vmul.f32 %v2396, %v2444
    %v3069 = vmul.f32 %v2396, %v2448
    %v3070 = vmul.f32 %v2396, %v2452
    %v3071 = vmul.f32 %v2396, %v2456
    %v3072 = vmul.f32 %v2396, %v2460
    %v3073 = vmul.f32 %v2396, %v2464
    %v3074 = vmul.f32 %v2396, %v2468
    %v3075 = vmul.f32 %v2396, %v2472
    %v3076 = vmul.f32 %v2396, %v2476
    %v3077 = vmul.f32 %v2396, %v2480
    %v3078 = vmul.f32 %v2396, %v2484
    %v3079 = vmul.f32 %v2396, %v2488
    %v3080 = vmul.f32 %v2396, %v2492
    %v3081 = vmul.f32 %v2396, %v2496
    %v3082 = vmul.f32 %v2396, %v2499
    %v3083 = vmul.f32 %v2396, %v2503
    %v3084 = vmul.f32 %v2396, %v2507
    %v3085 = vmul.f32 %v2396, %v2511
    %v3086 = vmul.f32 %v2396, %v2515
    %v3087 = vmul.f32 %v2396, %v2519
    %v3088 = vmul.f32 %v2396, %v2523
    %v3089 = vmul.f32 %v2396, %v2527
    %v3090 = vmul.f32 %v2396, %v2531
    %v3091 = vmul.f32 %v2396, %v2535
    %v3092 = vmul.f32 %v2396, %v2539
    %v3093 = vmul.f32 %v2396, %v2543
    %v3094 = vmul.f32 %v2396, %v2547
    %v3095 = vmul.f32 %v2396, %v2551
    %v3096 = vmul.f32 %v2396, %v2555
    %v3097 = vmul.f32 %v2396, %v2559
    %v3098 = vmul.f32 %v2396, %v2562
    %v3099 = vmul.f32 %v2396, %v2566
    %v3100 = vmul.f32 %v2396, %v2570
    %v3101 = vmul.f32 %v2396, %v2574
    %v3102 = vmul.f32 %v2396, %v2578
    %v3103 = vmul.f32 %v2396, %v2582
    %v3104 = vmul.f32 %v2396, %v2586
    %v3105 = vmul.f32 %v2396, %v2590
    %v3106 = vmul.f32 %v2396, %v2594
    %v3107 = vmul.f32 %v2396, %v2598
    %v3108 = vmul.f32 %v2396, %v2602
    %v3109 = vmul.f32 %v2396, %v2606
    %v3110 = vmul.f32 %v2396, %v2610
    %v3111 = vmul.f32 %v2396, %v2614
    %v3112 = vmul.f32 %v2396, %v2618
    %v3113 = vmul.f32 %v2396, %v2622
    %v3114 = vmul.f32 %v2396, %v2625
    %v3115 = vmul.f32 %v2396, %v2629
    %v3116 = vmul.f32 %v2396, %v2633
    %v3117 = vmul.f32 %v2396, %v2637
    %v3118 = vmul.f32 %v2396, %v2641
    %v3119 = vmul.f32 %v2396, %v2645
    %v3120 = vmul.f32 %v2396, %v2649
    %v3121 = vmul.f32 %v2396, %v2653
    %v3122 = vmul.f32 %v2396, %v2657
    %v3123 = vmul.f32 %v2396, %v2661
    %v3124 = vmul.f32 %v2396, %v2665
    %v3125 = vmul.f32 %v2396, %v2669
    %v3126 = vmul.f32 %v2396, %v2673
    %v3127 = vmul.f32 %v2396, %v2677
    %v3128 = vmul.f32 %v2396, %v2681
    %v3129 = vmul.f32 %v2396, %v2685
    %v3130 = vmul.f32 %v2396, %v2688
    %v3131 = vmul.f32 %v2396, %v2692
    %v3132 = vmul.f32 %v2396, %v2696
    %v3133 = vmul.f32 %v2396, %v2700
    %v3134 = vmul.f32 %v2396, %v2704
    %v3135 = vmul.f32 %v2396, %v2708
    %v3136 = vmul.f32 %v2396, %v2712
    %v3137 = vmul.f32 %v2396, %v2716
    %v3138 = vmul.f32 %v2396, %v2720
    %v3139 = vmul.f32 %v2396, %v2724
    %v3140 = vmul.f32 %v2396, %v2728
    %v3141 = vmul.f32 %v2396, %v2732
    %v3142 = vmul.f32 %v2396, %v2736
    %v3143 = vmul.f32 %v2396, %v2740
    %v3144 = vmul.f32 %v2396, %v2744
    %v3145 = vmul.f32 %v2396, %v2748
    %v3146 = vmul.f32 %v2396, %v2751
    %v3147 = vmul.f32 %v2396, %v2755
    %v3148 = vmul.f32 %v2396, %v2759
    %v3149 = vmul.f32 %v2396, %v2763
    %v3150 = vmul.f32 %v2396, %v2767
    %v3151 = vmul.f32 %v2396, %v2771
    %v3152 = vmul.f32 %v2396, %v2775
    %v3153 = vmul.f32 %v2396, %v2779
    %v3154 = vmul.f32 %v2396, %v2783
    %v3155 = vmul.f32 %v2396, %v2787
    %v3156 = vmul.f32 %v2396, %v2791
    %v3157 = vmul.f32 %v2396, %v2795
    %v3158 = vmul.f32 %v2396, %v2799
    %v3159 = vmul.f32 %v2396, %v2803
    %v3160 = vmul.f32 %v2396, %v2807
    %v3161 = vmul.f32 %v2396, %v2811
    %v3162 = vmul.f32 %v2396, %v2814
    %v3163 = vmul.f32 %v2396, %v2818
    %v3164 = vmul.f32 %v2396, %v2822
    %v3165 = vmul.f32 %v2396, %v2826
    %v3166 = vmul.f32 %v2396, %v2830
    %v3167 = vmul.f32 %v2396, %v2834
    %v3168 = vmul.f32 %v2396, %v2838
    %v3169 = vmul.f32 %v2396, %v2842
    %v3170 = vmul.f32 %v2396, %v2846
    %v3171 = vmul.f32 %v2396, %v2850
    %v3172 = vmul.f32 %v2396, %v2854
    %v3173 = vmul.f32 %v2396, %v2858
    %v3174 = vmul.f32 %v2396, %v2862
    %v3175 = vmul.f32 %v2396, %v2866
    %v3176 = vmul.f32 %v2396, %v2870
    %v3177 = vmul.f32 %v2396, %v2874
    %v3178 = vmul.f32 %v2396, %v2877
    %v3179 = vmul.f32 %v2396, %v2881
    %v3180 = vmul.f32 %v2396, %v2885
    %v3181 = vmul.f32 %v2396, %v2889
    %v3182 = vmul.f32 %v2396, %v2893
    %v3183 = vmul.f32 %v2396, %v2897
    %v3184 = vmul.f32 %v2396, %v2901
    %v3185 = vmul.f32 %v2396, %v2905
    %v3186 = vmul.f32 %v2396, %v2909
    %v3187 = vmul.f32 %v2396, %v2913
    %v3188 = vmul.f32 %v2396, %v2917
    %v3189 = vmul.f32 %v2396, %v2921
    %v3190 = vmul.f32 %v2396, %v2925
    %v3191 = vmul.f32 %v2396, %v2929
    %v3192 = vmul.f32 %v2396, %v2933
    %v3193 = vmul.f32 %v2396, %v2937
    %v3194 = vmul.f32 %v2400, %v2436
    %v3195 = vmul.f32 %v2400, %v2440
    %v3196 = vmul.f32 %v2400, %v2444
    %v3197 = vmul.f32 %v2400, %v2448
    %v3198 = vmul.f32 %v2400, %v2452
    %v3199 = vmul.f32 %v2400, %v2456
    %v3200 = vmul.f32 %v2400, %v2460
    %v3201 = vmul.f32 %v2400, %v2464
    %v3202 = vmul.f32 %v2400, %v2468
    %v3203 = vmul.f32 %v2400, %v2472
    %v3204 = vmul.f32 %v2400, %v2476
    %v3205 = vmul.f32 %v2400, %v2480
    %v3206 = vmul.f32 %v2400, %v2484
    %v3207 = vmul.f32 %v2400, %v2488
    %v3208 = vmul.f32 %v2400, %v2492
    %v3209 = vmul.f32 %v2400, %v2496
    %v3210 = vmul.f32 %v2400, %v2499
    %v3211 = vmul.f32 %v2400, %v2503
    %v3212 = vmul.f32 %v2400, %v2507
    %v3213 = vmul.f32 %v2400, %v2511
    %v3214 = vmul.f32 %v2400, %v2515
    %v3215 = vmul.f32 %v2400, %v2519
    %v3216 = vmul.f32 %v2400, %v2523
    %v3217 = vmul.f32 %v2400, %v2527
    %v3218 = vmul.f32 %v2400, %v2531
    %v3219 = vmul.f32 %v2400, %v2535
    %v3220 = vmul.f32 %v2400, %v2539
    %v3221 = vmul.f32 %v2400, %v2543
    %v3222 = vmul.f32 %v2400, %v2547
    %v3223 = vmul.f32 %v2400, %v2551
    %v3224 = vmul.f32 %v2400, %v2555
    %v3225 = vmul.f32 %v2400, %v2559
    %v3226 = vmul.f32 %v2400, %v2562
    %v3227 = vmul.f32 %v2400, %v2566
    %v3228 = vmul.f32 %v2400, %v2570
    %v3229 = vmul.f32 %v2400, %v2574
    %v3230 = vmul.f32 %v2400, %v2578
    %v3231 = vmul.f32 %v2400, %v2582
    %v3232 = vmul.f32 %v2400, %v2586
    %v3233 = vmul.f32 %v2400, %v2590
    %v3234 = vmul.f32 %v2400, %v2594
    %v3235 = vmul.f32 %v2400, %v2598
    %v3236 = vmul.f32 %v2400, %v2602
    %v3237 = vmul.f32 %v2400, %v2606
    %v3238 = vmul.f32 %v2400, %v2610
    %v3239 = vmul.f32 %v2400, %v2614
    %v3240 = vmul.f32 %v2400, %v2618
    %v3241 = vmul.f32 %v2400, %v2622
    %v3242 = vmul.f32 %v2400, %v2625
    %v3243 = vmul.f32 %v2400, %v2629
    %v3244 = vmul.f32 %v2400, %v2633
    %v3245 = vmul.f32 %v2400, %v2637
    %v3246 = vmul.f32 %v2400, %v2641
    %v3247 = vmul.f32 %v2400, %v2645
    %v3248 = vmul.f32 %v2400, %v2649
    %v3249 = vmul.f32 %v2400, %v2653
    %v3250 = vmul.f32 %v2400, %v2657
    %v3251 = vmul.f32 %v2400, %v2661
    %v3252 = vmul.f32 %v2400, %v2665
    %v3253 = vmul.f32 %v2400, %v2669
    %v3254 = vmul.f32 %v2400, %v2673
    %v3255 = vmul.f32 %v2400, %v2677
    %v3256 = vmul.f32 %v2400, %v2681
    %v3257 = vmul.f32 %v2400, %v2685
    %v3258 = vmul.f32 %v2400, %v2688
    %v3259 = vmul.f32 %v2400, %v2692
    %v3260 = vmul.f32 %v2400, %v2696
    %v3261 = vmul.f32 %v2400, %v2700
    %v3262 = vmul.f32 %v2400, %v2704
    %v3263 = vmul.f32 %v2400, %v2708
    %v3264 = vmul.f32 %v2400, %v2712
    %v3265 = vmul.f32 %v2400, %v2716
    %v3266 = vmul.f32 %v2400, %v2720
    %v3267 = vmul.f32 %v2400, %v2724
    %v3268 = vmul.f32 %v2400, %v2728
    %v3269 = vmul.f32 %v2400, %v2732
    %v3270 = vmul.f32 %v2400, %v2736
    %v3271 = vmul.f32 %v2400, %v2740
    %v3272 = vmul.f32 %v2400, %v2744
    %v3273 = vmul.f32 %v2400, %v2748
    %v3274 = vmul.f32 %v2400, %v2751
    %v3275 = vmul.f32 %v2400, %v2755
    %v3276 = vmul.f32 %v2400, %v2759
    %v3277 = vmul.f32 %v2400, %v2763
    %v3278 = vmul.f32 %v2400, %v2767
    %v3279 = vmul.f32 %v2400, %v2771
    %v3280 = vmul.f32 %v2400, %v2775
    %v3281 = vmul.f32 %v2400, %v2779
    %v3282 = vmul.f32 %v2400, %v2783
    %v3283 = vmul.f32 %v2400, %v2787
    %v3284 = vmul.f32 %v2400, %v2791
    %v3285 = vmul.f32 %v2400, %v2795
    %v3286 = vmul.f32 %v2400, %v2799
    %v3287 = vmul.f32 %v2400, %v2803
    %v3288 = vmul.f32 %v2400, %v2807
    %v3289 = vmul.f32 %v2400, %v2811
    %v3290 = vmul.f32 %v2400, %v2814
    %v3291 = vmul.f32 %v2400, %v2818
    %v3292 = vmul.f32 %v2400, %v2822
    %v3293 = vmul.f32 %v2400, %v2826
    %v3294 = vmul.f32 %v2400, %v2830
    %v3295 = vmul.f32 %v2400, %v2834
    %v3296 = vmul.f32 %v2400, %v2838
    %v3297 = vmul.f32 %v2400, %v2842
    %v3298 = vmul.f32 %v2400, %v2846
    %v3299 = vmul.f32 %v2400, %v2850
    %v3300 = vmul.f32 %v2400, %v2854
    %v3301 = vmul.f32 %v2400, %v2858
    %v3302 = vmul.f32 %v2400, %v2862
    %v3303 = vmul.f32 %v2400, %v2866
    %v3304 = vmul.f32 %v2400, %v2870
    %v3305 = vmul.f32 %v2400, %v2874
    %v3306 = vmul.f32 %v2400, %v2877
    %v3307 = vmul.f32 %v2400, %v2881
    %v3308 = vmul.f32 %v2400, %v2885
    %v3309 = vmul.f32 %v2400, %v2889
    %v3310 = vmul.f32 %v2400, %v2893
    %v3311 = vmul.f32 %v2400, %v2897
    %v3312 = vmul.f32 %v2400, %v2901
    %v3313 = vmul.f32 %v2400, %v2905
    %v3314 = vmul.f32 %v2400, %v2909
    %v3315 = vmul.f32 %v2400, %v2913
    %v3316 = vmul.f32 %v2400, %v2917
    %v3317 = vmul.f32 %v2400, %v2921
    %v3318 = vmul.f32 %v2400, %v2925
    %v3319 = vmul.f32 %v2400, %v2929
    %v3320 = vmul.f32 %v2400, %v2933
    %v3321 = vmul.f32 %v2400, %v2937
    %v3322 = vadd.f32 %v2135, %v3066
    %v3323 = vadd.f32 %v2136, %v3067
    %v3324 = vadd.f32 %v2137, %v3068
    %v3325 = vadd.f32 %v2138, %v3069
    %v3326 = vadd.f32 %v2139, %v3070
    %v3327 = vadd.f32 %v2140, %v3071
    %v3328 = vadd.f32 %v2141, %v3072
    %v3329 = vadd.f32 %v2142, %v3073
    %v3330 = vadd.f32 %v2143, %v3074
    %v3331 = vadd.f32 %v2144, %v3075
    %v3332 = vadd.f32 %v2145, %v3076
    %v3333 = vadd.f32 %v2146, %v3077
    %v3334 = vadd.f32 %v2147, %v3078
    %v3335 = vadd.f32 %v2148, %v3079
    %v3336 = vadd.f32 %v2149, %v3080
    %v3337 = vadd.f32 %v2150, %v3081
    %v3338 = vadd.f32 %v2151, %v3082
    %v3339 = vadd.f32 %v2152, %v3083
    %v3340 = vadd.f32 %v2153, %v3084
    %v3341 = vadd.f32 %v2154, %v3085
    %v3342 = vadd.f32 %v2155, %v3086
    %v3343 = vadd.f32 %v2156, %v3087
    %v3344 = vadd.f32 %v2157, %v3088
    %v3345 = vadd.f32 %v2158, %v3089
    %v3346 = vadd.f32 %v2159, %v3090
    %v3347 = vadd.f32 %v2160, %v3091
    %v3348 = vadd.f32 %v2161, %v3092
    %v3349 = vadd.f32 %v2162, %v3093
    %v3350 = vadd.f32 %v2163, %v3094
    %v3351 = vadd.f32 %v2164, %v3095
    %v3352 = vadd.f32 %v2165, %v3096
    %v3353 = vadd.f32 %v2166, %v3097
    %v3354 = vadd.f32 %v2167, %v3098
    %v3355 = vadd.f32 %v2168, %v3099
    %v3356 = vadd.f32 %v2169, %v3100
    %v3357 = vadd.f32 %v2170, %v3101
    %v3358 = vadd.f32 %v2171, %v3102
    %v3359 = vadd.f32 %v2172, %v3103
    %v3360 = vadd.f32 %v2173, %v3104
    %v3361 = vadd.f32 %v2174, %v3105
    %v3362 = vadd.f32 %v2175, %v3106
    %v3363 = vadd.f32 %v2176, %v3107
    %v3364 = vadd.f32 %v2177, %v3108
    %v3365 = vadd.f32 %v2178, %v3109
    %v3366 = vadd.f32 %v2179, %v3110
    %v3367 = vadd.f32 %v2180, %v3111
    %v3368 = vadd.f32 %v2181, %v3112
    %v3369 = vadd.f32 %v2182, %v3113
    %v3370 = vadd.f32 %v2183, %v3114
    %v3371 = vadd.f32 %v2184, %v3115
    %v3372 = vadd.f32 %v2185, %v3116
    %v3373 = vadd.f32 %v2186, %v3117
    %v3374 = vadd.f32 %v2187, %v3118
    %v3375 = vadd.f32 %v2188, %v3119
    %v3376 = vadd.f32 %v2189, %v3120
    %v3377 = vadd.f32 %v2190, %v3121
    %v3378 = vadd.f32 %v2191, %v3122
    %v3379 = vadd.f32 %v2192, %v3123
    %v3380 = vadd.f32 %v2193, %v3124
    %v3381 = vadd.f32 %v2194, %v3125
    %v3382 = vadd.f32 %v2195, %v3126
    %v3383 = vadd.f32 %v2196, %v3127
    %v3384 = vadd.f32 %v2197, %v3128
    %v3385 = vadd.f32 %v2198, %v3129
    %v3386 = vadd.f32 %v2199, %v3130
    %v3387 = vadd.f32 %v2200, %v3131
    %v3388 = vadd.f32 %v2201, %v3132
    %v3389 = vadd.f32 %v2202, %v3133
    %v3390 = vadd.f32 %v2203, %v3134
    %v3391 = vadd.f32 %v2204, %v3135
    %v3392 = vadd.f32 %v2205, %v3136
    %v3393 = vadd.f32 %v2206, %v3137
    %v3394 = vadd.f32 %v2207, %v3138
    %v3395 = vadd.f32 %v2208, %v3139
    %v3396 = vadd.f32 %v2209, %v3140
    %v3397 = vadd.f32 %v2210, %v3141
    %v3398 = vadd.f32 %v2211, %v3142
    %v3399 = vadd.f32 %v2212, %v3143
    %v3400 = vadd.f32 %v2213, %v3144
    %v3401 = vadd.f32 %v2214, %v3145
    %v3402 = vadd.f32 %v2215, %v3146
    %v3403 = vadd.f32 %v2216, %v3147
    %v3404 = vadd.f32 %v2217, %v3148
    %v3405 = vadd.f32 %v2218, %v3149
    %v3406 = vadd.f32 %v2219, %v3150
    %v3407 = vadd.f32 %v2220, %v3151
    %v3408 = vadd.f32 %v2221, %v3152
    %v3409 = vadd.f32 %v2222, %v3153
    %v3410 = vadd.f32 %v2223, %v3154
    %v3411 = vadd.f32 %v2224, %v3155
    %v3412 = vadd.f32 %v2225, %v3156
    %v3413 = vadd.f32 %v2226, %v3157
    %v3414 = vadd.f32 %v2227, %v3158
    %v3415 = vadd.f32 %v2228, %v3159
    %v3416 = vadd.f32 %v2229, %v3160
    %v3417 = vadd.f32 %v2230, %v3161
    %v3418 = vadd.f32 %v2231, %v3162
    %v3419 = vadd.f32 %v2232, %v3163
    %v3420 = vadd.f32 %v2233, %v3164
    %v3421 = vadd.f32 %v2234, %v3165
    %v3422 = vadd.f32 %v2235, %v3166
    %v3423 = vadd.f32 %v2236, %v3167
    %v3424 = vadd.f32 %v2237, %v3168
    %v3425 = vadd.f32 %v2238, %v3169
    %v3426 = vadd.f32 %v2239, %v3170
    %v3427 = vadd.f32 %v2240, %v3171
    %v3428 = vadd.f32 %v2241, %v3172
    %v3429 = vadd.f32 %v2242, %v3173
    %v3430 = vadd.f32 %v2243, %v3174
    %v3431 = vadd.f32 %v2244, %v3175
    %v3432 = vadd.f32 %v2245, %v3176
    %v3433 = vadd.f32 %v2246, %v3177
    %v3434 = vadd.f32 %v2247, %v3178
    %v3435 = vadd.f32 %v2248, %v3179
    %v3436 = vadd.f32 %v2249, %v3180
    %v3437 = vadd.f32 %v2250, %v3181
    %v3438 = vadd.f32 %v2251, %v3182
    %v3439 = vadd.f32 %v2252, %v3183
    %v3440 = vadd.f32 %v2253, %v3184
    %v3441 = vadd.f32 %v2254, %v3185
    %v3442 = vadd.f32 %v2255, %v3186
    %v3443 = vadd.f32 %v2256, %v3187
    %v3444 = vadd.f32 %v2257, %v3188
    %v3445 = vadd.f32 %v2258, %v3189
    %v3446 = vadd.f32 %v2259, %v3190
    %v3447 = vadd.f32 %v2260, %v3191
    %v3448 = vadd.f32 %v2261, %v3192
    %v3449 = vadd.f32 %v2262, %v3193
    %v3450 = vadd.f32 %v2263, %v3194
    %v3451 = vadd.f32 %v2264, %v3195
    %v3452 = vadd.f32 %v2265, %v3196
    %v3453 = vadd.f32 %v2266, %v3197
    %v3454 = vadd.f32 %v2267, %v3198
    %v3455 = vadd.f32 %v2268, %v3199
    %v3456 = vadd.f32 %v2269, %v3200
    %v3457 = vadd.f32 %v2270, %v3201
    %v3458 = vadd.f32 %v2271, %v3202
    %v3459 = vadd.f32 %v2272, %v3203
    %v3460 = vadd.f32 %v2273, %v3204
    %v3461 = vadd.f32 %v2274, %v3205
    %v3462 = vadd.f32 %v2275, %v3206
    %v3463 = vadd.f32 %v2276, %v3207
    %v3464 = vadd.f32 %v2277, %v3208
    %v3465 = vadd.f32 %v2278, %v3209
    %v3466 = vadd.f32 %v2279, %v3210
    %v3467 = vadd.f32 %v2280, %v3211
    %v3468 = vadd.f32 %v2281, %v3212
    %v3469 = vadd.f32 %v2282, %v3213
    %v3470 = vadd.f32 %v2283, %v3214
    %v3471 = vadd.f32 %v2284, %v3215
    %v3472 = vadd.f32 %v2285, %v3216
    %v3473 = vadd.f32 %v2286, %v3217
    %v3474 = vadd.f32 %v2287, %v3218
    %v3475 = vadd.f32 %v2288, %v3219
    %v3476 = vadd.f32 %v2289, %v3220
    %v3477 = vadd.f32 %v2290, %v3221
    %v3478 = vadd.f32 %v2291, %v3222
    %v3479 = vadd.f32 %v2292, %v3223
    %v3480 = vadd.f32 %v2293, %v3224
    %v3481 = vadd.f32 %v2294, %v3225
    %v3482 = vadd.f32 %v2295, %v3226
    %v3483 = vadd.f32 %v2296, %v3227
    %v3484 = vadd.f32 %v2297, %v3228
    %v3485 = vadd.f32 %v2298, %v3229
    %v3486 = vadd.f32 %v2299, %v3230
    %v3487 = vadd.f32 %v2300, %v3231
    %v3488 = vadd.f32 %v2301, %v3232
    %v3489 = vadd.f32 %v2302, %v3233
    %v3490 = vadd.f32 %v2303, %v3234
    %v3491 = vadd.f32 %v2304, %v3235
    %v3492 = vadd.f32 %v2305, %v3236
    %v3493 = vadd.f32 %v2306, %v3237
    %v3494 = vadd.f32 %v2307, %v3238
    %v3495 = vadd.f32 %v2308, %v3239
    %v3496 = vadd.f32 %v2309, %v3240
    %v3497 = vadd.f32 %v2310, %v3241
    %v3498 = vadd.f32 %v2311, %v3242
    %v3499 = vadd.f32 %v2312, %v3243
    %v3500 = vadd.f32 %v2313, %v3244
    %v3501 = vadd.f32 %v2314, %v3245
    %v3502 = vadd.f32 %v2315, %v3246
    %v3503 = vadd.f32 %v2316, %v3247
    %v3504 = vadd.f32 %v2317, %v3248
    %v3505 = vadd.f32 %v2318, %v3249
    %v3506 = vadd.f32 %v2319, %v3250
    %v3507 = vadd.f32 %v2320, %v3251
    %v3508 = vadd.f32 %v2321, %v3252
    %v3509 = vadd.f32 %v2322, %v3253
    %v3510 = vadd.f32 %v2323, %v3254
    %v3511 = vadd.f32 %v2324, %v3255
    %v3512 = vadd.f32 %v2325, %v3256
    %v3513 = vadd.f32 %v2326, %v3257
    %v3514 = vadd.f32 %v2327, %v3258
    %v3515 = vadd.f32 %v2328, %v3259
    %v3516 = vadd.f32 %v2329, %v3260
    %v3517 = vadd.f32 %v2330, %v3261
    %v3518 = vadd.f32 %v2331, %v3262
    %v3519 = vadd.f32 %v2332, %v3263
    %v3520 = vadd.f32 %v2333, %v3264
    %v3521 = vadd.f32 %v2334, %v3265
    %v3522 = vadd.f32 %v2335, %v3266
    %v3523 = vadd.f32 %v2336, %v3267
    %v3524 = vadd.f32 %v2337, %v3268
    %v3525 = vadd.f32 %v2338, %v3269
    %v3526 = vadd.f32 %v2339, %v3270
    %v3527 = vadd.f32 %v2340, %v3271
    %v3528 = vadd.f32 %v2341, %v3272
    %v3529 = vadd.f32 %v2342, %v3273
    %v3530 = vadd.f32 %v2343, %v3274
    %v3531 = vadd.f32 %v2344, %v3275
    %v3532 = vadd.f32 %v2345, %v3276
    %v3533 = vadd.f32 %v2346, %v3277
    %v3534 = vadd.f32 %v2347, %v3278
    %v3535 = vadd.f32 %v2348, %v3279
    %v3536 = vadd.f32 %v2349, %v3280
    %v3537 = vadd.f32 %v2350, %v3281
    %v3538 = vadd.f32 %v2351, %v3282
    %v3539 = vadd.f32 %v2352, %v3283
    %v3540 = vadd.f32 %v2353, %v3284
    %v3541 = vadd.f32 %v2354, %v3285
    %v3542 = vadd.f32 %v2355, %v3286
    %v3543 = vadd.f32 %v2356, %v3287
    %v3544 = vadd.f32 %v2357, %v3288
    %v3545 = vadd.f32 %v2358, %v3289
    %v3546 = vadd.f32 %v2359, %v3290
    %v3547 = vadd.f32 %v2360, %v3291
    %v3548 = vadd.f32 %v2361, %v3292
    %v3549 = vadd.f32 %v2362, %v3293
    %v3550 = vadd.f32 %v2363, %v3294
    %v3551 = vadd.f32 %v2364, %v3295
    %v3552 = vadd.f32 %v2365, %v3296
    %v3553 = vadd.f32 %v2366, %v3297
    %v3554 = vadd.f32 %v2367, %v3298
    %v3555 = vadd.f32 %v2368, %v3299
    %v3556 = vadd.f32 %v2369, %v3300
    %v3557 = vadd.f32 %v2370, %v3301
    %v3558 = vadd.f32 %v2371, %v3302
    %v3559 = vadd.f32 %v2372, %v3303
    %v3560 = vadd.f32 %v2373, %v3304
    %v3561 = vadd.f32 %v2374, %v3305
    %v3562 = vadd.f32 %v2375, %v3306
    %v3563 = vadd.f32 %v2376, %v3307
    %v3564 = vadd.f32 %v2377, %v3308
    %v3565 = vadd.f32 %v2378, %v3309
    %v3566 = vadd.f32 %v2379, %v3310
    %v3567 = vadd.f32 %v2380, %v3311
    %v3568 = vadd.f32 %v2381, %v3312
    %v3569 = vadd.f32 %v2382, %v3313
    %v3570 = vadd.f32 %v2383, %v3314
    %v3571 = vadd.f32 %v2384, %v3315
    %v3572 = vadd.f32 %v2385, %v3316
    %v3573 = vadd.f32 %v2386, %v3317
    %v3574 = vadd.f32 %v2387, %v3318
    %v3575 = vadd.f32 %v2388, %v3319
    %v3576 = vadd.f32 %v2389, %v3320
    %v3577 = vadd.f32 %v2390, %v3321
    %s3578 = scalar_lea.vmem %s2, 2
    %v3579 = vld [vmem:[%s3578] ss:$4 sm:$0xff]
    %v3580 = vlaneseq
    %v3581 = vshrl.u32 %v3580, 7
    %v3582 = vsub.s32 2, %v3581
    %v3583 = vrot.slane %v1459, %v3582
    %v3584 = vlaneseq
    %v3585 = vshrl.u32 %v3584, 7
    %v3586 = vsub.s32 2, %v3585
    %v3587 = vrot.slane %v1460, %v3586
    %v3589 = vlaneseq
    %v3590 = vshrl.u32 %v3589, 7
    %v3591 = vsub.s32 0, %v3590
    %v3592 = vrot.slane %v3579, %v3591
    %v3593 = vlaneseq
    %v3594 = vshrl.u32 %v3593, 7
    %v3595 = vsub.s32 1, %v3594
    %v3596 = vrot.slane %v3579, %v3595
    %v3597 = vlaneseq
    %v3598 = vshrl.u32 %v3597, 7
    %v3599 = vsub.s32 2, %v3598
    %v3600 = vrot.slane %v3579, %v3599
    %v3601 = vlaneseq
    %v3602 = vshrl.u32 %v3601, 7
    %v3603 = vsub.s32 3, %v3602
    %v3604 = vrot.slane %v3579, %v3603
    %v3605 = vlaneseq
    %v3606 = vshrl.u32 %v3605, 7
    %v3607 = vsub.s32 4, %v3606
    %v3608 = vrot.slane %v3579, %v3607
    %v3609 = vlaneseq
    %v3610 = vshrl.u32 %v3609, 7
    %v3611 = vsub.s32 5, %v3610
    %v3612 = vrot.slane %v3579, %v3611
    %v3613 = vlaneseq
    %v3614 = vshrl.u32 %v3613, 7
    %v3615 = vsub.s32 6, %v3614
    %v3616 = vrot.slane %v3579, %v3615
    %v3617 = vlaneseq
    %v3618 = vshrl.u32 %v3617, 7
    %v3619 = vsub.s32 7, %v3618
    %v3620 = vrot.slane %v3579, %v3619
    %3622 = vbcast.lane.b32.xlu0 %v3592, 256
    %v3623 = vpop.permute.xlu0 %3622
    %s3625 = sor.u32 256, 8
    %3626 = vbcast.lane.b32.xlu0 %v3592, %s3625
    %v3627 = vpop.permute.xlu0 %3626
    %s3629 = sor.u32 256, 16
    %3630 = vbcast.lane.b32.xlu0 %v3592, %s3629
    %v3631 = vpop.permute.xlu0 %3630
    %s3633 = sor.u32 256, 24
    %3634 = vbcast.lane.b32.xlu0 %v3592, %s3633
    %v3635 = vpop.permute.xlu0 %3634
    %s3637 = sor.u32 256, 32
    %3638 = vbcast.lane.b32.xlu0 %v3592, %s3637
    %v3639 = vpop.permute.xlu0 %3638
    %s3641 = sor.u32 256, 40
    %3642 = vbcast.lane.b32.xlu0 %v3592, %s3641
    %v3643 = vpop.permute.xlu0 %3642
    %s3645 = sor.u32 256, 48
    %3646 = vbcast.lane.b32.xlu0 %v3592, %s3645
    %v3647 = vpop.permute.xlu0 %3646
    %s3649 = sor.u32 256, 56
    %3650 = vbcast.lane.b32.xlu0 %v3592, %s3649
    %v3651 = vpop.permute.xlu0 %3650
    %s3653 = sor.u32 256, 64
    %3654 = vbcast.lane.b32.xlu0 %v3592, %s3653
    %v3655 = vpop.permute.xlu0 %3654
    %s3657 = sor.u32 256, 72
    %3658 = vbcast.lane.b32.xlu0 %v3592, %s3657
    %v3659 = vpop.permute.xlu0 %3658
    %s3661 = sor.u32 256, 80
    %3662 = vbcast.lane.b32.xlu0 %v3592, %s3661
    %v3663 = vpop.permute.xlu0 %3662
    %s3665 = sor.u32 256, 88
    %3666 = vbcast.lane.b32.xlu0 %v3592, %s3665
    %v3667 = vpop.permute.xlu0 %3666
    %s3669 = sor.u32 256, 96
    %3670 = vbcast.lane.b32.xlu0 %v3592, %s3669
    %v3671 = vpop.permute.xlu0 %3670
    %s3673 = sor.u32 256, 104
    %3674 = vbcast.lane.b32.xlu0 %v3592, %s3673
    %v3675 = vpop.permute.xlu0 %3674
    %s3677 = sor.u32 256, 112
    %3678 = vbcast.lane.b32.xlu0 %v3592, %s3677
    %v3679 = vpop.permute.xlu0 %3678
    %s3681 = sor.u32 256, 120
    %3682 = vbcast.lane.b32.xlu0 %v3592, %s3681
    %v3683 = vpop.permute.xlu0 %3682
    %3685 = vbcast.lane.b32.xlu0 %v3596, 256
    %v3686 = vpop.permute.xlu0 %3685
    %s3688 = sor.u32 256, 8
    %3689 = vbcast.lane.b32.xlu0 %v3596, %s3688
    %v3690 = vpop.permute.xlu0 %3689
    %s3692 = sor.u32 256, 16
    %3693 = vbcast.lane.b32.xlu0 %v3596, %s3692
    %v3694 = vpop.permute.xlu0 %3693
    %s3696 = sor.u32 256, 24
    %3697 = vbcast.lane.b32.xlu0 %v3596, %s3696
    %v3698 = vpop.permute.xlu0 %3697
    %s3700 = sor.u32 256, 32
    %3701 = vbcast.lane.b32.xlu0 %v3596, %s3700
    %v3702 = vpop.permute.xlu0 %3701
    %s3704 = sor.u32 256, 40
    %3705 = vbcast.lane.b32.xlu0 %v3596, %s3704
    %v3706 = vpop.permute.xlu0 %3705
    %s3708 = sor.u32 256, 48
    %3709 = vbcast.lane.b32.xlu0 %v3596, %s3708
    %v3710 = vpop.permute.xlu0 %3709
    %s3712 = sor.u32 256, 56
    %3713 = vbcast.lane.b32.xlu0 %v3596, %s3712
    %v3714 = vpop.permute.xlu0 %3713
    %s3716 = sor.u32 256, 64
    %3717 = vbcast.lane.b32.xlu0 %v3596, %s3716
    %v3718 = vpop.permute.xlu0 %3717
    %s3720 = sor.u32 256, 72
    %3721 = vbcast.lane.b32.xlu0 %v3596, %s3720
    %v3722 = vpop.permute.xlu0 %3721
    %s3724 = sor.u32 256, 80
    %3725 = vbcast.lane.b32.xlu0 %v3596, %s3724
    %v3726 = vpop.permute.xlu0 %3725
    %s3728 = sor.u32 256, 88
    %3729 = vbcast.lane.b32.xlu0 %v3596, %s3728
    %v3730 = vpop.permute.xlu0 %3729
    %s3732 = sor.u32 256, 96
    %3733 = vbcast.lane.b32.xlu0 %v3596, %s3732
    %v3734 = vpop.permute.xlu0 %3733
    %s3736 = sor.u32 256, 104
    %3737 = vbcast.lane.b32.xlu0 %v3596, %s3736
    %v3738 = vpop.permute.xlu0 %3737
    %s3740 = sor.u32 256, 112
    %3741 = vbcast.lane.b32.xlu0 %v3596, %s3740
    %v3742 = vpop.permute.xlu0 %3741
    %s3744 = sor.u32 256, 120
    %3745 = vbcast.lane.b32.xlu0 %v3596, %s3744
    %v3746 = vpop.permute.xlu0 %3745
    %3748 = vbcast.lane.b32.xlu0 %v3600, 256
    %v3749 = vpop.permute.xlu0 %3748
    %s3751 = sor.u32 256, 8
    %3752 = vbcast.lane.b32.xlu0 %v3600, %s3751
    %v3753 = vpop.permute.xlu0 %3752
    %s3755 = sor.u32 256, 16
    %3756 = vbcast.lane.b32.xlu0 %v3600, %s3755
    %v3757 = vpop.permute.xlu0 %3756
    %s3759 = sor.u32 256, 24
    %3760 = vbcast.lane.b32.xlu0 %v3600, %s3759
    %v3761 = vpop.permute.xlu0 %3760
    %s3763 = sor.u32 256, 32
    %3764 = vbcast.lane.b32.xlu0 %v3600, %s3763
    %v3765 = vpop.permute.xlu0 %3764
    %s3767 = sor.u32 256, 40
    %3768 = vbcast.lane.b32.xlu0 %v3600, %s3767
    %v3769 = vpop.permute.xlu0 %3768
    %s3771 = sor.u32 256, 48
    %3772 = vbcast.lane.b32.xlu0 %v3600, %s3771
    %v3773 = vpop.permute.xlu0 %3772
    %s3775 = sor.u32 256, 56
    %3776 = vbcast.lane.b32.xlu0 %v3600, %s3775
    %v3777 = vpop.permute.xlu0 %3776
    %s3779 = sor.u32 256, 64
    %3780 = vbcast.lane.b32.xlu0 %v3600, %s3779
    %v3781 = vpop.permute.xlu0 %3780
    %s3783 = sor.u32 256, 72
    %3784 = vbcast.lane.b32.xlu0 %v3600, %s3783
    %v3785 = vpop.permute.xlu0 %3784
    %s3787 = sor.u32 256, 80
    %3788 = vbcast.lane.b32.xlu0 %v3600, %s3787
    %v3789 = vpop.permute.xlu0 %3788
    %s3791 = sor.u32 256, 88
    %3792 = vbcast.lane.b32.xlu0 %v3600, %s3791
    %v3793 = vpop.permute.xlu0 %3792
    %s3795 = sor.u32 256, 96
    %3796 = vbcast.lane.b32.xlu0 %v3600, %s3795
    %v3797 = vpop.permute.xlu0 %3796
    %s3799 = sor.u32 256, 104
    %3800 = vbcast.lane.b32.xlu0 %v3600, %s3799
    %v3801 = vpop.permute.xlu0 %3800
    %s3803 = sor.u32 256, 112
    %3804 = vbcast.lane.b32.xlu0 %v3600, %s3803
    %v3805 = vpop.permute.xlu0 %3804
    %s3807 = sor.u32 256, 120
    %3808 = vbcast.lane.b32.xlu0 %v3600, %s3807
    %v3809 = vpop.permute.xlu0 %3808
    %3811 = vbcast.lane.b32.xlu0 %v3604, 256
    %v3812 = vpop.permute.xlu0 %3811
    %s3814 = sor.u32 256, 8
    %3815 = vbcast.lane.b32.xlu0 %v3604, %s3814
    %v3816 = vpop.permute.xlu0 %3815
    %s3818 = sor.u32 256, 16
    %3819 = vbcast.lane.b32.xlu0 %v3604, %s3818
    %v3820 = vpop.permute.xlu0 %3819
    %s3822 = sor.u32 256, 24
    %3823 = vbcast.lane.b32.xlu0 %v3604, %s3822
    %v3824 = vpop.permute.xlu0 %3823
    %s3826 = sor.u32 256, 32
    %3827 = vbcast.lane.b32.xlu0 %v3604, %s3826
    %v3828 = vpop.permute.xlu0 %3827
    %s3830 = sor.u32 256, 40
    %3831 = vbcast.lane.b32.xlu0 %v3604, %s3830
    %v3832 = vpop.permute.xlu0 %3831
    %s3834 = sor.u32 256, 48
    %3835 = vbcast.lane.b32.xlu0 %v3604, %s3834
    %v3836 = vpop.permute.xlu0 %3835
    %s3838 = sor.u32 256, 56
    %3839 = vbcast.lane.b32.xlu0 %v3604, %s3838
    %v3840 = vpop.permute.xlu0 %3839
    %s3842 = sor.u32 256, 64
    %3843 = vbcast.lane.b32.xlu0 %v3604, %s3842
    %v3844 = vpop.permute.xlu0 %3843
    %s3846 = sor.u32 256, 72
    %3847 = vbcast.lane.b32.xlu0 %v3604, %s3846
    %v3848 = vpop.permute.xlu0 %3847
    %s3850 = sor.u32 256, 80
    %3851 = vbcast.lane.b32.xlu0 %v3604, %s3850
    %v3852 = vpop.permute.xlu0 %3851
    %s3854 = sor.u32 256, 88
    %3855 = vbcast.lane.b32.xlu0 %v3604, %s3854
    %v3856 = vpop.permute.xlu0 %3855
    %s3858 = sor.u32 256, 96
    %3859 = vbcast.lane.b32.xlu0 %v3604, %s3858
    %v3860 = vpop.permute.xlu0 %3859
    %s3862 = sor.u32 256, 104
    %3863 = vbcast.lane.b32.xlu0 %v3604, %s3862
    %v3864 = vpop.permute.xlu0 %3863
    %s3866 = sor.u32 256, 112
    %3867 = vbcast.lane.b32.xlu0 %v3604, %s3866
    %v3868 = vpop.permute.xlu0 %3867
    %s3870 = sor.u32 256, 120
    %3871 = vbcast.lane.b32.xlu0 %v3604, %s3870
    %v3872 = vpop.permute.xlu0 %3871
    %3874 = vbcast.lane.b32.xlu0 %v3608, 256
    %v3875 = vpop.permute.xlu0 %3874
    %s3877 = sor.u32 256, 8
    %3878 = vbcast.lane.b32.xlu0 %v3608, %s3877
    %v3879 = vpop.permute.xlu0 %3878
    %s3881 = sor.u32 256, 16
    %3882 = vbcast.lane.b32.xlu0 %v3608, %s3881
    %v3883 = vpop.permute.xlu0 %3882
    %s3885 = sor.u32 256, 24
    %3886 = vbcast.lane.b32.xlu0 %v3608, %s3885
    %v3887 = vpop.permute.xlu0 %3886
    %s3889 = sor.u32 256, 32
    %3890 = vbcast.lane.b32.xlu0 %v3608, %s3889
    %v3891 = vpop.permute.xlu0 %3890
    %s3893 = sor.u32 256, 40
    %3894 = vbcast.lane.b32.xlu0 %v3608, %s3893
    %v3895 = vpop.permute.xlu0 %3894
    %s3897 = sor.u32 256, 48
    %3898 = vbcast.lane.b32.xlu0 %v3608, %s3897
    %v3899 = vpop.permute.xlu0 %3898
    %s3901 = sor.u32 256, 56
    %3902 = vbcast.lane.b32.xlu0 %v3608, %s3901
    %v3903 = vpop.permute.xlu0 %3902
    %s3905 = sor.u32 256, 64
    %3906 = vbcast.lane.b32.xlu0 %v3608, %s3905
    %v3907 = vpop.permute.xlu0 %3906
    %s3909 = sor.u32 256, 72
    %3910 = vbcast.lane.b32.xlu0 %v3608, %s3909
    %v3911 = vpop.permute.xlu0 %3910
    %s3913 = sor.u32 256, 80
    %3914 = vbcast.lane.b32.xlu0 %v3608, %s3913
    %v3915 = vpop.permute.xlu0 %3914
    %s3917 = sor.u32 256, 88
    %3918 = vbcast.lane.b32.xlu0 %v3608, %s3917
    %v3919 = vpop.permute.xlu0 %3918
    %s3921 = sor.u32 256, 96
    %3922 = vbcast.lane.b32.xlu0 %v3608, %s3921
    %v3923 = vpop.permute.xlu0 %3922
    %s3925 = sor.u32 256, 104
    %3926 = vbcast.lane.b32.xlu0 %v3608, %s3925
    %v3927 = vpop.permute.xlu0 %3926
    %s3929 = sor.u32 256, 112
    %3930 = vbcast.lane.b32.xlu0 %v3608, %s3929
    %v3931 = vpop.permute.xlu0 %3930
    %s3933 = sor.u32 256, 120
    %3934 = vbcast.lane.b32.xlu0 %v3608, %s3933
    %v3935 = vpop.permute.xlu0 %3934
    %3937 = vbcast.lane.b32.xlu0 %v3612, 256
    %v3938 = vpop.permute.xlu0 %3937
    %s3940 = sor.u32 256, 8
    %3941 = vbcast.lane.b32.xlu0 %v3612, %s3940
    %v3942 = vpop.permute.xlu0 %3941
    %s3944 = sor.u32 256, 16
    %3945 = vbcast.lane.b32.xlu0 %v3612, %s3944
    %v3946 = vpop.permute.xlu0 %3945
    %s3948 = sor.u32 256, 24
    %3949 = vbcast.lane.b32.xlu0 %v3612, %s3948
    %v3950 = vpop.permute.xlu0 %3949
    %s3952 = sor.u32 256, 32
    %3953 = vbcast.lane.b32.xlu0 %v3612, %s3952
    %v3954 = vpop.permute.xlu0 %3953
    %s3956 = sor.u32 256, 40
    %3957 = vbcast.lane.b32.xlu0 %v3612, %s3956
    %v3958 = vpop.permute.xlu0 %3957
    %s3960 = sor.u32 256, 48
    %3961 = vbcast.lane.b32.xlu0 %v3612, %s3960
    %v3962 = vpop.permute.xlu0 %3961
    %s3964 = sor.u32 256, 56
    %3965 = vbcast.lane.b32.xlu0 %v3612, %s3964
    %v3966 = vpop.permute.xlu0 %3965
    %s3968 = sor.u32 256, 64
    %3969 = vbcast.lane.b32.xlu0 %v3612, %s3968
    %v3970 = vpop.permute.xlu0 %3969
    %s3972 = sor.u32 256, 72
    %3973 = vbcast.lane.b32.xlu0 %v3612, %s3972
    %v3974 = vpop.permute.xlu0 %3973
    %s3976 = sor.u32 256, 80
    %3977 = vbcast.lane.b32.xlu0 %v3612, %s3976
    %v3978 = vpop.permute.xlu0 %3977
    %s3980 = sor.u32 256, 88
    %3981 = vbcast.lane.b32.xlu0 %v3612, %s3980
    %v3982 = vpop.permute.xlu0 %3981
    %s3984 = sor.u32 256, 96
    %3985 = vbcast.lane.b32.xlu0 %v3612, %s3984
    %v3986 = vpop.permute.xlu0 %3985
    %s3988 = sor.u32 256, 104
    %3989 = vbcast.lane.b32.xlu0 %v3612, %s3988
    %v3990 = vpop.permute.xlu0 %3989
    %s3992 = sor.u32 256, 112
    %3993 = vbcast.lane.b32.xlu0 %v3612, %s3992
    %v3994 = vpop.permute.xlu0 %3993
    %s3996 = sor.u32 256, 120
    %3997 = vbcast.lane.b32.xlu0 %v3612, %s3996
    %v3998 = vpop.permute.xlu0 %3997
    %4000 = vbcast.lane.b32.xlu0 %v3616, 256
    %v4001 = vpop.permute.xlu0 %4000
    %s4003 = sor.u32 256, 8
    %4004 = vbcast.lane.b32.xlu0 %v3616, %s4003
    %v4005 = vpop.permute.xlu0 %4004
    %s4007 = sor.u32 256, 16
    %4008 = vbcast.lane.b32.xlu0 %v3616, %s4007
    %v4009 = vpop.permute.xlu0 %4008
    %s4011 = sor.u32 256, 24
    %4012 = vbcast.lane.b32.xlu0 %v3616, %s4011
    %v4013 = vpop.permute.xlu0 %4012
    %s4015 = sor.u32 256, 32
    %4016 = vbcast.lane.b32.xlu0 %v3616, %s4015
    %v4017 = vpop.permute.xlu0 %4016
    %s4019 = sor.u32 256, 40
    %4020 = vbcast.lane.b32.xlu0 %v3616, %s4019
    %v4021 = vpop.permute.xlu0 %4020
    %s4023 = sor.u32 256, 48
    %4024 = vbcast.lane.b32.xlu0 %v3616, %s4023
    %v4025 = vpop.permute.xlu0 %4024
    %s4027 = sor.u32 256, 56
    %4028 = vbcast.lane.b32.xlu0 %v3616, %s4027
    %v4029 = vpop.permute.xlu0 %4028
    %s4031 = sor.u32 256, 64
    %4032 = vbcast.lane.b32.xlu0 %v3616, %s4031
    %v4033 = vpop.permute.xlu0 %4032
    %s4035 = sor.u32 256, 72
    %4036 = vbcast.lane.b32.xlu0 %v3616, %s4035
    %v4037 = vpop.permute.xlu0 %4036
    %s4039 = sor.u32 256, 80
    %4040 = vbcast.lane.b32.xlu0 %v3616, %s4039
    %v4041 = vpop.permute.xlu0 %4040
    %s4043 = sor.u32 256, 88
    %4044 = vbcast.lane.b32.xlu0 %v3616, %s4043
    %v4045 = vpop.permute.xlu0 %4044
    %s4047 = sor.u32 256, 96
    %4048 = vbcast.lane.b32.xlu0 %v3616, %s4047
    %v4049 = vpop.permute.xlu0 %4048
    %s4051 = sor.u32 256, 104
    %4052 = vbcast.lane.b32.xlu0 %v3616, %s4051
    %v4053 = vpop.permute.xlu0 %4052
    %s4055 = sor.u32 256, 112
    %4056 = vbcast.lane.b32.xlu0 %v3616, %s4055
    %v4057 = vpop.permute.xlu0 %4056
    %s4059 = sor.u32 256, 120
    %4060 = vbcast.lane.b32.xlu0 %v3616, %s4059
    %v4061 = vpop.permute.xlu0 %4060
    %4063 = vbcast.lane.b32.xlu0 %v3620, 256
    %v4064 = vpop.permute.xlu0 %4063
    %s4066 = sor.u32 256, 8
    %4067 = vbcast.lane.b32.xlu0 %v3620, %s4066
    %v4068 = vpop.permute.xlu0 %4067
    %s4070 = sor.u32 256, 16
    %4071 = vbcast.lane.b32.xlu0 %v3620, %s4070
    %v4072 = vpop.permute.xlu0 %4071
    %s4074 = sor.u32 256, 24
    %4075 = vbcast.lane.b32.xlu0 %v3620, %s4074
    %v4076 = vpop.permute.xlu0 %4075
    %s4078 = sor.u32 256, 32
    %4079 = vbcast.lane.b32.xlu0 %v3620, %s4078
    %v4080 = vpop.permute.xlu0 %4079
    %s4082 = sor.u32 256, 40
    %4083 = vbcast.lane.b32.xlu0 %v3620, %s4082
    %v4084 = vpop.permute.xlu0 %4083
    %s4086 = sor.u32 256, 48
    %4087 = vbcast.lane.b32.xlu0 %v3620, %s4086
    %v4088 = vpop.permute.xlu0 %4087
    %s4090 = sor.u32 256, 56
    %4091 = vbcast.lane.b32.xlu0 %v3620, %s4090
    %v4092 = vpop.permute.xlu0 %4091
    %s4094 = sor.u32 256, 64
    %4095 = vbcast.lane.b32.xlu0 %v3620, %s4094
    %v4096 = vpop.permute.xlu0 %4095
    %s4098 = sor.u32 256, 72
    %4099 = vbcast.lane.b32.xlu0 %v3620, %s4098
    %v4100 = vpop.permute.xlu0 %4099
    %s4102 = sor.u32 256, 80
    %4103 = vbcast.lane.b32.xlu0 %v3620, %s4102
    %v4104 = vpop.permute.xlu0 %4103
    %s4106 = sor.u32 256, 88
    %4107 = vbcast.lane.b32.xlu0 %v3620, %s4106
    %v4108 = vpop.permute.xlu0 %4107
    %s4110 = sor.u32 256, 96
    %4111 = vbcast.lane.b32.xlu0 %v3620, %s4110
    %v4112 = vpop.permute.xlu0 %4111
    %s4114 = sor.u32 256, 104
    %4115 = vbcast.lane.b32.xlu0 %v3620, %s4114
    %v4116 = vpop.permute.xlu0 %4115
    %s4118 = sor.u32 256, 112
    %4119 = vbcast.lane.b32.xlu0 %v3620, %s4118
    %v4120 = vpop.permute.xlu0 %4119
    %s4122 = sor.u32 256, 120
    %4123 = vbcast.lane.b32.xlu0 %v3620, %s4122
    %v4124 = vpop.permute.xlu0 %4123
    %v4253 = vmul.f32 %v3583, %v3623
    %v4254 = vmul.f32 %v3583, %v3627
    %v4255 = vmul.f32 %v3583, %v3631
    %v4256 = vmul.f32 %v3583, %v3635
    %v4257 = vmul.f32 %v3583, %v3639
    %v4258 = vmul.f32 %v3583, %v3643
    %v4259 = vmul.f32 %v3583, %v3647
    %v4260 = vmul.f32 %v3583, %v3651
    %v4261 = vmul.f32 %v3583, %v3655
    %v4262 = vmul.f32 %v3583, %v3659
    %v4263 = vmul.f32 %v3583, %v3663
    %v4264 = vmul.f32 %v3583, %v3667
    %v4265 = vmul.f32 %v3583, %v3671
    %v4266 = vmul.f32 %v3583, %v3675
    %v4267 = vmul.f32 %v3583, %v3679
    %v4268 = vmul.f32 %v3583, %v3683
    %v4269 = vmul.f32 %v3583, %v3686
    %v4270 = vmul.f32 %v3583, %v3690
    %v4271 = vmul.f32 %v3583, %v3694
    %v4272 = vmul.f32 %v3583, %v3698
    %v4273 = vmul.f32 %v3583, %v3702
    %v4274 = vmul.f32 %v3583, %v3706
    %v4275 = vmul.f32 %v3583, %v3710
    %v4276 = vmul.f32 %v3583, %v3714
    %v4277 = vmul.f32 %v3583, %v3718
    %v4278 = vmul.f32 %v3583, %v3722
    %v4279 = vmul.f32 %v3583, %v3726
    %v4280 = vmul.f32 %v3583, %v3730
    %v4281 = vmul.f32 %v3583, %v3734
    %v4282 = vmul.f32 %v3583, %v3738
    %v4283 = vmul.f32 %v3583, %v3742
    %v4284 = vmul.f32 %v3583, %v3746
    %v4285 = vmul.f32 %v3583, %v3749
    %v4286 = vmul.f32 %v3583, %v3753
    %v4287 = vmul.f32 %v3583, %v3757
    %v4288 = vmul.f32 %v3583, %v3761
    %v4289 = vmul.f32 %v3583, %v3765
    %v4290 = vmul.f32 %v3583, %v3769
    %v4291 = vmul.f32 %v3583, %v3773
    %v4292 = vmul.f32 %v3583, %v3777
    %v4293 = vmul.f32 %v3583, %v3781
    %v4294 = vmul.f32 %v3583, %v3785
    %v4295 = vmul.f32 %v3583, %v3789
    %v4296 = vmul.f32 %v3583, %v3793
    %v4297 = vmul.f32 %v3583, %v3797
    %v4298 = vmul.f32 %v3583, %v3801
    %v4299 = vmul.f32 %v3583, %v3805
    %v4300 = vmul.f32 %v3583, %v3809
    %v4301 = vmul.f32 %v3583, %v3812
    %v4302 = vmul.f32 %v3583, %v3816
    %v4303 = vmul.f32 %v3583, %v3820
    %v4304 = vmul.f32 %v3583, %v3824
    %v4305 = vmul.f32 %v3583, %v3828
    %v4306 = vmul.f32 %v3583, %v3832
    %v4307 = vmul.f32 %v3583, %v3836
    %v4308 = vmul.f32 %v3583, %v3840
    %v4309 = vmul.f32 %v3583, %v3844
    %v4310 = vmul.f32 %v3583, %v3848
    %v4311 = vmul.f32 %v3583, %v3852
    %v4312 = vmul.f32 %v3583, %v3856
    %v4313 = vmul.f32 %v3583, %v3860
    %v4314 = vmul.f32 %v3583, %v3864
    %v4315 = vmul.f32 %v3583, %v3868
    %v4316 = vmul.f32 %v3583, %v3872
    %v4317 = vmul.f32 %v3583, %v3875
    %v4318 = vmul.f32 %v3583, %v3879
    %v4319 = vmul.f32 %v3583, %v3883
    %v4320 = vmul.f32 %v3583, %v3887
    %v4321 = vmul.f32 %v3583, %v3891
    %v4322 = vmul.f32 %v3583, %v3895
    %v4323 = vmul.f32 %v3583, %v3899
    %v4324 = vmul.f32 %v3583, %v3903
    %v4325 = vmul.f32 %v3583, %v3907
    %v4326 = vmul.f32 %v3583, %v3911
    %v4327 = vmul.f32 %v3583, %v3915
    %v4328 = vmul.f32 %v3583, %v3919
    %v4329 = vmul.f32 %v3583, %v3923
    %v4330 = vmul.f32 %v3583, %v3927
    %v4331 = vmul.f32 %v3583, %v3931
    %v4332 = vmul.f32 %v3583, %v3935
    %v4333 = vmul.f32 %v3583, %v3938
    %v4334 = vmul.f32 %v3583, %v3942
    %v4335 = vmul.f32 %v3583, %v3946
    %v4336 = vmul.f32 %v3583, %v3950
    %v4337 = vmul.f32 %v3583, %v3954
    %v4338 = vmul.f32 %v3583, %v3958
    %v4339 = vmul.f32 %v3583, %v3962
    %v4340 = vmul.f32 %v3583, %v3966
    %v4341 = vmul.f32 %v3583, %v3970
    %v4342 = vmul.f32 %v3583, %v3974
    %v4343 = vmul.f32 %v3583, %v3978
    %v4344 = vmul.f32 %v3583, %v3982
    %v4345 = vmul.f32 %v3583, %v3986
    %v4346 = vmul.f32 %v3583, %v3990
    %v4347 = vmul.f32 %v3583, %v3994
    %v4348 = vmul.f32 %v3583, %v3998
    %v4349 = vmul.f32 %v3583, %v4001
    %v4350 = vmul.f32 %v3583, %v4005
    %v4351 = vmul.f32 %v3583, %v4009
    %v4352 = vmul.f32 %v3583, %v4013
    %v4353 = vmul.f32 %v3583, %v4017
    %v4354 = vmul.f32 %v3583, %v4021
    %v4355 = vmul.f32 %v3583, %v4025
    %v4356 = vmul.f32 %v3583, %v4029
    %v4357 = vmul.f32 %v3583, %v4033
    %v4358 = vmul.f32 %v3583, %v4037
    %v4359 = vmul.f32 %v3583, %v4041
    %v4360 = vmul.f32 %v3583, %v4045
    %v4361 = vmul.f32 %v3583, %v4049
    %v4362 = vmul.f32 %v3583, %v4053
    %v4363 = vmul.f32 %v3583, %v4057
    %v4364 = vmul.f32 %v3583, %v4061
    %v4365 = vmul.f32 %v3583, %v4064
    %v4366 = vmul.f32 %v3583, %v4068
    %v4367 = vmul.f32 %v3583, %v4072
    %v4368 = vmul.f32 %v3583, %v4076
    %v4369 = vmul.f32 %v3583, %v4080
    %v4370 = vmul.f32 %v3583, %v4084
    %v4371 = vmul.f32 %v3583, %v4088
    %v4372 = vmul.f32 %v3583, %v4092
    %v4373 = vmul.f32 %v3583, %v4096
    %v4374 = vmul.f32 %v3583, %v4100
    %v4375 = vmul.f32 %v3583, %v4104
    %v4376 = vmul.f32 %v3583, %v4108
    %v4377 = vmul.f32 %v3583, %v4112
    %v4378 = vmul.f32 %v3583, %v4116
    %v4379 = vmul.f32 %v3583, %v4120
    %v4380 = vmul.f32 %v3583, %v4124
    %v4381 = vmul.f32 %v3587, %v3623
    %v4382 = vmul.f32 %v3587, %v3627
    %v4383 = vmul.f32 %v3587, %v3631
    %v4384 = vmul.f32 %v3587, %v3635
    %v4385 = vmul.f32 %v3587, %v3639
    %v4386 = vmul.f32 %v3587, %v3643
    %v4387 = vmul.f32 %v3587, %v3647
    %v4388 = vmul.f32 %v3587, %v3651
    %v4389 = vmul.f32 %v3587, %v3655
    %v4390 = vmul.f32 %v3587, %v3659
    %v4391 = vmul.f32 %v3587, %v3663
    %v4392 = vmul.f32 %v3587, %v3667
    %v4393 = vmul.f32 %v3587, %v3671
    %v4394 = vmul.f32 %v3587, %v3675
    %v4395 = vmul.f32 %v3587, %v3679
    %v4396 = vmul.f32 %v3587, %v3683
    %v4397 = vmul.f32 %v3587, %v3686
    %v4398 = vmul.f32 %v3587, %v3690
    %v4399 = vmul.f32 %v3587, %v3694
    %v4400 = vmul.f32 %v3587, %v3698
    %v4401 = vmul.f32 %v3587, %v3702
    %v4402 = vmul.f32 %v3587, %v3706
    %v4403 = vmul.f32 %v3587, %v3710
    %v4404 = vmul.f32 %v3587, %v3714
    %v4405 = vmul.f32 %v3587, %v3718
    %v4406 = vmul.f32 %v3587, %v3722
    %v4407 = vmul.f32 %v3587, %v3726
    %v4408 = vmul.f32 %v3587, %v3730
    %v4409 = vmul.f32 %v3587, %v3734
    %v4410 = vmul.f32 %v3587, %v3738
    %v4411 = vmul.f32 %v3587, %v3742
    %v4412 = vmul.f32 %v3587, %v3746
    %v4413 = vmul.f32 %v3587, %v3749
    %v4414 = vmul.f32 %v3587, %v3753
    %v4415 = vmul.f32 %v3587, %v3757
    %v4416 = vmul.f32 %v3587, %v3761
    %v4417 = vmul.f32 %v3587, %v3765
    %v4418 = vmul.f32 %v3587, %v3769
    %v4419 = vmul.f32 %v3587, %v3773
    %v4420 = vmul.f32 %v3587, %v3777
    %v4421 = vmul.f32 %v3587, %v3781
    %v4422 = vmul.f32 %v3587, %v3785
    %v4423 = vmul.f32 %v3587, %v3789
    %v4424 = vmul.f32 %v3587, %v3793
    %v4425 = vmul.f32 %v3587, %v3797
    %v4426 = vmul.f32 %v3587, %v3801
    %v4427 = vmul.f32 %v3587, %v3805
    %v4428 = vmul.f32 %v3587, %v3809
    %v4429 = vmul.f32 %v3587, %v3812
    %v4430 = vmul.f32 %v3587, %v3816
    %v4431 = vmul.f32 %v3587, %v3820
    %v4432 = vmul.f32 %v3587, %v3824
    %v4433 = vmul.f32 %v3587, %v3828
    %v4434 = vmul.f32 %v3587, %v3832
    %v4435 = vmul.f32 %v3587, %v3836
    %v4436 = vmul.f32 %v3587, %v3840
    %v4437 = vmul.f32 %v3587, %v3844
    %v4438 = vmul.f32 %v3587, %v3848
    %v4439 = vmul.f32 %v3587, %v3852
    %v4440 = vmul.f32 %v3587, %v3856
    %v4441 = vmul.f32 %v3587, %v3860
    %v4442 = vmul.f32 %v3587, %v3864
    %v4443 = vmul.f32 %v3587, %v3868
    %v4444 = vmul.f32 %v3587, %v3872
    %v4445 = vmul.f32 %v3587, %v3875
    %v4446 = vmul.f32 %v3587, %v3879
    %v4447 = vmul.f32 %v3587, %v3883
    %v4448 = vmul.f32 %v3587, %v3887
    %v4449 = vmul.f32 %v3587, %v3891
    %v4450 = vmul.f32 %v3587, %v3895
    %v4451 = vmul.f32 %v3587, %v3899
    %v4452 = vmul.f32 %v3587, %v3903
    %v4453 = vmul.f32 %v3587, %v3907
    %v4454 = vmul.f32 %v3587, %v3911
    %v4455 = vmul.f32 %v3587, %v3915
    %v4456 = vmul.f32 %v3587, %v3919
    %v4457 = vmul.f32 %v3587, %v3923
    %v4458 = vmul.f32 %v3587, %v3927
    %v4459 = vmul.f32 %v3587, %v3931
    %v4460 = vmul.f32 %v3587, %v3935
    %v4461 = vmul.f32 %v3587, %v3938
    %v4462 = vmul.f32 %v3587, %v3942
    %v4463 = vmul.f32 %v3587, %v3946
    %v4464 = vmul.f32 %v3587, %v3950
    %v4465 = vmul.f32 %v3587, %v3954
    %v4466 = vmul.f32 %v3587, %v3958
    %v4467 = vmul.f32 %v3587, %v3962
    %v4468 = vmul.f32 %v3587, %v3966
    %v4469 = vmul.f32 %v3587, %v3970
    %v4470 = vmul.f32 %v3587, %v3974
    %v4471 = vmul.f32 %v3587, %v3978
    %v4472 = vmul.f32 %v3587, %v3982
    %v4473 = vmul.f32 %v3587, %v3986
    %v4474 = vmul.f32 %v3587, %v3990
    %v4475 = vmul.f32 %v3587, %v3994
    %v4476 = vmul.f32 %v3587, %v3998
    %v4477 = vmul.f32 %v3587, %v4001
    %v4478 = vmul.f32 %v3587, %v4005
    %v4479 = vmul.f32 %v3587, %v4009
    %v4480 = vmul.f32 %v3587, %v4013
    %v4481 = vmul.f32 %v3587, %v4017
    %v4482 = vmul.f32 %v3587, %v4021
    %v4483 = vmul.f32 %v3587, %v4025
    %v4484 = vmul.f32 %v3587, %v4029
    %v4485 = vmul.f32 %v3587, %v4033
    %v4486 = vmul.f32 %v3587, %v4037
    %v4487 = vmul.f32 %v3587, %v4041
    %v4488 = vmul.f32 %v3587, %v4045
    %v4489 = vmul.f32 %v3587, %v4049
    %v4490 = vmul.f32 %v3587, %v4053
    %v4491 = vmul.f32 %v3587, %v4057
    %v4492 = vmul.f32 %v3587, %v4061
    %v4493 = vmul.f32 %v3587, %v4064
    %v4494 = vmul.f32 %v3587, %v4068
    %v4495 = vmul.f32 %v3587, %v4072
    %v4496 = vmul.f32 %v3587, %v4076
    %v4497 = vmul.f32 %v3587, %v4080
    %v4498 = vmul.f32 %v3587, %v4084
    %v4499 = vmul.f32 %v3587, %v4088
    %v4500 = vmul.f32 %v3587, %v4092
    %v4501 = vmul.f32 %v3587, %v4096
    %v4502 = vmul.f32 %v3587, %v4100
    %v4503 = vmul.f32 %v3587, %v4104
    %v4504 = vmul.f32 %v3587, %v4108
    %v4505 = vmul.f32 %v3587, %v4112
    %v4506 = vmul.f32 %v3587, %v4116
    %v4507 = vmul.f32 %v3587, %v4120
    %v4508 = vmul.f32 %v3587, %v4124
    %v4509 = vadd.f32 %v3322, %v4253
    %v4510 = vadd.f32 %v3323, %v4254
    %v4511 = vadd.f32 %v3324, %v4255
    %v4512 = vadd.f32 %v3325, %v4256
    %v4513 = vadd.f32 %v3326, %v4257
    %v4514 = vadd.f32 %v3327, %v4258
    %v4515 = vadd.f32 %v3328, %v4259
    %v4516 = vadd.f32 %v3329, %v4260
    %v4517 = vadd.f32 %v3330, %v4261
    %v4518 = vadd.f32 %v3331, %v4262
    %v4519 = vadd.f32 %v3332, %v4263
    %v4520 = vadd.f32 %v3333, %v4264
    %v4521 = vadd.f32 %v3334, %v4265
    %v4522 = vadd.f32 %v3335, %v4266
    %v4523 = vadd.f32 %v3336, %v4267
    %v4524 = vadd.f32 %v3337, %v4268
    %v4525 = vadd.f32 %v3338, %v4269
    %v4526 = vadd.f32 %v3339, %v4270
    %v4527 = vadd.f32 %v3340, %v4271
    %v4528 = vadd.f32 %v3341, %v4272
    %v4529 = vadd.f32 %v3342, %v4273
    %v4530 = vadd.f32 %v3343, %v4274
    %v4531 = vadd.f32 %v3344, %v4275
    %v4532 = vadd.f32 %v3345, %v4276
    %v4533 = vadd.f32 %v3346, %v4277
    %v4534 = vadd.f32 %v3347, %v4278
    %v4535 = vadd.f32 %v3348, %v4279
    %v4536 = vadd.f32 %v3349, %v4280
    %v4537 = vadd.f32 %v3350, %v4281
    %v4538 = vadd.f32 %v3351, %v4282
    %v4539 = vadd.f32 %v3352, %v4283
    %v4540 = vadd.f32 %v3353, %v4284
    %v4541 = vadd.f32 %v3354, %v4285
    %v4542 = vadd.f32 %v3355, %v4286
    %v4543 = vadd.f32 %v3356, %v4287
    %v4544 = vadd.f32 %v3357, %v4288
    %v4545 = vadd.f32 %v3358, %v4289
    %v4546 = vadd.f32 %v3359, %v4290
    %v4547 = vadd.f32 %v3360, %v4291
    %v4548 = vadd.f32 %v3361, %v4292
    %v4549 = vadd.f32 %v3362, %v4293
    %v4550 = vadd.f32 %v3363, %v4294
    %v4551 = vadd.f32 %v3364, %v4295
    %v4552 = vadd.f32 %v3365, %v4296
    %v4553 = vadd.f32 %v3366, %v4297
    %v4554 = vadd.f32 %v3367, %v4298
    %v4555 = vadd.f32 %v3368, %v4299
    %v4556 = vadd.f32 %v3369, %v4300
    %v4557 = vadd.f32 %v3370, %v4301
    %v4558 = vadd.f32 %v3371, %v4302
    %v4559 = vadd.f32 %v3372, %v4303
    %v4560 = vadd.f32 %v3373, %v4304
    %v4561 = vadd.f32 %v3374, %v4305
    %v4562 = vadd.f32 %v3375, %v4306
    %v4563 = vadd.f32 %v3376, %v4307
    %v4564 = vadd.f32 %v3377, %v4308
    %v4565 = vadd.f32 %v3378, %v4309
    %v4566 = vadd.f32 %v3379, %v4310
    %v4567 = vadd.f32 %v3380, %v4311
    %v4568 = vadd.f32 %v3381, %v4312
    %v4569 = vadd.f32 %v3382, %v4313
    %v4570 = vadd.f32 %v3383, %v4314
    %v4571 = vadd.f32 %v3384, %v4315
    %v4572 = vadd.f32 %v3385, %v4316
    %v4573 = vadd.f32 %v3386, %v4317
    %v4574 = vadd.f32 %v3387, %v4318
    %v4575 = vadd.f32 %v3388, %v4319
    %v4576 = vadd.f32 %v3389, %v4320
    %v4577 = vadd.f32 %v3390, %v4321
    %v4578 = vadd.f32 %v3391, %v4322
    %v4579 = vadd.f32 %v3392, %v4323
    %v4580 = vadd.f32 %v3393, %v4324
    %v4581 = vadd.f32 %v3394, %v4325
    %v4582 = vadd.f32 %v3395, %v4326
    %v4583 = vadd.f32 %v3396, %v4327
    %v4584 = vadd.f32 %v3397, %v4328
    %v4585 = vadd.f32 %v3398, %v4329
    %v4586 = vadd.f32 %v3399, %v4330
    %v4587 = vadd.f32 %v3400, %v4331
    %v4588 = vadd.f32 %v3401, %v4332
    %v4589 = vadd.f32 %v3402, %v4333
    %v4590 = vadd.f32 %v3403, %v4334
    %v4591 = vadd.f32 %v3404, %v4335
    %v4592 = vadd.f32 %v3405, %v4336
    %v4593 = vadd.f32 %v3406, %v4337
    %v4594 = vadd.f32 %v3407, %v4338
    %v4595 = vadd.f32 %v3408, %v4339
    %v4596 = vadd.f32 %v3409, %v4340
    %v4597 = vadd.f32 %v3410, %v4341
    %v4598 = vadd.f32 %v3411, %v4342
    %v4599 = vadd.f32 %v3412, %v4343
    %v4600 = vadd.f32 %v3413, %v4344
    %v4601 = vadd.f32 %v3414, %v4345
    %v4602 = vadd.f32 %v3415, %v4346
    %v4603 = vadd.f32 %v3416, %v4347
    %v4604 = vadd.f32 %v3417, %v4348
    %v4605 = vadd.f32 %v3418, %v4349
    %v4606 = vadd.f32 %v3419, %v4350
    %v4607 = vadd.f32 %v3420, %v4351
    %v4608 = vadd.f32 %v3421, %v4352
    %v4609 = vadd.f32 %v3422, %v4353
    %v4610 = vadd.f32 %v3423, %v4354
    %v4611 = vadd.f32 %v3424, %v4355
    %v4612 = vadd.f32 %v3425, %v4356
    %v4613 = vadd.f32 %v3426, %v4357
    %v4614 = vadd.f32 %v3427, %v4358
    %v4615 = vadd.f32 %v3428, %v4359
    %v4616 = vadd.f32 %v3429, %v4360
    %v4617 = vadd.f32 %v3430, %v4361
    %v4618 = vadd.f32 %v3431, %v4362
    %v4619 = vadd.f32 %v3432, %v4363
    %v4620 = vadd.f32 %v3433, %v4364
    %v4621 = vadd.f32 %v3434, %v4365
    %v4622 = vadd.f32 %v3435, %v4366
    %v4623 = vadd.f32 %v3436, %v4367
    %v4624 = vadd.f32 %v3437, %v4368
    %v4625 = vadd.f32 %v3438, %v4369
    %v4626 = vadd.f32 %v3439, %v4370
    %v4627 = vadd.f32 %v3440, %v4371
    %v4628 = vadd.f32 %v3441, %v4372
    %v4629 = vadd.f32 %v3442, %v4373
    %v4630 = vadd.f32 %v3443, %v4374
    %v4631 = vadd.f32 %v3444, %v4375
    %v4632 = vadd.f32 %v3445, %v4376
    %v4633 = vadd.f32 %v3446, %v4377
    %v4634 = vadd.f32 %v3447, %v4378
    %v4635 = vadd.f32 %v3448, %v4379
    %v4636 = vadd.f32 %v3449, %v4380
    %v4637 = vadd.f32 %v3450, %v4381
    %v4638 = vadd.f32 %v3451, %v4382
    %v4639 = vadd.f32 %v3452, %v4383
    %v4640 = vadd.f32 %v3453, %v4384
    %v4641 = vadd.f32 %v3454, %v4385
    %v4642 = vadd.f32 %v3455, %v4386
    %v4643 = vadd.f32 %v3456, %v4387
    %v4644 = vadd.f32 %v3457, %v4388
    %v4645 = vadd.f32 %v3458, %v4389
    %v4646 = vadd.f32 %v3459, %v4390
    %v4647 = vadd.f32 %v3460, %v4391
    %v4648 = vadd.f32 %v3461, %v4392
    %v4649 = vadd.f32 %v3462, %v4393
    %v4650 = vadd.f32 %v3463, %v4394
    %v4651 = vadd.f32 %v3464, %v4395
    %v4652 = vadd.f32 %v3465, %v4396
    %v4653 = vadd.f32 %v3466, %v4397
    %v4654 = vadd.f32 %v3467, %v4398
    %v4655 = vadd.f32 %v3468, %v4399
    %v4656 = vadd.f32 %v3469, %v4400
    %v4657 = vadd.f32 %v3470, %v4401
    %v4658 = vadd.f32 %v3471, %v4402
    %v4659 = vadd.f32 %v3472, %v4403
    %v4660 = vadd.f32 %v3473, %v4404
    %v4661 = vadd.f32 %v3474, %v4405
    %v4662 = vadd.f32 %v3475, %v4406
    %v4663 = vadd.f32 %v3476, %v4407
    %v4664 = vadd.f32 %v3477, %v4408
    %v4665 = vadd.f32 %v3478, %v4409
    %v4666 = vadd.f32 %v3479, %v4410
    %v4667 = vadd.f32 %v3480, %v4411
    %v4668 = vadd.f32 %v3481, %v4412
    %v4669 = vadd.f32 %v3482, %v4413
    %v4670 = vadd.f32 %v3483, %v4414
    %v4671 = vadd.f32 %v3484, %v4415
    %v4672 = vadd.f32 %v3485, %v4416
    %v4673 = vadd.f32 %v3486, %v4417
    %v4674 = vadd.f32 %v3487, %v4418
    %v4675 = vadd.f32 %v3488, %v4419
    %v4676 = vadd.f32 %v3489, %v4420
    %v4677 = vadd.f32 %v3490, %v4421
    %v4678 = vadd.f32 %v3491, %v4422
    %v4679 = vadd.f32 %v3492, %v4423
    %v4680 = vadd.f32 %v3493, %v4424
    %v4681 = vadd.f32 %v3494, %v4425
    %v4682 = vadd.f32 %v3495, %v4426
    %v4683 = vadd.f32 %v3496, %v4427
    %v4684 = vadd.f32 %v3497, %v4428
    %v4685 = vadd.f32 %v3498, %v4429
    %v4686 = vadd.f32 %v3499, %v4430
    %v4687 = vadd.f32 %v3500, %v4431
    %v4688 = vadd.f32 %v3501, %v4432
    %v4689 = vadd.f32 %v3502, %v4433
    %v4690 = vadd.f32 %v3503, %v4434
    %v4691 = vadd.f32 %v3504, %v4435
    %v4692 = vadd.f32 %v3505, %v4436
    %v4693 = vadd.f32 %v3506, %v4437
    %v4694 = vadd.f32 %v3507, %v4438
    %v4695 = vadd.f32 %v3508, %v4439
    %v4696 = vadd.f32 %v3509, %v4440
    %v4697 = vadd.f32 %v3510, %v4441
    %v4698 = vadd.f32 %v3511, %v4442
    %v4699 = vadd.f32 %v3512, %v4443
    %v4700 = vadd.f32 %v3513, %v4444
    %v4701 = vadd.f32 %v3514, %v4445
    %v4702 = vadd.f32 %v3515, %v4446
    %v4703 = vadd.f32 %v3516, %v4447
    %v4704 = vadd.f32 %v3517, %v4448
    %v4705 = vadd.f32 %v3518, %v4449
    %v4706 = vadd.f32 %v3519, %v4450
    %v4707 = vadd.f32 %v3520, %v4451
    %v4708 = vadd.f32 %v3521, %v4452
    %v4709 = vadd.f32 %v3522, %v4453
    %v4710 = vadd.f32 %v3523, %v4454
    %v4711 = vadd.f32 %v3524, %v4455
    %v4712 = vadd.f32 %v3525, %v4456
    %v4713 = vadd.f32 %v3526, %v4457
    %v4714 = vadd.f32 %v3527, %v4458
    %v4715 = vadd.f32 %v3528, %v4459
    %v4716 = vadd.f32 %v3529, %v4460
    %v4717 = vadd.f32 %v3530, %v4461
    %v4718 = vadd.f32 %v3531, %v4462
    %v4719 = vadd.f32 %v3532, %v4463
    %v4720 = vadd.f32 %v3533, %v4464
    %v4721 = vadd.f32 %v3534, %v4465
    %v4722 = vadd.f32 %v3535, %v4466
    %v4723 = vadd.f32 %v3536, %v4467
    %v4724 = vadd.f32 %v3537, %v4468
    %v4725 = vadd.f32 %v3538, %v4469
    %v4726 = vadd.f32 %v3539, %v4470
    %v4727 = vadd.f32 %v3540, %v4471
    %v4728 = vadd.f32 %v3541, %v4472
    %v4729 = vadd.f32 %v3542, %v4473
    %v4730 = vadd.f32 %v3543, %v4474
    %v4731 = vadd.f32 %v3544, %v4475
    %v4732 = vadd.f32 %v3545, %v4476
    %v4733 = vadd.f32 %v3546, %v4477
    %v4734 = vadd.f32 %v3547, %v4478
    %v4735 = vadd.f32 %v3548, %v4479
    %v4736 = vadd.f32 %v3549, %v4480
    %v4737 = vadd.f32 %v3550, %v4481
    %v4738 = vadd.f32 %v3551, %v4482
    %v4739 = vadd.f32 %v3552, %v4483
    %v4740 = vadd.f32 %v3553, %v4484
    %v4741 = vadd.f32 %v3554, %v4485
    %v4742 = vadd.f32 %v3555, %v4486
    %v4743 = vadd.f32 %v3556, %v4487
    %v4744 = vadd.f32 %v3557, %v4488
    %v4745 = vadd.f32 %v3558, %v4489
    %v4746 = vadd.f32 %v3559, %v4490
    %v4747 = vadd.f32 %v3560, %v4491
    %v4748 = vadd.f32 %v3561, %v4492
    %v4749 = vadd.f32 %v3562, %v4493
    %v4750 = vadd.f32 %v3563, %v4494
    %v4751 = vadd.f32 %v3564, %v4495
    %v4752 = vadd.f32 %v3565, %v4496
    %v4753 = vadd.f32 %v3566, %v4497
    %v4754 = vadd.f32 %v3567, %v4498
    %v4755 = vadd.f32 %v3568, %v4499
    %v4756 = vadd.f32 %v3569, %v4500
    %v4757 = vadd.f32 %v3570, %v4501
    %v4758 = vadd.f32 %v3571, %v4502
    %v4759 = vadd.f32 %v3572, %v4503
    %v4760 = vadd.f32 %v3573, %v4504
    %v4761 = vadd.f32 %v3574, %v4505
    %v4762 = vadd.f32 %v3575, %v4506
    %v4763 = vadd.f32 %v3576, %v4507
    %v4764 = vadd.f32 %v3577, %v4508
    %s4765 = scalar_lea.vmem %s2, 3
    %v4766 = vld [vmem:[%s4765] ss:$4 sm:$0xff]
    %v4767 = vlaneseq
    %v4768 = vshrl.u32 %v4767, 7
    %v4769 = vsub.s32 3, %v4768
    %v4770 = vrot.slane %v1459, %v4769
    %v4771 = vlaneseq
    %v4772 = vshrl.u32 %v4771, 7
    %v4773 = vsub.s32 3, %v4772
    %v4774 = vrot.slane %v1460, %v4773
    %v4776 = vlaneseq
    %v4777 = vshrl.u32 %v4776, 7
    %v4778 = vsub.s32 0, %v4777
    %v4779 = vrot.slane %v4766, %v4778
    %v4780 = vlaneseq
    %v4781 = vshrl.u32 %v4780, 7
    %v4782 = vsub.s32 1, %v4781
    %v4783 = vrot.slane %v4766, %v4782
    %v4784 = vlaneseq
    %v4785 = vshrl.u32 %v4784, 7
    %v4786 = vsub.s32 2, %v4785
    %v4787 = vrot.slane %v4766, %v4786
    %v4788 = vlaneseq
    %v4789 = vshrl.u32 %v4788, 7
    %v4790 = vsub.s32 3, %v4789
    %v4791 = vrot.slane %v4766, %v4790
    %v4792 = vlaneseq
    %v4793 = vshrl.u32 %v4792, 7
    %v4794 = vsub.s32 4, %v4793
    %v4795 = vrot.slane %v4766, %v4794
    %v4796 = vlaneseq
    %v4797 = vshrl.u32 %v4796, 7
    %v4798 = vsub.s32 5, %v4797
    %v4799 = vrot.slane %v4766, %v4798
    %v4800 = vlaneseq
    %v4801 = vshrl.u32 %v4800, 7
    %v4802 = vsub.s32 6, %v4801
    %v4803 = vrot.slane %v4766, %v4802
    %v4804 = vlaneseq
    %v4805 = vshrl.u32 %v4804, 7
    %v4806 = vsub.s32 7, %v4805
    %v4807 = vrot.slane %v4766, %v4806
    %4809 = vbcast.lane.b32.xlu0 %v4779, 256
    %v4810 = vpop.permute.xlu0 %4809
    %s4812 = sor.u32 256, 8
    %4813 = vbcast.lane.b32.xlu0 %v4779, %s4812
    %v4814 = vpop.permute.xlu0 %4813
    %s4816 = sor.u32 256, 16
    %4817 = vbcast.lane.b32.xlu0 %v4779, %s4816
    %v4818 = vpop.permute.xlu0 %4817
    %s4820 = sor.u32 256, 24
    %4821 = vbcast.lane.b32.xlu0 %v4779, %s4820
    %v4822 = vpop.permute.xlu0 %4821
    %s4824 = sor.u32 256, 32
    %4825 = vbcast.lane.b32.xlu0 %v4779, %s4824
    %v4826 = vpop.permute.xlu0 %4825
    %s4828 = sor.u32 256, 40
    %4829 = vbcast.lane.b32.xlu0 %v4779, %s4828
    %v4830 = vpop.permute.xlu0 %4829
    %s4832 = sor.u32 256, 48
    %4833 = vbcast.lane.b32.xlu0 %v4779, %s4832
    %v4834 = vpop.permute.xlu0 %4833
    %s4836 = sor.u32 256, 56
    %4837 = vbcast.lane.b32.xlu0 %v4779, %s4836
    %v4838 = vpop.permute.xlu0 %4837
    %s4840 = sor.u32 256, 64
    %4841 = vbcast.lane.b32.xlu0 %v4779, %s4840
    %v4842 = vpop.permute.xlu0 %4841
    %s4844 = sor.u32 256, 72
    %4845 = vbcast.lane.b32.xlu0 %v4779, %s4844
    %v4846 = vpop.permute.xlu0 %4845
    %s4848 = sor.u32 256, 80
    %4849 = vbcast.lane.b32.xlu0 %v4779, %s4848
    %v4850 = vpop.permute.xlu0 %4849
    %s4852 = sor.u32 256, 88
    %4853 = vbcast.lane.b32.xlu0 %v4779, %s4852
    %v4854 = vpop.permute.xlu0 %4853
    %s4856 = sor.u32 256, 96
    %4857 = vbcast.lane.b32.xlu0 %v4779, %s4856
    %v4858 = vpop.permute.xlu0 %4857
    %s4860 = sor.u32 256, 104
    %4861 = vbcast.lane.b32.xlu0 %v4779, %s4860
    %v4862 = vpop.permute.xlu0 %4861
    %s4864 = sor.u32 256, 112
    %4865 = vbcast.lane.b32.xlu0 %v4779, %s4864
    %v4866 = vpop.permute.xlu0 %4865
    %s4868 = sor.u32 256, 120
    %4869 = vbcast.lane.b32.xlu0 %v4779, %s4868
    %v4870 = vpop.permute.xlu0 %4869
    %4872 = vbcast.lane.b32.xlu0 %v4783, 256
    %v4873 = vpop.permute.xlu0 %4872
    %s4875 = sor.u32 256, 8
    %4876 = vbcast.lane.b32.xlu0 %v4783, %s4875
    %v4877 = vpop.permute.xlu0 %4876
    %s4879 = sor.u32 256, 16
    %4880 = vbcast.lane.b32.xlu0 %v4783, %s4879
    %v4881 = vpop.permute.xlu0 %4880
    %s4883 = sor.u32 256, 24
    %4884 = vbcast.lane.b32.xlu0 %v4783, %s4883
    %v4885 = vpop.permute.xlu0 %4884
    %s4887 = sor.u32 256, 32
    %4888 = vbcast.lane.b32.xlu0 %v4783, %s4887
    %v4889 = vpop.permute.xlu0 %4888
    %s4891 = sor.u32 256, 40
    %4892 = vbcast.lane.b32.xlu0 %v4783, %s4891
    %v4893 = vpop.permute.xlu0 %4892
    %s4895 = sor.u32 256, 48
    %4896 = vbcast.lane.b32.xlu0 %v4783, %s4895
    %v4897 = vpop.permute.xlu0 %4896
    %s4899 = sor.u32 256, 56
    %4900 = vbcast.lane.b32.xlu0 %v4783, %s4899
    %v4901 = vpop.permute.xlu0 %4900
    %s4903 = sor.u32 256, 64
    %4904 = vbcast.lane.b32.xlu0 %v4783, %s4903
    %v4905 = vpop.permute.xlu0 %4904
    %s4907 = sor.u32 256, 72
    %4908 = vbcast.lane.b32.xlu0 %v4783, %s4907
    %v4909 = vpop.permute.xlu0 %4908
    %s4911 = sor.u32 256, 80
    %4912 = vbcast.lane.b32.xlu0 %v4783, %s4911
    %v4913 = vpop.permute.xlu0 %4912
    %s4915 = sor.u32 256, 88
    %4916 = vbcast.lane.b32.xlu0 %v4783, %s4915
    %v4917 = vpop.permute.xlu0 %4916
    %s4919 = sor.u32 256, 96
    %4920 = vbcast.lane.b32.xlu0 %v4783, %s4919
    %v4921 = vpop.permute.xlu0 %4920
    %s4923 = sor.u32 256, 104
    %4924 = vbcast.lane.b32.xlu0 %v4783, %s4923
    %v4925 = vpop.permute.xlu0 %4924
    %s4927 = sor.u32 256, 112
    %4928 = vbcast.lane.b32.xlu0 %v4783, %s4927
    %v4929 = vpop.permute.xlu0 %4928
    %s4931 = sor.u32 256, 120
    %4932 = vbcast.lane.b32.xlu0 %v4783, %s4931
    %v4933 = vpop.permute.xlu0 %4932
    %4935 = vbcast.lane.b32.xlu0 %v4787, 256
    %v4936 = vpop.permute.xlu0 %4935
    %s4938 = sor.u32 256, 8
    %4939 = vbcast.lane.b32.xlu0 %v4787, %s4938
    %v4940 = vpop.permute.xlu0 %4939
    %s4942 = sor.u32 256, 16
    %4943 = vbcast.lane.b32.xlu0 %v4787, %s4942
    %v4944 = vpop.permute.xlu0 %4943
    %s4946 = sor.u32 256, 24
    %4947 = vbcast.lane.b32.xlu0 %v4787, %s4946
    %v4948 = vpop.permute.xlu0 %4947
    %s4950 = sor.u32 256, 32
    %4951 = vbcast.lane.b32.xlu0 %v4787, %s4950
    %v4952 = vpop.permute.xlu0 %4951
    %s4954 = sor.u32 256, 40
    %4955 = vbcast.lane.b32.xlu0 %v4787, %s4954
    %v4956 = vpop.permute.xlu0 %4955
    %s4958 = sor.u32 256, 48
    %4959 = vbcast.lane.b32.xlu0 %v4787, %s4958
    %v4960 = vpop.permute.xlu0 %4959
    %s4962 = sor.u32 256, 56
    %4963 = vbcast.lane.b32.xlu0 %v4787, %s4962
    %v4964 = vpop.permute.xlu0 %4963
    %s4966 = sor.u32 256, 64
    %4967 = vbcast.lane.b32.xlu0 %v4787, %s4966
    %v4968 = vpop.permute.xlu0 %4967
    %s4970 = sor.u32 256, 72
    %4971 = vbcast.lane.b32.xlu0 %v4787, %s4970
    %v4972 = vpop.permute.xlu0 %4971
    %s4974 = sor.u32 256, 80
    %4975 = vbcast.lane.b32.xlu0 %v4787, %s4974
    %v4976 = vpop.permute.xlu0 %4975
    %s4978 = sor.u32 256, 88
    %4979 = vbcast.lane.b32.xlu0 %v4787, %s4978
    %v4980 = vpop.permute.xlu0 %4979
    %s4982 = sor.u32 256, 96
    %4983 = vbcast.lane.b32.xlu0 %v4787, %s4982
    %v4984 = vpop.permute.xlu0 %4983
    %s4986 = sor.u32 256, 104
    %4987 = vbcast.lane.b32.xlu0 %v4787, %s4986
    %v4988 = vpop.permute.xlu0 %4987
    %s4990 = sor.u32 256, 112
    %4991 = vbcast.lane.b32.xlu0 %v4787, %s4990
    %v4992 = vpop.permute.xlu0 %4991
    %s4994 = sor.u32 256, 120
    %4995 = vbcast.lane.b32.xlu0 %v4787, %s4994
    %v4996 = vpop.permute.xlu0 %4995
    %4998 = vbcast.lane.b32.xlu0 %v4791, 256
    %v4999 = vpop.permute.xlu0 %4998
    %s5001 = sor.u32 256, 8
    %5002 = vbcast.lane.b32.xlu0 %v4791, %s5001
    %v5003 = vpop.permute.xlu0 %5002
    %s5005 = sor.u32 256, 16
    %5006 = vbcast.lane.b32.xlu0 %v4791, %s5005
    %v5007 = vpop.permute.xlu0 %5006
    %s5009 = sor.u32 256, 24
    %5010 = vbcast.lane.b32.xlu0 %v4791, %s5009
    %v5011 = vpop.permute.xlu0 %5010
    %s5013 = sor.u32 256, 32
    %5014 = vbcast.lane.b32.xlu0 %v4791, %s5013
    %v5015 = vpop.permute.xlu0 %5014
    %s5017 = sor.u32 256, 40
    %5018 = vbcast.lane.b32.xlu0 %v4791, %s5017
    %v5019 = vpop.permute.xlu0 %5018
    %s5021 = sor.u32 256, 48
    %5022 = vbcast.lane.b32.xlu0 %v4791, %s5021
    %v5023 = vpop.permute.xlu0 %5022
    %s5025 = sor.u32 256, 56
    %5026 = vbcast.lane.b32.xlu0 %v4791, %s5025
    %v5027 = vpop.permute.xlu0 %5026
    %s5029 = sor.u32 256, 64
    %5030 = vbcast.lane.b32.xlu0 %v4791, %s5029
    %v5031 = vpop.permute.xlu0 %5030
    %s5033 = sor.u32 256, 72
    %5034 = vbcast.lane.b32.xlu0 %v4791, %s5033
    %v5035 = vpop.permute.xlu0 %5034
    %s5037 = sor.u32 256, 80
    %5038 = vbcast.lane.b32.xlu0 %v4791, %s5037
    %v5039 = vpop.permute.xlu0 %5038
    %s5041 = sor.u32 256, 88
    %5042 = vbcast.lane.b32.xlu0 %v4791, %s5041
    %v5043 = vpop.permute.xlu0 %5042
    %s5045 = sor.u32 256, 96
    %5046 = vbcast.lane.b32.xlu0 %v4791, %s5045
    %v5047 = vpop.permute.xlu0 %5046
    %s5049 = sor.u32 256, 104
    %5050 = vbcast.lane.b32.xlu0 %v4791, %s5049
    %v5051 = vpop.permute.xlu0 %5050
    %s5053 = sor.u32 256, 112
    %5054 = vbcast.lane.b32.xlu0 %v4791, %s5053
    %v5055 = vpop.permute.xlu0 %5054
    %s5057 = sor.u32 256, 120
    %5058 = vbcast.lane.b32.xlu0 %v4791, %s5057
    %v5059 = vpop.permute.xlu0 %5058
    %5061 = vbcast.lane.b32.xlu0 %v4795, 256
    %v5062 = vpop.permute.xlu0 %5061
    %s5064 = sor.u32 256, 8
    %5065 = vbcast.lane.b32.xlu0 %v4795, %s5064
    %v5066 = vpop.permute.xlu0 %5065
    %s5068 = sor.u32 256, 16
    %5069 = vbcast.lane.b32.xlu0 %v4795, %s5068
    %v5070 = vpop.permute.xlu0 %5069
    %s5072 = sor.u32 256, 24
    %5073 = vbcast.lane.b32.xlu0 %v4795, %s5072
    %v5074 = vpop.permute.xlu0 %5073
    %s5076 = sor.u32 256, 32
    %5077 = vbcast.lane.b32.xlu0 %v4795, %s5076
    %v5078 = vpop.permute.xlu0 %5077
    %s5080 = sor.u32 256, 40
    %5081 = vbcast.lane.b32.xlu0 %v4795, %s5080
    %v5082 = vpop.permute.xlu0 %5081
    %s5084 = sor.u32 256, 48
    %5085 = vbcast.lane.b32.xlu0 %v4795, %s5084
    %v5086 = vpop.permute.xlu0 %5085
    %s5088 = sor.u32 256, 56
    %5089 = vbcast.lane.b32.xlu0 %v4795, %s5088
    %v5090 = vpop.permute.xlu0 %5089
    %s5092 = sor.u32 256, 64
    %5093 = vbcast.lane.b32.xlu0 %v4795, %s5092
    %v5094 = vpop.permute.xlu0 %5093
    %s5096 = sor.u32 256, 72
    %5097 = vbcast.lane.b32.xlu0 %v4795, %s5096
    %v5098 = vpop.permute.xlu0 %5097
    %s5100 = sor.u32 256, 80
    %5101 = vbcast.lane.b32.xlu0 %v4795, %s5100
    %v5102 = vpop.permute.xlu0 %5101
    %s5104 = sor.u32 256, 88
    %5105 = vbcast.lane.b32.xlu0 %v4795, %s5104
    %v5106 = vpop.permute.xlu0 %5105
    %s5108 = sor.u32 256, 96
    %5109 = vbcast.lane.b32.xlu0 %v4795, %s5108
    %v5110 = vpop.permute.xlu0 %5109
    %s5112 = sor.u32 256, 104
    %5113 = vbcast.lane.b32.xlu0 %v4795, %s5112
    %v5114 = vpop.permute.xlu0 %5113
    %s5116 = sor.u32 256, 112
    %5117 = vbcast.lane.b32.xlu0 %v4795, %s5116
    %v5118 = vpop.permute.xlu0 %5117
    %s5120 = sor.u32 256, 120
    %5121 = vbcast.lane.b32.xlu0 %v4795, %s5120
    %v5122 = vpop.permute.xlu0 %5121
    %5124 = vbcast.lane.b32.xlu0 %v4799, 256
    %v5125 = vpop.permute.xlu0 %5124
    %s5127 = sor.u32 256, 8
    %5128 = vbcast.lane.b32.xlu0 %v4799, %s5127
    %v5129 = vpop.permute.xlu0 %5128
    %s5131 = sor.u32 256, 16
    %5132 = vbcast.lane.b32.xlu0 %v4799, %s5131
    %v5133 = vpop.permute.xlu0 %5132
    %s5135 = sor.u32 256, 24
    %5136 = vbcast.lane.b32.xlu0 %v4799, %s5135
    %v5137 = vpop.permute.xlu0 %5136
    %s5139 = sor.u32 256, 32
    %5140 = vbcast.lane.b32.xlu0 %v4799, %s5139
    %v5141 = vpop.permute.xlu0 %5140
    %s5143 = sor.u32 256, 40
    %5144 = vbcast.lane.b32.xlu0 %v4799, %s5143
    %v5145 = vpop.permute.xlu0 %5144
    %s5147 = sor.u32 256, 48
    %5148 = vbcast.lane.b32.xlu0 %v4799, %s5147
    %v5149 = vpop.permute.xlu0 %5148
    %s5151 = sor.u32 256, 56
    %5152 = vbcast.lane.b32.xlu0 %v4799, %s5151
    %v5153 = vpop.permute.xlu0 %5152
    %s5155 = sor.u32 256, 64
    %5156 = vbcast.lane.b32.xlu0 %v4799, %s5155
    %v5157 = vpop.permute.xlu0 %5156
    %s5159 = sor.u32 256, 72
    %5160 = vbcast.lane.b32.xlu0 %v4799, %s5159
    %v5161 = vpop.permute.xlu0 %5160
    %s5163 = sor.u32 256, 80
    %5164 = vbcast.lane.b32.xlu0 %v4799, %s5163
    %v5165 = vpop.permute.xlu0 %5164
    %s5167 = sor.u32 256, 88
    %5168 = vbcast.lane.b32.xlu0 %v4799, %s5167
    %v5169 = vpop.permute.xlu0 %5168
    %s5171 = sor.u32 256, 96
    %5172 = vbcast.lane.b32.xlu0 %v4799, %s5171
    %v5173 = vpop.permute.xlu0 %5172
    %s5175 = sor.u32 256, 104
    %5176 = vbcast.lane.b32.xlu0 %v4799, %s5175
    %v5177 = vpop.permute.xlu0 %5176
    %s5179 = sor.u32 256, 112
    %5180 = vbcast.lane.b32.xlu0 %v4799, %s5179
    %v5181 = vpop.permute.xlu0 %5180
    %s5183 = sor.u32 256, 120
    %5184 = vbcast.lane.b32.xlu0 %v4799, %s5183
    %v5185 = vpop.permute.xlu0 %5184
    %5187 = vbcast.lane.b32.xlu0 %v4803, 256
    %v5188 = vpop.permute.xlu0 %5187
    %s5190 = sor.u32 256, 8
    %5191 = vbcast.lane.b32.xlu0 %v4803, %s5190
    %v5192 = vpop.permute.xlu0 %5191
    %s5194 = sor.u32 256, 16
    %5195 = vbcast.lane.b32.xlu0 %v4803, %s5194
    %v5196 = vpop.permute.xlu0 %5195
    %s5198 = sor.u32 256, 24
    %5199 = vbcast.lane.b32.xlu0 %v4803, %s5198
    %v5200 = vpop.permute.xlu0 %5199
    %s5202 = sor.u32 256, 32
    %5203 = vbcast.lane.b32.xlu0 %v4803, %s5202
    %v5204 = vpop.permute.xlu0 %5203
    %s5206 = sor.u32 256, 40
    %5207 = vbcast.lane.b32.xlu0 %v4803, %s5206
    %v5208 = vpop.permute.xlu0 %5207
    %s5210 = sor.u32 256, 48
    %5211 = vbcast.lane.b32.xlu0 %v4803, %s5210
    %v5212 = vpop.permute.xlu0 %5211
    %s5214 = sor.u32 256, 56
    %5215 = vbcast.lane.b32.xlu0 %v4803, %s5214
    %v5216 = vpop.permute.xlu0 %5215
    %s5218 = sor.u32 256, 64
    %5219 = vbcast.lane.b32.xlu0 %v4803, %s5218
    %v5220 = vpop.permute.xlu0 %5219
    %s5222 = sor.u32 256, 72
    %5223 = vbcast.lane.b32.xlu0 %v4803, %s5222
    %v5224 = vpop.permute.xlu0 %5223
    %s5226 = sor.u32 256, 80
    %5227 = vbcast.lane.b32.xlu0 %v4803, %s5226
    %v5228 = vpop.permute.xlu0 %5227
    %s5230 = sor.u32 256, 88
    %5231 = vbcast.lane.b32.xlu0 %v4803, %s5230
    %v5232 = vpop.permute.xlu0 %5231
    %s5234 = sor.u32 256, 96
    %5235 = vbcast.lane.b32.xlu0 %v4803, %s5234
    %v5236 = vpop.permute.xlu0 %5235
    %s5238 = sor.u32 256, 104
    %5239 = vbcast.lane.b32.xlu0 %v4803, %s5238
    %v5240 = vpop.permute.xlu0 %5239
    %s5242 = sor.u32 256, 112
    %5243 = vbcast.lane.b32.xlu0 %v4803, %s5242
    %v5244 = vpop.permute.xlu0 %5243
    %s5246 = sor.u32 256, 120
    %5247 = vbcast.lane.b32.xlu0 %v4803, %s5246
    %v5248 = vpop.permute.xlu0 %5247
    %5250 = vbcast.lane.b32.xlu0 %v4807, 256
    %v5251 = vpop.permute.xlu0 %5250
    %s5253 = sor.u32 256, 8
    %5254 = vbcast.lane.b32.xlu0 %v4807, %s5253
    %v5255 = vpop.permute.xlu0 %5254
    %s5257 = sor.u32 256, 16
    %5258 = vbcast.lane.b32.xlu0 %v4807, %s5257
    %v5259 = vpop.permute.xlu0 %5258
    %s5261 = sor.u32 256, 24
    %5262 = vbcast.lane.b32.xlu0 %v4807, %s5261
    %v5263 = vpop.permute.xlu0 %5262
    %s5265 = sor.u32 256, 32
    %5266 = vbcast.lane.b32.xlu0 %v4807, %s5265
    %v5267 = vpop.permute.xlu0 %5266
    %s5269 = sor.u32 256, 40
    %5270 = vbcast.lane.b32.xlu0 %v4807, %s5269
    %v5271 = vpop.permute.xlu0 %5270
    %s5273 = sor.u32 256, 48
    %5274 = vbcast.lane.b32.xlu0 %v4807, %s5273
    %v5275 = vpop.permute.xlu0 %5274
    %s5277 = sor.u32 256, 56
    %5278 = vbcast.lane.b32.xlu0 %v4807, %s5277
    %v5279 = vpop.permute.xlu0 %5278
    %s5281 = sor.u32 256, 64
    %5282 = vbcast.lane.b32.xlu0 %v4807, %s5281
    %v5283 = vpop.permute.xlu0 %5282
    %s5285 = sor.u32 256, 72
    %5286 = vbcast.lane.b32.xlu0 %v4807, %s5285
    %v5287 = vpop.permute.xlu0 %5286
    %s5289 = sor.u32 256, 80
    %5290 = vbcast.lane.b32.xlu0 %v4807, %s5289
    %v5291 = vpop.permute.xlu0 %5290
    %s5293 = sor.u32 256, 88
    %5294 = vbcast.lane.b32.xlu0 %v4807, %s5293
    %v5295 = vpop.permute.xlu0 %5294
    %s5297 = sor.u32 256, 96
    %5298 = vbcast.lane.b32.xlu0 %v4807, %s5297
    %v5299 = vpop.permute.xlu0 %5298
    %s5301 = sor.u32 256, 104
    %5302 = vbcast.lane.b32.xlu0 %v4807, %s5301
    %v5303 = vpop.permute.xlu0 %5302
    %s5305 = sor.u32 256, 112
    %5306 = vbcast.lane.b32.xlu0 %v4807, %s5305
    %v5307 = vpop.permute.xlu0 %5306
    %s5309 = sor.u32 256, 120
    %5310 = vbcast.lane.b32.xlu0 %v4807, %s5309
    %v5311 = vpop.permute.xlu0 %5310
    %v5440 = vmul.f32 %v4770, %v4810
    %v5441 = vmul.f32 %v4770, %v4814
    %v5442 = vmul.f32 %v4770, %v4818
    %v5443 = vmul.f32 %v4770, %v4822
    %v5444 = vmul.f32 %v4770, %v4826
    %v5445 = vmul.f32 %v4770, %v4830
    %v5446 = vmul.f32 %v4770, %v4834
    %v5447 = vmul.f32 %v4770, %v4838
    %v5448 = vmul.f32 %v4770, %v4842
    %v5449 = vmul.f32 %v4770, %v4846
    %v5450 = vmul.f32 %v4770, %v4850
    %v5451 = vmul.f32 %v4770, %v4854
    %v5452 = vmul.f32 %v4770, %v4858
    %v5453 = vmul.f32 %v4770, %v4862
    %v5454 = vmul.f32 %v4770, %v4866
    %v5455 = vmul.f32 %v4770, %v4870
    %v5456 = vmul.f32 %v4770, %v4873
    %v5457 = vmul.f32 %v4770, %v4877
    %v5458 = vmul.f32 %v4770, %v4881
    %v5459 = vmul.f32 %v4770, %v4885
    %v5460 = vmul.f32 %v4770, %v4889
    %v5461 = vmul.f32 %v4770, %v4893
    %v5462 = vmul.f32 %v4770, %v4897
    %v5463 = vmul.f32 %v4770, %v4901
    %v5464 = vmul.f32 %v4770, %v4905
    %v5465 = vmul.f32 %v4770, %v4909
    %v5466 = vmul.f32 %v4770, %v4913
    %v5467 = vmul.f32 %v4770, %v4917
    %v5468 = vmul.f32 %v4770, %v4921
    %v5469 = vmul.f32 %v4770, %v4925
    %v5470 = vmul.f32 %v4770, %v4929
    %v5471 = vmul.f32 %v4770, %v4933
    %v5472 = vmul.f32 %v4770, %v4936
    %v5473 = vmul.f32 %v4770, %v4940
    %v5474 = vmul.f32 %v4770, %v4944
    %v5475 = vmul.f32 %v4770, %v4948
    %v5476 = vmul.f32 %v4770, %v4952
    %v5477 = vmul.f32 %v4770, %v4956
    %v5478 = vmul.f32 %v4770, %v4960
    %v5479 = vmul.f32 %v4770, %v4964
    %v5480 = vmul.f32 %v4770, %v4968
    %v5481 = vmul.f32 %v4770, %v4972
    %v5482 = vmul.f32 %v4770, %v4976
    %v5483 = vmul.f32 %v4770, %v4980
    %v5484 = vmul.f32 %v4770, %v4984
    %v5485 = vmul.f32 %v4770, %v4988
    %v5486 = vmul.f32 %v4770, %v4992
    %v5487 = vmul.f32 %v4770, %v4996
    %v5488 = vmul.f32 %v4770, %v4999
    %v5489 = vmul.f32 %v4770, %v5003
    %v5490 = vmul.f32 %v4770, %v5007
    %v5491 = vmul.f32 %v4770, %v5011
    %v5492 = vmul.f32 %v4770, %v5015
    %v5493 = vmul.f32 %v4770, %v5019
    %v5494 = vmul.f32 %v4770, %v5023
    %v5495 = vmul.f32 %v4770, %v5027
    %v5496 = vmul.f32 %v4770, %v5031
    %v5497 = vmul.f32 %v4770, %v5035
    %v5498 = vmul.f32 %v4770, %v5039
    %v5499 = vmul.f32 %v4770, %v5043
    %v5500 = vmul.f32 %v4770, %v5047
    %v5501 = vmul.f32 %v4770, %v5051
    %v5502 = vmul.f32 %v4770, %v5055
    %v5503 = vmul.f32 %v4770, %v5059
    %v5504 = vmul.f32 %v4770, %v5062
    %v5505 = vmul.f32 %v4770, %v5066
    %v5506 = vmul.f32 %v4770, %v5070
    %v5507 = vmul.f32 %v4770, %v5074
    %v5508 = vmul.f32 %v4770, %v5078
    %v5509 = vmul.f32 %v4770, %v5082
    %v5510 = vmul.f32 %v4770, %v5086
    %v5511 = vmul.f32 %v4770, %v5090
    %v5512 = vmul.f32 %v4770, %v5094
    %v5513 = vmul.f32 %v4770, %v5098
    %v5514 = vmul.f32 %v4770, %v5102
    %v5515 = vmul.f32 %v4770, %v5106
    %v5516 = vmul.f32 %v4770, %v5110
    %v5517 = vmul.f32 %v4770, %v5114
    %v5518 = vmul.f32 %v4770, %v5118
    %v5519 = vmul.f32 %v4770, %v5122
    %v5520 = vmul.f32 %v4770, %v5125
    %v5521 = vmul.f32 %v4770, %v5129
    %v5522 = vmul.f32 %v4770, %v5133
    %v5523 = vmul.f32 %v4770, %v5137
    %v5524 = vmul.f32 %v4770, %v5141
    %v5525 = vmul.f32 %v4770, %v5145
    %v5526 = vmul.f32 %v4770, %v5149
    %v5527 = vmul.f32 %v4770, %v5153
    %v5528 = vmul.f32 %v4770, %v5157
    %v5529 = vmul.f32 %v4770, %v5161
    %v5530 = vmul.f32 %v4770, %v5165
    %v5531 = vmul.f32 %v4770, %v5169
    %v5532 = vmul.f32 %v4770, %v5173
    %v5533 = vmul.f32 %v4770, %v5177
    %v5534 = vmul.f32 %v4770, %v5181
    %v5535 = vmul.f32 %v4770, %v5185
    %v5536 = vmul.f32 %v4770, %v5188
    %v5537 = vmul.f32 %v4770, %v5192
    %v5538 = vmul.f32 %v4770, %v5196
    %v5539 = vmul.f32 %v4770, %v5200
    %v5540 = vmul.f32 %v4770, %v5204
    %v5541 = vmul.f32 %v4770, %v5208
    %v5542 = vmul.f32 %v4770, %v5212
    %v5543 = vmul.f32 %v4770, %v5216
    %v5544 = vmul.f32 %v4770, %v5220
    %v5545 = vmul.f32 %v4770, %v5224
    %v5546 = vmul.f32 %v4770, %v5228
    %v5547 = vmul.f32 %v4770, %v5232
    %v5548 = vmul.f32 %v4770, %v5236
    %v5549 = vmul.f32 %v4770, %v5240
    %v5550 = vmul.f32 %v4770, %v5244
    %v5551 = vmul.f32 %v4770, %v5248
    %v5552 = vmul.f32 %v4770, %v5251
    %v5553 = vmul.f32 %v4770, %v5255
    %v5554 = vmul.f32 %v4770, %v5259
    %v5555 = vmul.f32 %v4770, %v5263
    %v5556 = vmul.f32 %v4770, %v5267
    %v5557 = vmul.f32 %v4770, %v5271
    %v5558 = vmul.f32 %v4770, %v5275
    %v5559 = vmul.f32 %v4770, %v5279
    %v5560 = vmul.f32 %v4770, %v5283
    %v5561 = vmul.f32 %v4770, %v5287
    %v5562 = vmul.f32 %v4770, %v5291
    %v5563 = vmul.f32 %v4770, %v5295
    %v5564 = vmul.f32 %v4770, %v5299
    %v5565 = vmul.f32 %v4770, %v5303
    %v5566 = vmul.f32 %v4770, %v5307
    %v5567 = vmul.f32 %v4770, %v5311
    %v5568 = vmul.f32 %v4774, %v4810
    %v5569 = vmul.f32 %v4774, %v4814
    %v5570 = vmul.f32 %v4774, %v4818
    %v5571 = vmul.f32 %v4774, %v4822
    %v5572 = vmul.f32 %v4774, %v4826
    %v5573 = vmul.f32 %v4774, %v4830
    %v5574 = vmul.f32 %v4774, %v4834
    %v5575 = vmul.f32 %v4774, %v4838
    %v5576 = vmul.f32 %v4774, %v4842
    %v5577 = vmul.f32 %v4774, %v4846
    %v5578 = vmul.f32 %v4774, %v4850
    %v5579 = vmul.f32 %v4774, %v4854
    %v5580 = vmul.f32 %v4774, %v4858
    %v5581 = vmul.f32 %v4774, %v4862
    %v5582 = vmul.f32 %v4774, %v4866
    %v5583 = vmul.f32 %v4774, %v4870
    %v5584 = vmul.f32 %v4774, %v4873
    %v5585 = vmul.f32 %v4774, %v4877
    %v5586 = vmul.f32 %v4774, %v4881
    %v5587 = vmul.f32 %v4774, %v4885
    %v5588 = vmul.f32 %v4774, %v4889
    %v5589 = vmul.f32 %v4774, %v4893
    %v5590 = vmul.f32 %v4774, %v4897
    %v5591 = vmul.f32 %v4774, %v4901
    %v5592 = vmul.f32 %v4774, %v4905
    %v5593 = vmul.f32 %v4774, %v4909
    %v5594 = vmul.f32 %v4774, %v4913
    %v5595 = vmul.f32 %v4774, %v4917
    %v5596 = vmul.f32 %v4774, %v4921
    %v5597 = vmul.f32 %v4774, %v4925
    %v5598 = vmul.f32 %v4774, %v4929
    %v5599 = vmul.f32 %v4774, %v4933
    %v5600 = vmul.f32 %v4774, %v4936
    %v5601 = vmul.f32 %v4774, %v4940
    %v5602 = vmul.f32 %v4774, %v4944
    %v5603 = vmul.f32 %v4774, %v4948
    %v5604 = vmul.f32 %v4774, %v4952
    %v5605 = vmul.f32 %v4774, %v4956
    %v5606 = vmul.f32 %v4774, %v4960
    %v5607 = vmul.f32 %v4774, %v4964
    %v5608 = vmul.f32 %v4774, %v4968
    %v5609 = vmul.f32 %v4774, %v4972
    %v5610 = vmul.f32 %v4774, %v4976
    %v5611 = vmul.f32 %v4774, %v4980
    %v5612 = vmul.f32 %v4774, %v4984
    %v5613 = vmul.f32 %v4774, %v4988
    %v5614 = vmul.f32 %v4774, %v4992
    %v5615 = vmul.f32 %v4774, %v4996
    %v5616 = vmul.f32 %v4774, %v4999
    %v5617 = vmul.f32 %v4774, %v5003
    %v5618 = vmul.f32 %v4774, %v5007
    %v5619 = vmul.f32 %v4774, %v5011
    %v5620 = vmul.f32 %v4774, %v5015
    %v5621 = vmul.f32 %v4774, %v5019
    %v5622 = vmul.f32 %v4774, %v5023
    %v5623 = vmul.f32 %v4774, %v5027
    %v5624 = vmul.f32 %v4774, %v5031
    %v5625 = vmul.f32 %v4774, %v5035
    %v5626 = vmul.f32 %v4774, %v5039
    %v5627 = vmul.f32 %v4774, %v5043
    %v5628 = vmul.f32 %v4774, %v5047
    %v5629 = vmul.f32 %v4774, %v5051
    %v5630 = vmul.f32 %v4774, %v5055
    %v5631 = vmul.f32 %v4774, %v5059
    %v5632 = vmul.f32 %v4774, %v5062
    %v5633 = vmul.f32 %v4774, %v5066
    %v5634 = vmul.f32 %v4774, %v5070
    %v5635 = vmul.f32 %v4774, %v5074
    %v5636 = vmul.f32 %v4774, %v5078
    %v5637 = vmul.f32 %v4774, %v5082
    %v5638 = vmul.f32 %v4774, %v5086
    %v5639 = vmul.f32 %v4774, %v5090
    %v5640 = vmul.f32 %v4774, %v5094
    %v5641 = vmul.f32 %v4774, %v5098
    %v5642 = vmul.f32 %v4774, %v5102
    %v5643 = vmul.f32 %v4774, %v5106
    %v5644 = vmul.f32 %v4774, %v5110
    %v5645 = vmul.f32 %v4774, %v5114
    %v5646 = vmul.f32 %v4774, %v5118
    %v5647 = vmul.f32 %v4774, %v5122
    %v5648 = vmul.f32 %v4774, %v5125
    %v5649 = vmul.f32 %v4774, %v5129
    %v5650 = vmul.f32 %v4774, %v5133
    %v5651 = vmul.f32 %v4774, %v5137
    %v5652 = vmul.f32 %v4774, %v5141
    %v5653 = vmul.f32 %v4774, %v5145
    %v5654 = vmul.f32 %v4774, %v5149
    %v5655 = vmul.f32 %v4774, %v5153
    %v5656 = vmul.f32 %v4774, %v5157
    %v5657 = vmul.f32 %v4774, %v5161
    %v5658 = vmul.f32 %v4774, %v5165
    %v5659 = vmul.f32 %v4774, %v5169
    %v5660 = vmul.f32 %v4774, %v5173
    %v5661 = vmul.f32 %v4774, %v5177
    %v5662 = vmul.f32 %v4774, %v5181
    %v5663 = vmul.f32 %v4774, %v5185
    %v5664 = vmul.f32 %v4774, %v5188
    %v5665 = vmul.f32 %v4774, %v5192
    %v5666 = vmul.f32 %v4774, %v5196
    %v5667 = vmul.f32 %v4774, %v5200
    %v5668 = vmul.f32 %v4774, %v5204
    %v5669 = vmul.f32 %v4774, %v5208
    %v5670 = vmul.f32 %v4774, %v5212
    %v5671 = vmul.f32 %v4774, %v5216
    %v5672 = vmul.f32 %v4774, %v5220
    %v5673 = vmul.f32 %v4774, %v5224
    %v5674 = vmul.f32 %v4774, %v5228
    %v5675 = vmul.f32 %v4774, %v5232
    %v5676 = vmul.f32 %v4774, %v5236
    %v5677 = vmul.f32 %v4774, %v5240
    %v5678 = vmul.f32 %v4774, %v5244
    %v5679 = vmul.f32 %v4774, %v5248
    %v5680 = vmul.f32 %v4774, %v5251
    %v5681 = vmul.f32 %v4774, %v5255
    %v5682 = vmul.f32 %v4774, %v5259
    %v5683 = vmul.f32 %v4774, %v5263
    %v5684 = vmul.f32 %v4774, %v5267
    %v5685 = vmul.f32 %v4774, %v5271
    %v5686 = vmul.f32 %v4774, %v5275
    %v5687 = vmul.f32 %v4774, %v5279
    %v5688 = vmul.f32 %v4774, %v5283
    %v5689 = vmul.f32 %v4774, %v5287
    %v5690 = vmul.f32 %v4774, %v5291
    %v5691 = vmul.f32 %v4774, %v5295
    %v5692 = vmul.f32 %v4774, %v5299
    %v5693 = vmul.f32 %v4774, %v5303
    %v5694 = vmul.f32 %v4774, %v5307
    %v5695 = vmul.f32 %v4774, %v5311
    %v5696 = vadd.f32 %v4509, %v5440
    %v5697 = vadd.f32 %v4510, %v5441
    %v5698 = vadd.f32 %v4511, %v5442
    %v5699 = vadd.f32 %v4512, %v5443
    %v5700 = vadd.f32 %v4513, %v5444
    %v5701 = vadd.f32 %v4514, %v5445
    %v5702 = vadd.f32 %v4515, %v5446
    %v5703 = vadd.f32 %v4516, %v5447
    %v5704 = vadd.f32 %v4517, %v5448
    %v5705 = vadd.f32 %v4518, %v5449
    %v5706 = vadd.f32 %v4519, %v5450
    %v5707 = vadd.f32 %v4520, %v5451
    %v5708 = vadd.f32 %v4521, %v5452
    %v5709 = vadd.f32 %v4522, %v5453
    %v5710 = vadd.f32 %v4523, %v5454
    %v5711 = vadd.f32 %v4524, %v5455
    %v5712 = vadd.f32 %v4525, %v5456
    %v5713 = vadd.f32 %v4526, %v5457
    %v5714 = vadd.f32 %v4527, %v5458
    %v5715 = vadd.f32 %v4528, %v5459
    %v5716 = vadd.f32 %v4529, %v5460
    %v5717 = vadd.f32 %v4530, %v5461
    %v5718 = vadd.f32 %v4531, %v5462
    %v5719 = vadd.f32 %v4532, %v5463
    %v5720 = vadd.f32 %v4533, %v5464
    %v5721 = vadd.f32 %v4534, %v5465
    %v5722 = vadd.f32 %v4535, %v5466
    %v5723 = vadd.f32 %v4536, %v5467
    %v5724 = vadd.f32 %v4537, %v5468
    %v5725 = vadd.f32 %v4538, %v5469
    %v5726 = vadd.f32 %v4539, %v5470
    %v5727 = vadd.f32 %v4540, %v5471
    %v5728 = vadd.f32 %v4541, %v5472
    %v5729 = vadd.f32 %v4542, %v5473
    %v5730 = vadd.f32 %v4543, %v5474
    %v5731 = vadd.f32 %v4544, %v5475
    %v5732 = vadd.f32 %v4545, %v5476
    %v5733 = vadd.f32 %v4546, %v5477
    %v5734 = vadd.f32 %v4547, %v5478
    %v5735 = vadd.f32 %v4548, %v5479
    %v5736 = vadd.f32 %v4549, %v5480
    %v5737 = vadd.f32 %v4550, %v5481
    %v5738 = vadd.f32 %v4551, %v5482
    %v5739 = vadd.f32 %v4552, %v5483
    %v5740 = vadd.f32 %v4553, %v5484
    %v5741 = vadd.f32 %v4554, %v5485
    %v5742 = vadd.f32 %v4555, %v5486
    %v5743 = vadd.f32 %v4556, %v5487
    %v5744 = vadd.f32 %v4557, %v5488
    %v5745 = vadd.f32 %v4558, %v5489
    %v5746 = vadd.f32 %v4559, %v5490
    %v5747 = vadd.f32 %v4560, %v5491
    %v5748 = vadd.f32 %v4561, %v5492
    %v5749 = vadd.f32 %v4562, %v5493
    %v5750 = vadd.f32 %v4563, %v5494
    %v5751 = vadd.f32 %v4564, %v5495
    %v5752 = vadd.f32 %v4565, %v5496
    %v5753 = vadd.f32 %v4566, %v5497
    %v5754 = vadd.f32 %v4567, %v5498
    %v5755 = vadd.f32 %v4568, %v5499
    %v5756 = vadd.f32 %v4569, %v5500
    %v5757 = vadd.f32 %v4570, %v5501
    %v5758 = vadd.f32 %v4571, %v5502
    %v5759 = vadd.f32 %v4572, %v5503
    %v5760 = vadd.f32 %v4573, %v5504
    %v5761 = vadd.f32 %v4574, %v5505
    %v5762 = vadd.f32 %v4575, %v5506
    %v5763 = vadd.f32 %v4576, %v5507
    %v5764 = vadd.f32 %v4577, %v5508
    %v5765 = vadd.f32 %v4578, %v5509
    %v5766 = vadd.f32 %v4579, %v5510
    %v5767 = vadd.f32 %v4580, %v5511
    %v5768 = vadd.f32 %v4581, %v5512
    %v5769 = vadd.f32 %v4582, %v5513
    %v5770 = vadd.f32 %v4583, %v5514
    %v5771 = vadd.f32 %v4584, %v5515
    %v5772 = vadd.f32 %v4585, %v5516
    %v5773 = vadd.f32 %v4586, %v5517
    %v5774 = vadd.f32 %v4587, %v5518
    %v5775 = vadd.f32 %v4588, %v5519
    %v5776 = vadd.f32 %v4589, %v5520
    %v5777 = vadd.f32 %v4590, %v5521
    %v5778 = vadd.f32 %v4591, %v5522
    %v5779 = vadd.f32 %v4592, %v5523
    %v5780 = vadd.f32 %v4593, %v5524
    %v5781 = vadd.f32 %v4594, %v5525
    %v5782 = vadd.f32 %v4595, %v5526
    %v5783 = vadd.f32 %v4596, %v5527
    %v5784 = vadd.f32 %v4597, %v5528
    %v5785 = vadd.f32 %v4598, %v5529
    %v5786 = vadd.f32 %v4599, %v5530
    %v5787 = vadd.f32 %v4600, %v5531
    %v5788 = vadd.f32 %v4601, %v5532
    %v5789 = vadd.f32 %v4602, %v5533
    %v5790 = vadd.f32 %v4603, %v5534
    %v5791 = vadd.f32 %v4604, %v5535
    %v5792 = vadd.f32 %v4605, %v5536
    %v5793 = vadd.f32 %v4606, %v5537
    %v5794 = vadd.f32 %v4607, %v5538
    %v5795 = vadd.f32 %v4608, %v5539
    %v5796 = vadd.f32 %v4609, %v5540
    %v5797 = vadd.f32 %v4610, %v5541
    %v5798 = vadd.f32 %v4611, %v5542
    %v5799 = vadd.f32 %v4612, %v5543
    %v5800 = vadd.f32 %v4613, %v5544
    %v5801 = vadd.f32 %v4614, %v5545
    %v5802 = vadd.f32 %v4615, %v5546
    %v5803 = vadd.f32 %v4616, %v5547
    %v5804 = vadd.f32 %v4617, %v5548
    %v5805 = vadd.f32 %v4618, %v5549
    %v5806 = vadd.f32 %v4619, %v5550
    %v5807 = vadd.f32 %v4620, %v5551
    %v5808 = vadd.f32 %v4621, %v5552
    %v5809 = vadd.f32 %v4622, %v5553
    %v5810 = vadd.f32 %v4623, %v5554
    %v5811 = vadd.f32 %v4624, %v5555
    %v5812 = vadd.f32 %v4625, %v5556
    %v5813 = vadd.f32 %v4626, %v5557
    %v5814 = vadd.f32 %v4627, %v5558
    %v5815 = vadd.f32 %v4628, %v5559
    %v5816 = vadd.f32 %v4629, %v5560
    %v5817 = vadd.f32 %v4630, %v5561
    %v5818 = vadd.f32 %v4631, %v5562
    %v5819 = vadd.f32 %v4632, %v5563
    %v5820 = vadd.f32 %v4633, %v5564
    %v5821 = vadd.f32 %v4634, %v5565
    %v5822 = vadd.f32 %v4635, %v5566
    %v5823 = vadd.f32 %v4636, %v5567
    %v5824 = vadd.f32 %v4637, %v5568
    %v5825 = vadd.f32 %v4638, %v5569
    %v5826 = vadd.f32 %v4639, %v5570
    %v5827 = vadd.f32 %v4640, %v5571
    %v5828 = vadd.f32 %v4641, %v5572
    %v5829 = vadd.f32 %v4642, %v5573
    %v5830 = vadd.f32 %v4643, %v5574
    %v5831 = vadd.f32 %v4644, %v5575
    %v5832 = vadd.f32 %v4645, %v5576
    %v5833 = vadd.f32 %v4646, %v5577
    %v5834 = vadd.f32 %v4647, %v5578
    %v5835 = vadd.f32 %v4648, %v5579
    %v5836 = vadd.f32 %v4649, %v5580
    %v5837 = vadd.f32 %v4650, %v5581
    %v5838 = vadd.f32 %v4651, %v5582
    %v5839 = vadd.f32 %v4652, %v5583
    %v5840 = vadd.f32 %v4653, %v5584
    %v5841 = vadd.f32 %v4654, %v5585
    %v5842 = vadd.f32 %v4655, %v5586
    %v5843 = vadd.f32 %v4656, %v5587
    %v5844 = vadd.f32 %v4657, %v5588
    %v5845 = vadd.f32 %v4658, %v5589
    %v5846 = vadd.f32 %v4659, %v5590
    %v5847 = vadd.f32 %v4660, %v5591
    %v5848 = vadd.f32 %v4661, %v5592
    %v5849 = vadd.f32 %v4662, %v5593
    %v5850 = vadd.f32 %v4663, %v5594
    %v5851 = vadd.f32 %v4664, %v5595
    %v5852 = vadd.f32 %v4665, %v5596
    %v5853 = vadd.f32 %v4666, %v5597
    %v5854 = vadd.f32 %v4667, %v5598
    %v5855 = vadd.f32 %v4668, %v5599
    %v5856 = vadd.f32 %v4669, %v5600
    %v5857 = vadd.f32 %v4670, %v5601
    %v5858 = vadd.f32 %v4671, %v5602
    %v5859 = vadd.f32 %v4672, %v5603
    %v5860 = vadd.f32 %v4673, %v5604
    %v5861 = vadd.f32 %v4674, %v5605
    %v5862 = vadd.f32 %v4675, %v5606
    %v5863 = vadd.f32 %v4676, %v5607
    %v5864 = vadd.f32 %v4677, %v5608
    %v5865 = vadd.f32 %v4678, %v5609
    %v5866 = vadd.f32 %v4679, %v5610
    %v5867 = vadd.f32 %v4680, %v5611
    %v5868 = vadd.f32 %v4681, %v5612
    %v5869 = vadd.f32 %v4682, %v5613
    %v5870 = vadd.f32 %v4683, %v5614
    %v5871 = vadd.f32 %v4684, %v5615
    %v5872 = vadd.f32 %v4685, %v5616
    %v5873 = vadd.f32 %v4686, %v5617
    %v5874 = vadd.f32 %v4687, %v5618
    %v5875 = vadd.f32 %v4688, %v5619
    %v5876 = vadd.f32 %v4689, %v5620
    %v5877 = vadd.f32 %v4690, %v5621
    %v5878 = vadd.f32 %v4691, %v5622
    %v5879 = vadd.f32 %v4692, %v5623
    %v5880 = vadd.f32 %v4693, %v5624
    %v5881 = vadd.f32 %v4694, %v5625
    %v5882 = vadd.f32 %v4695, %v5626
    %v5883 = vadd.f32 %v4696, %v5627
    %v5884 = vadd.f32 %v4697, %v5628
    %v5885 = vadd.f32 %v4698, %v5629
    %v5886 = vadd.f32 %v4699, %v5630
    %v5887 = vadd.f32 %v4700, %v5631
    %v5888 = vadd.f32 %v4701, %v5632
    %v5889 = vadd.f32 %v4702, %v5633
    %v5890 = vadd.f32 %v4703, %v5634
    %v5891 = vadd.f32 %v4704, %v5635
    %v5892 = vadd.f32 %v4705, %v5636
    %v5893 = vadd.f32 %v4706, %v5637
    %v5894 = vadd.f32 %v4707, %v5638
    %v5895 = vadd.f32 %v4708, %v5639
    %v5896 = vadd.f32 %v4709, %v5640
    %v5897 = vadd.f32 %v4710, %v5641
    %v5898 = vadd.f32 %v4711, %v5642
    %v5899 = vadd.f32 %v4712, %v5643
    %v5900 = vadd.f32 %v4713, %v5644
    %v5901 = vadd.f32 %v4714, %v5645
    %v5902 = vadd.f32 %v4715, %v5646
    %v5903 = vadd.f32 %v4716, %v5647
    %v5904 = vadd.f32 %v4717, %v5648
    %v5905 = vadd.f32 %v4718, %v5649
    %v5906 = vadd.f32 %v4719, %v5650
    %v5907 = vadd.f32 %v4720, %v5651
    %v5908 = vadd.f32 %v4721, %v5652
    %v5909 = vadd.f32 %v4722, %v5653
    %v5910 = vadd.f32 %v4723, %v5654
    %v5911 = vadd.f32 %v4724, %v5655
    %v5912 = vadd.f32 %v4725, %v5656
    %v5913 = vadd.f32 %v4726, %v5657
    %v5914 = vadd.f32 %v4727, %v5658
    %v5915 = vadd.f32 %v4728, %v5659
    %v5916 = vadd.f32 %v4729, %v5660
    %v5917 = vadd.f32 %v4730, %v5661
    %v5918 = vadd.f32 %v4731, %v5662
    %v5919 = vadd.f32 %v4732, %v5663
    %v5920 = vadd.f32 %v4733, %v5664
    %v5921 = vadd.f32 %v4734, %v5665
    %v5922 = vadd.f32 %v4735, %v5666
    %v5923 = vadd.f32 %v4736, %v5667
    %v5924 = vadd.f32 %v4737, %v5668
    %v5925 = vadd.f32 %v4738, %v5669
    %v5926 = vadd.f32 %v4739, %v5670
    %v5927 = vadd.f32 %v4740, %v5671
    %v5928 = vadd.f32 %v4741, %v5672
    %v5929 = vadd.f32 %v4742, %v5673
    %v5930 = vadd.f32 %v4743, %v5674
    %v5931 = vadd.f32 %v4744, %v5675
    %v5932 = vadd.f32 %v4745, %v5676
    %v5933 = vadd.f32 %v4746, %v5677
    %v5934 = vadd.f32 %v4747, %v5678
    %v5935 = vadd.f32 %v4748, %v5679
    %v5936 = vadd.f32 %v4749, %v5680
    %v5937 = vadd.f32 %v4750, %v5681
    %v5938 = vadd.f32 %v4751, %v5682
    %v5939 = vadd.f32 %v4752, %v5683
    %v5940 = vadd.f32 %v4753, %v5684
    %v5941 = vadd.f32 %v4754, %v5685
    %v5942 = vadd.f32 %v4755, %v5686
    %v5943 = vadd.f32 %v4756, %v5687
    %v5944 = vadd.f32 %v4757, %v5688
    %v5945 = vadd.f32 %v4758, %v5689
    %v5946 = vadd.f32 %v4759, %v5690
    %v5947 = vadd.f32 %v4760, %v5691
    %v5948 = vadd.f32 %v4761, %v5692
    %v5949 = vadd.f32 %v4762, %v5693
    %v5950 = vadd.f32 %v4763, %v5694
    %v5951 = vadd.f32 %v4764, %v5695
    %v5952 = vld [vmem:[#allocation10] sm:$0xff]
    %v5954 = vlaneseq
    %v5955 = vshrl.u32 %v5954, 7
    %v5956 = vsub.s32 0, %v5955
    %v5957 = vrot.slane %v5952, %v5956
    %v5958 = vlaneseq
    %v5959 = vshrl.u32 %v5958, 7
    %v5960 = vsub.s32 1, %v5959
    %v5961 = vrot.slane %v5952, %v5960
    %v5962 = vlaneseq
    %v5963 = vshrl.u32 %v5962, 7
    %v5964 = vsub.s32 2, %v5963
    %v5965 = vrot.slane %v5952, %v5964
    %v5966 = vlaneseq
    %v5967 = vshrl.u32 %v5966, 7
    %v5968 = vsub.s32 3, %v5967
    %v5969 = vrot.slane %v5952, %v5968
    %v5970 = vlaneseq
    %v5971 = vshrl.u32 %v5970, 7
    %v5972 = vsub.s32 4, %v5971
    %v5973 = vrot.slane %v5952, %v5972
    %v5974 = vlaneseq
    %v5975 = vshrl.u32 %v5974, 7
    %v5976 = vsub.s32 5, %v5975
    %v5977 = vrot.slane %v5952, %v5976
    %v5978 = vlaneseq
    %v5979 = vshrl.u32 %v5978, 7
    %v5980 = vsub.s32 6, %v5979
    %v5981 = vrot.slane %v5952, %v5980
    %v5982 = vlaneseq
    %v5983 = vshrl.u32 %v5982, 7
    %v5984 = vsub.s32 7, %v5983
    %v5985 = vrot.slane %v5952, %v5984
    %5987 = vbcast.lane.b32.xlu0 %v5957, 256
    %v5988 = vpop.permute.xlu0 %5987
    %s5990 = sor.u32 256, 8
    %5991 = vbcast.lane.b32.xlu0 %v5957, %s5990
    %v5992 = vpop.permute.xlu0 %5991
    %s5994 = sor.u32 256, 16
    %5995 = vbcast.lane.b32.xlu0 %v5957, %s5994
    %v5996 = vpop.permute.xlu0 %5995
    %s5998 = sor.u32 256, 24
    %5999 = vbcast.lane.b32.xlu0 %v5957, %s5998
    %v6000 = vpop.permute.xlu0 %5999
    %s6002 = sor.u32 256, 32
    %6003 = vbcast.lane.b32.xlu0 %v5957, %s6002
    %v6004 = vpop.permute.xlu0 %6003
    %s6006 = sor.u32 256, 40
    %6007 = vbcast.lane.b32.xlu0 %v5957, %s6006
    %v6008 = vpop.permute.xlu0 %6007
    %s6010 = sor.u32 256, 48
    %6011 = vbcast.lane.b32.xlu0 %v5957, %s6010
    %v6012 = vpop.permute.xlu0 %6011
    %s6014 = sor.u32 256, 56
    %6015 = vbcast.lane.b32.xlu0 %v5957, %s6014
    %v6016 = vpop.permute.xlu0 %6015
    %s6018 = sor.u32 256, 64
    %6019 = vbcast.lane.b32.xlu0 %v5957, %s6018
    %v6020 = vpop.permute.xlu0 %6019
    %s6022 = sor.u32 256, 72
    %6023 = vbcast.lane.b32.xlu0 %v5957, %s6022
    %v6024 = vpop.permute.xlu0 %6023
    %s6026 = sor.u32 256, 80
    %6027 = vbcast.lane.b32.xlu0 %v5957, %s6026
    %v6028 = vpop.permute.xlu0 %6027
    %s6030 = sor.u32 256, 88
    %6031 = vbcast.lane.b32.xlu0 %v5957, %s6030
    %v6032 = vpop.permute.xlu0 %6031
    %s6034 = sor.u32 256, 96
    %6035 = vbcast.lane.b32.xlu0 %v5957, %s6034
    %v6036 = vpop.permute.xlu0 %6035
    %s6038 = sor.u32 256, 104
    %6039 = vbcast.lane.b32.xlu0 %v5957, %s6038
    %v6040 = vpop.permute.xlu0 %6039
    %s6042 = sor.u32 256, 112
    %6043 = vbcast.lane.b32.xlu0 %v5957, %s6042
    %v6044 = vpop.permute.xlu0 %6043
    %s6046 = sor.u32 256, 120
    %6047 = vbcast.lane.b32.xlu0 %v5957, %s6046
    %v6048 = vpop.permute.xlu0 %6047
    %6050 = vbcast.lane.b32.xlu0 %v5961, 256
    %v6051 = vpop.permute.xlu0 %6050
    %s6053 = sor.u32 256, 8
    %6054 = vbcast.lane.b32.xlu0 %v5961, %s6053
    %v6055 = vpop.permute.xlu0 %6054
    %s6057 = sor.u32 256, 16
    %6058 = vbcast.lane.b32.xlu0 %v5961, %s6057
    %v6059 = vpop.permute.xlu0 %6058
    %s6061 = sor.u32 256, 24
    %6062 = vbcast.lane.b32.xlu0 %v5961, %s6061
    %v6063 = vpop.permute.xlu0 %6062
    %s6065 = sor.u32 256, 32
    %6066 = vbcast.lane.b32.xlu0 %v5961, %s6065
    %v6067 = vpop.permute.xlu0 %6066
    %s6069 = sor.u32 256, 40
    %6070 = vbcast.lane.b32.xlu0 %v5961, %s6069
    %v6071 = vpop.permute.xlu0 %6070
    %s6073 = sor.u32 256, 48
    %6074 = vbcast.lane.b32.xlu0 %v5961, %s6073
    %v6075 = vpop.permute.xlu0 %6074
    %s6077 = sor.u32 256, 56
    %6078 = vbcast.lane.b32.xlu0 %v5961, %s6077
    %v6079 = vpop.permute.xlu0 %6078
    %s6081 = sor.u32 256, 64
    %6082 = vbcast.lane.b32.xlu0 %v5961, %s6081
    %v6083 = vpop.permute.xlu0 %6082
    %s6085 = sor.u32 256, 72
    %6086 = vbcast.lane.b32.xlu0 %v5961, %s6085
    %v6087 = vpop.permute.xlu0 %6086
    %s6089 = sor.u32 256, 80
    %6090 = vbcast.lane.b32.xlu0 %v5961, %s6089
    %v6091 = vpop.permute.xlu0 %6090
    %s6093 = sor.u32 256, 88
    %6094 = vbcast.lane.b32.xlu0 %v5961, %s6093
    %v6095 = vpop.permute.xlu0 %6094
    %s6097 = sor.u32 256, 96
    %6098 = vbcast.lane.b32.xlu0 %v5961, %s6097
    %v6099 = vpop.permute.xlu0 %6098
    %s6101 = sor.u32 256, 104
    %6102 = vbcast.lane.b32.xlu0 %v5961, %s6101
    %v6103 = vpop.permute.xlu0 %6102
    %s6105 = sor.u32 256, 112
    %6106 = vbcast.lane.b32.xlu0 %v5961, %s6105
    %v6107 = vpop.permute.xlu0 %6106
    %s6109 = sor.u32 256, 120
    %6110 = vbcast.lane.b32.xlu0 %v5961, %s6109
    %v6111 = vpop.permute.xlu0 %6110
    %6113 = vbcast.lane.b32.xlu0 %v5965, 256
    %v6114 = vpop.permute.xlu0 %6113
    %s6116 = sor.u32 256, 8
    %6117 = vbcast.lane.b32.xlu0 %v5965, %s6116
    %v6118 = vpop.permute.xlu0 %6117
    %s6120 = sor.u32 256, 16
    %6121 = vbcast.lane.b32.xlu0 %v5965, %s6120
    %v6122 = vpop.permute.xlu0 %6121
    %s6124 = sor.u32 256, 24
    %6125 = vbcast.lane.b32.xlu0 %v5965, %s6124
    %v6126 = vpop.permute.xlu0 %6125
    %s6128 = sor.u32 256, 32
    %6129 = vbcast.lane.b32.xlu0 %v5965, %s6128
    %v6130 = vpop.permute.xlu0 %6129
    %s6132 = sor.u32 256, 40
    %6133 = vbcast.lane.b32.xlu0 %v5965, %s6132
    %v6134 = vpop.permute.xlu0 %6133
    %s6136 = sor.u32 256, 48
    %6137 = vbcast.lane.b32.xlu0 %v5965, %s6136
    %v6138 = vpop.permute.xlu0 %6137
    %s6140 = sor.u32 256, 56
    %6141 = vbcast.lane.b32.xlu0 %v5965, %s6140
    %v6142 = vpop.permute.xlu0 %6141
    %s6144 = sor.u32 256, 64
    %6145 = vbcast.lane.b32.xlu0 %v5965, %s6144
    %v6146 = vpop.permute.xlu0 %6145
    %s6148 = sor.u32 256, 72
    %6149 = vbcast.lane.b32.xlu0 %v5965, %s6148
    %v6150 = vpop.permute.xlu0 %6149
    %s6152 = sor.u32 256, 80
    %6153 = vbcast.lane.b32.xlu0 %v5965, %s6152
    %v6154 = vpop.permute.xlu0 %6153
    %s6156 = sor.u32 256, 88
    %6157 = vbcast.lane.b32.xlu0 %v5965, %s6156
    %v6158 = vpop.permute.xlu0 %6157
    %s6160 = sor.u32 256, 96
    %6161 = vbcast.lane.b32.xlu0 %v5965, %s6160
    %v6162 = vpop.permute.xlu0 %6161
    %s6164 = sor.u32 256, 104
    %6165 = vbcast.lane.b32.xlu0 %v5965, %s6164
    %v6166 = vpop.permute.xlu0 %6165
    %s6168 = sor.u32 256, 112
    %6169 = vbcast.lane.b32.xlu0 %v5965, %s6168
    %v6170 = vpop.permute.xlu0 %6169
    %s6172 = sor.u32 256, 120
    %6173 = vbcast.lane.b32.xlu0 %v5965, %s6172
    %v6174 = vpop.permute.xlu0 %6173
    %6176 = vbcast.lane.b32.xlu0 %v5969, 256
    %v6177 = vpop.permute.xlu0 %6176
    %s6179 = sor.u32 256, 8
    %6180 = vbcast.lane.b32.xlu0 %v5969, %s6179
    %v6181 = vpop.permute.xlu0 %6180
    %s6183 = sor.u32 256, 16
    %6184 = vbcast.lane.b32.xlu0 %v5969, %s6183
    %v6185 = vpop.permute.xlu0 %6184
    %s6187 = sor.u32 256, 24
    %6188 = vbcast.lane.b32.xlu0 %v5969, %s6187
    %v6189 = vpop.permute.xlu0 %6188
    %s6191 = sor.u32 256, 32
    %6192 = vbcast.lane.b32.xlu0 %v5969, %s6191
    %v6193 = vpop.permute.xlu0 %6192
    %s6195 = sor.u32 256, 40
    %6196 = vbcast.lane.b32.xlu0 %v5969, %s6195
    %v6197 = vpop.permute.xlu0 %6196
    %s6199 = sor.u32 256, 48
    %6200 = vbcast.lane.b32.xlu0 %v5969, %s6199
    %v6201 = vpop.permute.xlu0 %6200
    %s6203 = sor.u32 256, 56
    %6204 = vbcast.lane.b32.xlu0 %v5969, %s6203
    %v6205 = vpop.permute.xlu0 %6204
    %s6207 = sor.u32 256, 64
    %6208 = vbcast.lane.b32.xlu0 %v5969, %s6207
    %v6209 = vpop.permute.xlu0 %6208
    %s6211 = sor.u32 256, 72
    %6212 = vbcast.lane.b32.xlu0 %v5969, %s6211
    %v6213 = vpop.permute.xlu0 %6212
    %s6215 = sor.u32 256, 80
    %6216 = vbcast.lane.b32.xlu0 %v5969, %s6215
    %v6217 = vpop.permute.xlu0 %6216
    %s6219 = sor.u32 256, 88
    %6220 = vbcast.lane.b32.xlu0 %v5969, %s6219
    %v6221 = vpop.permute.xlu0 %6220
    %s6223 = sor.u32 256, 96
    %6224 = vbcast.lane.b32.xlu0 %v5969, %s6223
    %v6225 = vpop.permute.xlu0 %6224
    %s6227 = sor.u32 256, 104
    %6228 = vbcast.lane.b32.xlu0 %v5969, %s6227
    %v6229 = vpop.permute.xlu0 %6228
    %s6231 = sor.u32 256, 112
    %6232 = vbcast.lane.b32.xlu0 %v5969, %s6231
    %v6233 = vpop.permute.xlu0 %6232
    %s6235 = sor.u32 256, 120
    %6236 = vbcast.lane.b32.xlu0 %v5969, %s6235
    %v6237 = vpop.permute.xlu0 %6236
    %6239 = vbcast.lane.b32.xlu0 %v5973, 256
    %v6240 = vpop.permute.xlu0 %6239
    %s6242 = sor.u32 256, 8
    %6243 = vbcast.lane.b32.xlu0 %v5973, %s6242
    %v6244 = vpop.permute.xlu0 %6243
    %s6246 = sor.u32 256, 16
    %6247 = vbcast.lane.b32.xlu0 %v5973, %s6246
    %v6248 = vpop.permute.xlu0 %6247
    %s6250 = sor.u32 256, 24
    %6251 = vbcast.lane.b32.xlu0 %v5973, %s6250
    %v6252 = vpop.permute.xlu0 %6251
    %s6254 = sor.u32 256, 32
    %6255 = vbcast.lane.b32.xlu0 %v5973, %s6254
    %v6256 = vpop.permute.xlu0 %6255
    %s6258 = sor.u32 256, 40
    %6259 = vbcast.lane.b32.xlu0 %v5973, %s6258
    %v6260 = vpop.permute.xlu0 %6259
    %s6262 = sor.u32 256, 48
    %6263 = vbcast.lane.b32.xlu0 %v5973, %s6262
    %v6264 = vpop.permute.xlu0 %6263
    %s6266 = sor.u32 256, 56
    %6267 = vbcast.lane.b32.xlu0 %v5973, %s6266
    %v6268 = vpop.permute.xlu0 %6267
    %s6270 = sor.u32 256, 64
    %6271 = vbcast.lane.b32.xlu0 %v5973, %s6270
    %v6272 = vpop.permute.xlu0 %6271
    %s6274 = sor.u32 256, 72
    %6275 = vbcast.lane.b32.xlu0 %v5973, %s6274
    %v6276 = vpop.permute.xlu0 %6275
    %s6278 = sor.u32 256, 80
    %6279 = vbcast.lane.b32.xlu0 %v5973, %s6278
    %v6280 = vpop.permute.xlu0 %6279
    %s6282 = sor.u32 256, 88
    %6283 = vbcast.lane.b32.xlu0 %v5973, %s6282
    %v6284 = vpop.permute.xlu0 %6283
    %s6286 = sor.u32 256, 96
    %6287 = vbcast.lane.b32.xlu0 %v5973, %s6286
    %v6288 = vpop.permute.xlu0 %6287
    %s6290 = sor.u32 256, 104
    %6291 = vbcast.lane.b32.xlu0 %v5973, %s6290
    %v6292 = vpop.permute.xlu0 %6291
    %s6294 = sor.u32 256, 112
    %6295 = vbcast.lane.b32.xlu0 %v5973, %s6294
    %v6296 = vpop.permute.xlu0 %6295
    %s6298 = sor.u32 256, 120
    %6299 = vbcast.lane.b32.xlu0 %v5973, %s6298
    %v6300 = vpop.permute.xlu0 %6299
    %6302 = vbcast.lane.b32.xlu0 %v5977, 256
    %v6303 = vpop.permute.xlu0 %6302
    %s6305 = sor.u32 256, 8
    %6306 = vbcast.lane.b32.xlu0 %v5977, %s6305
    %v6307 = vpop.permute.xlu0 %6306
    %s6309 = sor.u32 256, 16
    %6310 = vbcast.lane.b32.xlu0 %v5977, %s6309
    %v6311 = vpop.permute.xlu0 %6310
    %s6313 = sor.u32 256, 24
    %6314 = vbcast.lane.b32.xlu0 %v5977, %s6313
    %v6315 = vpop.permute.xlu0 %6314
    %s6317 = sor.u32 256, 32
    %6318 = vbcast.lane.b32.xlu0 %v5977, %s6317
    %v6319 = vpop.permute.xlu0 %6318
    %s6321 = sor.u32 256, 40
    %6322 = vbcast.lane.b32.xlu0 %v5977, %s6321
    %v6323 = vpop.permute.xlu0 %6322
    %s6325 = sor.u32 256, 48
    %6326 = vbcast.lane.b32.xlu0 %v5977, %s6325
    %v6327 = vpop.permute.xlu0 %6326
    %s6329 = sor.u32 256, 56
    %6330 = vbcast.lane.b32.xlu0 %v5977, %s6329
    %v6331 = vpop.permute.xlu0 %6330
    %s6333 = sor.u32 256, 64
    %6334 = vbcast.lane.b32.xlu0 %v5977, %s6333
    %v6335 = vpop.permute.xlu0 %6334
    %s6337 = sor.u32 256, 72
    %6338 = vbcast.lane.b32.xlu0 %v5977, %s6337
    %v6339 = vpop.permute.xlu0 %6338
    %s6341 = sor.u32 256, 80
    %6342 = vbcast.lane.b32.xlu0 %v5977, %s6341
    %v6343 = vpop.permute.xlu0 %6342
    %s6345 = sor.u32 256, 88
    %6346 = vbcast.lane.b32.xlu0 %v5977, %s6345
    %v6347 = vpop.permute.xlu0 %6346
    %s6349 = sor.u32 256, 96
    %6350 = vbcast.lane.b32.xlu0 %v5977, %s6349
    %v6351 = vpop.permute.xlu0 %6350
    %s6353 = sor.u32 256, 104
    %6354 = vbcast.lane.b32.xlu0 %v5977, %s6353
    %v6355 = vpop.permute.xlu0 %6354
    %s6357 = sor.u32 256, 112
    %6358 = vbcast.lane.b32.xlu0 %v5977, %s6357
    %v6359 = vpop.permute.xlu0 %6358
    %s6361 = sor.u32 256, 120
    %6362 = vbcast.lane.b32.xlu0 %v5977, %s6361
    %v6363 = vpop.permute.xlu0 %6362
    %6365 = vbcast.lane.b32.xlu0 %v5981, 256
    %v6366 = vpop.permute.xlu0 %6365
    %s6368 = sor.u32 256, 8
    %6369 = vbcast.lane.b32.xlu0 %v5981, %s6368
    %v6370 = vpop.permute.xlu0 %6369
    %s6372 = sor.u32 256, 16
    %6373 = vbcast.lane.b32.xlu0 %v5981, %s6372
    %v6374 = vpop.permute.xlu0 %6373
    %s6376 = sor.u32 256, 24
    %6377 = vbcast.lane.b32.xlu0 %v5981, %s6376
    %v6378 = vpop.permute.xlu0 %6377
    %s6380 = sor.u32 256, 32
    %6381 = vbcast.lane.b32.xlu0 %v5981, %s6380
    %v6382 = vpop.permute.xlu0 %6381
    %s6384 = sor.u32 256, 40
    %6385 = vbcast.lane.b32.xlu0 %v5981, %s6384
    %v6386 = vpop.permute.xlu0 %6385
    %s6388 = sor.u32 256, 48
    %6389 = vbcast.lane.b32.xlu0 %v5981, %s6388
    %v6390 = vpop.permute.xlu0 %6389
    %s6392 = sor.u32 256, 56
    %6393 = vbcast.lane.b32.xlu0 %v5981, %s6392
    %v6394 = vpop.permute.xlu0 %6393
    %s6396 = sor.u32 256, 64
    %6397 = vbcast.lane.b32.xlu0 %v5981, %s6396
    %v6398 = vpop.permute.xlu0 %6397
    %s6400 = sor.u32 256, 72
    %6401 = vbcast.lane.b32.xlu0 %v5981, %s6400
    %v6402 = vpop.permute.xlu0 %6401
    %s6404 = sor.u32 256, 80
    %6405 = vbcast.lane.b32.xlu0 %v5981, %s6404
    %v6406 = vpop.permute.xlu0 %6405
    %s6408 = sor.u32 256, 88
    %6409 = vbcast.lane.b32.xlu0 %v5981, %s6408
    %v6410 = vpop.permute.xlu0 %6409
    %s6412 = sor.u32 256, 96
    %6413 = vbcast.lane.b32.xlu0 %v5981, %s6412
    %v6414 = vpop.permute.xlu0 %6413
    %s6416 = sor.u32 256, 104
    %6417 = vbcast.lane.b32.xlu0 %v5981, %s6416
    %v6418 = vpop.permute.xlu0 %6417
    %s6420 = sor.u32 256, 112
    %6421 = vbcast.lane.b32.xlu0 %v5981, %s6420
    %v6422 = vpop.permute.xlu0 %6421
    %s6424 = sor.u32 256, 120
    %6425 = vbcast.lane.b32.xlu0 %v5981, %s6424
    %v6426 = vpop.permute.xlu0 %6425
    %6428 = vbcast.lane.b32.xlu0 %v5985, 256
    %v6429 = vpop.permute.xlu0 %6428
    %s6431 = sor.u32 256, 8
    %6432 = vbcast.lane.b32.xlu0 %v5985, %s6431
    %v6433 = vpop.permute.xlu0 %6432
    %s6435 = sor.u32 256, 16
    %6436 = vbcast.lane.b32.xlu0 %v5985, %s6435
    %v6437 = vpop.permute.xlu0 %6436
    %s6439 = sor.u32 256, 24
    %6440 = vbcast.lane.b32.xlu0 %v5985, %s6439
    %v6441 = vpop.permute.xlu0 %6440
    %s6443 = sor.u32 256, 32
    %6444 = vbcast.lane.b32.xlu0 %v5985, %s6443
    %v6445 = vpop.permute.xlu0 %6444
    %s6447 = sor.u32 256, 40
    %6448 = vbcast.lane.b32.xlu0 %v5985, %s6447
    %v6449 = vpop.permute.xlu0 %6448
    %s6451 = sor.u32 256, 48
    %6452 = vbcast.lane.b32.xlu0 %v5985, %s6451
    %v6453 = vpop.permute.xlu0 %6452
    %s6455 = sor.u32 256, 56
    %6456 = vbcast.lane.b32.xlu0 %v5985, %s6455
    %v6457 = vpop.permute.xlu0 %6456
    %s6459 = sor.u32 256, 64
    %6460 = vbcast.lane.b32.xlu0 %v5985, %s6459
    %v6461 = vpop.permute.xlu0 %6460
    %s6463 = sor.u32 256, 72
    %6464 = vbcast.lane.b32.xlu0 %v5985, %s6463
    %v6465 = vpop.permute.xlu0 %6464
    %s6467 = sor.u32 256, 80
    %6468 = vbcast.lane.b32.xlu0 %v5985, %s6467
    %v6469 = vpop.permute.xlu0 %6468
    %s6471 = sor.u32 256, 88
    %6472 = vbcast.lane.b32.xlu0 %v5985, %s6471
    %v6473 = vpop.permute.xlu0 %6472
    %s6475 = sor.u32 256, 96
    %6476 = vbcast.lane.b32.xlu0 %v5985, %s6475
    %v6477 = vpop.permute.xlu0 %6476
    %s6479 = sor.u32 256, 104
    %6480 = vbcast.lane.b32.xlu0 %v5985, %s6479
    %v6481 = vpop.permute.xlu0 %6480
    %s6483 = sor.u32 256, 112
    %6484 = vbcast.lane.b32.xlu0 %v5985, %s6483
    %v6485 = vpop.permute.xlu0 %6484
    %s6487 = sor.u32 256, 120
    %6488 = vbcast.lane.b32.xlu0 %v5985, %s6487
    %v6489 = vpop.permute.xlu0 %6488
    %v6618 = vadd.f32 %v5696, %v5988
    %v6619 = vadd.f32 %v5697, %v5992
    %v6620 = vadd.f32 %v5698, %v5996
    %v6621 = vadd.f32 %v5699, %v6000
    %v6622 = vadd.f32 %v5700, %v6004
    %v6623 = vadd.f32 %v5701, %v6008
    %v6624 = vadd.f32 %v5702, %v6012
    %v6625 = vadd.f32 %v5703, %v6016
    %v6626 = vadd.f32 %v5704, %v6020
    %v6627 = vadd.f32 %v5705, %v6024
    %v6628 = vadd.f32 %v5706, %v6028
    %v6629 = vadd.f32 %v5707, %v6032
    %v6630 = vadd.f32 %v5708, %v6036
    %v6631 = vadd.f32 %v5709, %v6040
    %v6632 = vadd.f32 %v5710, %v6044
    %v6633 = vadd.f32 %v5711, %v6048
    %v6634 = vadd.f32 %v5712, %v6051
    %v6635 = vadd.f32 %v5713, %v6055
    %v6636 = vadd.f32 %v5714, %v6059
    %v6637 = vadd.f32 %v5715, %v6063
    %v6638 = vadd.f32 %v5716, %v6067
    %v6639 = vadd.f32 %v5717, %v6071
    %v6640 = vadd.f32 %v5718, %v6075
    %v6641 = vadd.f32 %v5719, %v6079
    %v6642 = vadd.f32 %v5720, %v6083
    %v6643 = vadd.f32 %v5721, %v6087
    %v6644 = vadd.f32 %v5722, %v6091
    %v6645 = vadd.f32 %v5723, %v6095
    %v6646 = vadd.f32 %v5724, %v6099
    %v6647 = vadd.f32 %v5725, %v6103
    %v6648 = vadd.f32 %v5726, %v6107
    %v6649 = vadd.f32 %v5727, %v6111
    %v6650 = vadd.f32 %v5728, %v6114
    %v6651 = vadd.f32 %v5729, %v6118
    %v6652 = vadd.f32 %v5730, %v6122
    %v6653 = vadd.f32 %v5731, %v6126
    %v6654 = vadd.f32 %v5732, %v6130
    %v6655 = vadd.f32 %v5733, %v6134
    %v6656 = vadd.f32 %v5734, %v6138
    %v6657 = vadd.f32 %v5735, %v6142
    %v6658 = vadd.f32 %v5736, %v6146
    %v6659 = vadd.f32 %v5737, %v6150
    %v6660 = vadd.f32 %v5738, %v6154
    %v6661 = vadd.f32 %v5739, %v6158
    %v6662 = vadd.f32 %v5740, %v6162
    %v6663 = vadd.f32 %v5741, %v6166
    %v6664 = vadd.f32 %v5742, %v6170
    %v6665 = vadd.f32 %v5743, %v6174
    %v6666 = vadd.f32 %v5744, %v6177
    %v6667 = vadd.f32 %v5745, %v6181
    %v6668 = vadd.f32 %v5746, %v6185
    %v6669 = vadd.f32 %v5747, %v6189
    %v6670 = vadd.f32 %v5748, %v6193
    %v6671 = vadd.f32 %v5749, %v6197
    %v6672 = vadd.f32 %v5750, %v6201
    %v6673 = vadd.f32 %v5751, %v6205
    %v6674 = vadd.f32 %v5752, %v6209
    %v6675 = vadd.f32 %v5753, %v6213
    %v6676 = vadd.f32 %v5754, %v6217
    %v6677 = vadd.f32 %v5755, %v6221
    %v6678 = vadd.f32 %v5756, %v6225
    %v6679 = vadd.f32 %v5757, %v6229
    %v6680 = vadd.f32 %v5758, %v6233
    %v6681 = vadd.f32 %v5759, %v6237
    %v6682 = vadd.f32 %v5760, %v6240
    %v6683 = vadd.f32 %v5761, %v6244
    %v6684 = vadd.f32 %v5762, %v6248
    %v6685 = vadd.f32 %v5763, %v6252
    %v6686 = vadd.f32 %v5764, %v6256
    %v6687 = vadd.f32 %v5765, %v6260
    %v6688 = vadd.f32 %v5766, %v6264
    %v6689 = vadd.f32 %v5767, %v6268
    %v6690 = vadd.f32 %v5768, %v6272
    %v6691 = vadd.f32 %v5769, %v6276
    %v6692 = vadd.f32 %v5770, %v6280
    %v6693 = vadd.f32 %v5771, %v6284
    %v6694 = vadd.f32 %v5772, %v6288
    %v6695 = vadd.f32 %v5773, %v6292
    %v6696 = vadd.f32 %v5774, %v6296
    %v6697 = vadd.f32 %v5775, %v6300
    %v6698 = vadd.f32 %v5776, %v6303
    %v6699 = vadd.f32 %v5777, %v6307
    %v6700 = vadd.f32 %v5778, %v6311
    %v6701 = vadd.f32 %v5779, %v6315
    %v6702 = vadd.f32 %v5780, %v6319
    %v6703 = vadd.f32 %v5781, %v6323
    %v6704 = vadd.f32 %v5782, %v6327
    %v6705 = vadd.f32 %v5783, %v6331
    %v6706 = vadd.f32 %v5784, %v6335
    %v6707 = vadd.f32 %v5785, %v6339
    %v6708 = vadd.f32 %v5786, %v6343
    %v6709 = vadd.f32 %v5787, %v6347
    %v6710 = vadd.f32 %v5788, %v6351
    %v6711 = vadd.f32 %v5789, %v6355
    %v6712 = vadd.f32 %v5790, %v6359
    %v6713 = vadd.f32 %v5791, %v6363
    %v6714 = vadd.f32 %v5792, %v6366
    %v6715 = vadd.f32 %v5793, %v6370
    %v6716 = vadd.f32 %v5794, %v6374
    %v6717 = vadd.f32 %v5795, %v6378
    %v6718 = vadd.f32 %v5796, %v6382
    %v6719 = vadd.f32 %v5797, %v6386
    %v6720 = vadd.f32 %v5798, %v6390
    %v6721 = vadd.f32 %v5799, %v6394
    %v6722 = vadd.f32 %v5800, %v6398
    %v6723 = vadd.f32 %v5801, %v6402
    %v6724 = vadd.f32 %v5802, %v6406
    %v6725 = vadd.f32 %v5803, %v6410
    %v6726 = vadd.f32 %v5804, %v6414
    %v6727 = vadd.f32 %v5805, %v6418
    %v6728 = vadd.f32 %v5806, %v6422
    %v6729 = vadd.f32 %v5807, %v6426
    %v6730 = vadd.f32 %v5808, %v6429
    %v6731 = vadd.f32 %v5809, %v6433
    %v6732 = vadd.f32 %v5810, %v6437
    %v6733 = vadd.f32 %v5811, %v6441
    %v6734 = vadd.f32 %v5812, %v6445
    %v6735 = vadd.f32 %v5813, %v6449
    %v6736 = vadd.f32 %v5814, %v6453
    %v6737 = vadd.f32 %v5815, %v6457
    %v6738 = vadd.f32 %v5816, %v6461
    %v6739 = vadd.f32 %v5817, %v6465
    %v6740 = vadd.f32 %v5818, %v6469
    %v6741 = vadd.f32 %v5819, %v6473
    %v6742 = vadd.f32 %v5820, %v6477
    %v6743 = vadd.f32 %v5821, %v6481
    %v6744 = vadd.f32 %v5822, %v6485
    %v6745 = vadd.f32 %v5823, %v6489
    %v6746 = vadd.f32 %v5824, %v5988
    %v6747 = vadd.f32 %v5825, %v5992
    %v6748 = vadd.f32 %v5826, %v5996
    %v6749 = vadd.f32 %v5827, %v6000
    %v6750 = vadd.f32 %v5828, %v6004
    %v6751 = vadd.f32 %v5829, %v6008
    %v6752 = vadd.f32 %v5830, %v6012
    %v6753 = vadd.f32 %v5831, %v6016
    %v6754 = vadd.f32 %v5832, %v6020
    %v6755 = vadd.f32 %v5833, %v6024
    %v6756 = vadd.f32 %v5834, %v6028
    %v6757 = vadd.f32 %v5835, %v6032
    %v6758 = vadd.f32 %v5836, %v6036
    %v6759 = vadd.f32 %v5837, %v6040
    %v6760 = vadd.f32 %v5838, %v6044
    %v6761 = vadd.f32 %v5839, %v6048
    %v6762 = vadd.f32 %v5840, %v6051
    %v6763 = vadd.f32 %v5841, %v6055
    %v6764 = vadd.f32 %v5842, %v6059
    %v6765 = vadd.f32 %v5843, %v6063
    %v6766 = vadd.f32 %v5844, %v6067
    %v6767 = vadd.f32 %v5845, %v6071
    %v6768 = vadd.f32 %v5846, %v6075
    %v6769 = vadd.f32 %v5847, %v6079
    %v6770 = vadd.f32 %v5848, %v6083
    %v6771 = vadd.f32 %v5849, %v6087
    %v6772 = vadd.f32 %v5850, %v6091
    %v6773 = vadd.f32 %v5851, %v6095
    %v6774 = vadd.f32 %v5852, %v6099
    %v6775 = vadd.f32 %v5853, %v6103
    %v6776 = vadd.f32 %v5854, %v6107
    %v6777 = vadd.f32 %v5855, %v6111
    %v6778 = vadd.f32 %v5856, %v6114
    %v6779 = vadd.f32 %v5857, %v6118
    %v6780 = vadd.f32 %v5858, %v6122
    %v6781 = vadd.f32 %v5859, %v6126
    %v6782 = vadd.f32 %v5860, %v6130
    %v6783 = vadd.f32 %v5861, %v6134
    %v6784 = vadd.f32 %v5862, %v6138
    %v6785 = vadd.f32 %v5863, %v6142
    %v6786 = vadd.f32 %v5864, %v6146
    %v6787 = vadd.f32 %v5865, %v6150
    %v6788 = vadd.f32 %v5866, %v6154
    %v6789 = vadd.f32 %v5867, %v6158
    %v6790 = vadd.f32 %v5868, %v6162
    %v6791 = vadd.f32 %v5869, %v6166
    %v6792 = vadd.f32 %v5870, %v6170
    %v6793 = vadd.f32 %v5871, %v6174
    %v6794 = vadd.f32 %v5872, %v6177
    %v6795 = vadd.f32 %v5873, %v6181
    %v6796 = vadd.f32 %v5874, %v6185
    %v6797 = vadd.f32 %v5875, %v6189
    %v6798 = vadd.f32 %v5876, %v6193
    %v6799 = vadd.f32 %v5877, %v6197
    %v6800 = vadd.f32 %v5878, %v6201
    %v6801 = vadd.f32 %v5879, %v6205
    %v6802 = vadd.f32 %v5880, %v6209
    %v6803 = vadd.f32 %v5881, %v6213
    %v6804 = vadd.f32 %v5882, %v6217
    %v6805 = vadd.f32 %v5883, %v6221
    %v6806 = vadd.f32 %v5884, %v6225
    %v6807 = vadd.f32 %v5885, %v6229
    %v6808 = vadd.f32 %v5886, %v6233
    %v6809 = vadd.f32 %v5887, %v6237
    %v6810 = vadd.f32 %v5888, %v6240
    %v6811 = vadd.f32 %v5889, %v6244
    %v6812 = vadd.f32 %v5890, %v6248
    %v6813 = vadd.f32 %v5891, %v6252
    %v6814 = vadd.f32 %v5892, %v6256
    %v6815 = vadd.f32 %v5893, %v6260
    %v6816 = vadd.f32 %v5894, %v6264
    %v6817 = vadd.f32 %v5895, %v6268
    %v6818 = vadd.f32 %v5896, %v6272
    %v6819 = vadd.f32 %v5897, %v6276
    %v6820 = vadd.f32 %v5898, %v6280
    %v6821 = vadd.f32 %v5899, %v6284
    %v6822 = vadd.f32 %v5900, %v6288
    %v6823 = vadd.f32 %v5901, %v6292
    %v6824 = vadd.f32 %v5902, %v6296
    %v6825 = vadd.f32 %v5903, %v6300
    %v6826 = vadd.f32 %v5904, %v6303
    %v6827 = vadd.f32 %v5905, %v6307
    %v6828 = vadd.f32 %v5906, %v6311
    %v6829 = vadd.f32 %v5907, %v6315
    %v6830 = vadd.f32 %v5908, %v6319
    %v6831 = vadd.f32 %v5909, %v6323
    %v6832 = vadd.f32 %v5910, %v6327
    %v6833 = vadd.f32 %v5911, %v6331
    %v6834 = vadd.f32 %v5912, %v6335
    %v6835 = vadd.f32 %v5913, %v6339
    %v6836 = vadd.f32 %v5914, %v6343
    %v6837 = vadd.f32 %v5915, %v6347
    %v6838 = vadd.f32 %v5916, %v6351
    %v6839 = vadd.f32 %v5917, %v6355
    %v6840 = vadd.f32 %v5918, %v6359
    %v6841 = vadd.f32 %v5919, %v6363
    %v6842 = vadd.f32 %v5920, %v6366
    %v6843 = vadd.f32 %v5921, %v6370
    %v6844 = vadd.f32 %v5922, %v6374
    %v6845 = vadd.f32 %v5923, %v6378
    %v6846 = vadd.f32 %v5924, %v6382
    %v6847 = vadd.f32 %v5925, %v6386
    %v6848 = vadd.f32 %v5926, %v6390
    %v6849 = vadd.f32 %v5927, %v6394
    %v6850 = vadd.f32 %v5928, %v6398
    %v6851 = vadd.f32 %v5929, %v6402
    %v6852 = vadd.f32 %v5930, %v6406
    %v6853 = vadd.f32 %v5931, %v6410
    %v6854 = vadd.f32 %v5932, %v6414
    %v6855 = vadd.f32 %v5933, %v6418
    %v6856 = vadd.f32 %v5934, %v6422
    %v6857 = vadd.f32 %v5935, %v6426
    %v6858 = vadd.f32 %v5936, %v6429
    %v6859 = vadd.f32 %v5937, %v6433
    %v6860 = vadd.f32 %v5938, %v6437
    %v6861 = vadd.f32 %v5939, %v6441
    %v6862 = vadd.f32 %v5940, %v6445
    %v6863 = vadd.f32 %v5941, %v6449
    %v6864 = vadd.f32 %v5942, %v6453
    %v6865 = vadd.f32 %v5943, %v6457
    %v6866 = vadd.f32 %v5944, %v6461
    %v6867 = vadd.f32 %v5945, %v6465
    %v6868 = vadd.f32 %v5946, %v6469
    %v6869 = vadd.f32 %v5947, %v6473
    %v6870 = vadd.f32 %v5948, %v6477
    %v6871 = vadd.f32 %v5949, %v6481
    %v6872 = vadd.f32 %v5950, %v6485
    %v6873 = vadd.f32 %v5951, %v6489
    %s6874 = smul.u32 4, 144
    %s6875 = smul.u32 %s6874, 1
    %s6876 = sshll.u32 %s6875, 4
    %6877 = dma.done %s84, %s6876
    %v6878 = vpack.c.bf16 %v6619, %v6618
    %v6879 = vpack.c.bf16 %v6621, %v6620
    %v6880 = vpack.c.bf16 %v6623, %v6622
    %v6881 = vpack.c.bf16 %v6625, %v6624
    %v6882 = vpack.c.bf16 %v6627, %v6626
    %v6883 = vpack.c.bf16 %v6629, %v6628
    %v6884 = vpack.c.bf16 %v6631, %v6630
    %v6885 = vpack.c.bf16 %v6633, %v6632
    %v6886 = vpack.c.bf16 %v6635, %v6634
    %v6887 = vpack.c.bf16 %v6637, %v6636
    %v6888 = vpack.c.bf16 %v6639, %v6638
    %v6889 = vpack.c.bf16 %v6641, %v6640
    %v6890 = vpack.c.bf16 %v6643, %v6642
    %v6891 = vpack.c.bf16 %v6645, %v6644
    %v6892 = vpack.c.bf16 %v6647, %v6646
    %v6893 = vpack.c.bf16 %v6649, %v6648
    %v6894 = vpack.c.bf16 %v6651, %v6650
    %v6895 = vpack.c.bf16 %v6653, %v6652
    %v6896 = vpack.c.bf16 %v6655, %v6654
    %v6897 = vpack.c.bf16 %v6657, %v6656
    %v6898 = vpack.c.bf16 %v6659, %v6658
    %v6899 = vpack.c.bf16 %v6661, %v6660
    %v6900 = vpack.c.bf16 %v6663, %v6662
    %v6901 = vpack.c.bf16 %v6665, %v6664
    %v6902 = vpack.c.bf16 %v6667, %v6666
    %v6903 = vpack.c.bf16 %v6669, %v6668
    %v6904 = vpack.c.bf16 %v6671, %v6670
    %v6905 = vpack.c.bf16 %v6673, %v6672
    %v6906 = vpack.c.bf16 %v6675, %v6674
    %v6907 = vpack.c.bf16 %v6677, %v6676
    %v6908 = vpack.c.bf16 %v6679, %v6678
    %v6909 = vpack.c.bf16 %v6681, %v6680
    %v6910 = vpack.c.bf16 %v6683, %v6682
    %v6911 = vpack.c.bf16 %v6685, %v6684
    %v6912 = vpack.c.bf16 %v6687, %v6686
    %v6913 = vpack.c.bf16 %v6689, %v6688
    %v6914 = vpack.c.bf16 %v6691, %v6690
    %v6915 = vpack.c.bf16 %v6693, %v6692
    %v6916 = vpack.c.bf16 %v6695, %v6694
    %v6917 = vpack.c.bf16 %v6697, %v6696
    %v6918 = vpack.c.bf16 %v6699, %v6698
    %v6919 = vpack.c.bf16 %v6701, %v6700
    %v6920 = vpack.c.bf16 %v6703, %v6702
    %v6921 = vpack.c.bf16 %v6705, %v6704
    %v6922 = vpack.c.bf16 %v6707, %v6706
    %v6923 = vpack.c.bf16 %v6709, %v6708
    %v6924 = vpack.c.bf16 %v6711, %v6710
    %v6925 = vpack.c.bf16 %v6713, %v6712
    %v6926 = vpack.c.bf16 %v6715, %v6714
    %v6927 = vpack.c.bf16 %v6717, %v6716
    %v6928 = vpack.c.bf16 %v6719, %v6718
    %v6929 = vpack.c.bf16 %v6721, %v6720
    %v6930 = vpack.c.bf16 %v6723, %v6722
    %v6931 = vpack.c.bf16 %v6725, %v6724
    %v6932 = vpack.c.bf16 %v6727, %v6726
    %v6933 = vpack.c.bf16 %v6729, %v6728
    %v6934 = vpack.c.bf16 %v6731, %v6730
    %v6935 = vpack.c.bf16 %v6733, %v6732
    %v6936 = vpack.c.bf16 %v6735, %v6734
    %v6937 = vpack.c.bf16 %v6737, %v6736
    %v6938 = vpack.c.bf16 %v6739, %v6738
    %v6939 = vpack.c.bf16 %v6741, %v6740
    %v6940 = vpack.c.bf16 %v6743, %v6742
    %v6941 = vpack.c.bf16 %v6745, %v6744
    %v6942 = vpack.c.bf16 %v6747, %v6746
    %v6943 = vpack.c.bf16 %v6749, %v6748
    %v6944 = vpack.c.bf16 %v6751, %v6750
    %v6945 = vpack.c.bf16 %v6753, %v6752
    %v6946 = vpack.c.bf16 %v6755, %v6754
    %v6947 = vpack.c.bf16 %v6757, %v6756
    %v6948 = vpack.c.bf16 %v6759, %v6758
    %v6949 = vpack.c.bf16 %v6761, %v6760
    %v6950 = vpack.c.bf16 %v6763, %v6762
    %v6951 = vpack.c.bf16 %v6765, %v6764
    %v6952 = vpack.c.bf16 %v6767, %v6766
    %v6953 = vpack.c.bf16 %v6769, %v6768
    %v6954 = vpack.c.bf16 %v6771, %v6770
    %v6955 = vpack.c.bf16 %v6773, %v6772
    %v6956 = vpack.c.bf16 %v6775, %v6774
    %v6957 = vpack.c.bf16 %v6777, %v6776
    %v6958 = vpack.c.bf16 %v6779, %v6778
    %v6959 = vpack.c.bf16 %v6781, %v6780
    %v6960 = vpack.c.bf16 %v6783, %v6782
    %v6961 = vpack.c.bf16 %v6785, %v6784
    %v6962 = vpack.c.bf16 %v6787, %v6786
    %v6963 = vpack.c.bf16 %v6789, %v6788
    %v6964 = vpack.c.bf16 %v6791, %v6790
    %v6965 = vpack.c.bf16 %v6793, %v6792
    %v6966 = vpack.c.bf16 %v6795, %v6794
    %v6967 = vpack.c.bf16 %v6797, %v6796
    %v6968 = vpack.c.bf16 %v6799, %v6798
    %v6969 = vpack.c.bf16 %v6801, %v6800
    %v6970 = vpack.c.bf16 %v6803, %v6802
    %v6971 = vpack.c.bf16 %v6805, %v6804
    %v6972 = vpack.c.bf16 %v6807, %v6806
    %v6973 = vpack.c.bf16 %v6809, %v6808
    %v6974 = vpack.c.bf16 %v6811, %v6810
    %v6975 = vpack.c.bf16 %v6813, %v6812
    %v6976 = vpack.c.bf16 %v6815, %v6814
    %v6977 = vpack.c.bf16 %v6817, %v6816
    %v6978 = vpack.c.bf16 %v6819, %v6818
    %v6979 = vpack.c.bf16 %v6821, %v6820
    %v6980 = vpack.c.bf16 %v6823, %v6822
    %v6981 = vpack.c.bf16 %v6825, %v6824
    %v6982 = vpack.c.bf16 %v6827, %v6826
    %v6983 = vpack.c.bf16 %v6829, %v6828
    %v6984 = vpack.c.bf16 %v6831, %v6830
    %v6985 = vpack.c.bf16 %v6833, %v6832
    %v6986 = vpack.c.bf16 %v6835, %v6834
    %v6987 = vpack.c.bf16 %v6837, %v6836
    %v6988 = vpack.c.bf16 %v6839, %v6838
    %v6989 = vpack.c.bf16 %v6841, %v6840
    %v6990 = vpack.c.bf16 %v6843, %v6842
    %v6991 = vpack.c.bf16 %v6845, %v6844
    %v6992 = vpack.c.bf16 %v6847, %v6846
    %v6993 = vpack.c.bf16 %v6849, %v6848
    %v6994 = vpack.c.bf16 %v6851, %v6850
    %v6995 = vpack.c.bf16 %v6853, %v6852
    %v6996 = vpack.c.bf16 %v6855, %v6854
    %v6997 = vpack.c.bf16 %v6857, %v6856
    %v6998 = vpack.c.bf16 %v6859, %v6858
    %v6999 = vpack.c.bf16 %v6861, %v6860
    %v7000 = vpack.c.bf16 %v6863, %v6862
    %v7001 = vpack.c.bf16 %v6865, %v6864
    %v7002 = vpack.c.bf16 %v6867, %v6866
    %v7003 = vpack.c.bf16 %v6869, %v6868
    %v7004 = vpack.c.bf16 %v6871, %v6870
    %v7005 = vpack.c.bf16 %v6873, %v6872
    %v7006 = vld [vmem:[#allocation3] sm:$0xf]
    %v7007 = vld [vmem:[#allocation3 + $0x4] sm:$0xf]
    %v7008 = vld [vmem:[#allocation3 + $0x8] sm:$0xf]
    %v7009 = vld [vmem:[#allocation3 + $0xc] sm:$0xf]
    %v7010 = vld [vmem:[#allocation3 + $0x10] sm:$0xf]
    %v7011 = vld [vmem:[#allocation3 + $0x14] sm:$0xf]
    %v7012 = vld [vmem:[#allocation3 + $0x18] sm:$0xf]
    %v7013 = vld [vmem:[#allocation3 + $0x1c] sm:$0xf]
    %v7014 = vld [vmem:[#allocation3 + $0x20] sm:$0xf]
    %v7015 = vld [vmem:[#allocation3 + $0x24] sm:$0xf]
    %v7016 = vld [vmem:[#allocation3 + $0x28] sm:$0xf]
    %v7017 = vld [vmem:[#allocation3 + $0x2c] sm:$0xf]
    %v7018 = vld [vmem:[#allocation3 + $0x30] sm:$0xf]
    %v7019 = vld [vmem:[#allocation3 + $0x34] sm:$0xf]
    %v7020 = vld [vmem:[#allocation3 + $0x38] sm:$0xf]
    %v7021 = vld [vmem:[#allocation3 + $0x3c] sm:$0xf]
    %v7022 = vld [vmem:[#allocation3 + $0x40] sm:$0xf]
    %v7023 = vld [vmem:[#allocation3 + $0x44] sm:$0xf]
    %v7024 = vld [vmem:[#allocation3 + $0x48] sm:$0xf]
    %v7025 = vld [vmem:[#allocation3 + $0x4c] sm:$0xf]
    %v7026 = vld [vmem:[#allocation3 + $0x50] sm:$0xf]
    %v7027 = vld [vmem:[#allocation3 + $0x54] sm:$0xf]
    %v7028 = vld [vmem:[#allocation3 + $0x58] sm:$0xf]
    %v7029 = vld [vmem:[#allocation3 + $0x5c] sm:$0xf]
    %v7030 = vld [vmem:[#allocation3 + $0x60] sm:$0xf]
    %v7031 = vld [vmem:[#allocation3 + $0x64] sm:$0xf]
    %v7032 = vld [vmem:[#allocation3 + $0x68] sm:$0xf]
    %v7033 = vld [vmem:[#allocation3 + $0x6c] sm:$0xf]
    %v7034 = vld [vmem:[#allocation3 + $0x70] sm:$0xf]
    %v7035 = vld [vmem:[#allocation3 + $0x74] sm:$0xf]
    %v7036 = vld [vmem:[#allocation3 + $0x78] sm:$0xf]
    %v7037 = vld [vmem:[#allocation3 + $0x7c] sm:$0xf]
    %v7038 = vld [vmem:[#allocation3 + $0x80] sm:$0xf]
    %v7039 = vld [vmem:[#allocation3 + $0x84] sm:$0xf]
    %v7040 = vld [vmem:[#allocation3 + $0x88] sm:$0xf]
    %v7041 = vld [vmem:[#allocation3 + $0x8c] sm:$0xf]
    %v7042 = vld [vmem:[#allocation3 + $0x90] sm:$0xf]
    %v7043 = vld [vmem:[#allocation3 + $0x94] sm:$0xf]
    %v7044 = vld [vmem:[#allocation3 + $0x98] sm:$0xf]
    %v7045 = vld [vmem:[#allocation3 + $0x9c] sm:$0xf]
    %v7046 = vld [vmem:[#allocation3 + $0xa0] sm:$0xf]
    %v7047 = vld [vmem:[#allocation3 + $0xa4] sm:$0xf]
    %v7048 = vld [vmem:[#allocation3 + $0xa8] sm:$0xf]
    %v7049 = vld [vmem:[#allocation3 + $0xac] sm:$0xf]
    %v7050 = vld [vmem:[#allocation3 + $0xb0] sm:$0xf]
    %v7051 = vld [vmem:[#allocation3 + $0xb4] sm:$0xf]
    %v7052 = vld [vmem:[#allocation3 + $0xb8] sm:$0xf]
    %v7053 = vld [vmem:[#allocation3 + $0xbc] sm:$0xf]
    %v7054 = vld [vmem:[#allocation3 + $0xc0] sm:$0xf]
    %v7055 = vld [vmem:[#allocation3 + $0xc4] sm:$0xf]
    %v7056 = vld [vmem:[#allocation3 + $0xc8] sm:$0xf]
    %v7057 = vld [vmem:[#allocation3 + $0xcc] sm:$0xf]
    %v7058 = vld [vmem:[#allocation3 + $0xd0] sm:$0xf]
    %v7059 = vld [vmem:[#allocation3 + $0xd4] sm:$0xf]
    %v7060 = vld [vmem:[#allocation3 + $0xd8] sm:$0xf]
    %v7061 = vld [vmem:[#allocation3 + $0xdc] sm:$0xf]
    %v7062 = vld [vmem:[#allocation3 + $0xe0] sm:$0xf]
    %v7063 = vld [vmem:[#allocation3 + $0xe4] sm:$0xf]
    %v7064 = vld [vmem:[#allocation3 + $0xe8] sm:$0xf]
    %v7065 = vld [vmem:[#allocation3 + $0xec] sm:$0xf]
    %v7066 = vld [vmem:[#allocation3 + $0xf0] sm:$0xf]
    %v7067 = vld [vmem:[#allocation3 + $0xf4] sm:$0xf]
    %v7068 = vld [vmem:[#allocation3 + $0xf8] sm:$0xf]
    %v7069 = vld [vmem:[#allocation3 + $0xfc] sm:$0xf]
    %v7070 = vld [vmem:[#allocation3 + $0x100] sm:$0xf]
    %v7071 = vld [vmem:[#allocation3 + $0x104] sm:$0xf]
    %v7072 = vld [vmem:[#allocation3 + $0x108] sm:$0xf]
    %v7073 = vld [vmem:[#allocation3 + $0x10c] sm:$0xf]
    %v7074 = vld [vmem:[#allocation3 + $0x110] sm:$0xf]
    %v7075 = vld [vmem:[#allocation3 + $0x114] sm:$0xf]
    %v7076 = vld [vmem:[#allocation3 + $0x118] sm:$0xf]
    %v7077 = vld [vmem:[#allocation3 + $0x11c] sm:$0xf]
    %v7078 = vld [vmem:[#allocation3 + $0x120] sm:$0xf]
    %v7079 = vld [vmem:[#allocation3 + $0x124] sm:$0xf]
    %v7080 = vld [vmem:[#allocation3 + $0x128] sm:$0xf]
    %v7081 = vld [vmem:[#allocation3 + $0x12c] sm:$0xf]
    %v7082 = vld [vmem:[#allocation3 + $0x130] sm:$0xf]
    %v7083 = vld [vmem:[#allocation3 + $0x134] sm:$0xf]
    %v7084 = vld [vmem:[#allocation3 + $0x138] sm:$0xf]
    %v7085 = vld [vmem:[#allocation3 + $0x13c] sm:$0xf]
    %v7086 = vld [vmem:[#allocation3 + $0x140] sm:$0xf]
    %v7087 = vld [vmem:[#allocation3 + $0x144] sm:$0xf]
    %v7088 = vld [vmem:[#allocation3 + $0x148] sm:$0xf]
    %v7089 = vld [vmem:[#allocation3 + $0x14c] sm:$0xf]
    %v7090 = vld [vmem:[#allocation3 + $0x150] sm:$0xf]
    %v7091 = vld [vmem:[#allocation3 + $0x154] sm:$0xf]
    %v7092 = vld [vmem:[#allocation3 + $0x158] sm:$0xf]
    %v7093 = vld [vmem:[#allocation3 + $0x15c] sm:$0xf]
    %v7094 = vld [vmem:[#allocation3 + $0x160] sm:$0xf]
    %v7095 = vld [vmem:[#allocation3 + $0x164] sm:$0xf]
    %v7096 = vld [vmem:[#allocation3 + $0x168] sm:$0xf]
    %v7097 = vld [vmem:[#allocation3 + $0x16c] sm:$0xf]
    %v7098 = vld [vmem:[#allocation3 + $0x170] sm:$0xf]
    %v7099 = vld [vmem:[#allocation3 + $0x174] sm:$0xf]
    %v7100 = vld [vmem:[#allocation3 + $0x178] sm:$0xf]
    %v7101 = vld [vmem:[#allocation3 + $0x17c] sm:$0xf]
    %v7102 = vld [vmem:[#allocation3 + $0x180] sm:$0xf]
    %v7103 = vld [vmem:[#allocation3 + $0x184] sm:$0xf]
    %v7104 = vld [vmem:[#allocation3 + $0x188] sm:$0xf]
    %v7105 = vld [vmem:[#allocation3 + $0x18c] sm:$0xf]
    %v7106 = vld [vmem:[#allocation3 + $0x190] sm:$0xf]
    %v7107 = vld [vmem:[#allocation3 + $0x194] sm:$0xf]
    %v7108 = vld [vmem:[#allocation3 + $0x198] sm:$0xf]
    %v7109 = vld [vmem:[#allocation3 + $0x19c] sm:$0xf]
    %v7110 = vld [vmem:[#allocation3 + $0x1a0] sm:$0xf]
    %v7111 = vld [vmem:[#allocation3 + $0x1a4] sm:$0xf]
    %v7112 = vld [vmem:[#allocation3 + $0x1a8] sm:$0xf]
    %v7113 = vld [vmem:[#allocation3 + $0x1ac] sm:$0xf]
    %v7114 = vld [vmem:[#allocation3 + $0x1b0] sm:$0xf]
    %v7115 = vld [vmem:[#allocation3 + $0x1b4] sm:$0xf]
    %v7116 = vld [vmem:[#allocation3 + $0x1b8] sm:$0xf]
    %v7117 = vld [vmem:[#allocation3 + $0x1bc] sm:$0xf]
    %v7118 = vld [vmem:[#allocation3 + $0x1c0] sm:$0xf]
    %v7119 = vld [vmem:[#allocation3 + $0x1c4] sm:$0xf]
    %v7120 = vld [vmem:[#allocation3 + $0x1c8] sm:$0xf]
    %v7121 = vld [vmem:[#allocation3 + $0x1cc] sm:$0xf]
    %v7122 = vld [vmem:[#allocation3 + $0x1d0] sm:$0xf]
    %v7123 = vld [vmem:[#allocation3 + $0x1d4] sm:$0xf]
    %v7124 = vld [vmem:[#allocation3 + $0x1d8] sm:$0xf]
    %v7125 = vld [vmem:[#allocation3 + $0x1dc] sm:$0xf]
    %v7126 = vld [vmem:[#allocation3 + $0x1e0] sm:$0xf]
    %v7127 = vld [vmem:[#allocation3 + $0x1e4] sm:$0xf]
    %v7128 = vld [vmem:[#allocation3 + $0x1e8] sm:$0xf]
    %v7129 = vld [vmem:[#allocation3 + $0x1ec] sm:$0xf]
    %v7130 = vld [vmem:[#allocation3 + $0x1f0] sm:$0xf]
    %v7131 = vld [vmem:[#allocation3 + $0x1f4] sm:$0xf]
    %v7132 = vld [vmem:[#allocation3 + $0x1f8] sm:$0xf]
    %v7133 = vld [vmem:[#allocation3 + $0x1fc] sm:$0xf]
    %v7134 = vpack.c.bf16 %v1439, %v1439
    %v7135 = vld [vmem:[#allocation3 + $0x200] sm:$0xf]
    %v7136 = vld [vmem:[#allocation3 + $0x204] sm:$0xf]
    %v7137 = vld [vmem:[#allocation3 + $0x208] sm:$0xf]
    %v7138 = vld [vmem:[#allocation3 + $0x20c] sm:$0xf]
    %v7139 = vld [vmem:[#allocation3 + $0x210] sm:$0xf]
    %v7140 = vld [vmem:[#allocation3 + $0x214] sm:$0xf]
    %v7141 = vld [vmem:[#allocation3 + $0x218] sm:$0xf]
    %v7142 = vld [vmem:[#allocation3 + $0x21c] sm:$0xf]
    %v7143 = vld [vmem:[#allocation3 + $0x220] sm:$0xf]
    %v7144 = vld [vmem:[#allocation3 + $0x224] sm:$0xf]
    %v7145 = vld [vmem:[#allocation3 + $0x228] sm:$0xf]
    %v7146 = vld [vmem:[#allocation3 + $0x22c] sm:$0xf]
    %v7147 = vld [vmem:[#allocation3 + $0x230] sm:$0xf]
    %v7148 = vld [vmem:[#allocation3 + $0x234] sm:$0xf]
    %v7149 = vld [vmem:[#allocation3 + $0x238] sm:$0xf]
    %v7150 = vld [vmem:[#allocation3 + $0x23c] sm:$0xf]
    %v7167 = vunpack.c.l.b16 %v7135
    %v7168 = vunpack.c.l.b16 %v7136
    %v7169 = vunpack.c.l.b16 %v7137
    %v7170 = vunpack.c.l.b16 %v7138
    %v7171 = vunpack.c.l.b16 %v7139
    %v7172 = vunpack.c.l.b16 %v7140
    %v7173 = vunpack.c.l.b16 %v7141
    %v7174 = vunpack.c.l.b16 %v7142
    %v7175 = vunpack.c.l.b16 %v7143
    %v7176 = vunpack.c.l.b16 %v7144
    %v7177 = vunpack.c.l.b16 %v7145
    %v7178 = vunpack.c.l.b16 %v7146
    %v7179 = vunpack.c.l.b16 %v7147
    %v7180 = vunpack.c.l.b16 %v7148
    %v7181 = vunpack.c.l.b16 %v7149
    %v7182 = vunpack.c.l.b16 %v7150
    %v7183 = vpack.c.b16 %v7168, %v7167
    %v7184 = vpack.c.b16 %v7170, %v7169
    %v7185 = vpack.c.b16 %v7172, %v7171
    %v7186 = vpack.c.b16 %v7174, %v7173
    %v7187 = vpack.c.b16 %v7176, %v7175
    %v7188 = vpack.c.b16 %v7178, %v7177
    %v7189 = vpack.c.b16 %v7180, %v7179
    %v7190 = vpack.c.b16 %v7182, %v7181
    %7199 = vmatprep.subr.bf16.mxu0 0
    %7200 = vmatpush1.bf16.msra.mxu0 %v7190
    %7201 = vmatprep.subr.bf16.mxu0 0
    %7202 = vmatpush1.bf16.msra.mxu0 %v7189
    %7203 = vmatprep.subr.bf16.mxu0 0
    %7204 = vmatpush1.bf16.msra.mxu0 %v7188
    %7205 = vmatprep.subr.bf16.mxu0 0
    %7206 = vmatpush1.bf16.msra.mxu0 %v7187
    %7207 = vmatprep.subr.bf16.mxu0 0
    %7208 = vmatpush1.bf16.msra.mxu0 %v7186
    %7209 = vmatprep.subr.bf16.mxu0 0
    %7210 = vmatpush1.bf16.msra.mxu0 %v7185
    %7211 = vmatprep.subr.bf16.mxu0 0
    %7212 = vmatpush1.bf16.msra.mxu0 %v7184
    %7213 = vmatprep.subr.bf16.mxu0 0
    %7214 = vmatpush1.bf16.msra.mxu0 %v7183
    %7215 = vmatprep.subr.bf16.mxu0 0
    %7216 = vmatpush2.bf16.msra.mxu0 0
    %7217 = vmatprep.subr.bf16.mxu0 0
    %7218 = vmatpush2.bf16.msra.mxu0 0
    %7219 = vmatprep.subr.bf16.mxu0 0
    %7220 = vmatpush2.bf16.msra.mxu0 0
    %7221 = vmatprep.subr.bf16.mxu0 0
    %7222 = vmatpush2.bf16.msra.mxu0 0
    %7223 = vmatprep.subr.bf16.mxu0 0
    %7224 = vmatpush2.bf16.msra.mxu0 0
    %7225 = vmatprep.subr.bf16.mxu0 0
    %7226 = vmatpush2.bf16.msra.mxu0 0
    %7227 = vmatprep.subr.bf16.mxu0 0
    %7228 = vmatpush2.bf16.msra.mxu0 0
    %7229 = vmatprep.subr.bf16.mxu0 0
    %7230 = vmatpush2.bf16.msra.mxu0 0
    %7231 = vmatprep.mubr.bf16.mxu0 0
    %7232 = vmatmul.mubr.bf16.gmra.mxu0 %v7134
    %v7233 = vpop.f32.mrf.mxu0
    %v7234 = vadd.f32 0.0, %v7233
    %v7235 = vpop.f32.mrf.mxu0
    %v7236 = vpop.f32.mrf.mxu0
    %v7237 = vpop.f32.mrf.mxu0
    %7238 = vdwg.mxu0
    %v7367 = vunpack.c.l.b16 %v6878
    %v7368 = vunpack.c.h.b16 %v6878
    %v7369 = vunpack.c.l.b16 %v6879
    %v7370 = vunpack.c.h.b16 %v6879
    %v7371 = vunpack.c.l.b16 %v6880
    %v7372 = vunpack.c.h.b16 %v6880
    %v7373 = vunpack.c.l.b16 %v6881
    %v7374 = vunpack.c.h.b16 %v6881
    %v7375 = vunpack.c.l.b16 %v6882
    %v7376 = vunpack.c.h.b16 %v6882
    %v7377 = vunpack.c.l.b16 %v6883
    %v7378 = vunpack.c.h.b16 %v6883
    %v7379 = vunpack.c.l.b16 %v6884
    %v7380 = vunpack.c.h.b16 %v6884
    %v7381 = vunpack.c.l.b16 %v6885
    %v7382 = vunpack.c.h.b16 %v6885
    %v7383 = vunpack.c.l.b16 %v6886
    %v7384 = vunpack.c.h.b16 %v6886
    %v7385 = vunpack.c.l.b16 %v6887
    %v7386 = vunpack.c.h.b16 %v6887
    %v7387 = vunpack.c.l.b16 %v6888
    %v7388 = vunpack.c.h.b16 %v6888
    %v7389 = vunpack.c.l.b16 %v6889
    %v7390 = vunpack.c.h.b16 %v6889
    %v7391 = vunpack.c.l.b16 %v6890
    %v7392 = vunpack.c.h.b16 %v6890
    %v7393 = vunpack.c.l.b16 %v6891
    %v7394 = vunpack.c.h.b16 %v6891
    %v7395 = vunpack.c.l.b16 %v6892
    %v7396 = vunpack.c.h.b16 %v6892
    %v7397 = vunpack.c.l.b16 %v6893
    %v7398 = vunpack.c.h.b16 %v6893
    %v7399 = vunpack.c.l.b16 %v6894
    %v7400 = vunpack.c.h.b16 %v6894
    %v7401 = vunpack.c.l.b16 %v6895
    %v7402 = vunpack.c.h.b16 %v6895
    %v7403 = vunpack.c.l.b16 %v6896
    %v7404 = vunpack.c.h.b16 %v6896
    %v7405 = vunpack.c.l.b16 %v6897
    %v7406 = vunpack.c.h.b16 %v6897
    %v7407 = vunpack.c.l.b16 %v6898
    %v7408 = vunpack.c.h.b16 %v6898
    %v7409 = vunpack.c.l.b16 %v6899
    %v7410 = vunpack.c.h.b16 %v6899
    %v7411 = vunpack.c.l.b16 %v6900
    %v7412 = vunpack.c.h.b16 %v6900
    %v7413 = vunpack.c.l.b16 %v6901
    %v7414 = vunpack.c.h.b16 %v6901
    %v7415 = vunpack.c.l.b16 %v6902
    %v7416 = vunpack.c.h.b16 %v6902
    %v7417 = vunpack.c.l.b16 %v6903
    %v7418 = vunpack.c.h.b16 %v6903
    %v7419 = vunpack.c.l.b16 %v6904
    %v7420 = vunpack.c.h.b16 %v6904
    %v7421 = vunpack.c.l.b16 %v6905
    %v7422 = vunpack.c.h.b16 %v6905
    %v7423 = vunpack.c.l.b16 %v6906
    %v7424 = vunpack.c.h.b16 %v6906
    %v7425 = vunpack.c.l.b16 %v6907
    %v7426 = vunpack.c.h.b16 %v6907
    %v7427 = vunpack.c.l.b16 %v6908
    %v7428 = vunpack.c.h.b16 %v6908
    %v7429 = vunpack.c.l.b16 %v6909
    %v7430 = vunpack.c.h.b16 %v6909
    %v7431 = vunpack.c.l.b16 %v6910
    %v7432 = vunpack.c.h.b16 %v6910
    %v7433 = vunpack.c.l.b16 %v6911
    %v7434 = vunpack.c.h.b16 %v6911
    %v7435 = vunpack.c.l.b16 %v6912
    %v7436 = vunpack.c.h.b16 %v6912
    %v7437 = vunpack.c.l.b16 %v6913
    %v7438 = vunpack.c.h.b16 %v6913
    %v7439 = vunpack.c.l.b16 %v6914
    %v7440 = vunpack.c.h.b16 %v6914
    %v7441 = vunpack.c.l.b16 %v6915
    %v7442 = vunpack.c.h.b16 %v6915
    %v7443 = vunpack.c.l.b16 %v6916
    %v7444 = vunpack.c.h.b16 %v6916
    %v7445 = vunpack.c.l.b16 %v6917
    %v7446 = vunpack.c.h.b16 %v6917
    %v7447 = vunpack.c.l.b16 %v6918
    %v7448 = vunpack.c.h.b16 %v6918
    %v7449 = vunpack.c.l.b16 %v6919
    %v7450 = vunpack.c.h.b16 %v6919
    %v7451 = vunpack.c.l.b16 %v6920
    %v7452 = vunpack.c.h.b16 %v6920
    %v7453 = vunpack.c.l.b16 %v6921
    %v7454 = vunpack.c.h.b16 %v6921
    %v7455 = vunpack.c.l.b16 %v6922
    %v7456 = vunpack.c.h.b16 %v6922
    %v7457 = vunpack.c.l.b16 %v6923
    %v7458 = vunpack.c.h.b16 %v6923
    %v7459 = vunpack.c.l.b16 %v6924
    %v7460 = vunpack.c.h.b16 %v6924
    %v7461 = vunpack.c.l.b16 %v6925
    %v7462 = vunpack.c.h.b16 %v6925
    %v7463 = vunpack.c.l.b16 %v6926
    %v7464 = vunpack.c.h.b16 %v6926
    %v7465 = vunpack.c.l.b16 %v6927
    %v7466 = vunpack.c.h.b16 %v6927
    %v7467 = vunpack.c.l.b16 %v6928
    %v7468 = vunpack.c.h.b16 %v6928
    %v7469 = vunpack.c.l.b16 %v6929
    %v7470 = vunpack.c.h.b16 %v6929
    %v7471 = vunpack.c.l.b16 %v6930
    %v7472 = vunpack.c.h.b16 %v6930
    %v7473 = vunpack.c.l.b16 %v6931
    %v7474 = vunpack.c.h.b16 %v6931
    %v7475 = vunpack.c.l.b16 %v6932
    %v7476 = vunpack.c.h.b16 %v6932
    %v7477 = vunpack.c.l.b16 %v6933
    %v7478 = vunpack.c.h.b16 %v6933
    %v7479 = vunpack.c.l.b16 %v6934
    %v7480 = vunpack.c.h.b16 %v6934
    %v7481 = vunpack.c.l.b16 %v6935
    %v7482 = vunpack.c.h.b16 %v6935
    %v7483 = vunpack.c.l.b16 %v6936
    %v7484 = vunpack.c.h.b16 %v6936
    %v7485 = vunpack.c.l.b16 %v6937
    %v7486 = vunpack.c.h.b16 %v6937
    %v7487 = vunpack.c.l.b16 %v6938
    %v7488 = vunpack.c.h.b16 %v6938
    %v7489 = vunpack.c.l.b16 %v6939
    %v7490 = vunpack.c.h.b16 %v6939
    %v7491 = vunpack.c.l.b16 %v6940
    %v7492 = vunpack.c.h.b16 %v6940
    %v7493 = vunpack.c.l.b16 %v6941
    %v7494 = vunpack.c.h.b16 %v6941
    %v7495 = vunpack.c.l.b16 %v6942
    %v7496 = vunpack.c.h.b16 %v6942
    %v7497 = vunpack.c.l.b16 %v6943
    %v7498 = vunpack.c.h.b16 %v6943
    %v7499 = vunpack.c.l.b16 %v6944
    %v7500 = vunpack.c.h.b16 %v6944
    %v7501 = vunpack.c.l.b16 %v6945
    %v7502 = vunpack.c.h.b16 %v6945
    %v7503 = vunpack.c.l.b16 %v6946
    %v7504 = vunpack.c.h.b16 %v6946
    %v7505 = vunpack.c.l.b16 %v6947
    %v7506 = vunpack.c.h.b16 %v6947
    %v7507 = vunpack.c.l.b16 %v6948
    %v7508 = vunpack.c.h.b16 %v6948
    %v7509 = vunpack.c.l.b16 %v6949
    %v7510 = vunpack.c.h.b16 %v6949
    %v7511 = vunpack.c.l.b16 %v6950
    %v7512 = vunpack.c.h.b16 %v6950
    %v7513 = vunpack.c.l.b16 %v6951
    %v7514 = vunpack.c.h.b16 %v6951
    %v7515 = vunpack.c.l.b16 %v6952
    %v7516 = vunpack.c.h.b16 %v6952
    %v7517 = vunpack.c.l.b16 %v6953
    %v7518 = vunpack.c.h.b16 %v6953
    %v7519 = vunpack.c.l.b16 %v6954
    %v7520 = vunpack.c.h.b16 %v6954
    %v7521 = vunpack.c.l.b16 %v6955
    %v7522 = vunpack.c.h.b16 %v6955
    %v7523 = vunpack.c.l.b16 %v6956
    %v7524 = vunpack.c.h.b16 %v6956
    %v7525 = vunpack.c.l.b16 %v6957
    %v7526 = vunpack.c.h.b16 %v6957
    %v7527 = vunpack.c.l.b16 %v6958
    %v7528 = vunpack.c.h.b16 %v6958
    %v7529 = vunpack.c.l.b16 %v6959
    %v7530 = vunpack.c.h.b16 %v6959
    %v7531 = vunpack.c.l.b16 %v6960
    %v7532 = vunpack.c.h.b16 %v6960
    %v7533 = vunpack.c.l.b16 %v6961
    %v7534 = vunpack.c.h.b16 %v6961
    %v7535 = vunpack.c.l.b16 %v6962
    %v7536 = vunpack.c.h.b16 %v6962
    %v7537 = vunpack.c.l.b16 %v6963
    %v7538 = vunpack.c.h.b16 %v6963
    %v7539 = vunpack.c.l.b16 %v6964
    %v7540 = vunpack.c.h.b16 %v6964
    %v7541 = vunpack.c.l.b16 %v6965
    %v7542 = vunpack.c.h.b16 %v6965
    %v7543 = vunpack.c.l.b16 %v6966
    %v7544 = vunpack.c.h.b16 %v6966
    %v7545 = vunpack.c.l.b16 %v6967
    %v7546 = vunpack.c.h.b16 %v6967
    %v7547 = vunpack.c.l.b16 %v6968
    %v7548 = vunpack.c.h.b16 %v6968
    %v7549 = vunpack.c.l.b16 %v6969
    %v7550 = vunpack.c.h.b16 %v6969
    %v7551 = vunpack.c.l.b16 %v6970
    %v7552 = vunpack.c.h.b16 %v6970
    %v7553 = vunpack.c.l.b16 %v6971
    %v7554 = vunpack.c.h.b16 %v6971
    %v7555 = vunpack.c.l.b16 %v6972
    %v7556 = vunpack.c.h.b16 %v6972
    %v7557 = vunpack.c.l.b16 %v6973
    %v7558 = vunpack.c.h.b16 %v6973
    %v7559 = vunpack.c.l.b16 %v6974
    %v7560 = vunpack.c.h.b16 %v6974
    %v7561 = vunpack.c.l.b16 %v6975
    %v7562 = vunpack.c.h.b16 %v6975
    %v7563 = vunpack.c.l.b16 %v6976
    %v7564 = vunpack.c.h.b16 %v6976
    %v7565 = vunpack.c.l.b16 %v6977
    %v7566 = vunpack.c.h.b16 %v6977
    %v7567 = vunpack.c.l.b16 %v6978
    %v7568 = vunpack.c.h.b16 %v6978
    %v7569 = vunpack.c.l.b16 %v6979
    %v7570 = vunpack.c.h.b16 %v6979
    %v7571 = vunpack.c.l.b16 %v6980
    %v7572 = vunpack.c.h.b16 %v6980
    %v7573 = vunpack.c.l.b16 %v6981
    %v7574 = vunpack.c.h.b16 %v6981
    %v7575 = vunpack.c.l.b16 %v6982
    %v7576 = vunpack.c.h.b16 %v6982
    %v7577 = vunpack.c.l.b16 %v6983
    %v7578 = vunpack.c.h.b16 %v6983
    %v7579 = vunpack.c.l.b16 %v6984
    %v7580 = vunpack.c.h.b16 %v6984
    %v7581 = vunpack.c.l.b16 %v6985
    %v7582 = vunpack.c.h.b16 %v6985
    %v7583 = vunpack.c.l.b16 %v6986
    %v7584 = vunpack.c.h.b16 %v6986
    %v7585 = vunpack.c.l.b16 %v6987
    %v7586 = vunpack.c.h.b16 %v6987
    %v7587 = vunpack.c.l.b16 %v6988
    %v7588 = vunpack.c.h.b16 %v6988
    %v7589 = vunpack.c.l.b16 %v6989
    %v7590 = vunpack.c.h.b16 %v6989
    %v7591 = vunpack.c.l.b16 %v6990
    %v7592 = vunpack.c.h.b16 %v6990
    %v7593 = vunpack.c.l.b16 %v6991
    %v7594 = vunpack.c.h.b16 %v6991
    %v7595 = vunpack.c.l.b16 %v6992
    %v7596 = vunpack.c.h.b16 %v6992
    %v7597 = vunpack.c.l.b16 %v6993
    %v7598 = vunpack.c.h.b16 %v6993
    %v7599 = vunpack.c.l.b16 %v6994
    %v7600 = vunpack.c.h.b16 %v6994
    %v7601 = vunpack.c.l.b16 %v6995
    %v7602 = vunpack.c.h.b16 %v6995
    %v7603 = vunpack.c.l.b16 %v6996
    %v7604 = vunpack.c.h.b16 %v6996
    %v7605 = vunpack.c.l.b16 %v6997
    %v7606 = vunpack.c.h.b16 %v6997
    %v7607 = vunpack.c.l.b16 %v6998
    %v7608 = vunpack.c.h.b16 %v6998
    %v7609 = vunpack.c.l.b16 %v6999
    %v7610 = vunpack.c.h.b16 %v6999
    %v7611 = vunpack.c.l.b16 %v7000
    %v7612 = vunpack.c.h.b16 %v7000
    %v7613 = vunpack.c.l.b16 %v7001
    %v7614 = vunpack.c.h.b16 %v7001
    %v7615 = vunpack.c.l.b16 %v7002
    %v7616 = vunpack.c.h.b16 %v7002
    %v7617 = vunpack.c.l.b16 %v7003
    %v7618 = vunpack.c.h.b16 %v7003
    %v7619 = vunpack.c.l.b16 %v7004
    %v7620 = vunpack.c.h.b16 %v7004
    %v7621 = vunpack.c.l.b16 %v7005
    %v7622 = vunpack.c.h.b16 %v7005
    %7623 = vset.pattern.permute.xlu0 0
    %7624 = vperm.xlu0 %7623, %v7367
    %v7625 = vpop.permute.xlu0 %7624
    %7626 = vset.pattern.permute.xlu0 0
    %7627 = vperm.xlu0 %7626, %v7368
    %v7628 = vpop.permute.xlu0 %7627
    %7629 = vset.pattern.permute.xlu0 0
    %7630 = vperm.xlu0 %7629, %v7369
    %v7631 = vpop.permute.xlu0 %7630
    %7632 = vset.pattern.permute.xlu0 0
    %7633 = vperm.xlu0 %7632, %v7370
    %v7634 = vpop.permute.xlu0 %7633
    %7635 = vset.pattern.permute.xlu0 0
    %7636 = vperm.xlu0 %7635, %v7371
    %v7637 = vpop.permute.xlu0 %7636
    %7638 = vset.pattern.permute.xlu0 0
    %7639 = vperm.xlu0 %7638, %v7372
    %v7640 = vpop.permute.xlu0 %7639
    %7641 = vset.pattern.permute.xlu0 0
    %7642 = vperm.xlu0 %7641, %v7373
    %v7643 = vpop.permute.xlu0 %7642
    %7644 = vset.pattern.permute.xlu0 0
    %7645 = vperm.xlu0 %7644, %v7374
    %v7646 = vpop.permute.xlu0 %7645
    %7647 = vset.pattern.permute.xlu0 0
    %7648 = vperm.xlu0 %7647, %v7375
    %v7649 = vpop.permute.xlu0 %7648
    %7650 = vset.pattern.permute.xlu0 0
    %7651 = vperm.xlu0 %7650, %v7376
    %v7652 = vpop.permute.xlu0 %7651
    %7653 = vset.pattern.permute.xlu0 0
    %7654 = vperm.xlu0 %7653, %v7377
    %v7655 = vpop.permute.xlu0 %7654
    %7656 = vset.pattern.permute.xlu0 0
    %7657 = vperm.xlu0 %7656, %v7378
    %v7658 = vpop.permute.xlu0 %7657
    %7659 = vset.pattern.permute.xlu0 0
    %7660 = vperm.xlu0 %7659, %v7379
    %v7661 = vpop.permute.xlu0 %7660
    %7662 = vset.pattern.permute.xlu0 0
    %7663 = vperm.xlu0 %7662, %v7380
    %v7664 = vpop.permute.xlu0 %7663
    %7665 = vset.pattern.permute.xlu0 0
    %7666 = vperm.xlu0 %7665, %v7381
    %v7667 = vpop.permute.xlu0 %7666
    %7668 = vset.pattern.permute.xlu0 0
    %7669 = vperm.xlu0 %7668, %v7382
    %v7670 = vpop.permute.xlu0 %7669
    %7671 = vset.pattern.permute.xlu0 0
    %7672 = vperm.xlu0 %7671, %v7383
    %v7673 = vpop.permute.xlu0 %7672
    %7674 = vset.pattern.permute.xlu0 0
    %7675 = vperm.xlu0 %7674, %v7384
    %v7676 = vpop.permute.xlu0 %7675
    %7677 = vset.pattern.permute.xlu0 0
    %7678 = vperm.xlu0 %7677, %v7385
    %v7679 = vpop.permute.xlu0 %7678
    %7680 = vset.pattern.permute.xlu0 0
    %7681 = vperm.xlu0 %7680, %v7386
    %v7682 = vpop.permute.xlu0 %7681
    %7683 = vset.pattern.permute.xlu0 0
    %7684 = vperm.xlu0 %7683, %v7387
    %v7685 = vpop.permute.xlu0 %7684
    %7686 = vset.pattern.permute.xlu0 0
    %7687 = vperm.xlu0 %7686, %v7388
    %v7688 = vpop.permute.xlu0 %7687
    %7689 = vset.pattern.permute.xlu0 0
    %7690 = vperm.xlu0 %7689, %v7389
    %v7691 = vpop.permute.xlu0 %7690
    %7692 = vset.pattern.permute.xlu0 0
    %7693 = vperm.xlu0 %7692, %v7390
    %v7694 = vpop.permute.xlu0 %7693
    %7695 = vset.pattern.permute.xlu0 0
    %7696 = vperm.xlu0 %7695, %v7391
    %v7697 = vpop.permute.xlu0 %7696
    %7698 = vset.pattern.permute.xlu0 0
    %7699 = vperm.xlu0 %7698, %v7392
    %v7700 = vpop.permute.xlu0 %7699
    %7701 = vset.pattern.permute.xlu0 0
    %7702 = vperm.xlu0 %7701, %v7393
    %v7703 = vpop.permute.xlu0 %7702
    %7704 = vset.pattern.permute.xlu0 0
    %7705 = vperm.xlu0 %7704, %v7394
    %v7706 = vpop.permute.xlu0 %7705
    %7707 = vset.pattern.permute.xlu0 0
    %7708 = vperm.xlu0 %7707, %v7395
    %v7709 = vpop.permute.xlu0 %7708
    %7710 = vset.pattern.permute.xlu0 0
    %7711 = vperm.xlu0 %7710, %v7396
    %v7712 = vpop.permute.xlu0 %7711
    %7713 = vset.pattern.permute.xlu0 0
    %7714 = vperm.xlu0 %7713, %v7397
    %v7715 = vpop.permute.xlu0 %7714
    %7716 = vset.pattern.permute.xlu0 0
    %7717 = vperm.xlu0 %7716, %v7398
    %v7718 = vpop.permute.xlu0 %7717
    %7719 = vset.pattern.permute.xlu0 0
    %7720 = vperm.xlu0 %7719, %v7399
    %v7721 = vpop.permute.xlu0 %7720
    %7722 = vset.pattern.permute.xlu0 0
    %7723 = vperm.xlu0 %7722, %v7400
    %v7724 = vpop.permute.xlu0 %7723
    %7725 = vset.pattern.permute.xlu0 0
    %7726 = vperm.xlu0 %7725, %v7401
    %v7727 = vpop.permute.xlu0 %7726
    %7728 = vset.pattern.permute.xlu0 0
    %7729 = vperm.xlu0 %7728, %v7402
    %v7730 = vpop.permute.xlu0 %7729
    %7731 = vset.pattern.permute.xlu0 0
    %7732 = vperm.xlu0 %7731, %v7403
    %v7733 = vpop.permute.xlu0 %7732
    %7734 = vset.pattern.permute.xlu0 0
    %7735 = vperm.xlu0 %7734, %v7404
    %v7736 = vpop.permute.xlu0 %7735
    %7737 = vset.pattern.permute.xlu0 0
    %7738 = vperm.xlu0 %7737, %v7405
    %v7739 = vpop.permute.xlu0 %7738
    %7740 = vset.pattern.permute.xlu0 0
    %7741 = vperm.xlu0 %7740, %v7406
    %v7742 = vpop.permute.xlu0 %7741
    %7743 = vset.pattern.permute.xlu0 0
    %7744 = vperm.xlu0 %7743, %v7407
    %v7745 = vpop.permute.xlu0 %7744
    %7746 = vset.pattern.permute.xlu0 0
    %7747 = vperm.xlu0 %7746, %v7408
    %v7748 = vpop.permute.xlu0 %7747
    %7749 = vset.pattern.permute.xlu0 0
    %7750 = vperm.xlu0 %7749, %v7409
    %v7751 = vpop.permute.xlu0 %7750
    %7752 = vset.pattern.permute.xlu0 0
    %7753 = vperm.xlu0 %7752, %v7410
    %v7754 = vpop.permute.xlu0 %7753
    %7755 = vset.pattern.permute.xlu0 0
    %7756 = vperm.xlu0 %7755, %v7411
    %v7757 = vpop.permute.xlu0 %7756
    %7758 = vset.pattern.permute.xlu0 0
    %7759 = vperm.xlu0 %7758, %v7412
    %v7760 = vpop.permute.xlu0 %7759
    %7761 = vset.pattern.permute.xlu0 0
    %7762 = vperm.xlu0 %7761, %v7413
    %v7763 = vpop.permute.xlu0 %7762
    %7764 = vset.pattern.permute.xlu0 0
    %7765 = vperm.xlu0 %7764, %v7414
    %v7766 = vpop.permute.xlu0 %7765
    %7767 = vset.pattern.permute.xlu0 0
    %7768 = vperm.xlu0 %7767, %v7415
    %v7769 = vpop.permute.xlu0 %7768
    %7770 = vset.pattern.permute.xlu0 0
    %7771 = vperm.xlu0 %7770, %v7416
    %v7772 = vpop.permute.xlu0 %7771
    %7773 = vset.pattern.permute.xlu0 0
    %7774 = vperm.xlu0 %7773, %v7417
    %v7775 = vpop.permute.xlu0 %7774
    %7776 = vset.pattern.permute.xlu0 0
    %7777 = vperm.xlu0 %7776, %v7418
    %v7778 = vpop.permute.xlu0 %7777
    %7779 = vset.pattern.permute.xlu0 0
    %7780 = vperm.xlu0 %7779, %v7419
    %v7781 = vpop.permute.xlu0 %7780
    %7782 = vset.pattern.permute.xlu0 0
    %7783 = vperm.xlu0 %7782, %v7420
    %v7784 = vpop.permute.xlu0 %7783
    %7785 = vset.pattern.permute.xlu0 0
    %7786 = vperm.xlu0 %7785, %v7421
    %v7787 = vpop.permute.xlu0 %7786
    %7788 = vset.pattern.permute.xlu0 0
    %7789 = vperm.xlu0 %7788, %v7422
    %v7790 = vpop.permute.xlu0 %7789
    %7791 = vset.pattern.permute.xlu0 0
    %7792 = vperm.xlu0 %7791, %v7423
    %v7793 = vpop.permute.xlu0 %7792
    %7794 = vset.pattern.permute.xlu0 0
    %7795 = vperm.xlu0 %7794, %v7424
    %v7796 = vpop.permute.xlu0 %7795
    %7797 = vset.pattern.permute.xlu0 0
    %7798 = vperm.xlu0 %7797, %v7425
    %v7799 = vpop.permute.xlu0 %7798
    %7800 = vset.pattern.permute.xlu0 0
    %7801 = vperm.xlu0 %7800, %v7426
    %v7802 = vpop.permute.xlu0 %7801
    %7803 = vset.pattern.permute.xlu0 0
    %7804 = vperm.xlu0 %7803, %v7427
    %v7805 = vpop.permute.xlu0 %7804
    %7806 = vset.pattern.permute.xlu0 0
    %7807 = vperm.xlu0 %7806, %v7428
    %v7808 = vpop.permute.xlu0 %7807
    %7809 = vset.pattern.permute.xlu0 0
    %7810 = vperm.xlu0 %7809, %v7429
    %v7811 = vpop.permute.xlu0 %7810
    %7812 = vset.pattern.permute.xlu0 0
    %7813 = vperm.xlu0 %7812, %v7430
    %v7814 = vpop.permute.xlu0 %7813
    %7815 = vset.pattern.permute.xlu0 0
    %7816 = vperm.xlu0 %7815, %v7431
    %v7817 = vpop.permute.xlu0 %7816
    %7818 = vset.pattern.permute.xlu0 0
    %7819 = vperm.xlu0 %7818, %v7432
    %v7820 = vpop.permute.xlu0 %7819
    %7821 = vset.pattern.permute.xlu0 0
    %7822 = vperm.xlu0 %7821, %v7433
    %v7823 = vpop.permute.xlu0 %7822
    %7824 = vset.pattern.permute.xlu0 0
    %7825 = vperm.xlu0 %7824, %v7434
    %v7826 = vpop.permute.xlu0 %7825
    %7827 = vset.pattern.permute.xlu0 0
    %7828 = vperm.xlu0 %7827, %v7435
    %v7829 = vpop.permute.xlu0 %7828
    %7830 = vset.pattern.permute.xlu0 0
    %7831 = vperm.xlu0 %7830, %v7436
    %v7832 = vpop.permute.xlu0 %7831
    %7833 = vset.pattern.permute.xlu0 0
    %7834 = vperm.xlu0 %7833, %v7437
    %v7835 = vpop.permute.xlu0 %7834
    %7836 = vset.pattern.permute.xlu0 0
    %7837 = vperm.xlu0 %7836, %v7438
    %v7838 = vpop.permute.xlu0 %7837
    %7839 = vset.pattern.permute.xlu0 0
    %7840 = vperm.xlu0 %7839, %v7439
    %v7841 = vpop.permute.xlu0 %7840
    %7842 = vset.pattern.permute.xlu0 0
    %7843 = vperm.xlu0 %7842, %v7440
    %v7844 = vpop.permute.xlu0 %7843
    %7845 = vset.pattern.permute.xlu0 0
    %7846 = vperm.xlu0 %7845, %v7441
    %v7847 = vpop.permute.xlu0 %7846
    %7848 = vset.pattern.permute.xlu0 0
    %7849 = vperm.xlu0 %7848, %v7442
    %v7850 = vpop.permute.xlu0 %7849
    %7851 = vset.pattern.permute.xlu0 0
    %7852 = vperm.xlu0 %7851, %v7443
    %v7853 = vpop.permute.xlu0 %7852
    %7854 = vset.pattern.permute.xlu0 0
    %7855 = vperm.xlu0 %7854, %v7444
    %v7856 = vpop.permute.xlu0 %7855
    %7857 = vset.pattern.permute.xlu0 0
    %7858 = vperm.xlu0 %7857, %v7445
    %v7859 = vpop.permute.xlu0 %7858
    %7860 = vset.pattern.permute.xlu0 0
    %7861 = vperm.xlu0 %7860, %v7446
    %v7862 = vpop.permute.xlu0 %7861
    %7863 = vset.pattern.permute.xlu0 0
    %7864 = vperm.xlu0 %7863, %v7447
    %v7865 = vpop.permute.xlu0 %7864
    %7866 = vset.pattern.permute.xlu0 0
    %7867 = vperm.xlu0 %7866, %v7448
    %v7868 = vpop.permute.xlu0 %7867
    %7869 = vset.pattern.permute.xlu0 0
    %7870 = vperm.xlu0 %7869, %v7449
    %v7871 = vpop.permute.xlu0 %7870
    %7872 = vset.pattern.permute.xlu0 0
    %7873 = vperm.xlu0 %7872, %v7450
    %v7874 = vpop.permute.xlu0 %7873
    %7875 = vset.pattern.permute.xlu0 0
    %7876 = vperm.xlu0 %7875, %v7451
    %v7877 = vpop.permute.xlu0 %7876
    %7878 = vset.pattern.permute.xlu0 0
    %7879 = vperm.xlu0 %7878, %v7452
    %v7880 = vpop.permute.xlu0 %7879
    %7881 = vset.pattern.permute.xlu0 0
    %7882 = vperm.xlu0 %7881, %v7453
    %v7883 = vpop.permute.xlu0 %7882
    %7884 = vset.pattern.permute.xlu0 0
    %7885 = vperm.xlu0 %7884, %v7454
    %v7886 = vpop.permute.xlu0 %7885
    %7887 = vset.pattern.permute.xlu0 0
    %7888 = vperm.xlu0 %7887, %v7455
    %v7889 = vpop.permute.xlu0 %7888
    %7890 = vset.pattern.permute.xlu0 0
    %7891 = vperm.xlu0 %7890, %v7456
    %v7892 = vpop.permute.xlu0 %7891
    %7893 = vset.pattern.permute.xlu0 0
    %7894 = vperm.xlu0 %7893, %v7457
    %v7895 = vpop.permute.xlu0 %7894
    %7896 = vset.pattern.permute.xlu0 0
    %7897 = vperm.xlu0 %7896, %v7458
    %v7898 = vpop.permute.xlu0 %7897
    %7899 = vset.pattern.permute.xlu0 0
    %7900 = vperm.xlu0 %7899, %v7459
    %v7901 = vpop.permute.xlu0 %7900
    %7902 = vset.pattern.permute.xlu0 0
    %7903 = vperm.xlu0 %7902, %v7460
    %v7904 = vpop.permute.xlu0 %7903
    %7905 = vset.pattern.permute.xlu0 0
    %7906 = vperm.xlu0 %7905, %v7461
    %v7907 = vpop.permute.xlu0 %7906
    %7908 = vset.pattern.permute.xlu0 0
    %7909 = vperm.xlu0 %7908, %v7462
    %v7910 = vpop.permute.xlu0 %7909
    %7911 = vset.pattern.permute.xlu0 0
    %7912 = vperm.xlu0 %7911, %v7463
    %v7913 = vpop.permute.xlu0 %7912
    %7914 = vset.pattern.permute.xlu0 0
    %7915 = vperm.xlu0 %7914, %v7464
    %v7916 = vpop.permute.xlu0 %7915
    %7917 = vset.pattern.permute.xlu0 0
    %7918 = vperm.xlu0 %7917, %v7465
    %v7919 = vpop.permute.xlu0 %7918
    %7920 = vset.pattern.permute.xlu0 0
    %7921 = vperm.xlu0 %7920, %v7466
    %v7922 = vpop.permute.xlu0 %7921
    %7923 = vset.pattern.permute.xlu0 0
    %7924 = vperm.xlu0 %7923, %v7467
    %v7925 = vpop.permute.xlu0 %7924
    %7926 = vset.pattern.permute.xlu0 0
    %7927 = vperm.xlu0 %7926, %v7468
    %v7928 = vpop.permute.xlu0 %7927
    %7929 = vset.pattern.permute.xlu0 0
    %7930 = vperm.xlu0 %7929, %v7469
    %v7931 = vpop.permute.xlu0 %7930
    %7932 = vset.pattern.permute.xlu0 0
    %7933 = vperm.xlu0 %7932, %v7470
    %v7934 = vpop.permute.xlu0 %7933
    %7935 = vset.pattern.permute.xlu0 0
    %7936 = vperm.xlu0 %7935, %v7471
    %v7937 = vpop.permute.xlu0 %7936
    %7938 = vset.pattern.permute.xlu0 0
    %7939 = vperm.xlu0 %7938, %v7472
    %v7940 = vpop.permute.xlu0 %7939
    %7941 = vset.pattern.permute.xlu0 0
    %7942 = vperm.xlu0 %7941, %v7473
    %v7943 = vpop.permute.xlu0 %7942
    %7944 = vset.pattern.permute.xlu0 0
    %7945 = vperm.xlu0 %7944, %v7474
    %v7946 = vpop.permute.xlu0 %7945
    %7947 = vset.pattern.permute.xlu0 0
    %7948 = vperm.xlu0 %7947, %v7475
    %v7949 = vpop.permute.xlu0 %7948
    %7950 = vset.pattern.permute.xlu0 0
    %7951 = vperm.xlu0 %7950, %v7476
    %v7952 = vpop.permute.xlu0 %7951
    %7953 = vset.pattern.permute.xlu0 0
    %7954 = vperm.xlu0 %7953, %v7477
    %v7955 = vpop.permute.xlu0 %7954
    %7956 = vset.pattern.permute.xlu0 0
    %7957 = vperm.xlu0 %7956, %v7478
    %v7958 = vpop.permute.xlu0 %7957
    %7959 = vset.pattern.permute.xlu0 0
    %7960 = vperm.xlu0 %7959, %v7479
    %v7961 = vpop.permute.xlu0 %7960
    %7962 = vset.pattern.permute.xlu0 0
    %7963 = vperm.xlu0 %7962, %v7480
    %v7964 = vpop.permute.xlu0 %7963
    %7965 = vset.pattern.permute.xlu0 0
    %7966 = vperm.xlu0 %7965, %v7481
    %v7967 = vpop.permute.xlu0 %7966
    %7968 = vset.pattern.permute.xlu0 0
    %7969 = vperm.xlu0 %7968, %v7482
    %v7970 = vpop.permute.xlu0 %7969
    %7971 = vset.pattern.permute.xlu0 0
    %7972 = vperm.xlu0 %7971, %v7483
    %v7973 = vpop.permute.xlu0 %7972
    %7974 = vset.pattern.permute.xlu0 0
    %7975 = vperm.xlu0 %7974, %v7484
    %v7976 = vpop.permute.xlu0 %7975
    %7977 = vset.pattern.permute.xlu0 0
    %7978 = vperm.xlu0 %7977, %v7485
    %v7979 = vpop.permute.xlu0 %7978
    %7980 = vset.pattern.permute.xlu0 0
    %7981 = vperm.xlu0 %7980, %v7486
    %v7982 = vpop.permute.xlu0 %7981
    %7983 = vset.pattern.permute.xlu0 0
    %7984 = vperm.xlu0 %7983, %v7487
    %v7985 = vpop.permute.xlu0 %7984
    %7986 = vset.pattern.permute.xlu0 0
    %7987 = vperm.xlu0 %7986, %v7488
    %v7988 = vpop.permute.xlu0 %7987
    %7989 = vset.pattern.permute.xlu0 0
    %7990 = vperm.xlu0 %7989, %v7489
    %v7991 = vpop.permute.xlu0 %7990
    %7992 = vset.pattern.permute.xlu0 0
    %7993 = vperm.xlu0 %7992, %v7490
    %v7994 = vpop.permute.xlu0 %7993
    %7995 = vset.pattern.permute.xlu0 0
    %7996 = vperm.xlu0 %7995, %v7491
    %v7997 = vpop.permute.xlu0 %7996
    %7998 = vset.pattern.permute.xlu0 0
    %7999 = vperm.xlu0 %7998, %v7492
    %v8000 = vpop.permute.xlu0 %7999
    %8001 = vset.pattern.permute.xlu0 0
    %8002 = vperm.xlu0 %8001, %v7493
    %v8003 = vpop.permute.xlu0 %8002
    %8004 = vset.pattern.permute.xlu0 0
    %8005 = vperm.xlu0 %8004, %v7494
    %v8006 = vpop.permute.xlu0 %8005
    %8007 = vset.pattern.permute.xlu0 0
    %8008 = vperm.xlu0 %8007, %v7495
    %v8009 = vpop.permute.xlu0 %8008
    %8010 = vset.pattern.permute.xlu0 0
    %8011 = vperm.xlu0 %8010, %v7496
    %v8012 = vpop.permute.xlu0 %8011
    %8013 = vset.pattern.permute.xlu0 0
    %8014 = vperm.xlu0 %8013, %v7497
    %v8015 = vpop.permute.xlu0 %8014
    %8016 = vset.pattern.permute.xlu0 0
    %8017 = vperm.xlu0 %8016, %v7498
    %v8018 = vpop.permute.xlu0 %8017
    %8019 = vset.pattern.permute.xlu0 0
    %8020 = vperm.xlu0 %8019, %v7499
    %v8021 = vpop.permute.xlu0 %8020
    %8022 = vset.pattern.permute.xlu0 0
    %8023 = vperm.xlu0 %8022, %v7500
    %v8024 = vpop.permute.xlu0 %8023
    %8025 = vset.pattern.permute.xlu0 0
    %8026 = vperm.xlu0 %8025, %v7501
    %v8027 = vpop.permute.xlu0 %8026
    %8028 = vset.pattern.permute.xlu0 0
    %8029 = vperm.xlu0 %8028, %v7502
    %v8030 = vpop.permute.xlu0 %8029
    %8031 = vset.pattern.permute.xlu0 0
    %8032 = vperm.xlu0 %8031, %v7503
    %v8033 = vpop.permute.xlu0 %8032
    %8034 = vset.pattern.permute.xlu0 0
    %8035 = vperm.xlu0 %8034, %v7504
    %v8036 = vpop.permute.xlu0 %8035
    %8037 = vset.pattern.permute.xlu0 0
    %8038 = vperm.xlu0 %8037, %v7505
    %v8039 = vpop.permute.xlu0 %8038
    %8040 = vset.pattern.permute.xlu0 0
    %8041 = vperm.xlu0 %8040, %v7506
    %v8042 = vpop.permute.xlu0 %8041
    %8043 = vset.pattern.permute.xlu0 0
    %8044 = vperm.xlu0 %8043, %v7507
    %v8045 = vpop.permute.xlu0 %8044
    %8046 = vset.pattern.permute.xlu0 0
    %8047 = vperm.xlu0 %8046, %v7508
    %v8048 = vpop.permute.xlu0 %8047
    %8049 = vset.pattern.permute.xlu0 0
    %8050 = vperm.xlu0 %8049, %v7509
    %v8051 = vpop.permute.xlu0 %8050
    %8052 = vset.pattern.permute.xlu0 0
    %8053 = vperm.xlu0 %8052, %v7510
    %v8054 = vpop.permute.xlu0 %8053
    %8055 = vset.pattern.permute.xlu0 0
    %8056 = vperm.xlu0 %8055, %v7511
    %v8057 = vpop.permute.xlu0 %8056
    %8058 = vset.pattern.permute.xlu0 0
    %8059 = vperm.xlu0 %8058, %v7512
    %v8060 = vpop.permute.xlu0 %8059
    %8061 = vset.pattern.permute.xlu0 0
    %8062 = vperm.xlu0 %8061, %v7513
    %v8063 = vpop.permute.xlu0 %8062
    %8064 = vset.pattern.permute.xlu0 0
    %8065 = vperm.xlu0 %8064, %v7514
    %v8066 = vpop.permute.xlu0 %8065
    %8067 = vset.pattern.permute.xlu0 0
    %8068 = vperm.xlu0 %8067, %v7515
    %v8069 = vpop.permute.xlu0 %8068
    %8070 = vset.pattern.permute.xlu0 0
    %8071 = vperm.xlu0 %8070, %v7516
    %v8072 = vpop.permute.xlu0 %8071
    %8073 = vset.pattern.permute.xlu0 0
    %8074 = vperm.xlu0 %8073, %v7517
    %v8075 = vpop.permute.xlu0 %8074
    %8076 = vset.pattern.permute.xlu0 0
    %8077 = vperm.xlu0 %8076, %v7518
    %v8078 = vpop.permute.xlu0 %8077
    %8079 = vset.pattern.permute.xlu0 0
    %8080 = vperm.xlu0 %8079, %v7519
    %v8081 = vpop.permute.xlu0 %8080
    %8082 = vset.pattern.permute.xlu0 0
    %8083 = vperm.xlu0 %8082, %v7520
    %v8084 = vpop.permute.xlu0 %8083
    %8085 = vset.pattern.permute.xlu0 0
    %8086 = vperm.xlu0 %8085, %v7521
    %v8087 = vpop.permute.xlu0 %8086
    %8088 = vset.pattern.permute.xlu0 0
    %8089 = vperm.xlu0 %8088, %v7522
    %v8090 = vpop.permute.xlu0 %8089
    %8091 = vset.pattern.permute.xlu0 0
    %8092 = vperm.xlu0 %8091, %v7523
    %v8093 = vpop.permute.xlu0 %8092
    %8094 = vset.pattern.permute.xlu0 0
    %8095 = vperm.xlu0 %8094, %v7524
    %v8096 = vpop.permute.xlu0 %8095
    %8097 = vset.pattern.permute.xlu0 0
    %8098 = vperm.xlu0 %8097, %v7525
    %v8099 = vpop.permute.xlu0 %8098
    %8100 = vset.pattern.permute.xlu0 0
    %8101 = vperm.xlu0 %8100, %v7526
    %v8102 = vpop.permute.xlu0 %8101
    %8103 = vset.pattern.permute.xlu0 0
    %8104 = vperm.xlu0 %8103, %v7527
    %v8105 = vpop.permute.xlu0 %8104
    %8106 = vset.pattern.permute.xlu0 0
    %8107 = vperm.xlu0 %8106, %v7528
    %v8108 = vpop.permute.xlu0 %8107
    %8109 = vset.pattern.permute.xlu0 0
    %8110 = vperm.xlu0 %8109, %v7529
    %v8111 = vpop.permute.xlu0 %8110
    %8112 = vset.pattern.permute.xlu0 0
    %8113 = vperm.xlu0 %8112, %v7530
    %v8114 = vpop.permute.xlu0 %8113
    %8115 = vset.pattern.permute.xlu0 0
    %8116 = vperm.xlu0 %8115, %v7531
    %v8117 = vpop.permute.xlu0 %8116
    %8118 = vset.pattern.permute.xlu0 0
    %8119 = vperm.xlu0 %8118, %v7532
    %v8120 = vpop.permute.xlu0 %8119
    %8121 = vset.pattern.permute.xlu0 0
    %8122 = vperm.xlu0 %8121, %v7533
    %v8123 = vpop.permute.xlu0 %8122
    %8124 = vset.pattern.permute.xlu0 0
    %8125 = vperm.xlu0 %8124, %v7534
    %v8126 = vpop.permute.xlu0 %8125
    %8127 = vset.pattern.permute.xlu0 0
    %8128 = vperm.xlu0 %8127, %v7535
    %v8129 = vpop.permute.xlu0 %8128
    %8130 = vset.pattern.permute.xlu0 0
    %8131 = vperm.xlu0 %8130, %v7536
    %v8132 = vpop.permute.xlu0 %8131
    %8133 = vset.pattern.permute.xlu0 0
    %8134 = vperm.xlu0 %8133, %v7537
    %v8135 = vpop.permute.xlu0 %8134
    %8136 = vset.pattern.permute.xlu0 0
    %8137 = vperm.xlu0 %8136, %v7538
    %v8138 = vpop.permute.xlu0 %8137
    %8139 = vset.pattern.permute.xlu0 0
    %8140 = vperm.xlu0 %8139, %v7539
    %v8141 = vpop.permute.xlu0 %8140
    %8142 = vset.pattern.permute.xlu0 0
    %8143 = vperm.xlu0 %8142, %v7540
    %v8144 = vpop.permute.xlu0 %8143
    %8145 = vset.pattern.permute.xlu0 0
    %8146 = vperm.xlu0 %8145, %v7541
    %v8147 = vpop.permute.xlu0 %8146
    %8148 = vset.pattern.permute.xlu0 0
    %8149 = vperm.xlu0 %8148, %v7542
    %v8150 = vpop.permute.xlu0 %8149
    %8151 = vset.pattern.permute.xlu0 0
    %8152 = vperm.xlu0 %8151, %v7543
    %v8153 = vpop.permute.xlu0 %8152
    %8154 = vset.pattern.permute.xlu0 0
    %8155 = vperm.xlu0 %8154, %v7544
    %v8156 = vpop.permute.xlu0 %8155
    %8157 = vset.pattern.permute.xlu0 0
    %8158 = vperm.xlu0 %8157, %v7545
    %v8159 = vpop.permute.xlu0 %8158
    %8160 = vset.pattern.permute.xlu0 0
    %8161 = vperm.xlu0 %8160, %v7546
    %v8162 = vpop.permute.xlu0 %8161
    %8163 = vset.pattern.permute.xlu0 0
    %8164 = vperm.xlu0 %8163, %v7547
    %v8165 = vpop.permute.xlu0 %8164
    %8166 = vset.pattern.permute.xlu0 0
    %8167 = vperm.xlu0 %8166, %v7548
    %v8168 = vpop.permute.xlu0 %8167
    %8169 = vset.pattern.permute.xlu0 0
    %8170 = vperm.xlu0 %8169, %v7549
    %v8171 = vpop.permute.xlu0 %8170
    %8172 = vset.pattern.permute.xlu0 0
    %8173 = vperm.xlu0 %8172, %v7550
    %v8174 = vpop.permute.xlu0 %8173
    %8175 = vset.pattern.permute.xlu0 0
    %8176 = vperm.xlu0 %8175, %v7551
    %v8177 = vpop.permute.xlu0 %8176
    %8178 = vset.pattern.permute.xlu0 0
    %8179 = vperm.xlu0 %8178, %v7552
    %v8180 = vpop.permute.xlu0 %8179
    %8181 = vset.pattern.permute.xlu0 0
    %8182 = vperm.xlu0 %8181, %v7553
    %v8183 = vpop.permute.xlu0 %8182
    %8184 = vset.pattern.permute.xlu0 0
    %8185 = vperm.xlu0 %8184, %v7554
    %v8186 = vpop.permute.xlu0 %8185
    %8187 = vset.pattern.permute.xlu0 0
    %8188 = vperm.xlu0 %8187, %v7555
    %v8189 = vpop.permute.xlu0 %8188
    %8190 = vset.pattern.permute.xlu0 0
    %8191 = vperm.xlu0 %8190, %v7556
    %v8192 = vpop.permute.xlu0 %8191
    %8193 = vset.pattern.permute.xlu0 0
    %8194 = vperm.xlu0 %8193, %v7557
    %v8195 = vpop.permute.xlu0 %8194
    %8196 = vset.pattern.permute.xlu0 0
    %8197 = vperm.xlu0 %8196, %v7558
    %v8198 = vpop.permute.xlu0 %8197
    %8199 = vset.pattern.permute.xlu0 0
    %8200 = vperm.xlu0 %8199, %v7559
    %v8201 = vpop.permute.xlu0 %8200
    %8202 = vset.pattern.permute.xlu0 0
    %8203 = vperm.xlu0 %8202, %v7560
    %v8204 = vpop.permute.xlu0 %8203
    %8205 = vset.pattern.permute.xlu0 0
    %8206 = vperm.xlu0 %8205, %v7561
    %v8207 = vpop.permute.xlu0 %8206
    %8208 = vset.pattern.permute.xlu0 0
    %8209 = vperm.xlu0 %8208, %v7562
    %v8210 = vpop.permute.xlu0 %8209
    %8211 = vset.pattern.permute.xlu0 0
    %8212 = vperm.xlu0 %8211, %v7563
    %v8213 = vpop.permute.xlu0 %8212
    %8214 = vset.pattern.permute.xlu0 0
    %8215 = vperm.xlu0 %8214, %v7564
    %v8216 = vpop.permute.xlu0 %8215
    %8217 = vset.pattern.permute.xlu0 0
    %8218 = vperm.xlu0 %8217, %v7565
    %v8219 = vpop.permute.xlu0 %8218
    %8220 = vset.pattern.permute.xlu0 0
    %8221 = vperm.xlu0 %8220, %v7566
    %v8222 = vpop.permute.xlu0 %8221
    %8223 = vset.pattern.permute.xlu0 0
    %8224 = vperm.xlu0 %8223, %v7567
    %v8225 = vpop.permute.xlu0 %8224
    %8226 = vset.pattern.permute.xlu0 0
    %8227 = vperm.xlu0 %8226, %v7568
    %v8228 = vpop.permute.xlu0 %8227
    %8229 = vset.pattern.permute.xlu0 0
    %8230 = vperm.xlu0 %8229, %v7569
    %v8231 = vpop.permute.xlu0 %8230
    %8232 = vset.pattern.permute.xlu0 0
    %8233 = vperm.xlu0 %8232, %v7570
    %v8234 = vpop.permute.xlu0 %8233
    %8235 = vset.pattern.permute.xlu0 0
    %8236 = vperm.xlu0 %8235, %v7571
    %v8237 = vpop.permute.xlu0 %8236
    %8238 = vset.pattern.permute.xlu0 0
    %8239 = vperm.xlu0 %8238, %v7572
    %v8240 = vpop.permute.xlu0 %8239
    %8241 = vset.pattern.permute.xlu0 0
    %8242 = vperm.xlu0 %8241, %v7573
    %v8243 = vpop.permute.xlu0 %8242
    %8244 = vset.pattern.permute.xlu0 0
    %8245 = vperm.xlu0 %8244, %v7574
    %v8246 = vpop.permute.xlu0 %8245
    %8247 = vset.pattern.permute.xlu0 0
    %8248 = vperm.xlu0 %8247, %v7575
    %v8249 = vpop.permute.xlu0 %8248
    %8250 = vset.pattern.permute.xlu0 0
    %8251 = vperm.xlu0 %8250, %v7576
    %v8252 = vpop.permute.xlu0 %8251
    %8253 = vset.pattern.permute.xlu0 0
    %8254 = vperm.xlu0 %8253, %v7577
    %v8255 = vpop.permute.xlu0 %8254
    %8256 = vset.pattern.permute.xlu0 0
    %8257 = vperm.xlu0 %8256, %v7578
    %v8258 = vpop.permute.xlu0 %8257
    %8259 = vset.pattern.permute.xlu0 0
    %8260 = vperm.xlu0 %8259, %v7579
    %v8261 = vpop.permute.xlu0 %8260
    %8262 = vset.pattern.permute.xlu0 0
    %8263 = vperm.xlu0 %8262, %v7580
    %v8264 = vpop.permute.xlu0 %8263
    %8265 = vset.pattern.permute.xlu0 0
    %8266 = vperm.xlu0 %8265, %v7581
    %v8267 = vpop.permute.xlu0 %8266
    %8268 = vset.pattern.permute.xlu0 0
    %8269 = vperm.xlu0 %8268, %v7582
    %v8270 = vpop.permute.xlu0 %8269
    %8271 = vset.pattern.permute.xlu0 0
    %8272 = vperm.xlu0 %8271, %v7583
    %v8273 = vpop.permute.xlu0 %8272
    %8274 = vset.pattern.permute.xlu0 0
    %8275 = vperm.xlu0 %8274, %v7584
    %v8276 = vpop.permute.xlu0 %8275
    %8277 = vset.pattern.permute.xlu0 0
    %8278 = vperm.xlu0 %8277, %v7585
    %v8279 = vpop.permute.xlu0 %8278
    %8280 = vset.pattern.permute.xlu0 0
    %8281 = vperm.xlu0 %8280, %v7586
    %v8282 = vpop.permute.xlu0 %8281
    %8283 = vset.pattern.permute.xlu0 0
    %8284 = vperm.xlu0 %8283, %v7587
    %v8285 = vpop.permute.xlu0 %8284
    %8286 = vset.pattern.permute.xlu0 0
    %8287 = vperm.xlu0 %8286, %v7588
    %v8288 = vpop.permute.xlu0 %8287
    %8289 = vset.pattern.permute.xlu0 0
    %8290 = vperm.xlu0 %8289, %v7589
    %v8291 = vpop.permute.xlu0 %8290
    %8292 = vset.pattern.permute.xlu0 0
    %8293 = vperm.xlu0 %8292, %v7590
    %v8294 = vpop.permute.xlu0 %8293
    %8295 = vset.pattern.permute.xlu0 0
    %8296 = vperm.xlu0 %8295, %v7591
    %v8297 = vpop.permute.xlu0 %8296
    %8298 = vset.pattern.permute.xlu0 0
    %8299 = vperm.xlu0 %8298, %v7592
    %v8300 = vpop.permute.xlu0 %8299
    %8301 = vset.pattern.permute.xlu0 0
    %8302 = vperm.xlu0 %8301, %v7593
    %v8303 = vpop.permute.xlu0 %8302
    %8304 = vset.pattern.permute.xlu0 0
    %8305 = vperm.xlu0 %8304, %v7594
    %v8306 = vpop.permute.xlu0 %8305
    %8307 = vset.pattern.permute.xlu0 0
    %8308 = vperm.xlu0 %8307, %v7595
    %v8309 = vpop.permute.xlu0 %8308
    %8310 = vset.pattern.permute.xlu0 0
    %8311 = vperm.xlu0 %8310, %v7596
    %v8312 = vpop.permute.xlu0 %8311
    %8313 = vset.pattern.permute.xlu0 0
    %8314 = vperm.xlu0 %8313, %v7597
    %v8315 = vpop.permute.xlu0 %8314
    %8316 = vset.pattern.permute.xlu0 0
    %8317 = vperm.xlu0 %8316, %v7598
    %v8318 = vpop.permute.xlu0 %8317
    %8319 = vset.pattern.permute.xlu0 0
    %8320 = vperm.xlu0 %8319, %v7599
    %v8321 = vpop.permute.xlu0 %8320
    %8322 = vset.pattern.permute.xlu0 0
    %8323 = vperm.xlu0 %8322, %v7600
    %v8324 = vpop.permute.xlu0 %8323
    %8325 = vset.pattern.permute.xlu0 0
    %8326 = vperm.xlu0 %8325, %v7601
    %v8327 = vpop.permute.xlu0 %8326
    %8328 = vset.pattern.permute.xlu0 0
    %8329 = vperm.xlu0 %8328, %v7602
    %v8330 = vpop.permute.xlu0 %8329
    %8331 = vset.pattern.permute.xlu0 0
    %8332 = vperm.xlu0 %8331, %v7603
    %v8333 = vpop.permute.xlu0 %8332
    %8334 = vset.pattern.permute.xlu0 0
    %8335 = vperm.xlu0 %8334, %v7604
    %v8336 = vpop.permute.xlu0 %8335
    %8337 = vset.pattern.permute.xlu0 0
    %8338 = vperm.xlu0 %8337, %v7605
    %v8339 = vpop.permute.xlu0 %8338
    %8340 = vset.pattern.permute.xlu0 0
    %8341 = vperm.xlu0 %8340, %v7606
    %v8342 = vpop.permute.xlu0 %8341
    %8343 = vset.pattern.permute.xlu0 0
    %8344 = vperm.xlu0 %8343, %v7607
    %v8345 = vpop.permute.xlu0 %8344
    %8346 = vset.pattern.permute.xlu0 0
    %8347 = vperm.xlu0 %8346, %v7608
    %v8348 = vpop.permute.xlu0 %8347
    %8349 = vset.pattern.permute.xlu0 0
    %8350 = vperm.xlu0 %8349, %v7609
    %v8351 = vpop.permute.xlu0 %8350
    %8352 = vset.pattern.permute.xlu0 0
    %8353 = vperm.xlu0 %8352, %v7610
    %v8354 = vpop.permute.xlu0 %8353
    %8355 = vset.pattern.permute.xlu0 0
    %8356 = vperm.xlu0 %8355, %v7611
    %v8357 = vpop.permute.xlu0 %8356
    %8358 = vset.pattern.permute.xlu0 0
    %8359 = vperm.xlu0 %8358, %v7612
    %v8360 = vpop.permute.xlu0 %8359
    %8361 = vset.pattern.permute.xlu0 0
    %8362 = vperm.xlu0 %8361, %v7613
    %v8363 = vpop.permute.xlu0 %8362
    %8364 = vset.pattern.permute.xlu0 0
    %8365 = vperm.xlu0 %8364, %v7614
    %v8366 = vpop.permute.xlu0 %8365
    %8367 = vset.pattern.permute.xlu0 0
    %8368 = vperm.xlu0 %8367, %v7615
    %v8369 = vpop.permute.xlu0 %8368
    %8370 = vset.pattern.permute.xlu0 0
    %8371 = vperm.xlu0 %8370, %v7616
    %v8372 = vpop.permute.xlu0 %8371
    %8373 = vset.pattern.permute.xlu0 0
    %8374 = vperm.xlu0 %8373, %v7617
    %v8375 = vpop.permute.xlu0 %8374
    %8376 = vset.pattern.permute.xlu0 0
    %8377 = vperm.xlu0 %8376, %v7618
    %v8378 = vpop.permute.xlu0 %8377
    %8379 = vset.pattern.permute.xlu0 0
    %8380 = vperm.xlu0 %8379, %v7619
    %v8381 = vpop.permute.xlu0 %8380
    %8382 = vset.pattern.permute.xlu0 0
    %8383 = vperm.xlu0 %8382, %v7620
    %v8384 = vpop.permute.xlu0 %8383
    %8385 = vset.pattern.permute.xlu0 0
    %8386 = vperm.xlu0 %8385, %v7621
    %v8387 = vpop.permute.xlu0 %8386
    %8388 = vset.pattern.permute.xlu0 0
    %8389 = vperm.xlu0 %8388, %v7622
    %v8390 = vpop.permute.xlu0 %8389
    %v8391 = vlaneseq
    %v8392 = vand.u32 %v8391, 127
    %v8393 = vlaneseq
    %v8394 = vshrl.u32 %v8393, 7
    %v8395 = vsub.s32 %v8392, %v8394
    %v8396 = vrot.slane %v7625, %v8395
    %v8397 = vadd.s32 %v8392, 4294967288
    %v8398 = vlaneseq
    %v8399 = vshrl.u32 %v8398, 7
    %v8400 = vsub.s32 %v8397, %v8399
    %v8401 = vrot.slane %v7628, %v8400
    %vm8402 = vcmask 130112
    %v8403 = vsel %vm8402, %v8401, %v8396
    %v8404 = vadd.s32 %v8392, 4294967280
    %v8405 = vlaneseq
    %v8406 = vshrl.u32 %v8405, 7
    %v8407 = vsub.s32 %v8404, %v8406
    %v8408 = vrot.slane %v7631, %v8407
    %vm8409 = vcmask 195712
    %v8410 = vsel %vm8409, %v8408, %v8403
    %v8411 = vadd.s32 %v8392, 4294967272
    %v8412 = vlaneseq
    %v8413 = vshrl.u32 %v8412, 7
    %v8414 = vsub.s32 %v8411, %v8413
    %v8415 = vrot.slane %v7634, %v8414
    %vm8416 = vcmask 261312
    %v8417 = vsel %vm8416, %v8415, %v8410
    %v8418 = vadd.s32 %v8392, 4294967264
    %v8419 = vlaneseq
    %v8420 = vshrl.u32 %v8419, 7
    %v8421 = vsub.s32 %v8418, %v8420
    %v8422 = vrot.slane %v7637, %v8421
    %vm8423 = vcmask 326912
    %v8424 = vsel %vm8423, %v8422, %v8417
    %v8425 = vadd.s32 %v8392, 4294967256
    %v8426 = vlaneseq
    %v8427 = vshrl.u32 %v8426, 7
    %v8428 = vsub.s32 %v8425, %v8427
    %v8429 = vrot.slane %v7640, %v8428
    %vm8430 = vcmask 392512
    %v8431 = vsel %vm8430, %v8429, %v8424
    %v8432 = vadd.s32 %v8392, 4294967248
    %v8433 = vlaneseq
    %v8434 = vshrl.u32 %v8433, 7
    %v8435 = vsub.s32 %v8432, %v8434
    %v8436 = vrot.slane %v7643, %v8435
    %vm8437 = vcmask 458112
    %v8438 = vsel %vm8437, %v8436, %v8431
    %v8439 = vadd.s32 %v8392, 4294967240
    %v8440 = vlaneseq
    %v8441 = vshrl.u32 %v8440, 7
    %v8442 = vsub.s32 %v8439, %v8441
    %v8443 = vrot.slane %v7646, %v8442
    %vm8444 = vcmask 523712
    %v8445 = vsel %vm8444, %v8443, %v8438
    %v8446 = vadd.s32 %v8392, 4294967232
    %v8447 = vlaneseq
    %v8448 = vshrl.u32 %v8447, 7
    %v8449 = vsub.s32 %v8446, %v8448
    %v8450 = vrot.slane %v7649, %v8449
    %vm8451 = vcmask 589312
    %v8452 = vsel %vm8451, %v8450, %v8445
    %v8453 = vadd.s32 %v8392, 4294967224
    %v8454 = vlaneseq
    %v8455 = vshrl.u32 %v8454, 7
    %v8456 = vsub.s32 %v8453, %v8455
    %v8457 = vrot.slane %v7652, %v8456
    %vm8458 = vcmask 654912
    %v8459 = vsel %vm8458, %v8457, %v8452
    %v8460 = vadd.s32 %v8392, 4294967216
    %v8461 = vlaneseq
    %v8462 = vshrl.u32 %v8461, 7
    %v8463 = vsub.s32 %v8460, %v8462
    %v8464 = vrot.slane %v7655, %v8463
    %vm8465 = vcmask 720512
    %v8466 = vsel %vm8465, %v8464, %v8459
    %v8467 = vadd.s32 %v8392, 4294967208
    %v8468 = vlaneseq
    %v8469 = vshrl.u32 %v8468, 7
    %v8470 = vsub.s32 %v8467, %v8469
    %v8471 = vrot.slane %v7658, %v8470
    %vm8472 = vcmask 786112
    %v8473 = vsel %vm8472, %v8471, %v8466
    %v8474 = vadd.s32 %v8392, 4294967200
    %v8475 = vlaneseq
    %v8476 = vshrl.u32 %v8475, 7
    %v8477 = vsub.s32 %v8474, %v8476
    %v8478 = vrot.slane %v7661, %v8477
    %vm8479 = vcmask 851712
    %v8480 = vsel %vm8479, %v8478, %v8473
    %v8481 = vadd.s32 %v8392, 4294967192
    %v8482 = vlaneseq
    %v8483 = vshrl.u32 %v8482, 7
    %v8484 = vsub.s32 %v8481, %v8483
    %v8485 = vrot.slane %v7664, %v8484
    %vm8486 = vcmask 917312
    %v8487 = vsel %vm8486, %v8485, %v8480
    %v8488 = vadd.s32 %v8392, 4294967184
    %v8489 = vlaneseq
    %v8490 = vshrl.u32 %v8489, 7
    %v8491 = vsub.s32 %v8488, %v8490
    %v8492 = vrot.slane %v7667, %v8491
    %vm8493 = vcmask 982912
    %v8494 = vsel %vm8493, %v8492, %v8487
    %v8495 = vadd.s32 %v8392, 4294967176
    %v8496 = vlaneseq
    %v8497 = vshrl.u32 %v8496, 7
    %v8498 = vsub.s32 %v8495, %v8497
    %v8499 = vrot.slane %v7670, %v8498
    %vm8500 = vcmask 1048512
    %v8501 = vsel %vm8500, %v8499, %v8494
    %v8502 = vlaneseq
    %v8503 = vshrl.u32 %v8502, 7
    %v8504 = vsub.s32 %v8392, %v8503
    %v8505 = vrot.slane %v7673, %v8504
    %v8506 = vlaneseq
    %v8507 = vshrl.u32 %v8506, 7
    %v8508 = vsub.s32 %v8397, %v8507
    %v8509 = vrot.slane %v7676, %v8508
    %v8510 = vsel %vm8402, %v8509, %v8505
    %v8511 = vlaneseq
    %v8512 = vshrl.u32 %v8511, 7
    %v8513 = vsub.s32 %v8404, %v8512
    %v8514 = vrot.slane %v7679, %v8513
    %v8515 = vsel %vm8409, %v8514, %v8510
    %v8516 = vlaneseq
    %v8517 = vshrl.u32 %v8516, 7
    %v8518 = vsub.s32 %v8411, %v8517
    %v8519 = vrot.slane %v7682, %v8518
    %v8520 = vsel %vm8416, %v8519, %v8515
    %v8521 = vlaneseq
    %v8522 = vshrl.u32 %v8521, 7
    %v8523 = vsub.s32 %v8418, %v8522
    %v8524 = vrot.slane %v7685, %v8523
    %v8525 = vsel %vm8423, %v8524, %v8520
    %v8526 = vlaneseq
    %v8527 = vshrl.u32 %v8526, 7
    %v8528 = vsub.s32 %v8425, %v8527
    %v8529 = vrot.slane %v7688, %v8528
    %v8530 = vsel %vm8430, %v8529, %v8525
    %v8531 = vlaneseq
    %v8532 = vshrl.u32 %v8531, 7
    %v8533 = vsub.s32 %v8432, %v8532
    %v8534 = vrot.slane %v7691, %v8533
    %v8535 = vsel %vm8437, %v8534, %v8530
    %v8536 = vlaneseq
    %v8537 = vshrl.u32 %v8536, 7
    %v8538 = vsub.s32 %v8439, %v8537
    %v8539 = vrot.slane %v7694, %v8538
    %v8540 = vsel %vm8444, %v8539, %v8535
    %v8541 = vlaneseq
    %v8542 = vshrl.u32 %v8541, 7
    %v8543 = vsub.s32 %v8446, %v8542
    %v8544 = vrot.slane %v7697, %v8543
    %v8545 = vsel %vm8451, %v8544, %v8540
    %v8546 = vlaneseq
    %v8547 = vshrl.u32 %v8546, 7
    %v8548 = vsub.s32 %v8453, %v8547
    %v8549 = vrot.slane %v7700, %v8548
    %v8550 = vsel %vm8458, %v8549, %v8545
    %v8551 = vlaneseq
    %v8552 = vshrl.u32 %v8551, 7
    %v8553 = vsub.s32 %v8460, %v8552
    %v8554 = vrot.slane %v7703, %v8553
    %v8555 = vsel %vm8465, %v8554, %v8550
    %v8556 = vlaneseq
    %v8557 = vshrl.u32 %v8556, 7
    %v8558 = vsub.s32 %v8467, %v8557
    %v8559 = vrot.slane %v7706, %v8558
    %v8560 = vsel %vm8472, %v8559, %v8555
    %v8561 = vlaneseq
    %v8562 = vshrl.u32 %v8561, 7
    %v8563 = vsub.s32 %v8474, %v8562
    %v8564 = vrot.slane %v7709, %v8563
    %v8565 = vsel %vm8479, %v8564, %v8560
    %v8566 = vlaneseq
    %v8567 = vshrl.u32 %v8566, 7
    %v8568 = vsub.s32 %v8481, %v8567
    %v8569 = vrot.slane %v7712, %v8568
    %v8570 = vsel %vm8486, %v8569, %v8565
    %v8571 = vlaneseq
    %v8572 = vshrl.u32 %v8571, 7
    %v8573 = vsub.s32 %v8488, %v8572
    %v8574 = vrot.slane %v7715, %v8573
    %v8575 = vsel %vm8493, %v8574, %v8570
    %v8576 = vlaneseq
    %v8577 = vshrl.u32 %v8576, 7
    %v8578 = vsub.s32 %v8495, %v8577
    %v8579 = vrot.slane %v7718, %v8578
    %v8580 = vsel %vm8500, %v8579, %v8575
    %v8581 = vlaneseq
    %v8582 = vshrl.u32 %v8581, 7
    %v8583 = vsub.s32 %v8392, %v8582
    %v8584 = vrot.slane %v7721, %v8583
    %v8585 = vlaneseq
    %v8586 = vshrl.u32 %v8585, 7
    %v8587 = vsub.s32 %v8397, %v8586
    %v8588 = vrot.slane %v7724, %v8587
    %v8589 = vsel %vm8402, %v8588, %v8584
    %v8590 = vlaneseq
    %v8591 = vshrl.u32 %v8590, 7
    %v8592 = vsub.s32 %v8404, %v8591
    %v8593 = vrot.slane %v7727, %v8592
    %v8594 = vsel %vm8409, %v8593, %v8589
    %v8595 = vlaneseq
    %v8596 = vshrl.u32 %v8595, 7
    %v8597 = vsub.s32 %v8411, %v8596
    %v8598 = vrot.slane %v7730, %v8597
    %v8599 = vsel %vm8416, %v8598, %v8594
    %v8600 = vlaneseq
    %v8601 = vshrl.u32 %v8600, 7
    %v8602 = vsub.s32 %v8418, %v8601
    %v8603 = vrot.slane %v7733, %v8602
    %v8604 = vsel %vm8423, %v8603, %v8599
    %v8605 = vlaneseq
    %v8606 = vshrl.u32 %v8605, 7
    %v8607 = vsub.s32 %v8425, %v8606
    %v8608 = vrot.slane %v7736, %v8607
    %v8609 = vsel %vm8430, %v8608, %v8604
    %v8610 = vlaneseq
    %v8611 = vshrl.u32 %v8610, 7
    %v8612 = vsub.s32 %v8432, %v8611
    %v8613 = vrot.slane %v7739, %v8612
    %v8614 = vsel %vm8437, %v8613, %v8609
    %v8615 = vlaneseq
    %v8616 = vshrl.u32 %v8615, 7
    %v8617 = vsub.s32 %v8439, %v8616
    %v8618 = vrot.slane %v7742, %v8617
    %v8619 = vsel %vm8444, %v8618, %v8614
    %v8620 = vlaneseq
    %v8621 = vshrl.u32 %v8620, 7
    %v8622 = vsub.s32 %v8446, %v8621
    %v8623 = vrot.slane %v7745, %v8622
    %v8624 = vsel %vm8451, %v8623, %v8619
    %v8625 = vlaneseq
    %v8626 = vshrl.u32 %v8625, 7
    %v8627 = vsub.s32 %v8453, %v8626
    %v8628 = vrot.slane %v7748, %v8627
    %v8629 = vsel %vm8458, %v8628, %v8624
    %v8630 = vlaneseq
    %v8631 = vshrl.u32 %v8630, 7
    %v8632 = vsub.s32 %v8460, %v8631
    %v8633 = vrot.slane %v7751, %v8632
    %v8634 = vsel %vm8465, %v8633, %v8629
    %v8635 = vlaneseq
    %v8636 = vshrl.u32 %v8635, 7
    %v8637 = vsub.s32 %v8467, %v8636
    %v8638 = vrot.slane %v7754, %v8637
    %v8639 = vsel %vm8472, %v8638, %v8634
    %v8640 = vlaneseq
    %v8641 = vshrl.u32 %v8640, 7
    %v8642 = vsub.s32 %v8474, %v8641
    %v8643 = vrot.slane %v7757, %v8642
    %v8644 = vsel %vm8479, %v8643, %v8639
    %v8645 = vlaneseq
    %v8646 = vshrl.u32 %v8645, 7
    %v8647 = vsub.s32 %v8481, %v8646
    %v8648 = vrot.slane %v7760, %v8647
    %v8649 = vsel %vm8486, %v8648, %v8644
    %v8650 = vlaneseq
    %v8651 = vshrl.u32 %v8650, 7
    %v8652 = vsub.s32 %v8488, %v8651
    %v8653 = vrot.slane %v7763, %v8652
    %v8654 = vsel %vm8493, %v8653, %v8649
    %v8655 = vlaneseq
    %v8656 = vshrl.u32 %v8655, 7
    %v8657 = vsub.s32 %v8495, %v8656
    %v8658 = vrot.slane %v7766, %v8657
    %v8659 = vsel %vm8500, %v8658, %v8654
    %v8660 = vlaneseq
    %v8661 = vshrl.u32 %v8660, 7
    %v8662 = vsub.s32 %v8392, %v8661
    %v8663 = vrot.slane %v7769, %v8662
    %v8664 = vlaneseq
    %v8665 = vshrl.u32 %v8664, 7
    %v8666 = vsub.s32 %v8397, %v8665
    %v8667 = vrot.slane %v7772, %v8666
    %v8668 = vsel %vm8402, %v8667, %v8663
    %v8669 = vlaneseq
    %v8670 = vshrl.u32 %v8669, 7
    %v8671 = vsub.s32 %v8404, %v8670
    %v8672 = vrot.slane %v7775, %v8671
    %v8673 = vsel %vm8409, %v8672, %v8668
    %v8674 = vlaneseq
    %v8675 = vshrl.u32 %v8674, 7
    %v8676 = vsub.s32 %v8411, %v8675
    %v8677 = vrot.slane %v7778, %v8676
    %v8678 = vsel %vm8416, %v8677, %v8673
    %v8679 = vlaneseq
    %v8680 = vshrl.u32 %v8679, 7
    %v8681 = vsub.s32 %v8418, %v8680
    %v8682 = vrot.slane %v7781, %v8681
    %v8683 = vsel %vm8423, %v8682, %v8678
    %v8684 = vlaneseq
    %v8685 = vshrl.u32 %v8684, 7
    %v8686 = vsub.s32 %v8425, %v8685
    %v8687 = vrot.slane %v7784, %v8686
    %v8688 = vsel %vm8430, %v8687, %v8683
    %v8689 = vlaneseq
    %v8690 = vshrl.u32 %v8689, 7
    %v8691 = vsub.s32 %v8432, %v8690
    %v8692 = vrot.slane %v7787, %v8691
    %v8693 = vsel %vm8437, %v8692, %v8688
    %v8694 = vlaneseq
    %v8695 = vshrl.u32 %v8694, 7
    %v8696 = vsub.s32 %v8439, %v8695
    %v8697 = vrot.slane %v7790, %v8696
    %v8698 = vsel %vm8444, %v8697, %v8693
    %v8699 = vlaneseq
    %v8700 = vshrl.u32 %v8699, 7
    %v8701 = vsub.s32 %v8446, %v8700
    %v8702 = vrot.slane %v7793, %v8701
    %v8703 = vsel %vm8451, %v8702, %v8698
    %v8704 = vlaneseq
    %v8705 = vshrl.u32 %v8704, 7
    %v8706 = vsub.s32 %v8453, %v8705
    %v8707 = vrot.slane %v7796, %v8706
    %v8708 = vsel %vm8458, %v8707, %v8703
    %v8709 = vlaneseq
    %v8710 = vshrl.u32 %v8709, 7
    %v8711 = vsub.s32 %v8460, %v8710
    %v8712 = vrot.slane %v7799, %v8711
    %v8713 = vsel %vm8465, %v8712, %v8708
    %v8714 = vlaneseq
    %v8715 = vshrl.u32 %v8714, 7
    %v8716 = vsub.s32 %v8467, %v8715
    %v8717 = vrot.slane %v7802, %v8716
    %v8718 = vsel %vm8472, %v8717, %v8713
    %v8719 = vlaneseq
    %v8720 = vshrl.u32 %v8719, 7
    %v8721 = vsub.s32 %v8474, %v8720
    %v8722 = vrot.slane %v7805, %v8721
    %v8723 = vsel %vm8479, %v8722, %v8718
    %v8724 = vlaneseq
    %v8725 = vshrl.u32 %v8724, 7
    %v8726 = vsub.s32 %v8481, %v8725
    %v8727 = vrot.slane %v7808, %v8726
    %v8728 = vsel %vm8486, %v8727, %v8723
    %v8729 = vlaneseq
    %v8730 = vshrl.u32 %v8729, 7
    %v8731 = vsub.s32 %v8488, %v8730
    %v8732 = vrot.slane %v7811, %v8731
    %v8733 = vsel %vm8493, %v8732, %v8728
    %v8734 = vlaneseq
    %v8735 = vshrl.u32 %v8734, 7
    %v8736 = vsub.s32 %v8495, %v8735
    %v8737 = vrot.slane %v7814, %v8736
    %v8738 = vsel %vm8500, %v8737, %v8733
    %v8739 = vlaneseq
    %v8740 = vshrl.u32 %v8739, 7
    %v8741 = vsub.s32 %v8392, %v8740
    %v8742 = vrot.slane %v7817, %v8741
    %v8743 = vlaneseq
    %v8744 = vshrl.u32 %v8743, 7
    %v8745 = vsub.s32 %v8397, %v8744
    %v8746 = vrot.slane %v7820, %v8745
    %v8747 = vsel %vm8402, %v8746, %v8742
    %v8748 = vlaneseq
    %v8749 = vshrl.u32 %v8748, 7
    %v8750 = vsub.s32 %v8404, %v8749
    %v8751 = vrot.slane %v7823, %v8750
    %v8752 = vsel %vm8409, %v8751, %v8747
    %v8753 = vlaneseq
    %v8754 = vshrl.u32 %v8753, 7
    %v8755 = vsub.s32 %v8411, %v8754
    %v8756 = vrot.slane %v7826, %v8755
    %v8757 = vsel %vm8416, %v8756, %v8752
    %v8758 = vlaneseq
    %v8759 = vshrl.u32 %v8758, 7
    %v8760 = vsub.s32 %v8418, %v8759
    %v8761 = vrot.slane %v7829, %v8760
    %v8762 = vsel %vm8423, %v8761, %v8757
    %v8763 = vlaneseq
    %v8764 = vshrl.u32 %v8763, 7
    %v8765 = vsub.s32 %v8425, %v8764
    %v8766 = vrot.slane %v7832, %v8765
    %v8767 = vsel %vm8430, %v8766, %v8762
    %v8768 = vlaneseq
    %v8769 = vshrl.u32 %v8768, 7
    %v8770 = vsub.s32 %v8432, %v8769
    %v8771 = vrot.slane %v7835, %v8770
    %v8772 = vsel %vm8437, %v8771, %v8767
    %v8773 = vlaneseq
    %v8774 = vshrl.u32 %v8773, 7
    %v8775 = vsub.s32 %v8439, %v8774
    %v8776 = vrot.slane %v7838, %v8775
    %v8777 = vsel %vm8444, %v8776, %v8772
    %v8778 = vlaneseq
    %v8779 = vshrl.u32 %v8778, 7
    %v8780 = vsub.s32 %v8446, %v8779
    %v8781 = vrot.slane %v7841, %v8780
    %v8782 = vsel %vm8451, %v8781, %v8777
    %v8783 = vlaneseq
    %v8784 = vshrl.u32 %v8783, 7
    %v8785 = vsub.s32 %v8453, %v8784
    %v8786 = vrot.slane %v7844, %v8785
    %v8787 = vsel %vm8458, %v8786, %v8782
    %v8788 = vlaneseq
    %v8789 = vshrl.u32 %v8788, 7
    %v8790 = vsub.s32 %v8460, %v8789
    %v8791 = vrot.slane %v7847, %v8790
    %v8792 = vsel %vm8465, %v8791, %v8787
    %v8793 = vlaneseq
    %v8794 = vshrl.u32 %v8793, 7
    %v8795 = vsub.s32 %v8467, %v8794
    %v8796 = vrot.slane %v7850, %v8795
    %v8797 = vsel %vm8472, %v8796, %v8792
    %v8798 = vlaneseq
    %v8799 = vshrl.u32 %v8798, 7
    %v8800 = vsub.s32 %v8474, %v8799
    %v8801 = vrot.slane %v7853, %v8800
    %v8802 = vsel %vm8479, %v8801, %v8797
    %v8803 = vlaneseq
    %v8804 = vshrl.u32 %v8803, 7
    %v8805 = vsub.s32 %v8481, %v8804
    %v8806 = vrot.slane %v7856, %v8805
    %v8807 = vsel %vm8486, %v8806, %v8802
    %v8808 = vlaneseq
    %v8809 = vshrl.u32 %v8808, 7
    %v8810 = vsub.s32 %v8488, %v8809
    %v8811 = vrot.slane %v7859, %v8810
    %v8812 = vsel %vm8493, %v8811, %v8807
    %v8813 = vlaneseq
    %v8814 = vshrl.u32 %v8813, 7
    %v8815 = vsub.s32 %v8495, %v8814
    %v8816 = vrot.slane %v7862, %v8815
    %v8817 = vsel %vm8500, %v8816, %v8812
    %v8818 = vlaneseq
    %v8819 = vshrl.u32 %v8818, 7
    %v8820 = vsub.s32 %v8392, %v8819
    %v8821 = vrot.slane %v7865, %v8820
    %v8822 = vlaneseq
    %v8823 = vshrl.u32 %v8822, 7
    %v8824 = vsub.s32 %v8397, %v8823
    %v8825 = vrot.slane %v7868, %v8824
    %v8826 = vsel %vm8402, %v8825, %v8821
    %v8827 = vlaneseq
    %v8828 = vshrl.u32 %v8827, 7
    %v8829 = vsub.s32 %v8404, %v8828
    %v8830 = vrot.slane %v7871, %v8829
    %v8831 = vsel %vm8409, %v8830, %v8826
    %v8832 = vlaneseq
    %v8833 = vshrl.u32 %v8832, 7
    %v8834 = vsub.s32 %v8411, %v8833
    %v8835 = vrot.slane %v7874, %v8834
    %v8836 = vsel %vm8416, %v8835, %v8831
    %v8837 = vlaneseq
    %v8838 = vshrl.u32 %v8837, 7
    %v8839 = vsub.s32 %v8418, %v8838
    %v8840 = vrot.slane %v7877, %v8839
    %v8841 = vsel %vm8423, %v8840, %v8836
    %v8842 = vlaneseq
    %v8843 = vshrl.u32 %v8842, 7
    %v8844 = vsub.s32 %v8425, %v8843
    %v8845 = vrot.slane %v7880, %v8844
    %v8846 = vsel %vm8430, %v8845, %v8841
    %v8847 = vlaneseq
    %v8848 = vshrl.u32 %v8847, 7
    %v8849 = vsub.s32 %v8432, %v8848
    %v8850 = vrot.slane %v7883, %v8849
    %v8851 = vsel %vm8437, %v8850, %v8846
    %v8852 = vlaneseq
    %v8853 = vshrl.u32 %v8852, 7
    %v8854 = vsub.s32 %v8439, %v8853
    %v8855 = vrot.slane %v7886, %v8854
    %v8856 = vsel %vm8444, %v8855, %v8851
    %v8857 = vlaneseq
    %v8858 = vshrl.u32 %v8857, 7
    %v8859 = vsub.s32 %v8446, %v8858
    %v8860 = vrot.slane %v7889, %v8859
    %v8861 = vsel %vm8451, %v8860, %v8856
    %v8862 = vlaneseq
    %v8863 = vshrl.u32 %v8862, 7
    %v8864 = vsub.s32 %v8453, %v8863
    %v8865 = vrot.slane %v7892, %v8864
    %v8866 = vsel %vm8458, %v8865, %v8861
    %v8867 = vlaneseq
    %v8868 = vshrl.u32 %v8867, 7
    %v8869 = vsub.s32 %v8460, %v8868
    %v8870 = vrot.slane %v7895, %v8869
    %v8871 = vsel %vm8465, %v8870, %v8866
    %v8872 = vlaneseq
    %v8873 = vshrl.u32 %v8872, 7
    %v8874 = vsub.s32 %v8467, %v8873
    %v8875 = vrot.slane %v7898, %v8874
    %v8876 = vsel %vm8472, %v8875, %v8871
    %v8877 = vlaneseq
    %v8878 = vshrl.u32 %v8877, 7
    %v8879 = vsub.s32 %v8474, %v8878
    %v8880 = vrot.slane %v7901, %v8879
    %v8881 = vsel %vm8479, %v8880, %v8876
    %v8882 = vlaneseq
    %v8883 = vshrl.u32 %v8882, 7
    %v8884 = vsub.s32 %v8481, %v8883
    %v8885 = vrot.slane %v7904, %v8884
    %v8886 = vsel %vm8486, %v8885, %v8881
    %v8887 = vlaneseq
    %v8888 = vshrl.u32 %v8887, 7
    %v8889 = vsub.s32 %v8488, %v8888
    %v8890 = vrot.slane %v7907, %v8889
    %v8891 = vsel %vm8493, %v8890, %v8886
    %v8892 = vlaneseq
    %v8893 = vshrl.u32 %v8892, 7
    %v8894 = vsub.s32 %v8495, %v8893
    %v8895 = vrot.slane %v7910, %v8894
    %v8896 = vsel %vm8500, %v8895, %v8891
    %v8897 = vlaneseq
    %v8898 = vshrl.u32 %v8897, 7
    %v8899 = vsub.s32 %v8392, %v8898
    %v8900 = vrot.slane %v7913, %v8899
    %v8901 = vlaneseq
    %v8902 = vshrl.u32 %v8901, 7
    %v8903 = vsub.s32 %v8397, %v8902
    %v8904 = vrot.slane %v7916, %v8903
    %v8905 = vsel %vm8402, %v8904, %v8900
    %v8906 = vlaneseq
    %v8907 = vshrl.u32 %v8906, 7
    %v8908 = vsub.s32 %v8404, %v8907
    %v8909 = vrot.slane %v7919, %v8908
    %v8910 = vsel %vm8409, %v8909, %v8905
    %v8911 = vlaneseq
    %v8912 = vshrl.u32 %v8911, 7
    %v8913 = vsub.s32 %v8411, %v8912
    %v8914 = vrot.slane %v7922, %v8913
    %v8915 = vsel %vm8416, %v8914, %v8910
    %v8916 = vlaneseq
    %v8917 = vshrl.u32 %v8916, 7
    %v8918 = vsub.s32 %v8418, %v8917
    %v8919 = vrot.slane %v7925, %v8918
    %v8920 = vsel %vm8423, %v8919, %v8915
    %v8921 = vlaneseq
    %v8922 = vshrl.u32 %v8921, 7
    %v8923 = vsub.s32 %v8425, %v8922
    %v8924 = vrot.slane %v7928, %v8923
    %v8925 = vsel %vm8430, %v8924, %v8920
    %v8926 = vlaneseq
    %v8927 = vshrl.u32 %v8926, 7
    %v8928 = vsub.s32 %v8432, %v8927
    %v8929 = vrot.slane %v7931, %v8928
    %v8930 = vsel %vm8437, %v8929, %v8925
    %v8931 = vlaneseq
    %v8932 = vshrl.u32 %v8931, 7
    %v8933 = vsub.s32 %v8439, %v8932
    %v8934 = vrot.slane %v7934, %v8933
    %v8935 = vsel %vm8444, %v8934, %v8930
    %v8936 = vlaneseq
    %v8937 = vshrl.u32 %v8936, 7
    %v8938 = vsub.s32 %v8446, %v8937
    %v8939 = vrot.slane %v7937, %v8938
    %v8940 = vsel %vm8451, %v8939, %v8935
    %v8941 = vlaneseq
    %v8942 = vshrl.u32 %v8941, 7
    %v8943 = vsub.s32 %v8453, %v8942
    %v8944 = vrot.slane %v7940, %v8943
    %v8945 = vsel %vm8458, %v8944, %v8940
    %v8946 = vlaneseq
    %v8947 = vshrl.u32 %v8946, 7
    %v8948 = vsub.s32 %v8460, %v8947
    %v8949 = vrot.slane %v7943, %v8948
    %v8950 = vsel %vm8465, %v8949, %v8945
    %v8951 = vlaneseq
    %v8952 = vshrl.u32 %v8951, 7
    %v8953 = vsub.s32 %v8467, %v8952
    %v8954 = vrot.slane %v7946, %v8953
    %v8955 = vsel %vm8472, %v8954, %v8950
    %v8956 = vlaneseq
    %v8957 = vshrl.u32 %v8956, 7
    %v8958 = vsub.s32 %v8474, %v8957
    %v8959 = vrot.slane %v7949, %v8958
    %v8960 = vsel %vm8479, %v8959, %v8955
    %v8961 = vlaneseq
    %v8962 = vshrl.u32 %v8961, 7
    %v8963 = vsub.s32 %v8481, %v8962
    %v8964 = vrot.slane %v7952, %v8963
    %v8965 = vsel %vm8486, %v8964, %v8960
    %v8966 = vlaneseq
    %v8967 = vshrl.u32 %v8966, 7
    %v8968 = vsub.s32 %v8488, %v8967
    %v8969 = vrot.slane %v7955, %v8968
    %v8970 = vsel %vm8493, %v8969, %v8965
    %v8971 = vlaneseq
    %v8972 = vshrl.u32 %v8971, 7
    %v8973 = vsub.s32 %v8495, %v8972
    %v8974 = vrot.slane %v7958, %v8973
    %v8975 = vsel %vm8500, %v8974, %v8970
    %v8976 = vlaneseq
    %v8977 = vshrl.u32 %v8976, 7
    %v8978 = vsub.s32 %v8392, %v8977
    %v8979 = vrot.slane %v7961, %v8978
    %v8980 = vlaneseq
    %v8981 = vshrl.u32 %v8980, 7
    %v8982 = vsub.s32 %v8397, %v8981
    %v8983 = vrot.slane %v7964, %v8982
    %v8984 = vsel %vm8402, %v8983, %v8979
    %v8985 = vlaneseq
    %v8986 = vshrl.u32 %v8985, 7
    %v8987 = vsub.s32 %v8404, %v8986
    %v8988 = vrot.slane %v7967, %v8987
    %v8989 = vsel %vm8409, %v8988, %v8984
    %v8990 = vlaneseq
    %v8991 = vshrl.u32 %v8990, 7
    %v8992 = vsub.s32 %v8411, %v8991
    %v8993 = vrot.slane %v7970, %v8992
    %v8994 = vsel %vm8416, %v8993, %v8989
    %v8995 = vlaneseq
    %v8996 = vshrl.u32 %v8995, 7
    %v8997 = vsub.s32 %v8418, %v8996
    %v8998 = vrot.slane %v7973, %v8997
    %v8999 = vsel %vm8423, %v8998, %v8994
    %v9000 = vlaneseq
    %v9001 = vshrl.u32 %v9000, 7
    %v9002 = vsub.s32 %v8425, %v9001
    %v9003 = vrot.slane %v7976, %v9002
    %v9004 = vsel %vm8430, %v9003, %v8999
    %v9005 = vlaneseq
    %v9006 = vshrl.u32 %v9005, 7
    %v9007 = vsub.s32 %v8432, %v9006
    %v9008 = vrot.slane %v7979, %v9007
    %v9009 = vsel %vm8437, %v9008, %v9004
    %v9010 = vlaneseq
    %v9011 = vshrl.u32 %v9010, 7
    %v9012 = vsub.s32 %v8439, %v9011
    %v9013 = vrot.slane %v7982, %v9012
    %v9014 = vsel %vm8444, %v9013, %v9009
    %v9015 = vlaneseq
    %v9016 = vshrl.u32 %v9015, 7
    %v9017 = vsub.s32 %v8446, %v9016
    %v9018 = vrot.slane %v7985, %v9017
    %v9019 = vsel %vm8451, %v9018, %v9014
    %v9020 = vlaneseq
    %v9021 = vshrl.u32 %v9020, 7
    %v9022 = vsub.s32 %v8453, %v9021
    %v9023 = vrot.slane %v7988, %v9022
    %v9024 = vsel %vm8458, %v9023, %v9019
    %v9025 = vlaneseq
    %v9026 = vshrl.u32 %v9025, 7
    %v9027 = vsub.s32 %v8460, %v9026
    %v9028 = vrot.slane %v7991, %v9027
    %v9029 = vsel %vm8465, %v9028, %v9024
    %v9030 = vlaneseq
    %v9031 = vshrl.u32 %v9030, 7
    %v9032 = vsub.s32 %v8467, %v9031
    %v9033 = vrot.slane %v7994, %v9032
    %v9034 = vsel %vm8472, %v9033, %v9029
    %v9035 = vlaneseq
    %v9036 = vshrl.u32 %v9035, 7
    %v9037 = vsub.s32 %v8474, %v9036
    %v9038 = vrot.slane %v7997, %v9037
    %v9039 = vsel %vm8479, %v9038, %v9034
    %v9040 = vlaneseq
    %v9041 = vshrl.u32 %v9040, 7
    %v9042 = vsub.s32 %v8481, %v9041
    %v9043 = vrot.slane %v8000, %v9042
    %v9044 = vsel %vm8486, %v9043, %v9039
    %v9045 = vlaneseq
    %v9046 = vshrl.u32 %v9045, 7
    %v9047 = vsub.s32 %v8488, %v9046
    %v9048 = vrot.slane %v8003, %v9047
    %v9049 = vsel %vm8493, %v9048, %v9044
    %v9050 = vlaneseq
    %v9051 = vshrl.u32 %v9050, 7
    %v9052 = vsub.s32 %v8495, %v9051
    %v9053 = vrot.slane %v8006, %v9052
    %v9054 = vsel %vm8500, %v9053, %v9049
    %v9055 = vlaneseq
    %v9056 = vshrl.u32 %v9055, 7
    %v9057 = vsub.s32 %v8392, %v9056
    %v9058 = vrot.slane %v8009, %v9057
    %v9059 = vlaneseq
    %v9060 = vshrl.u32 %v9059, 7
    %v9061 = vsub.s32 %v8397, %v9060
    %v9062 = vrot.slane %v8012, %v9061
    %v9063 = vsel %vm8402, %v9062, %v9058
    %v9064 = vlaneseq
    %v9065 = vshrl.u32 %v9064, 7
    %v9066 = vsub.s32 %v8404, %v9065
    %v9067 = vrot.slane %v8015, %v9066
    %v9068 = vsel %vm8409, %v9067, %v9063
    %v9069 = vlaneseq
    %v9070 = vshrl.u32 %v9069, 7
    %v9071 = vsub.s32 %v8411, %v9070
    %v9072 = vrot.slane %v8018, %v9071
    %v9073 = vsel %vm8416, %v9072, %v9068
    %v9074 = vlaneseq
    %v9075 = vshrl.u32 %v9074, 7
    %v9076 = vsub.s32 %v8418, %v9075
    %v9077 = vrot.slane %v8021, %v9076
    %v9078 = vsel %vm8423, %v9077, %v9073
    %v9079 = vlaneseq
    %v9080 = vshrl.u32 %v9079, 7
    %v9081 = vsub.s32 %v8425, %v9080
    %v9082 = vrot.slane %v8024, %v9081
    %v9083 = vsel %vm8430, %v9082, %v9078
    %v9084 = vlaneseq
    %v9085 = vshrl.u32 %v9084, 7
    %v9086 = vsub.s32 %v8432, %v9085
    %v9087 = vrot.slane %v8027, %v9086
    %v9088 = vsel %vm8437, %v9087, %v9083
    %v9089 = vlaneseq
    %v9090 = vshrl.u32 %v9089, 7
    %v9091 = vsub.s32 %v8439, %v9090
    %v9092 = vrot.slane %v8030, %v9091
    %v9093 = vsel %vm8444, %v9092, %v9088
    %v9094 = vlaneseq
    %v9095 = vshrl.u32 %v9094, 7
    %v9096 = vsub.s32 %v8446, %v9095
    %v9097 = vrot.slane %v8033, %v9096
    %v9098 = vsel %vm8451, %v9097, %v9093
    %v9099 = vlaneseq
    %v9100 = vshrl.u32 %v9099, 7
    %v9101 = vsub.s32 %v8453, %v9100
    %v9102 = vrot.slane %v8036, %v9101
    %v9103 = vsel %vm8458, %v9102, %v9098
    %v9104 = vlaneseq
    %v9105 = vshrl.u32 %v9104, 7
    %v9106 = vsub.s32 %v8460, %v9105
    %v9107 = vrot.slane %v8039, %v9106
    %v9108 = vsel %vm8465, %v9107, %v9103
    %v9109 = vlaneseq
    %v9110 = vshrl.u32 %v9109, 7
    %v9111 = vsub.s32 %v8467, %v9110
    %v9112 = vrot.slane %v8042, %v9111
    %v9113 = vsel %vm8472, %v9112, %v9108
    %v9114 = vlaneseq
    %v9115 = vshrl.u32 %v9114, 7
    %v9116 = vsub.s32 %v8474, %v9115
    %v9117 = vrot.slane %v8045, %v9116
    %v9118 = vsel %vm8479, %v9117, %v9113
    %v9119 = vlaneseq
    %v9120 = vshrl.u32 %v9119, 7
    %v9121 = vsub.s32 %v8481, %v9120
    %v9122 = vrot.slane %v8048, %v9121
    %v9123 = vsel %vm8486, %v9122, %v9118
    %v9124 = vlaneseq
    %v9125 = vshrl.u32 %v9124, 7
    %v9126 = vsub.s32 %v8488, %v9125
    %v9127 = vrot.slane %v8051, %v9126
    %v9128 = vsel %vm8493, %v9127, %v9123
    %v9129 = vlaneseq
    %v9130 = vshrl.u32 %v9129, 7
    %v9131 = vsub.s32 %v8495, %v9130
    %v9132 = vrot.slane %v8054, %v9131
    %v9133 = vsel %vm8500, %v9132, %v9128
    %v9134 = vlaneseq
    %v9135 = vshrl.u32 %v9134, 7
    %v9136 = vsub.s32 %v8392, %v9135
    %v9137 = vrot.slane %v8057, %v9136
    %v9138 = vlaneseq
    %v9139 = vshrl.u32 %v9138, 7
    %v9140 = vsub.s32 %v8397, %v9139
    %v9141 = vrot.slane %v8060, %v9140
    %v9142 = vsel %vm8402, %v9141, %v9137
    %v9143 = vlaneseq
    %v9144 = vshrl.u32 %v9143, 7
    %v9145 = vsub.s32 %v8404, %v9144
    %v9146 = vrot.slane %v8063, %v9145
    %v9147 = vsel %vm8409, %v9146, %v9142
    %v9148 = vlaneseq
    %v9149 = vshrl.u32 %v9148, 7
    %v9150 = vsub.s32 %v8411, %v9149
    %v9151 = vrot.slane %v8066, %v9150
    %v9152 = vsel %vm8416, %v9151, %v9147
    %v9153 = vlaneseq
    %v9154 = vshrl.u32 %v9153, 7
    %v9155 = vsub.s32 %v8418, %v9154
    %v9156 = vrot.slane %v8069, %v9155
    %v9157 = vsel %vm8423, %v9156, %v9152
    %v9158 = vlaneseq
    %v9159 = vshrl.u32 %v9158, 7
    %v9160 = vsub.s32 %v8425, %v9159
    %v9161 = vrot.slane %v8072, %v9160
    %v9162 = vsel %vm8430, %v9161, %v9157
    %v9163 = vlaneseq
    %v9164 = vshrl.u32 %v9163, 7
    %v9165 = vsub.s32 %v8432, %v9164
    %v9166 = vrot.slane %v8075, %v9165
    %v9167 = vsel %vm8437, %v9166, %v9162
    %v9168 = vlaneseq
    %v9169 = vshrl.u32 %v9168, 7
    %v9170 = vsub.s32 %v8439, %v9169
    %v9171 = vrot.slane %v8078, %v9170
    %v9172 = vsel %vm8444, %v9171, %v9167
    %v9173 = vlaneseq
    %v9174 = vshrl.u32 %v9173, 7
    %v9175 = vsub.s32 %v8446, %v9174
    %v9176 = vrot.slane %v8081, %v9175
    %v9177 = vsel %vm8451, %v9176, %v9172
    %v9178 = vlaneseq
    %v9179 = vshrl.u32 %v9178, 7
    %v9180 = vsub.s32 %v8453, %v9179
    %v9181 = vrot.slane %v8084, %v9180
    %v9182 = vsel %vm8458, %v9181, %v9177
    %v9183 = vlaneseq
    %v9184 = vshrl.u32 %v9183, 7
    %v9185 = vsub.s32 %v8460, %v9184
    %v9186 = vrot.slane %v8087, %v9185
    %v9187 = vsel %vm8465, %v9186, %v9182
    %v9188 = vlaneseq
    %v9189 = vshrl.u32 %v9188, 7
    %v9190 = vsub.s32 %v8467, %v9189
    %v9191 = vrot.slane %v8090, %v9190
    %v9192 = vsel %vm8472, %v9191, %v9187
    %v9193 = vlaneseq
    %v9194 = vshrl.u32 %v9193, 7
    %v9195 = vsub.s32 %v8474, %v9194
    %v9196 = vrot.slane %v8093, %v9195
    %v9197 = vsel %vm8479, %v9196, %v9192
    %v9198 = vlaneseq
    %v9199 = vshrl.u32 %v9198, 7
    %v9200 = vsub.s32 %v8481, %v9199
    %v9201 = vrot.slane %v8096, %v9200
    %v9202 = vsel %vm8486, %v9201, %v9197
    %v9203 = vlaneseq
    %v9204 = vshrl.u32 %v9203, 7
    %v9205 = vsub.s32 %v8488, %v9204
    %v9206 = vrot.slane %v8099, %v9205
    %v9207 = vsel %vm8493, %v9206, %v9202
    %v9208 = vlaneseq
    %v9209 = vshrl.u32 %v9208, 7
    %v9210 = vsub.s32 %v8495, %v9209
    %v9211 = vrot.slane %v8102, %v9210
    %v9212 = vsel %vm8500, %v9211, %v9207
    %v9213 = vlaneseq
    %v9214 = vshrl.u32 %v9213, 7
    %v9215 = vsub.s32 %v8392, %v9214
    %v9216 = vrot.slane %v8105, %v9215
    %v9217 = vlaneseq
    %v9218 = vshrl.u32 %v9217, 7
    %v9219 = vsub.s32 %v8397, %v9218
    %v9220 = vrot.slane %v8108, %v9219
    %v9221 = vsel %vm8402, %v9220, %v9216
    %v9222 = vlaneseq
    %v9223 = vshrl.u32 %v9222, 7
    %v9224 = vsub.s32 %v8404, %v9223
    %v9225 = vrot.slane %v8111, %v9224
    %v9226 = vsel %vm8409, %v9225, %v9221
    %v9227 = vlaneseq
    %v9228 = vshrl.u32 %v9227, 7
    %v9229 = vsub.s32 %v8411, %v9228
    %v9230 = vrot.slane %v8114, %v9229
    %v9231 = vsel %vm8416, %v9230, %v9226
    %v9232 = vlaneseq
    %v9233 = vshrl.u32 %v9232, 7
    %v9234 = vsub.s32 %v8418, %v9233
    %v9235 = vrot.slane %v8117, %v9234
    %v9236 = vsel %vm8423, %v9235, %v9231
    %v9237 = vlaneseq
    %v9238 = vshrl.u32 %v9237, 7
    %v9239 = vsub.s32 %v8425, %v9238
    %v9240 = vrot.slane %v8120, %v9239
    %v9241 = vsel %vm8430, %v9240, %v9236
    %v9242 = vlaneseq
    %v9243 = vshrl.u32 %v9242, 7
    %v9244 = vsub.s32 %v8432, %v9243
    %v9245 = vrot.slane %v8123, %v9244
    %v9246 = vsel %vm8437, %v9245, %v9241
    %v9247 = vlaneseq
    %v9248 = vshrl.u32 %v9247, 7
    %v9249 = vsub.s32 %v8439, %v9248
    %v9250 = vrot.slane %v8126, %v9249
    %v9251 = vsel %vm8444, %v9250, %v9246
    %v9252 = vlaneseq
    %v9253 = vshrl.u32 %v9252, 7
    %v9254 = vsub.s32 %v8446, %v9253
    %v9255 = vrot.slane %v8129, %v9254
    %v9256 = vsel %vm8451, %v9255, %v9251
    %v9257 = vlaneseq
    %v9258 = vshrl.u32 %v9257, 7
    %v9259 = vsub.s32 %v8453, %v9258
    %v9260 = vrot.slane %v8132, %v9259
    %v9261 = vsel %vm8458, %v9260, %v9256
    %v9262 = vlaneseq
    %v9263 = vshrl.u32 %v9262, 7
    %v9264 = vsub.s32 %v8460, %v9263
    %v9265 = vrot.slane %v8135, %v9264
    %v9266 = vsel %vm8465, %v9265, %v9261
    %v9267 = vlaneseq
    %v9268 = vshrl.u32 %v9267, 7
    %v9269 = vsub.s32 %v8467, %v9268
    %v9270 = vrot.slane %v8138, %v9269
    %v9271 = vsel %vm8472, %v9270, %v9266
    %v9272 = vlaneseq
    %v9273 = vshrl.u32 %v9272, 7
    %v9274 = vsub.s32 %v8474, %v9273
    %v9275 = vrot.slane %v8141, %v9274
    %v9276 = vsel %vm8479, %v9275, %v9271
    %v9277 = vlaneseq
    %v9278 = vshrl.u32 %v9277, 7
    %v9279 = vsub.s32 %v8481, %v9278
    %v9280 = vrot.slane %v8144, %v9279
    %v9281 = vsel %vm8486, %v9280, %v9276
    %v9282 = vlaneseq
    %v9283 = vshrl.u32 %v9282, 7
    %v9284 = vsub.s32 %v8488, %v9283
    %v9285 = vrot.slane %v8147, %v9284
    %v9286 = vsel %vm8493, %v9285, %v9281
    %v9287 = vlaneseq
    %v9288 = vshrl.u32 %v9287, 7
    %v9289 = vsub.s32 %v8495, %v9288
    %v9290 = vrot.slane %v8150, %v9289
    %v9291 = vsel %vm8500, %v9290, %v9286
    %v9292 = vlaneseq
    %v9293 = vshrl.u32 %v9292, 7
    %v9294 = vsub.s32 %v8392, %v9293
    %v9295 = vrot.slane %v8153, %v9294
    %v9296 = vlaneseq
    %v9297 = vshrl.u32 %v9296, 7
    %v9298 = vsub.s32 %v8397, %v9297
    %v9299 = vrot.slane %v8156, %v9298
    %v9300 = vsel %vm8402, %v9299, %v9295
    %v9301 = vlaneseq
    %v9302 = vshrl.u32 %v9301, 7
    %v9303 = vsub.s32 %v8404, %v9302
    %v9304 = vrot.slane %v8159, %v9303
    %v9305 = vsel %vm8409, %v9304, %v9300
    %v9306 = vlaneseq
    %v9307 = vshrl.u32 %v9306, 7
    %v9308 = vsub.s32 %v8411, %v9307
    %v9309 = vrot.slane %v8162, %v9308
    %v9310 = vsel %vm8416, %v9309, %v9305
    %v9311 = vlaneseq
    %v9312 = vshrl.u32 %v9311, 7
    %v9313 = vsub.s32 %v8418, %v9312
    %v9314 = vrot.slane %v8165, %v9313
    %v9315 = vsel %vm8423, %v9314, %v9310
    %v9316 = vlaneseq
    %v9317 = vshrl.u32 %v9316, 7
    %v9318 = vsub.s32 %v8425, %v9317
    %v9319 = vrot.slane %v8168, %v9318
    %v9320 = vsel %vm8430, %v9319, %v9315
    %v9321 = vlaneseq
    %v9322 = vshrl.u32 %v9321, 7
    %v9323 = vsub.s32 %v8432, %v9322
    %v9324 = vrot.slane %v8171, %v9323
    %v9325 = vsel %vm8437, %v9324, %v9320
    %v9326 = vlaneseq
    %v9327 = vshrl.u32 %v9326, 7
    %v9328 = vsub.s32 %v8439, %v9327
    %v9329 = vrot.slane %v8174, %v9328
    %v9330 = vsel %vm8444, %v9329, %v9325
    %v9331 = vlaneseq
    %v9332 = vshrl.u32 %v9331, 7
    %v9333 = vsub.s32 %v8446, %v9332
    %v9334 = vrot.slane %v8177, %v9333
    %v9335 = vsel %vm8451, %v9334, %v9330
    %v9336 = vlaneseq
    %v9337 = vshrl.u32 %v9336, 7
    %v9338 = vsub.s32 %v8453, %v9337
    %v9339 = vrot.slane %v8180, %v9338
    %v9340 = vsel %vm8458, %v9339, %v9335
    %v9341 = vlaneseq
    %v9342 = vshrl.u32 %v9341, 7
    %v9343 = vsub.s32 %v8460, %v9342
    %v9344 = vrot.slane %v8183, %v9343
    %v9345 = vsel %vm8465, %v9344, %v9340
    %v9346 = vlaneseq
    %v9347 = vshrl.u32 %v9346, 7
    %v9348 = vsub.s32 %v8467, %v9347
    %v9349 = vrot.slane %v8186, %v9348
    %v9350 = vsel %vm8472, %v9349, %v9345
    %v9351 = vlaneseq
    %v9352 = vshrl.u32 %v9351, 7
    %v9353 = vsub.s32 %v8474, %v9352
    %v9354 = vrot.slane %v8189, %v9353
    %v9355 = vsel %vm8479, %v9354, %v9350
    %v9356 = vlaneseq
    %v9357 = vshrl.u32 %v9356, 7
    %v9358 = vsub.s32 %v8481, %v9357
    %v9359 = vrot.slane %v8192, %v9358
    %v9360 = vsel %vm8486, %v9359, %v9355
    %v9361 = vlaneseq
    %v9362 = vshrl.u32 %v9361, 7
    %v9363 = vsub.s32 %v8488, %v9362
    %v9364 = vrot.slane %v8195, %v9363
    %v9365 = vsel %vm8493, %v9364, %v9360
    %v9366 = vlaneseq
    %v9367 = vshrl.u32 %v9366, 7
    %v9368 = vsub.s32 %v8495, %v9367
    %v9369 = vrot.slane %v8198, %v9368
    %v9370 = vsel %vm8500, %v9369, %v9365
    %v9371 = vlaneseq
    %v9372 = vshrl.u32 %v9371, 7
    %v9373 = vsub.s32 %v8392, %v9372
    %v9374 = vrot.slane %v8201, %v9373
    %v9375 = vlaneseq
    %v9376 = vshrl.u32 %v9375, 7
    %v9377 = vsub.s32 %v8397, %v9376
    %v9378 = vrot.slane %v8204, %v9377
    %v9379 = vsel %vm8402, %v9378, %v9374
    %v9380 = vlaneseq
    %v9381 = vshrl.u32 %v9380, 7
    %v9382 = vsub.s32 %v8404, %v9381
    %v9383 = vrot.slane %v8207, %v9382
    %v9384 = vsel %vm8409, %v9383, %v9379
    %v9385 = vlaneseq
    %v9386 = vshrl.u32 %v9385, 7
    %v9387 = vsub.s32 %v8411, %v9386
    %v9388 = vrot.slane %v8210, %v9387
    %v9389 = vsel %vm8416, %v9388, %v9384
    %v9390 = vlaneseq
    %v9391 = vshrl.u32 %v9390, 7
    %v9392 = vsub.s32 %v8418, %v9391
    %v9393 = vrot.slane %v8213, %v9392
    %v9394 = vsel %vm8423, %v9393, %v9389
    %v9395 = vlaneseq
    %v9396 = vshrl.u32 %v9395, 7
    %v9397 = vsub.s32 %v8425, %v9396
    %v9398 = vrot.slane %v8216, %v9397
    %v9399 = vsel %vm8430, %v9398, %v9394
    %v9400 = vlaneseq
    %v9401 = vshrl.u32 %v9400, 7
    %v9402 = vsub.s32 %v8432, %v9401
    %v9403 = vrot.slane %v8219, %v9402
    %v9404 = vsel %vm8437, %v9403, %v9399
    %v9405 = vlaneseq
    %v9406 = vshrl.u32 %v9405, 7
    %v9407 = vsub.s32 %v8439, %v9406
    %v9408 = vrot.slane %v8222, %v9407
    %v9409 = vsel %vm8444, %v9408, %v9404
    %v9410 = vlaneseq
    %v9411 = vshrl.u32 %v9410, 7
    %v9412 = vsub.s32 %v8446, %v9411
    %v9413 = vrot.slane %v8225, %v9412
    %v9414 = vsel %vm8451, %v9413, %v9409
    %v9415 = vlaneseq
    %v9416 = vshrl.u32 %v9415, 7
    %v9417 = vsub.s32 %v8453, %v9416
    %v9418 = vrot.slane %v8228, %v9417
    %v9419 = vsel %vm8458, %v9418, %v9414
    %v9420 = vlaneseq
    %v9421 = vshrl.u32 %v9420, 7
    %v9422 = vsub.s32 %v8460, %v9421
    %v9423 = vrot.slane %v8231, %v9422
    %v9424 = vsel %vm8465, %v9423, %v9419
    %v9425 = vlaneseq
    %v9426 = vshrl.u32 %v9425, 7
    %v9427 = vsub.s32 %v8467, %v9426
    %v9428 = vrot.slane %v8234, %v9427
    %v9429 = vsel %vm8472, %v9428, %v9424
    %v9430 = vlaneseq
    %v9431 = vshrl.u32 %v9430, 7
    %v9432 = vsub.s32 %v8474, %v9431
    %v9433 = vrot.slane %v8237, %v9432
    %v9434 = vsel %vm8479, %v9433, %v9429
    %v9435 = vlaneseq
    %v9436 = vshrl.u32 %v9435, 7
    %v9437 = vsub.s32 %v8481, %v9436
    %v9438 = vrot.slane %v8240, %v9437
    %v9439 = vsel %vm8486, %v9438, %v9434
    %v9440 = vlaneseq
    %v9441 = vshrl.u32 %v9440, 7
    %v9442 = vsub.s32 %v8488, %v9441
    %v9443 = vrot.slane %v8243, %v9442
    %v9444 = vsel %vm8493, %v9443, %v9439
    %v9445 = vlaneseq
    %v9446 = vshrl.u32 %v9445, 7
    %v9447 = vsub.s32 %v8495, %v9446
    %v9448 = vrot.slane %v8246, %v9447
    %v9449 = vsel %vm8500, %v9448, %v9444
    %v9450 = vlaneseq
    %v9451 = vshrl.u32 %v9450, 7
    %v9452 = vsub.s32 %v8392, %v9451
    %v9453 = vrot.slane %v8249, %v9452
    %v9454 = vlaneseq
    %v9455 = vshrl.u32 %v9454, 7
    %v9456 = vsub.s32 %v8397, %v9455
    %v9457 = vrot.slane %v8252, %v9456
    %v9458 = vsel %vm8402, %v9457, %v9453
    %v9459 = vlaneseq
    %v9460 = vshrl.u32 %v9459, 7
    %v9461 = vsub.s32 %v8404, %v9460
    %v9462 = vrot.slane %v8255, %v9461
    %v9463 = vsel %vm8409, %v9462, %v9458
    %v9464 = vlaneseq
    %v9465 = vshrl.u32 %v9464, 7
    %v9466 = vsub.s32 %v8411, %v9465
    %v9467 = vrot.slane %v8258, %v9466
    %v9468 = vsel %vm8416, %v9467, %v9463
    %v9469 = vlaneseq
    %v9470 = vshrl.u32 %v9469, 7
    %v9471 = vsub.s32 %v8418, %v9470
    %v9472 = vrot.slane %v8261, %v9471
    %v9473 = vsel %vm8423, %v9472, %v9468
    %v9474 = vlaneseq
    %v9475 = vshrl.u32 %v9474, 7
    %v9476 = vsub.s32 %v8425, %v9475
    %v9477 = vrot.slane %v8264, %v9476
    %v9478 = vsel %vm8430, %v9477, %v9473
    %v9479 = vlaneseq
    %v9480 = vshrl.u32 %v9479, 7
    %v9481 = vsub.s32 %v8432, %v9480
    %v9482 = vrot.slane %v8267, %v9481
    %v9483 = vsel %vm8437, %v9482, %v9478
    %v9484 = vlaneseq
    %v9485 = vshrl.u32 %v9484, 7
    %v9486 = vsub.s32 %v8439, %v9485
    %v9487 = vrot.slane %v8270, %v9486
    %v9488 = vsel %vm8444, %v9487, %v9483
    %v9489 = vlaneseq
    %v9490 = vshrl.u32 %v9489, 7
    %v9491 = vsub.s32 %v8446, %v9490
    %v9492 = vrot.slane %v8273, %v9491
    %v9493 = vsel %vm8451, %v9492, %v9488
    %v9494 = vlaneseq
    %v9495 = vshrl.u32 %v9494, 7
    %v9496 = vsub.s32 %v8453, %v9495
    %v9497 = vrot.slane %v8276, %v9496
    %v9498 = vsel %vm8458, %v9497, %v9493
    %v9499 = vlaneseq
    %v9500 = vshrl.u32 %v9499, 7
    %v9501 = vsub.s32 %v8460, %v9500
    %v9502 = vrot.slane %v8279, %v9501
    %v9503 = vsel %vm8465, %v9502, %v9498
    %v9504 = vlaneseq
    %v9505 = vshrl.u32 %v9504, 7
    %v9506 = vsub.s32 %v8467, %v9505
    %v9507 = vrot.slane %v8282, %v9506
    %v9508 = vsel %vm8472, %v9507, %v9503
    %v9509 = vlaneseq
    %v9510 = vshrl.u32 %v9509, 7
    %v9511 = vsub.s32 %v8474, %v9510
    %v9512 = vrot.slane %v8285, %v9511
    %v9513 = vsel %vm8479, %v9512, %v9508
    %v9514 = vlaneseq
    %v9515 = vshrl.u32 %v9514, 7
    %v9516 = vsub.s32 %v8481, %v9515
    %v9517 = vrot.slane %v8288, %v9516
    %v9518 = vsel %vm8486, %v9517, %v9513
    %v9519 = vlaneseq
    %v9520 = vshrl.u32 %v9519, 7
    %v9521 = vsub.s32 %v8488, %v9520
    %v9522 = vrot.slane %v8291, %v9521
    %v9523 = vsel %vm8493, %v9522, %v9518
    %v9524 = vlaneseq
    %v9525 = vshrl.u32 %v9524, 7
    %v9526 = vsub.s32 %v8495, %v9525
    %v9527 = vrot.slane %v8294, %v9526
    %v9528 = vsel %vm8500, %v9527, %v9523
    %v9529 = vlaneseq
    %v9530 = vshrl.u32 %v9529, 7
    %v9531 = vsub.s32 %v8392, %v9530
    %v9532 = vrot.slane %v8297, %v9531
    %v9533 = vlaneseq
    %v9534 = vshrl.u32 %v9533, 7
    %v9535 = vsub.s32 %v8397, %v9534
    %v9536 = vrot.slane %v8300, %v9535
    %v9537 = vsel %vm8402, %v9536, %v9532
    %v9538 = vlaneseq
    %v9539 = vshrl.u32 %v9538, 7
    %v9540 = vsub.s32 %v8404, %v9539
    %v9541 = vrot.slane %v8303, %v9540
    %v9542 = vsel %vm8409, %v9541, %v9537
    %v9543 = vlaneseq
    %v9544 = vshrl.u32 %v9543, 7
    %v9545 = vsub.s32 %v8411, %v9544
    %v9546 = vrot.slane %v8306, %v9545
    %v9547 = vsel %vm8416, %v9546, %v9542
    %v9548 = vlaneseq
    %v9549 = vshrl.u32 %v9548, 7
    %v9550 = vsub.s32 %v8418, %v9549
    %v9551 = vrot.slane %v8309, %v9550
    %v9552 = vsel %vm8423, %v9551, %v9547
    %v9553 = vlaneseq
    %v9554 = vshrl.u32 %v9553, 7
    %v9555 = vsub.s32 %v8425, %v9554
    %v9556 = vrot.slane %v8312, %v9555
    %v9557 = vsel %vm8430, %v9556, %v9552
    %v9558 = vlaneseq
    %v9559 = vshrl.u32 %v9558, 7
    %v9560 = vsub.s32 %v8432, %v9559
    %v9561 = vrot.slane %v8315, %v9560
    %v9562 = vsel %vm8437, %v9561, %v9557
    %v9563 = vlaneseq
    %v9564 = vshrl.u32 %v9563, 7
    %v9565 = vsub.s32 %v8439, %v9564
    %v9566 = vrot.slane %v8318, %v9565
    %v9567 = vsel %vm8444, %v9566, %v9562
    %v9568 = vlaneseq
    %v9569 = vshrl.u32 %v9568, 7
    %v9570 = vsub.s32 %v8446, %v9569
    %v9571 = vrot.slane %v8321, %v9570
    %v9572 = vsel %vm8451, %v9571, %v9567
    %v9573 = vlaneseq
    %v9574 = vshrl.u32 %v9573, 7
    %v9575 = vsub.s32 %v8453, %v9574
    %v9576 = vrot.slane %v8324, %v9575
    %v9577 = vsel %vm8458, %v9576, %v9572
    %v9578 = vlaneseq
    %v9579 = vshrl.u32 %v9578, 7
    %v9580 = vsub.s32 %v8460, %v9579
    %v9581 = vrot.slane %v8327, %v9580
    %v9582 = vsel %vm8465, %v9581, %v9577
    %v9583 = vlaneseq
    %v9584 = vshrl.u32 %v9583, 7
    %v9585 = vsub.s32 %v8467, %v9584
    %v9586 = vrot.slane %v8330, %v9585
    %v9587 = vsel %vm8472, %v9586, %v9582
    %v9588 = vlaneseq
    %v9589 = vshrl.u32 %v9588, 7
    %v9590 = vsub.s32 %v8474, %v9589
    %v9591 = vrot.slane %v8333, %v9590
    %v9592 = vsel %vm8479, %v9591, %v9587
    %v9593 = vlaneseq
    %v9594 = vshrl.u32 %v9593, 7
    %v9595 = vsub.s32 %v8481, %v9594
    %v9596 = vrot.slane %v8336, %v9595
    %v9597 = vsel %vm8486, %v9596, %v9592
    %v9598 = vlaneseq
    %v9599 = vshrl.u32 %v9598, 7
    %v9600 = vsub.s32 %v8488, %v9599
    %v9601 = vrot.slane %v8339, %v9600
    %v9602 = vsel %vm8493, %v9601, %v9597
    %v9603 = vlaneseq
    %v9604 = vshrl.u32 %v9603, 7
    %v9605 = vsub.s32 %v8495, %v9604
    %v9606 = vrot.slane %v8342, %v9605
    %v9607 = vsel %vm8500, %v9606, %v9602
    %v9608 = vlaneseq
    %v9609 = vshrl.u32 %v9608, 7
    %v9610 = vsub.s32 %v8392, %v9609
    %v9611 = vrot.slane %v8345, %v9610
    %v9612 = vlaneseq
    %v9613 = vshrl.u32 %v9612, 7
    %v9614 = vsub.s32 %v8397, %v9613
    %v9615 = vrot.slane %v8348, %v9614
    %v9616 = vsel %vm8402, %v9615, %v9611
    %v9617 = vlaneseq
    %v9618 = vshrl.u32 %v9617, 7
    %v9619 = vsub.s32 %v8404, %v9618
    %v9620 = vrot.slane %v8351, %v9619
    %v9621 = vsel %vm8409, %v9620, %v9616
    %v9622 = vlaneseq
    %v9623 = vshrl.u32 %v9622, 7
    %v9624 = vsub.s32 %v8411, %v9623
    %v9625 = vrot.slane %v8354, %v9624
    %v9626 = vsel %vm8416, %v9625, %v9621
    %v9627 = vlaneseq
    %v9628 = vshrl.u32 %v9627, 7
    %v9629 = vsub.s32 %v8418, %v9628
    %v9630 = vrot.slane %v8357, %v9629
    %v9631 = vsel %vm8423, %v9630, %v9626
    %v9632 = vlaneseq
    %v9633 = vshrl.u32 %v9632, 7
    %v9634 = vsub.s32 %v8425, %v9633
    %v9635 = vrot.slane %v8360, %v9634
    %v9636 = vsel %vm8430, %v9635, %v9631
    %v9637 = vlaneseq
    %v9638 = vshrl.u32 %v9637, 7
    %v9639 = vsub.s32 %v8432, %v9638
    %v9640 = vrot.slane %v8363, %v9639
    %v9641 = vsel %vm8437, %v9640, %v9636
    %v9642 = vlaneseq
    %v9643 = vshrl.u32 %v9642, 7
    %v9644 = vsub.s32 %v8439, %v9643
    %v9645 = vrot.slane %v8366, %v9644
    %v9646 = vsel %vm8444, %v9645, %v9641
    %v9647 = vlaneseq
    %v9648 = vshrl.u32 %v9647, 7
    %v9649 = vsub.s32 %v8446, %v9648
    %v9650 = vrot.slane %v8369, %v9649
    %v9651 = vsel %vm8451, %v9650, %v9646
    %v9652 = vlaneseq
    %v9653 = vshrl.u32 %v9652, 7
    %v9654 = vsub.s32 %v8453, %v9653
    %v9655 = vrot.slane %v8372, %v9654
    %v9656 = vsel %vm8458, %v9655, %v9651
    %v9657 = vlaneseq
    %v9658 = vshrl.u32 %v9657, 7
    %v9659 = vsub.s32 %v8460, %v9658
    %v9660 = vrot.slane %v8375, %v9659
    %v9661 = vsel %vm8465, %v9660, %v9656
    %v9662 = vlaneseq
    %v9663 = vshrl.u32 %v9662, 7
    %v9664 = vsub.s32 %v8467, %v9663
    %v9665 = vrot.slane %v8378, %v9664
    %v9666 = vsel %vm8472, %v9665, %v9661
    %v9667 = vlaneseq
    %v9668 = vshrl.u32 %v9667, 7
    %v9669 = vsub.s32 %v8474, %v9668
    %v9670 = vrot.slane %v8381, %v9669
    %v9671 = vsel %vm8479, %v9670, %v9666
    %v9672 = vlaneseq
    %v9673 = vshrl.u32 %v9672, 7
    %v9674 = vsub.s32 %v8481, %v9673
    %v9675 = vrot.slane %v8384, %v9674
    %v9676 = vsel %vm8486, %v9675, %v9671
    %v9677 = vlaneseq
    %v9678 = vshrl.u32 %v9677, 7
    %v9679 = vsub.s32 %v8488, %v9678
    %v9680 = vrot.slane %v8387, %v9679
    %v9681 = vsel %vm8493, %v9680, %v9676
    %v9682 = vlaneseq
    %v9683 = vshrl.u32 %v9682, 7
    %v9684 = vsub.s32 %v8495, %v9683
    %v9685 = vrot.slane %v8390, %v9684
    %v9686 = vsel %vm8500, %v9685, %v9681
    %vm9687 = vcmask 1041409
    %v9688 = vsel %vm9687, %v9133, %v8501
    %v9689 = vsel %vm9687, %v9212, %v8580
    %v9690 = vsel %vm9687, %v9291, %v8659
    %v9691 = vsel %vm9687, %v9370, %v8738
    %v9692 = vsel %vm9687, %v9449, %v8817
    %v9693 = vsel %vm9687, %v9528, %v8896
    %v9694 = vsel %vm9687, %v9607, %v8975
    %v9695 = vsel %vm9687, %v9686, %v9054
    %v9696 = vpack.c.b16 %v9688, %v9688
    %v9697 = vpack.c.b16 %v9689, %v9689
    %v9698 = vpack.c.b16 %v9690, %v9690
    %v9699 = vpack.c.b16 %v9691, %v9691
    %v9700 = vpack.c.b16 %v9692, %v9692
    %v9701 = vpack.c.b16 %v9693, %v9693
    %v9702 = vpack.c.b16 %v9694, %v9694
    %v9703 = vpack.c.b16 %v9695, %v9695
    %v9840 = vunpack.c.l.b16 %v7006
    %v9841 = vunpack.c.l.b16 %v7007
    %v9842 = vunpack.c.l.b16 %v7008
    %v9843 = vunpack.c.l.b16 %v7009
    %v9844 = vunpack.c.l.b16 %v7010
    %v9845 = vunpack.c.l.b16 %v7011
    %v9846 = vunpack.c.l.b16 %v7012
    %v9847 = vunpack.c.l.b16 %v7013
    %v9848 = vunpack.c.l.b16 %v7014
    %v9849 = vunpack.c.l.b16 %v7015
    %v9850 = vunpack.c.l.b16 %v7016
    %v9851 = vunpack.c.l.b16 %v7017
    %v9852 = vunpack.c.l.b16 %v7018
    %v9853 = vunpack.c.l.b16 %v7019
    %v9854 = vunpack.c.l.b16 %v7020
    %v9855 = vunpack.c.l.b16 %v7021
    %v9856 = vunpack.c.l.b16 %v7022
    %v9857 = vunpack.c.l.b16 %v7023
    %v9858 = vunpack.c.l.b16 %v7024
    %v9859 = vunpack.c.l.b16 %v7025
    %v9860 = vunpack.c.l.b16 %v7026
    %v9861 = vunpack.c.l.b16 %v7027
    %v9862 = vunpack.c.l.b16 %v7028
    %v9863 = vunpack.c.l.b16 %v7029
    %v9864 = vunpack.c.l.b16 %v7030
    %v9865 = vunpack.c.l.b16 %v7031
    %v9866 = vunpack.c.l.b16 %v7032
    %v9867 = vunpack.c.l.b16 %v7033
    %v9868 = vunpack.c.l.b16 %v7034
    %v9869 = vunpack.c.l.b16 %v7035
    %v9870 = vunpack.c.l.b16 %v7036
    %v9871 = vunpack.c.l.b16 %v7037
    %v9872 = vunpack.c.l.b16 %v7038
    %v9873 = vunpack.c.l.b16 %v7039
    %v9874 = vunpack.c.l.b16 %v7040
    %v9875 = vunpack.c.l.b16 %v7041
    %v9876 = vunpack.c.l.b16 %v7042
    %v9877 = vunpack.c.l.b16 %v7043
    %v9878 = vunpack.c.l.b16 %v7044
    %v9879 = vunpack.c.l.b16 %v7045
    %v9880 = vunpack.c.l.b16 %v7046
    %v9881 = vunpack.c.l.b16 %v7047
    %v9882 = vunpack.c.l.b16 %v7048
    %v9883 = vunpack.c.l.b16 %v7049
    %v9884 = vunpack.c.l.b16 %v7050
    %v9885 = vunpack.c.l.b16 %v7051
    %v9886 = vunpack.c.l.b16 %v7052
    %v9887 = vunpack.c.l.b16 %v7053
    %v9888 = vunpack.c.l.b16 %v7054
    %v9889 = vunpack.c.l.b16 %v7055
    %v9890 = vunpack.c.l.b16 %v7056
    %v9891 = vunpack.c.l.b16 %v7057
    %v9892 = vunpack.c.l.b16 %v7058
    %v9893 = vunpack.c.l.b16 %v7059
    %v9894 = vunpack.c.l.b16 %v7060
    %v9895 = vunpack.c.l.b16 %v7061
    %v9896 = vunpack.c.l.b16 %v7062
    %v9897 = vunpack.c.l.b16 %v7063
    %v9898 = vunpack.c.l.b16 %v7064
    %v9899 = vunpack.c.l.b16 %v7065
    %v9900 = vunpack.c.l.b16 %v7066
    %v9901 = vunpack.c.l.b16 %v7067
    %v9902 = vunpack.c.l.b16 %v7068
    %v9903 = vunpack.c.l.b16 %v7069
    %v9904 = vunpack.c.l.b16 %v7070
    %v9905 = vunpack.c.l.b16 %v7071
    %v9906 = vunpack.c.l.b16 %v7072
    %v9907 = vunpack.c.l.b16 %v7073
    %v9908 = vunpack.c.l.b16 %v7074
    %v9909 = vunpack.c.l.b16 %v7075
    %v9910 = vunpack.c.l.b16 %v7076
    %v9911 = vunpack.c.l.b16 %v7077
    %v9912 = vunpack.c.l.b16 %v7078
    %v9913 = vunpack.c.l.b16 %v7079
    %v9914 = vunpack.c.l.b16 %v7080
    %v9915 = vunpack.c.l.b16 %v7081
    %v9916 = vunpack.c.l.b16 %v7082
    %v9917 = vunpack.c.l.b16 %v7083
    %v9918 = vunpack.c.l.b16 %v7084
    %v9919 = vunpack.c.l.b16 %v7085
    %v9920 = vunpack.c.l.b16 %v7086
    %v9921 = vunpack.c.l.b16 %v7087
    %v9922 = vunpack.c.l.b16 %v7088
    %v9923 = vunpack.c.l.b16 %v7089
    %v9924 = vunpack.c.l.b16 %v7090
    %v9925 = vunpack.c.l.b16 %v7091
    %v9926 = vunpack.c.l.b16 %v7092
    %v9927 = vunpack.c.l.b16 %v7093
    %v9928 = vunpack.c.l.b16 %v7094
    %v9929 = vunpack.c.l.b16 %v7095
    %v9930 = vunpack.c.l.b16 %v7096
    %v9931 = vunpack.c.l.b16 %v7097
    %v9932 = vunpack.c.l.b16 %v7098
    %v9933 = vunpack.c.l.b16 %v7099
    %v9934 = vunpack.c.l.b16 %v7100
    %v9935 = vunpack.c.l.b16 %v7101
    %v9936 = vunpack.c.l.b16 %v7102
    %v9937 = vunpack.c.l.b16 %v7103
    %v9938 = vunpack.c.l.b16 %v7104
    %v9939 = vunpack.c.l.b16 %v7105
    %v9940 = vunpack.c.l.b16 %v7106
    %v9941 = vunpack.c.l.b16 %v7107
    %v9942 = vunpack.c.l.b16 %v7108
    %v9943 = vunpack.c.l.b16 %v7109
    %v9944 = vunpack.c.l.b16 %v7110
    %v9945 = vunpack.c.l.b16 %v7111
    %v9946 = vunpack.c.l.b16 %v7112
    %v9947 = vunpack.c.l.b16 %v7113
    %v9948 = vunpack.c.l.b16 %v7114
    %v9949 = vunpack.c.l.b16 %v7115
    %v9950 = vunpack.c.l.b16 %v7116
    %v9951 = vunpack.c.l.b16 %v7117
    %v9952 = vunpack.c.l.b16 %v7118
    %v9953 = vunpack.c.l.b16 %v7119
    %v9954 = vunpack.c.l.b16 %v7120
    %v9955 = vunpack.c.l.b16 %v7121
    %v9956 = vunpack.c.l.b16 %v7122
    %v9957 = vunpack.c.l.b16 %v7123
    %v9958 = vunpack.c.l.b16 %v7124
    %v9959 = vunpack.c.l.b16 %v7125
    %v9960 = vunpack.c.l.b16 %v7126
    %v9961 = vunpack.c.l.b16 %v7127
    %v9962 = vunpack.c.l.b16 %v7128
    %v9963 = vunpack.c.l.b16 %v7129
    %v9964 = vunpack.c.l.b16 %v7130
    %v9965 = vunpack.c.l.b16 %v7131
    %v9966 = vunpack.c.l.b16 %v7132
    %v9967 = vunpack.c.l.b16 %v7133
    %v9968 = vpack.c.b16 %v9841, %v9840
    %v9969 = vpack.c.b16 %v9843, %v9842
    %v9970 = vpack.c.b16 %v9845, %v9844
    %v9971 = vpack.c.b16 %v9847, %v9846
    %v9972 = vpack.c.b16 %v9849, %v9848
    %v9973 = vpack.c.b16 %v9851, %v9850
    %v9974 = vpack.c.b16 %v9853, %v9852
    %v9975 = vpack.c.b16 %v9855, %v9854
    %v9976 = vpack.c.b16 %v9857, %v9856
    %v9977 = vpack.c.b16 %v9859, %v9858
    %v9978 = vpack.c.b16 %v9861, %v9860
    %v9979 = vpack.c.b16 %v9863, %v9862
    %v9980 = vpack.c.b16 %v9865, %v9864
    %v9981 = vpack.c.b16 %v9867, %v9866
    %v9982 = vpack.c.b16 %v9869, %v9868
    %v9983 = vpack.c.b16 %v9871, %v9870
    %v9984 = vpack.c.b16 %v9873, %v9872
    %v9985 = vpack.c.b16 %v9875, %v9874
    %v9986 = vpack.c.b16 %v9877, %v9876
    %v9987 = vpack.c.b16 %v9879, %v9878
    %v9988 = vpack.c.b16 %v9881, %v9880
    %v9989 = vpack.c.b16 %v9883, %v9882
    %v9990 = vpack.c.b16 %v9885, %v9884
    %v9991 = vpack.c.b16 %v9887, %v9886
    %v9992 = vpack.c.b16 %v9889, %v9888
    %v9993 = vpack.c.b16 %v9891, %v9890
    %v9994 = vpack.c.b16 %v9893, %v9892
    %v9995 = vpack.c.b16 %v9895, %v9894
    %v9996 = vpack.c.b16 %v9897, %v9896
    %v9997 = vpack.c.b16 %v9899, %v9898
    %v9998 = vpack.c.b16 %v9901, %v9900
    %v9999 = vpack.c.b16 %v9903, %v9902
    %v10000 = vpack.c.b16 %v9905, %v9904
    %v10001 = vpack.c.b16 %v9907, %v9906
    %v10002 = vpack.c.b16 %v9909, %v9908
    %v10003 = vpack.c.b16 %v9911, %v9910
    %v10004 = vpack.c.b16 %v9913, %v9912
    %v10005 = vpack.c.b16 %v9915, %v9914
    %v10006 = vpack.c.b16 %v9917, %v9916
    %v10007 = vpack.c.b16 %v9919, %v9918
    %v10008 = vpack.c.b16 %v9921, %v9920
    %v10009 = vpack.c.b16 %v9923, %v9922
    %v10010 = vpack.c.b16 %v9925, %v9924
    %v10011 = vpack.c.b16 %v9927, %v9926
    %v10012 = vpack.c.b16 %v9929, %v9928
    %v10013 = vpack.c.b16 %v9931, %v9930
    %v10014 = vpack.c.b16 %v9933, %v9932
    %v10015 = vpack.c.b16 %v9935, %v9934
    %v10016 = vpack.c.b16 %v9937, %v9936
    %v10017 = vpack.c.b16 %v9939, %v9938
    %v10018 = vpack.c.b16 %v9941, %v9940
    %v10019 = vpack.c.b16 %v9943, %v9942
    %v10020 = vpack.c.b16 %v9945, %v9944
    %v10021 = vpack.c.b16 %v9947, %v9946
    %v10022 = vpack.c.b16 %v9949, %v9948
    %v10023 = vpack.c.b16 %v9951, %v9950
    %v10024 = vpack.c.b16 %v9953, %v9952
    %v10025 = vpack.c.b16 %v9955, %v9954
    %v10026 = vpack.c.b16 %v9957, %v9956
    %v10027 = vpack.c.b16 %v9959, %v9958
    %v10028 = vpack.c.b16 %v9961, %v9960
    %v10029 = vpack.c.b16 %v9963, %v9962
    %v10030 = vpack.c.b16 %v9965, %v9964
    %v10031 = vpack.c.b16 %v9967, %v9966
    %10096 = vmatprep.subr.bf16.mxu0 0
    %10097 = vmatpush1.bf16.msra.mxu0 %v9975
    %10098 = vmatprep.subr.bf16.mxu0 0
    %10099 = vmatpush1.bf16.msra.mxu0 %v9974
    %10100 = vmatprep.subr.bf16.mxu0 0
    %10101 = vmatpush1.bf16.msra.mxu0 %v9973
    %10102 = vmatprep.subr.bf16.mxu0 0
    %10103 = vmatpush1.bf16.msra.mxu0 %v9972
    %10104 = vmatprep.subr.bf16.mxu0 0
    %10105 = vmatpush1.bf16.msra.mxu0 %v9971
    %10106 = vmatprep.subr.bf16.mxu0 0
    %10107 = vmatpush1.bf16.msra.mxu0 %v9970
    %10108 = vmatprep.subr.bf16.mxu0 0
    %10109 = vmatpush1.bf16.msra.mxu0 %v9969
    %10110 = vmatprep.subr.bf16.mxu0 0
    %10111 = vmatpush1.bf16.msra.mxu0 %v9968
    %10112 = vmatprep.subr.bf16.mxu0 0
    %10113 = vmatpush2.bf16.msra.mxu0 %v9983
    %10114 = vmatprep.subr.bf16.mxu0 0
    %10115 = vmatpush2.bf16.msra.mxu0 %v9982
    %10116 = vmatprep.subr.bf16.mxu0 0
    %10117 = vmatpush2.bf16.msra.mxu0 %v9981
    %10118 = vmatprep.subr.bf16.mxu0 0
    %10119 = vmatpush2.bf16.msra.mxu0 %v9980
    %10120 = vmatprep.subr.bf16.mxu0 0
    %10121 = vmatpush2.bf16.msra.mxu0 %v9979
    %10122 = vmatprep.subr.bf16.mxu0 0
    %10123 = vmatpush2.bf16.msra.mxu0 %v9978
    %10124 = vmatprep.subr.bf16.mxu0 0
    %10125 = vmatpush2.bf16.msra.mxu0 %v9977
    %10126 = vmatprep.subr.bf16.mxu0 0
    %10127 = vmatpush2.bf16.msra.mxu0 %v9976
    %10128 = vmatprep.mubr.bf16.mxu0 %v9697
    %10129 = vmatmul.mubr.bf16.gmra.mxu0 %v9696
    %v10130 = vpop.f32.mrf.mxu0
    %v10131 = vadd.f32 %v7234, %v10130
    %v10132 = vpop.f32.mrf.mxu0
    %v10133 = vpop.f32.mrf.mxu0
    %v10134 = vpop.f32.mrf.mxu0
    %10135 = vdwg.mxu0
    %10136 = vmatprep.subr.bf16.mxu0 0
    %10137 = vmatpush1.bf16.msra.mxu0 %v9991
    %10138 = vmatprep.subr.bf16.mxu0 0
    %10139 = vmatpush1.bf16.msra.mxu0 %v9990
    %10140 = vmatprep.subr.bf16.mxu0 0
    %10141 = vmatpush1.bf16.msra.mxu0 %v9989
    %10142 = vmatprep.subr.bf16.mxu0 0
    %10143 = vmatpush1.bf16.msra.mxu0 %v9988
    %10144 = vmatprep.subr.bf16.mxu0 0
    %10145 = vmatpush1.bf16.msra.mxu0 %v9987
    %10146 = vmatprep.subr.bf16.mxu0 0
    %10147 = vmatpush1.bf16.msra.mxu0 %v9986
    %10148 = vmatprep.subr.bf16.mxu0 0
    %10149 = vmatpush1.bf16.msra.mxu0 %v9985
    %10150 = vmatprep.subr.bf16.mxu0 0
    %10151 = vmatpush1.bf16.msra.mxu0 %v9984
    %10152 = vmatprep.subr.bf16.mxu0 0
    %10153 = vmatpush2.bf16.msra.mxu0 %v9999
    %10154 = vmatprep.subr.bf16.mxu0 0
    %10155 = vmatpush2.bf16.msra.mxu0 %v9998
    %10156 = vmatprep.subr.bf16.mxu0 0
    %10157 = vmatpush2.bf16.msra.mxu0 %v9997
    %10158 = vmatprep.subr.bf16.mxu0 0
    %10159 = vmatpush2.bf16.msra.mxu0 %v9996
    %10160 = vmatprep.subr.bf16.mxu0 0
    %10161 = vmatpush2.bf16.msra.mxu0 %v9995
    %10162 = vmatprep.subr.bf16.mxu0 0
    %10163 = vmatpush2.bf16.msra.mxu0 %v9994
    %10164 = vmatprep.subr.bf16.mxu0 0
    %10165 = vmatpush2.bf16.msra.mxu0 %v9993
    %10166 = vmatprep.subr.bf16.mxu0 0
    %10167 = vmatpush2.bf16.msra.mxu0 %v9992
    %10168 = vmatprep.mubr.bf16.mxu0 %v9699
    %10169 = vmatmul.mubr.bf16.gmra.mxu0 %v9698
    %v10170 = vpop.f32.mrf.mxu0
    %v10171 = vadd.f32 %v10131, %v10170
    %v10172 = vpop.f32.mrf.mxu0
    %v10173 = vpop.f32.mrf.mxu0
    %v10174 = vpop.f32.mrf.mxu0
    %10175 = vdwg.mxu0
    %10176 = vmatprep.subr.bf16.mxu0 0
    %10177 = vmatpush1.bf16.msra.mxu0 %v10007
    %10178 = vmatprep.subr.bf16.mxu0 0
    %10179 = vmatpush1.bf16.msra.mxu0 %v10006
    %10180 = vmatprep.subr.bf16.mxu0 0
    %10181 = vmatpush1.bf16.msra.mxu0 %v10005
    %10182 = vmatprep.subr.bf16.mxu0 0
    %10183 = vmatpush1.bf16.msra.mxu0 %v10004
    %10184 = vmatprep.subr.bf16.mxu0 0
    %10185 = vmatpush1.bf16.msra.mxu0 %v10003
    %10186 = vmatprep.subr.bf16.mxu0 0
    %10187 = vmatpush1.bf16.msra.mxu0 %v10002
    %10188 = vmatprep.subr.bf16.mxu0 0
    %10189 = vmatpush1.bf16.msra.mxu0 %v10001
    %10190 = vmatprep.subr.bf16.mxu0 0
    %10191 = vmatpush1.bf16.msra.mxu0 %v10000
    %10192 = vmatprep.subr.bf16.mxu0 0
    %10193 = vmatpush2.bf16.msra.mxu0 %v10015
    %10194 = vmatprep.subr.bf16.mxu0 0
    %10195 = vmatpush2.bf16.msra.mxu0 %v10014
    %10196 = vmatprep.subr.bf16.mxu0 0
    %10197 = vmatpush2.bf16.msra.mxu0 %v10013
    %10198 = vmatprep.subr.bf16.mxu0 0
    %10199 = vmatpush2.bf16.msra.mxu0 %v10012
    %10200 = vmatprep.subr.bf16.mxu0 0
    %10201 = vmatpush2.bf16.msra.mxu0 %v10011
    %10202 = vmatprep.subr.bf16.mxu0 0
    %10203 = vmatpush2.bf16.msra.mxu0 %v10010
    %10204 = vmatprep.subr.bf16.mxu0 0
    %10205 = vmatpush2.bf16.msra.mxu0 %v10009
    %10206 = vmatprep.subr.bf16.mxu0 0
    %10207 = vmatpush2.bf16.msra.mxu0 %v10008
    %10208 = vmatprep.mubr.bf16.mxu0 %v9701
    %10209 = vmatmul.mubr.bf16.gmra.mxu0 %v9700
    %v10210 = vpop.f32.mrf.mxu0
    %v10211 = vadd.f32 %v10171, %v10210
    %v10212 = vpop.f32.mrf.mxu0
    %v10213 = vpop.f32.mrf.mxu0
    %v10214 = vpop.f32.mrf.mxu0
    %10215 = vdwg.mxu0
    %10216 = vmatprep.subr.bf16.mxu0 0
    %10217 = vmatpush1.bf16.msra.mxu0 %v10023
    %10218 = vmatprep.subr.bf16.mxu0 0
    %10219 = vmatpush1.bf16.msra.mxu0 %v10022
    %10220 = vmatprep.subr.bf16.mxu0 0
    %10221 = vmatpush1.bf16.msra.mxu0 %v10021
    %10222 = vmatprep.subr.bf16.mxu0 0
    %10223 = vmatpush1.bf16.msra.mxu0 %v10020
    %10224 = vmatprep.subr.bf16.mxu0 0
    %10225 = vmatpush1.bf16.msra.mxu0 %v10019
    %10226 = vmatprep.subr.bf16.mxu0 0
    %10227 = vmatpush1.bf16.msra.mxu0 %v10018
    %10228 = vmatprep.subr.bf16.mxu0 0
    %10229 = vmatpush1.bf16.msra.mxu0 %v10017
    %10230 = vmatprep.subr.bf16.mxu0 0
    %10231 = vmatpush1.bf16.msra.mxu0 %v10016
    %10232 = vmatprep.subr.bf16.mxu0 0
    %10233 = vmatpush2.bf16.msra.mxu0 %v10031
    %10234 = vmatprep.subr.bf16.mxu0 0
    %10235 = vmatpush2.bf16.msra.mxu0 %v10030
    %10236 = vmatprep.subr.bf16.mxu0 0
    %10237 = vmatpush2.bf16.msra.mxu0 %v10029
    %10238 = vmatprep.subr.bf16.mxu0 0
    %10239 = vmatpush2.bf16.msra.mxu0 %v10028
    %10240 = vmatprep.subr.bf16.mxu0 0
    %10241 = vmatpush2.bf16.msra.mxu0 %v10027
    %10242 = vmatprep.subr.bf16.mxu0 0
    %10243 = vmatpush2.bf16.msra.mxu0 %v10026
    %10244 = vmatprep.subr.bf16.mxu0 0
    %10245 = vmatpush2.bf16.msra.mxu0 %v10025
    %10246 = vmatprep.subr.bf16.mxu0 0
    %10247 = vmatpush2.bf16.msra.mxu0 %v10024
    %10248 = vmatprep.mubr.bf16.mxu0 %v9703
    %10249 = vmatmul.mubr.bf16.gmra.mxu0 %v9702
    %v10250 = vpop.f32.mrf.mxu0
    %v10251 = vadd.f32 %v10211, %v10250
    %v10252 = vpop.f32.mrf.mxu0
    %v10253 = vpop.f32.mrf.mxu0
    %v10254 = vpop.f32.mrf.mxu0
    %10255 = vdwg.mxu0
    %v10256 = vld [vmem:[%s8] sm:$0x1]
    %v10258 = vlaneseq
    %v10259 = vshrl.u32 %v10258, 7
    %v10260 = vsub.s32 0, %v10259
    %v10261 = vrot.slane %v10256, %v10260
    %v10263 = vadd.f32 %v10251, %v10261
    %10264 = vst [vmem:[#allocation13] sm:$0x3] %v10263
    // Predicated region
    $region58: #{tpu_custom_call.1} parent=1 // pred_check
      _
    $region59: #{tpu_custom_call.1} parent=1 // pred_check_branch
      %10266 = sbr.rel (0) target = $region61
    $region60: #{tpu_custom_call.1} parent=1 // pred_region
      %s10268 = ssub.s32 32, 32
      %10269 = vsyncadd [#allocation9], %s10268
      %s10271 = sshll.u32 [#allocation13], 4
      %s10272 = int_to_ptr.vmem [resolvable:$true] %s10271
      %10274 = dma.vmem_to_hbm [thread:$0]  %s10272, 32, %s11, [#allocation9]
    $region61: #{tpu_custom_call.1} parent=1 // pred_fallthru
      _
    // Predicated region
    $region62: #{tpu_custom_call.1} parent=1 // pred_check
      _
    $region63: #{tpu_custom_call.1} parent=1 // pred_check_branch
      %10276 = sbr.rel (0) target = $region65
    $region64: #{tpu_custom_call.1} parent=1 // pred_region
      %10277 = dma.done [#allocation9], 32
    $region65: #{tpu_custom_call.1} parent=1 // pred_fallthru
      _
    %10278 = vsyncpa [#allocation8], 1
    %10279 = vsyncpa [#allocation11], 1
    %10280 = vsyncpa [#allocation9], 1
  %10281 = vsyncmov [#allocation4]
  %s10282 = vpop.sfrf %10281
  %p10283 = scmp.eq.s32.totalorder %s10282, 0
  %p10284 = pneg %p10283
  %10286 = shalt.err (%p10284)
  %s10287 = scalar_lea.sflag [#allocation4], 1
  %10288 = vsyncmov %s10287
  %s10289 = vpop.sfrf %10288
  %p10290 = scmp.eq.s32.totalorder %s10289, 0
  %p10291 = pneg %p10290
  %10293 = shalt.err (%p10291)

</llo_original>
